<compile_context>
chip_gen: v6e
topology: v6e:2x2x1
jax: 0.10.0
libtpu: 0.0.40
codegen_flags: <defaults>
</compile_context>

<pallas_src>
import functools

import jax
import jax.numpy as jnp
from jax import lax
from jax.experimental import pallas as pl
from jax.experimental.pallas import tpu as pltpu

FCC_HIDDEN = 64  # FCCNetwork(num_hidden_features=64, num_hidden_layers=2)


# ------------------------------ fused kernel --------------------------------

def _tex_kernel(ids_ref, table_ref,
                pw0_ref, pb0_ref, pw1_ref, pb1_ref, pwo_ref, pbo_ref,
                wq_ref, bq_ref, wk_ref, bk_ref, wv_ref, bv_ref,
                wo_ref, ob_ref,
                f1w_ref, f1b_ref, f2w_ref, f2b_ref,
                ln1g_ref, ln1b_ref, ln2g_ref, ln2b_ref,
                o_ref, *, B, T, V, F, L, H, Dh):
    BT = B * T
    D = H * Dh

    # ---- token embedding: one-hot selection matmul on the MXU ----
    ids = ids_ref[...]                                         # (BT, 1) int32
    iota_v = lax.broadcasted_iota(jnp.int32, (BT, V), 1)
    onehot = (iota_v == ids).astype(jnp.float32)               # (BT, V)
    emb = jnp.dot(onehot, table_ref[...],
                  preferred_element_type=jnp.float32)          # (BT, F)

    # ---- positional FCC (1 -> 64 -> 64 -> F), position = (row % T)/T ----
    t_idx = lax.broadcasted_iota(jnp.int32, (B, T, 1), 1).reshape(BT, 1)
    pos = t_idx.astype(jnp.float32) * (1.0 / T)                # (BT, 1)
    h = pos * pw0_ref[...] + pb0_ref[...]                      # 1->64 as VPU broadcast mul
    h = jnp.where(h >= 0.0, h, 0.01 * h)                       # leaky_relu (hidden 0)
    h = jnp.dot(h, pw1_ref[...], preferred_element_type=jnp.float32) + pb1_ref[...]
    h = jnp.where(h >= 0.0, h, 0.01 * h)                       # leaky_relu (hidden 1)
    pe = jnp.dot(h, pwo_ref[...], preferred_element_type=jnp.float32) + pbo_ref[...]
    pe = jnp.where(pe >= 0.0, pe, 0.01 * pe)                   # outer leaky_relu in forward()

    x = jnp.concatenate([emb, pe], axis=-1)                    # (BT, D)

    # ---- L post-norm encoder layers, fully unrolled, weights resident in VMEM ----
    for l in range(L):
        # multi-head attention; per-head weights lane-0-aligned (host-packed),
        # softmax scale already folded into wq / bq.
        attn = ob_ref[l]                                       # (1, D) out_proj bias
        for hd in range(H):
            i = l * H + hd
            q = jnp.dot(x, wq_ref[i], preferred_element_type=jnp.float32) + bq_ref[i]
            k = jnp.dot(x, wk_ref[i], preferred_element_type=jnp.float32) + bk_ref[i]
            v = jnp.dot(x, wv_ref[i], preferred_element_type=jnp.float32) + bv_ref[i]
            q3 = q.reshape(B, T, Dh)                           # leading-dim split, layout no-op
            k3 = k.reshape(B, T, Dh)
            v3 = v.reshape(B, T, Dh)
            s = jnp.einsum('bqd,bkd->bqk', q3, k3,
                           preferred_element_type=jnp.float32)  # (B, T, T)
            p = jnp.exp(s - jnp.max(s, axis=-1, keepdims=True))
            p = p / jnp.sum(p, axis=-1, keepdims=True)          # exact divide (no approx recip)
            o3 = jnp.einsum('bqk,bkd->bqd', p, v3,
                            preferred_element_type=jnp.float32)  # (B, T, Dh)
            attn = attn + jnp.dot(o3.reshape(BT, Dh), wo_ref[i],
                                  preferred_element_type=jnp.float32)

        # add & LayerNorm 1 (biased variance, eps=1e-5: torch defaults)
        y = x + attn
        mu = jnp.mean(y, axis=-1, keepdims=True)
        var = jnp.mean(jnp.square(y - mu), axis=-1, keepdims=True)
        x1 = (y - mu) * lax.rsqrt(var + 1e-5) * ln1g_ref[l] + ln1b_ref[l]

        # relu FFN
        hft = jnp.maximum(
            jnp.dot(x1, f1w_ref[l], preferred_element_type=jnp.float32) + f1b_ref[l], 0.0)
        f = jnp.dot(hft, f2w_ref[l], preferred_element_type=jnp.float32) + f2b_ref[l]

        # add & LayerNorm 2
        y2 = x1 + f
        mu2 = jnp.mean(y2, axis=-1, keepdims=True)
        var2 = jnp.mean(jnp.square(y2 - mu2), axis=-1, keepdims=True)
        x = (y2 - mu2) * lax.rsqrt(var2 + 1e-5) * ln2g_ref[l] + ln2b_ref[l]

    o_ref[...] = x                                             # single (BT, D) store


# ------------------------------ pallas wrapper ------------------------------

def _full(shape):
    n = len(shape)
    return pl.BlockSpec(shape, lambda i, _n=n: (0,) * _n)


def pallas_tex_transformer(ids, p, *, B, T, num_heads):
    V, F = p["emb_table"].shape
    D = 2 * F
    H = num_heads
    Dh = D // H
    L = p["out_b"].shape[0]
    BT = B * T

    kernel = functools.partial(_tex_kernel, B=B, T=T, V=V, F=F, L=L, H=H, Dh=Dh)

    args = (ids, p["emb_table"],
            p["fcc_w0"], p["fcc_b0"], p["fcc_w1"], p["fcc_b1"],
            p["fcc_wo"], p["fcc_bo"],
            p["wq"], p["bq"], p["wk"], p["bk"], p["wv"], p["bv"],
            p["wo"], p["out_b"],
            p["ff_w1"], p["ff_b1"], p["ff_w2"], p["ff_b2"],
            p["ln1_g"], p["ln1_b"], p["ln2_g"], p["ln2_b"])

    return pl.pallas_call(
        kernel,
        grid=(1,),
        in_specs=[_full(a.shape) for a in args],
        out_specs=_full((BT, D)),
        out_shape=jax.ShapeDtypeStruct((BT, D), jnp.float32),
        compiler_params=pltpu.CompilerParams(dimension_semantics=("arbitrary",)),
    )(*args)


# --------------------------- parameter construction -------------------------

def _linear_init(key, fan_in, fan_out):
    # PyTorch nn.Linear default: U(-1/sqrt(fan_in), 1/sqrt(fan_in)); bias stored as (1, N)
    k1, k2 = jax.random.split(key)
    bound = 1.0 / (fan_in ** 0.5)
    w = jax.random.uniform(k1, (fan_in, fan_out), jnp.float32, -bound, bound)
    b = jax.random.uniform(k2, (1, fan_out), jnp.float32, -bound, bound)
    return w, b


def init_params(key, vocab_size, num_filters, dim_feedforward, num_layers, num_heads):
    F = num_filters
    D = 2 * F                         # d_model = transformer_num_filters * 2 (after concat)
    H = num_heads
    Dh = D // H
    scale = 1.0 / (Dh ** 0.5)

    keys = jax.random.split(key, 4 + num_layers)
    params = {}
    # nn.Embedding default init: N(0, 1)
    params["emb_table"] = jax.random.normal(keys[0], (vocab_size, F), jnp.float32)
    # FCCNetwork(num_hidden_features=64, num_hidden_layers=2, num_output_features=F)
    params["fcc_w0"], params["fcc_b0"] = _linear_init(keys[1], 1, FCC_HIDDEN)
    params["fcc_w1"], params["fcc_b1"] = _linear_init(keys[2], FCC_HIDDEN, FCC_HIDDEN)
    params["fcc_wo"], params["fcc_bo"] = _linear_init(keys[3], FCC_HIDDEN, F)

    wq, bq, wk, bk, wv, bv, wo = [], [], [], [], [], [], []
    out_b, f1w, f1b, f2w, f2b = [], [], [], [], []
    ln1g, ln1b, ln2g, ln2b = [], [], [], []

    def split_heads(w_cols, b_cols):
        # (D, D) -> (H, D, Dh) head-major;  (1, D) -> (H, 1, Dh)
        wh = w_cols.reshape(D, H, Dh).transpose(1, 0, 2)
        bh = b_cols.reshape(1, H, Dh).transpose(1, 0, 2)
        return wh, bh

    for li in range(num_layers):
        lk = jax.random.split(keys[4 + li], 4)
        in_w, in_b = _linear_init(lk[0], D, 3 * D)      # qkv in_proj (x @ W convention)
        ow, ob = _linear_init(lk[1], D, D)              # attn out_proj
        w1, b1 = _linear_init(lk[2], D, dim_feedforward)
        w2, b2 = _linear_init(lk[3], dim_feedforward, D)

        wq_l, bq_l = split_heads(in_w[:, :D], in_b[:, :D])
        wk_l, bk_l = split_heads(in_w[:, D:2 * D], in_b[:, D:2 * D])
        wv_l, bv_l = split_heads(in_w[:, 2 * D:], in_b[:, 2 * D:])
        wq.append(wq_l * scale)        # fold softmax scale into q projection (one-time)
        bq.append(bq_l * scale)
        wk.append(wk_l); bk.append(bk_l)
        wv.append(wv_l); bv.append(bv_l)
        wo.append(ow.reshape(H, Dh, D))                 # per-head rows of out_proj
        out_b.append(ob)
        f1w.append(w1); f1b.append(b1); f2w.append(w2); f2b.append(b2)
        ln1g.append(jnp.ones((1, D), jnp.float32)); ln1b.append(jnp.zeros((1, D), jnp.float32))
        ln2g.append(jnp.ones((1, D), jnp.float32)); ln2b.append(jnp.zeros((1, D), jnp.float32))

    params["wq"] = jnp.concatenate(wq, axis=0)          # (L*H, D, Dh), scale folded in
    params["bq"] = jnp.concatenate(bq, axis=0)          # (L*H, 1, Dh)
    params["wk"] = jnp.concatenate(wk, axis=0)
    params["bk"] = jnp.concatenate(bk, axis=0)
    params["wv"] = jnp.concatenate(wv, axis=0)
    params["bv"] = jnp.concatenate(bv, axis=0)
    params["wo"] = jnp.concatenate(wo, axis=0)          # (L*H, Dh, D)
    params["out_b"] = jnp.stack(out_b, axis=0)          # (L, 1, D)
    params["ff_w1"] = jnp.stack(f1w, axis=0)            # (L, D, FF)
    params["ff_b1"] = jnp.stack(f1b, axis=0)            # (L, 1, FF)
    params["ff_w2"] = jnp.stack(f2w, axis=0)            # (L, FF, D)
    params["ff_b2"] = jnp.stack(f2b, axis=0)            # (L, 1, D)
    params["ln1_g"] = jnp.stack(ln1g, axis=0)
    params["ln1_b"] = jnp.stack(ln1b, axis=0)
    params["ln2_g"] = jnp.stack(ln2g, axis=0)
    params["ln2_b"] = jnp.stack(ln2b, axis=0)
    return params


# -------------------------------- forward pass ------------------------------

@functools.partial(jax.jit, static_argnames=("num_heads",))
def tex_transformer_forward(x_tokens, params, *, num_heads):
    B, T = x_tokens.shape
    F = params["emb_table"].shape[1]
    D = 2 * F
    ids = x_tokens.reshape(B * T, 1).astype(jnp.int32)
    out = pallas_tex_transformer(ids, params, B=B, T=T, num_heads=num_heads)
    return out.reshape(B, T, D)


# ----------------------------------- main ------------------------------------

if __name__ == "__main__":
    # transformer_num_filters=32 (-> d_model 64), transformer_num_layers=2,
    # transformer_num_heads=4, transformer_dim_feedforward=64,
    # vocab_size=128, context_length=8, batch=2
    B, T = 2, 8
    VOCAB = 128
    NF, HEADS, FFD, LAYERS = 32, 4, 64, 2

    key = jax.random.PRNGKey(0)
    kx, kp = jax.random.split(key)
    x = jax.random.randint(kx, (B, T), 0, VOCAB, dtype=jnp.int32)
    params = init_params(kp, VOCAB, NF, FFD, LAYERS, HEADS)

    out = tex_transformer_forward(x, params, num_heads=HEADS)
    out = jax.block_until_ready(out)
    assert out.shape == (B, T, 2 * NF), out.shape
    assert jnp.all(jnp.isfinite(out))
    print("KERNEL_OK")
</pallas_src>

<mosaic_0001>
module attributes {stable_mosaic.version = 11 : i64} {
  func.func @_tex_kernel(%arg0: i32, %arg1: memref<16x1xi32, #tpu.memory_space<vmem>>, %arg2: memref<128x32xf32, #tpu.memory_space<vmem>>, %arg3: memref<1x64xf32, #tpu.memory_space<vmem>>, %arg4: memref<1x64xf32, #tpu.memory_space<vmem>>, %arg5: memref<64x64xf32, #tpu.memory_space<vmem>>, %arg6: memref<1x64xf32, #tpu.memory_space<vmem>>, %arg7: memref<64x32xf32, #tpu.memory_space<vmem>>, %arg8: memref<1x32xf32, #tpu.memory_space<vmem>>, %arg9: memref<8x64x16xf32, #tpu.memory_space<vmem>>, %arg10: memref<8x1x16xf32, #tpu.memory_space<vmem>>, %arg11: memref<8x64x16xf32, #tpu.memory_space<vmem>>, %arg12: memref<8x1x16xf32, #tpu.memory_space<vmem>>, %arg13: memref<8x64x16xf32, #tpu.memory_space<vmem>>, %arg14: memref<8x1x16xf32, #tpu.memory_space<vmem>>, %arg15: memref<8x16x64xf32, #tpu.memory_space<vmem>>, %arg16: memref<2x1x64xf32, #tpu.memory_space<vmem>>, %arg17: memref<2x64x64xf32, #tpu.memory_space<vmem>>, %arg18: memref<2x1x64xf32, #tpu.memory_space<vmem>>, %arg19: memref<2x64x64xf32, #tpu.memory_space<vmem>>, %arg20: memref<2x1x64xf32, #tpu.memory_space<vmem>>, %arg21: memref<2x1x64xf32, #tpu.memory_space<vmem>>, %arg22: memref<2x1x64xf32, #tpu.memory_space<vmem>>, %arg23: memref<2x1x64xf32, #tpu.memory_space<vmem>>, %arg24: memref<2x1x64xf32, #tpu.memory_space<vmem>>, %arg25: memref<16x64xf32, #tpu.memory_space<vmem>>) attributes {dimension_semantics = [#tpu.dimension_semantics<arbitrary>], iteration_bounds = array<i64: 1>, scalar_prefetch = 0 : i64, scratch_operands = 0 : i64, tpu.core_type = #tpu.core_type<tc>, window_params = [{pipeline_mode = #tpu.pipeline_mode<synchronous>, transform_indices = @transform_0, window_bounds = array<i64: 16, 1>}, {pipeline_mode = #tpu.pipeline_mode<synchronous>, transform_indices = @transform_1, window_bounds = array<i64: 128, 32>}, {pipeline_mode = #tpu.pipeline_mode<synchronous>, transform_indices = @transform_2, window_bounds = array<i64: 1, 64>}, {pipeline_mode = #tpu.pipeline_mode<synchronous>, transform_indices = @transform_3, window_bounds = array<i64: 1, 64>}, {pipeline_mode = #tpu.pipeline_mode<synchronous>, transform_indices = @transform_4, window_bounds = array<i64: 64, 64>}, {pipeline_mode = #tpu.pipeline_mode<synchronous>, transform_indices = @transform_5, window_bounds = array<i64: 1, 64>}, {pipeline_mode = #tpu.pipeline_mode<synchronous>, transform_indices = @transform_6, window_bounds = array<i64: 64, 32>}, {pipeline_mode = #tpu.pipeline_mode<synchronous>, transform_indices = @transform_7, window_bounds = array<i64: 1, 32>}, {pipeline_mode = #tpu.pipeline_mode<synchronous>, transform_indices = @transform_8, window_bounds = array<i64: 8, 64, 16>}, {pipeline_mode = #tpu.pipeline_mode<synchronous>, transform_indices = @transform_9, window_bounds = array<i64: 8, 1, 16>}, {pipeline_mode = #tpu.pipeline_mode<synchronous>, transform_indices = @transform_10, window_bounds = array<i64: 8, 64, 16>}, {pipeline_mode = #tpu.pipeline_mode<synchronous>, transform_indices = @transform_11, window_bounds = array<i64: 8, 1, 16>}, {pipeline_mode = #tpu.pipeline_mode<synchronous>, transform_indices = @transform_12, window_bounds = array<i64: 8, 64, 16>}, {pipeline_mode = #tpu.pipeline_mode<synchronous>, transform_indices = @transform_13, window_bounds = array<i64: 8, 1, 16>}, {pipeline_mode = #tpu.pipeline_mode<synchronous>, transform_indices = @transform_14, window_bounds = array<i64: 8, 16, 64>}, {pipeline_mode = #tpu.pipeline_mode<synchronous>, transform_indices = @transform_15, window_bounds = array<i64: 2, 1, 64>}, {pipeline_mode = #tpu.pipeline_mode<synchronous>, transform_indices = @transform_16, window_bounds = array<i64: 2, 64, 64>}, {pipeline_mode = #tpu.pipeline_mode<synchronous>, transform_indices = @transform_17, window_bounds = array<i64: 2, 1, 64>}, {pipeline_mode = #tpu.pipeline_mode<synchronous>, transform_indices = @transform_18, window_bounds = array<i64: 2, 64, 64>}, {pipeline_mode = #tpu.pipeline_mode<synchronous>, transform_indices = @transform_19, window_bounds = array<i64: 2, 1, 64>}, {pipeline_mode = #tpu.pipeline_mode<synchronous>, transform_indices = @transform_20, window_bounds = array<i64: 2, 1, 64>}, {pipeline_mode = #tpu.pipeline_mode<synchronous>, transform_indices = @transform_21, window_bounds = array<i64: 2, 1, 64>}, {pipeline_mode = #tpu.pipeline_mode<synchronous>, transform_indices = @transform_22, window_bounds = array<i64: 2, 1, 64>}, {pipeline_mode = #tpu.pipeline_mode<synchronous>, transform_indices = @transform_23, window_bounds = array<i64: 2, 1, 64>}, {pipeline_mode = #tpu.pipeline_mode<synchronous>, transform_indices = @transform_24, window_bounds = array<i64: 16, 64>}]} {
    %c0 = arith.constant 0 : index
    %c0_0 = arith.constant 0 : index
    %0 = vector.load %arg1[%c0, %c0_0] : memref<16x1xi32, #tpu.memory_space<vmem>>, vector<16x1xi32>
    %1 = tpu.iota {dimensions = array<i32: 1>} : vector<16x128xi32>
    %2 = vector.broadcast %0 : vector<16x1xi32> to vector<16x128xi32>
    %3 = arith.cmpi eq, %1, %2 : vector<16x128xi32>
    %4 = arith.extui %3 : vector<16x128xi1> to vector<16x128xi32>
    %5 = arith.sitofp %4 : vector<16x128xi32> to vector<16x128xf32>
    %c0_1 = arith.constant 0 : index
    %c0_2 = arith.constant 0 : index
    %6 = vector.load %arg2[%c0_1, %c0_2] : memref<128x32xf32, #tpu.memory_space<vmem>>, vector<128x32xf32>
    %cst = arith.constant dense<0.000000e+00> : vector<16x32xf32>
    %7 = tpu.matmul %5, %6, %cst {dimension_numbers = #tpu.dot_dimension_numbers<[1], [0], [0], [1], [0, 0, 1, 1], [], []>} : vector<16x128xf32>, vector<128x32xf32>, vector<16x32xf32> -> vector<16x32xf32>
    %8 = tpu.iota {dimensions = array<i32: 1>} : vector<2x8x1xi32>
    %9 = vector.shape_cast %8 : vector<2x8x1xi32> to vector<16x1xi32>
    %10 = arith.sitofp %9 : vector<16x1xi32> to vector<16x1xf32>
    %cst_3 = arith.constant 1.250000e-01 : f32
    %11 = vector.broadcast %cst_3 : f32 to vector<16x1xf32>
    %12 = arith.mulf %10, %11 : vector<16x1xf32>
    %c0_4 = arith.constant 0 : index
    %c0_5 = arith.constant 0 : index
    %13 = vector.load %arg3[%c0_4, %c0_5] : memref<1x64xf32, #tpu.memory_space<vmem>>, vector<1x64xf32>
    %14 = vector.broadcast %12 : vector<16x1xf32> to vector<16x64xf32>
    %15 = vector.broadcast %13 : vector<1x64xf32> to vector<16x64xf32>
    %16 = arith.mulf %14, %15 : vector<16x64xf32>
    %c0_6 = arith.constant 0 : index
    %c0_7 = arith.constant 0 : index
    %17 = vector.load %arg4[%c0_6, %c0_7] : memref<1x64xf32, #tpu.memory_space<vmem>>, vector<1x64xf32>
    %18 = vector.broadcast %17 : vector<1x64xf32> to vector<16x64xf32>
    %19 = arith.addf %16, %18 : vector<16x64xf32>
    %cst_8 = arith.constant 0.000000e+00 : f32
    %20 = vector.broadcast %cst_8 : f32 to vector<16x64xf32>
    %21 = arith.cmpf oge, %19, %20 : vector<16x64xf32>
    %cst_9 = arith.constant 0.00999999977 : f32
    %22 = vector.broadcast %cst_9 : f32 to vector<16x64xf32>
    %23 = arith.mulf %22, %19 : vector<16x64xf32>
    %24 = arith.select %21, %19, %23 : vector<16x64xi1>, vector<16x64xf32>
    %c0_10 = arith.constant 0 : index
    %c0_11 = arith.constant 0 : index
    %25 = vector.load %arg5[%c0_10, %c0_11] : memref<64x64xf32, #tpu.memory_space<vmem>>, vector<64x64xf32>
    %cst_12 = arith.constant dense<0.000000e+00> : vector<16x64xf32>
    %26 = tpu.matmul %24, %25, %cst_12 {dimension_numbers = #tpu.dot_dimension_numbers<[1], [0], [0], [1], [0, 0, 1, 1], [], []>} : vector<16x64xf32>, vector<64x64xf32>, vector<16x64xf32> -> vector<16x64xf32>
    %c0_13 = arith.constant 0 : index
    %c0_14 = arith.constant 0 : index
    %27 = vector.load %arg6[%c0_13, %c0_14] : memref<1x64xf32, #tpu.memory_space<vmem>>, vector<1x64xf32>
    %28 = vector.broadcast %27 : vector<1x64xf32> to vector<16x64xf32>
    %29 = arith.addf %26, %28 : vector<16x64xf32>
    %cst_15 = arith.constant 0.000000e+00 : f32
    %30 = vector.broadcast %cst_15 : f32 to vector<16x64xf32>
    %31 = arith.cmpf oge, %29, %30 : vector<16x64xf32>
    %cst_16 = arith.constant 0.00999999977 : f32
    %32 = vector.broadcast %cst_16 : f32 to vector<16x64xf32>
    %33 = arith.mulf %32, %29 : vector<16x64xf32>
    %34 = arith.select %31, %29, %33 : vector<16x64xi1>, vector<16x64xf32>
    %c0_17 = arith.constant 0 : index
    %c0_18 = arith.constant 0 : index
    %35 = vector.load %arg7[%c0_17, %c0_18] : memref<64x32xf32, #tpu.memory_space<vmem>>, vector<64x32xf32>
    %cst_19 = arith.constant dense<0.000000e+00> : vector<16x32xf32>
    %36 = tpu.matmul %34, %35, %cst_19 {dimension_numbers = #tpu.dot_dimension_numbers<[1], [0], [0], [1], [0, 0, 1, 1], [], []>} : vector<16x64xf32>, vector<64x32xf32>, vector<16x32xf32> -> vector<16x32xf32>
    %c0_20 = arith.constant 0 : index
    %c0_21 = arith.constant 0 : index
    %37 = vector.load %arg8[%c0_20, %c0_21] : memref<1x32xf32, #tpu.memory_space<vmem>>, vector<1x32xf32>
    %38 = vector.broadcast %37 : vector<1x32xf32> to vector<16x32xf32>
    %39 = arith.addf %36, %38 : vector<16x32xf32>
    %cst_22 = arith.constant 0.000000e+00 : f32
    %40 = vector.broadcast %cst_22 : f32 to vector<16x32xf32>
    %41 = arith.cmpf oge, %39, %40 : vector<16x32xf32>
    %cst_23 = arith.constant 0.00999999977 : f32
    %42 = vector.broadcast %cst_23 : f32 to vector<16x32xf32>
    %43 = arith.mulf %42, %39 : vector<16x32xf32>
    %44 = arith.select %41, %39, %43 : vector<16x32xi1>, vector<16x32xf32>
    %45 = tpu.concatenate %7, %44 in 1 : vector<16x32xf32>, vector<16x32xf32> -> vector<16x64xf32>
    %c0_24 = arith.constant 0 : index
    %c0_25 = arith.constant 0 : index
    %c0_26 = arith.constant 0 : index
    %46 = vector.load %arg16[%c0_24, %c0_25, %c0_26] : memref<2x1x64xf32, #tpu.memory_space<vmem>>, vector<1x1x64xf32>
    %47 = vector.shape_cast %46 : vector<1x1x64xf32> to vector<1x64xf32>
    %c0_27 = arith.constant 0 : index
    %c0_28 = arith.constant 0 : index
    %c0_29 = arith.constant 0 : index
    %48 = vector.load %arg9[%c0_27, %c0_28, %c0_29] : memref<8x64x16xf32, #tpu.memory_space<vmem>>, vector<1x64x16xf32>
    %49 = vector.shape_cast %48 : vector<1x64x16xf32> to vector<64x16xf32>
    %cst_30 = arith.constant dense<0.000000e+00> : vector<16x16xf32>
    %50 = tpu.matmul %45, %49, %cst_30 {dimension_numbers = #tpu.dot_dimension_numbers<[1], [0], [0], [1], [0, 0, 1, 1], [], []>} : vector<16x64xf32>, vector<64x16xf32>, vector<16x16xf32> -> vector<16x16xf32>
    %c0_31 = arith.constant 0 : index
    %c0_32 = arith.constant 0 : index
    %c0_33 = arith.constant 0 : index
    %51 = vector.load %arg10[%c0_31, %c0_32, %c0_33] : memref<8x1x16xf32, #tpu.memory_space<vmem>>, vector<1x1x16xf32>
    %52 = vector.shape_cast %51 : vector<1x1x16xf32> to vector<1x16xf32>
    %53 = vector.broadcast %52 : vector<1x16xf32> to vector<16x16xf32>
    %54 = arith.addf %50, %53 : vector<16x16xf32>
    %c0_34 = arith.constant 0 : index
    %c0_35 = arith.constant 0 : index
    %c0_36 = arith.constant 0 : index
    %55 = vector.load %arg11[%c0_34, %c0_35, %c0_36] : memref<8x64x16xf32, #tpu.memory_space<vmem>>, vector<1x64x16xf32>
    %56 = vector.shape_cast %55 : vector<1x64x16xf32> to vector<64x16xf32>
    %cst_37 = arith.constant dense<0.000000e+00> : vector<16x16xf32>
    %57 = tpu.matmul %45, %56, %cst_37 {dimension_numbers = #tpu.dot_dimension_numbers<[1], [0], [0], [1], [0, 0, 1, 1], [], []>} : vector<16x64xf32>, vector<64x16xf32>, vector<16x16xf32> -> vector<16x16xf32>
    %c0_38 = arith.constant 0 : index
    %c0_39 = arith.constant 0 : index
    %c0_40 = arith.constant 0 : index
    %58 = vector.load %arg12[%c0_38, %c0_39, %c0_40] : memref<8x1x16xf32, #tpu.memory_space<vmem>>, vector<1x1x16xf32>
    %59 = vector.shape_cast %58 : vector<1x1x16xf32> to vector<1x16xf32>
    %60 = vector.broadcast %59 : vector<1x16xf32> to vector<16x16xf32>
    %61 = arith.addf %57, %60 : vector<16x16xf32>
    %c0_41 = arith.constant 0 : index
    %c0_42 = arith.constant 0 : index
    %c0_43 = arith.constant 0 : index
    %62 = vector.load %arg13[%c0_41, %c0_42, %c0_43] : memref<8x64x16xf32, #tpu.memory_space<vmem>>, vector<1x64x16xf32>
    %63 = vector.shape_cast %62 : vector<1x64x16xf32> to vector<64x16xf32>
    %cst_44 = arith.constant dense<0.000000e+00> : vector<16x16xf32>
    %64 = tpu.matmul %45, %63, %cst_44 {dimension_numbers = #tpu.dot_dimension_numbers<[1], [0], [0], [1], [0, 0, 1, 1], [], []>} : vector<16x64xf32>, vector<64x16xf32>, vector<16x16xf32> -> vector<16x16xf32>
    %c0_45 = arith.constant 0 : index
    %c0_46 = arith.constant 0 : index
    %c0_47 = arith.constant 0 : index
    %65 = vector.load %arg14[%c0_45, %c0_46, %c0_47] : memref<8x1x16xf32, #tpu.memory_space<vmem>>, vector<1x1x16xf32>
    %66 = vector.shape_cast %65 : vector<1x1x16xf32> to vector<1x16xf32>
    %67 = vector.broadcast %66 : vector<1x16xf32> to vector<16x16xf32>
    %68 = arith.addf %64, %67 : vector<16x16xf32>
    %69 = vector.shape_cast %54 : vector<16x16xf32> to vector<2x8x16xf32>
    %70 = vector.shape_cast %61 : vector<16x16xf32> to vector<2x8x16xf32>
    %71 = vector.shape_cast %68 : vector<16x16xf32> to vector<2x8x16xf32>
    "tpu.trace_start"() <{level = 10 : i32, message = "bqd,bkd->bqk"}> : () -> ()
    %cst_48 = arith.constant dense<0.000000e+00> : vector<2x8x8xf32>
    %72 = tpu.matmul %69, %70, %cst_48 {dimension_numbers = #tpu.dot_dimension_numbers<[2], [2], [1], [1], [0, 0, 0, 1, 1, 1], [0], [0]>} : vector<2x8x16xf32>, vector<2x8x16xf32>, vector<2x8x8xf32> -> vector<2x8x8xf32>
    "tpu.trace_stop"() : () -> ()
    %cst_49 = arith.constant dense<0xFF800000> : vector<2x8xf32>
    %73 = vector.multi_reduction <maximumf>, %72, %cst_49 [2] : vector<2x8x8xf32> to vector<2x8xf32>
    %74 = vector.shape_cast %73 : vector<2x8xf32> to vector<2x8x1xf32>
    %75 = vector.broadcast %74 : vector<2x8x1xf32> to vector<2x8x8xf32>
    %76 = arith.subf %72, %75 : vector<2x8x8xf32>
    %77 = math.exp %76 : vector<2x8x8xf32>
    %cst_50 = arith.constant dense<0.000000e+00> : vector<2x8xf32>
    %78 = vector.multi_reduction <add>, %77, %cst_50 [2] : vector<2x8x8xf32> to vector<2x8xf32>
    %79 = vector.shape_cast %78 : vector<2x8xf32> to vector<2x8x1xf32>
    %80 = vector.broadcast %79 : vector<2x8x1xf32> to vector<2x8x8xf32>
    %81 = arith.divf %77, %80 : vector<2x8x8xf32>
    "tpu.trace_start"() <{level = 10 : i32, message = "bqk,bkd->bqd"}> : () -> ()
    %cst_51 = arith.constant dense<0.000000e+00> : vector<2x8x16xf32>
    %82 = tpu.matmul %81, %71, %cst_51 {dimension_numbers = #tpu.dot_dimension_numbers<[2], [1], [1], [2], [0, 0, 0, 1, 1, 2], [0], [0]>} : vector<2x8x8xf32>, vector<2x8x16xf32>, vector<2x8x16xf32> -> vector<2x8x16xf32>
    "tpu.trace_stop"() : () -> ()
    %83 = vector.shape_cast %82 : vector<2x8x16xf32> to vector<16x16xf32>
    %c0_52 = arith.constant 0 : index
    %c0_53 = arith.constant 0 : index
    %c0_54 = arith.constant 0 : index
    %84 = vector.load %arg15[%c0_52, %c0_53, %c0_54] : memref<8x16x64xf32, #tpu.memory_space<vmem>>, vector<1x16x64xf32>
    %85 = vector.shape_cast %84 : vector<1x16x64xf32> to vector<16x64xf32>
    %cst_55 = arith.constant dense<0.000000e+00> : vector<16x64xf32>
    %86 = tpu.matmul %83, %85, %cst_55 {dimension_numbers = #tpu.dot_dimension_numbers<[1], [0], [0], [1], [0, 0, 1, 1], [], []>} : vector<16x16xf32>, vector<16x64xf32>, vector<16x64xf32> -> vector<16x64xf32>
    %87 = vector.broadcast %47 : vector<1x64xf32> to vector<16x64xf32>
    %88 = arith.addf %87, %86 : vector<16x64xf32>
    %c1 = arith.constant 1 : index
    %c0_56 = arith.constant 0 : index
    %c0_57 = arith.constant 0 : index
    %89 = vector.load %arg9[%c1, %c0_56, %c0_57] : memref<8x64x16xf32, #tpu.memory_space<vmem>>, vector<1x64x16xf32>
    %90 = vector.shape_cast %89 : vector<1x64x16xf32> to vector<64x16xf32>
    %cst_58 = arith.constant dense<0.000000e+00> : vector<16x16xf32>
    %91 = tpu.matmul %45, %90, %cst_58 {dimension_numbers = #tpu.dot_dimension_numbers<[1], [0], [0], [1], [0, 0, 1, 1], [], []>} : vector<16x64xf32>, vector<64x16xf32>, vector<16x16xf32> -> vector<16x16xf32>
    %c1_59 = arith.constant 1 : index
    %c0_60 = arith.constant 0 : index
    %c0_61 = arith.constant 0 : index
    %92 = vector.load %arg10[%c1_59, %c0_60, %c0_61] : memref<8x1x16xf32, #tpu.memory_space<vmem>>, vector<1x1x16xf32>
    %93 = vector.shape_cast %92 : vector<1x1x16xf32> to vector<1x16xf32>
    %94 = vector.broadcast %93 : vector<1x16xf32> to vector<16x16xf32>
    %95 = arith.addf %91, %94 : vector<16x16xf32>
    %c1_62 = arith.constant 1 : index
    %c0_63 = arith.constant 0 : index
    %c0_64 = arith.constant 0 : index
    %96 = vector.load %arg11[%c1_62, %c0_63, %c0_64] : memref<8x64x16xf32, #tpu.memory_space<vmem>>, vector<1x64x16xf32>
    %97 = vector.shape_cast %96 : vector<1x64x16xf32> to vector<64x16xf32>
    %cst_65 = arith.constant dense<0.000000e+00> : vector<16x16xf32>
    %98 = tpu.matmul %45, %97, %cst_65 {dimension_numbers = #tpu.dot_dimension_numbers<[1], [0], [0], [1], [0, 0, 1, 1], [], []>} : vector<16x64xf32>, vector<64x16xf32>, vector<16x16xf32> -> vector<16x16xf32>
    %c1_66 = arith.constant 1 : index
    %c0_67 = arith.constant 0 : index
    %c0_68 = arith.constant 0 : index
    %99 = vector.load %arg12[%c1_66, %c0_67, %c0_68] : memref<8x1x16xf32, #tpu.memory_space<vmem>>, vector<1x1x16xf32>
    %100 = vector.shape_cast %99 : vector<1x1x16xf32> to vector<1x16xf32>
    %101 = vector.broadcast %100 : vector<1x16xf32> to vector<16x16xf32>
    %102 = arith.addf %98, %101 : vector<16x16xf32>
    %c1_69 = arith.constant 1 : index
    %c0_70 = arith.constant 0 : index
    %c0_71 = arith.constant 0 : index
    %103 = vector.load %arg13[%c1_69, %c0_70, %c0_71] : memref<8x64x16xf32, #tpu.memory_space<vmem>>, vector<1x64x16xf32>
    %104 = vector.shape_cast %103 : vector<1x64x16xf32> to vector<64x16xf32>
    %cst_72 = arith.constant dense<0.000000e+00> : vector<16x16xf32>
    %105 = tpu.matmul %45, %104, %cst_72 {dimension_numbers = #tpu.dot_dimension_numbers<[1], [0], [0], [1], [0, 0, 1, 1], [], []>} : vector<16x64xf32>, vector<64x16xf32>, vector<16x16xf32> -> vector<16x16xf32>
    %c1_73 = arith.constant 1 : index
    %c0_74 = arith.constant 0 : index
    %c0_75 = arith.constant 0 : index
    %106 = vector.load %arg14[%c1_73, %c0_74, %c0_75] : memref<8x1x16xf32, #tpu.memory_space<vmem>>, vector<1x1x16xf32>
    %107 = vector.shape_cast %106 : vector<1x1x16xf32> to vector<1x16xf32>
    %108 = vector.broadcast %107 : vector<1x16xf32> to vector<16x16xf32>
    %109 = arith.addf %105, %108 : vector<16x16xf32>
    %110 = vector.shape_cast %95 : vector<16x16xf32> to vector<2x8x16xf32>
    %111 = vector.shape_cast %102 : vector<16x16xf32> to vector<2x8x16xf32>
    %112 = vector.shape_cast %109 : vector<16x16xf32> to vector<2x8x16xf32>
    "tpu.trace_start"() <{level = 10 : i32, message = "bqd,bkd->bqk"}> : () -> ()
    %cst_76 = arith.constant dense<0.000000e+00> : vector<2x8x8xf32>
    %113 = tpu.matmul %110, %111, %cst_76 {dimension_numbers = #tpu.dot_dimension_numbers<[2], [2], [1], [1], [0, 0, 0, 1, 1, 1], [0], [0]>} : vector<2x8x16xf32>, vector<2x8x16xf32>, vector<2x8x8xf32> -> vector<2x8x8xf32>
    "tpu.trace_stop"() : () -> ()
    %cst_77 = arith.constant dense<0xFF800000> : vector<2x8xf32>
    %114 = vector.multi_reduction <maximumf>, %113, %cst_77 [2] : vector<2x8x8xf32> to vector<2x8xf32>
    %115 = vector.shape_cast %114 : vector<2x8xf32> to vector<2x8x1xf32>
    %116 = vector.broadcast %115 : vector<2x8x1xf32> to vector<2x8x8xf32>
    %117 = arith.subf %113, %116 : vector<2x8x8xf32>
    %118 = math.exp %117 : vector<2x8x8xf32>
    %cst_78 = arith.constant dense<0.000000e+00> : vector<2x8xf32>
    %119 = vector.multi_reduction <add>, %118, %cst_78 [2] : vector<2x8x8xf32> to vector<2x8xf32>
    %120 = vector.shape_cast %119 : vector<2x8xf32> to vector<2x8x1xf32>
    %121 = vector.broadcast %120 : vector<2x8x1xf32> to vector<2x8x8xf32>
    %122 = arith.divf %118, %121 : vector<2x8x8xf32>
    "tpu.trace_start"() <{level = 10 : i32, message = "bqk,bkd->bqd"}> : () -> ()
    %cst_79 = arith.constant dense<0.000000e+00> : vector<2x8x16xf32>
    %123 = tpu.matmul %122, %112, %cst_79 {dimension_numbers = #tpu.dot_dimension_numbers<[2], [1], [1], [2], [0, 0, 0, 1, 1, 2], [0], [0]>} : vector<2x8x8xf32>, vector<2x8x16xf32>, vector<2x8x16xf32> -> vector<2x8x16xf32>
    "tpu.trace_stop"() : () -> ()
    %124 = vector.shape_cast %123 : vector<2x8x16xf32> to vector<16x16xf32>
    %c1_80 = arith.constant 1 : index
    %c0_81 = arith.constant 0 : index
    %c0_82 = arith.constant 0 : index
    %125 = vector.load %arg15[%c1_80, %c0_81, %c0_82] : memref<8x16x64xf32, #tpu.memory_space<vmem>>, vector<1x16x64xf32>
    %126 = vector.shape_cast %125 : vector<1x16x64xf32> to vector<16x64xf32>
    %cst_83 = arith.constant dense<0.000000e+00> : vector<16x64xf32>
    %127 = tpu.matmul %124, %126, %cst_83 {dimension_numbers = #tpu.dot_dimension_numbers<[1], [0], [0], [1], [0, 0, 1, 1], [], []>} : vector<16x16xf32>, vector<16x64xf32>, vector<16x64xf32> -> vector<16x64xf32>
    %128 = arith.addf %88, %127 : vector<16x64xf32>
    %c2 = arith.constant 2 : index
    %c0_84 = arith.constant 0 : index
    %c0_85 = arith.constant 0 : index
    %129 = vector.load %arg9[%c2, %c0_84, %c0_85] : memref<8x64x16xf32, #tpu.memory_space<vmem>>, vector<1x64x16xf32>
    %130 = vector.shape_cast %129 : vector<1x64x16xf32> to vector<64x16xf32>
    %cst_86 = arith.constant dense<0.000000e+00> : vector<16x16xf32>
    %131 = tpu.matmul %45, %130, %cst_86 {dimension_numbers = #tpu.dot_dimension_numbers<[1], [0], [0], [1], [0, 0, 1, 1], [], []>} : vector<16x64xf32>, vector<64x16xf32>, vector<16x16xf32> -> vector<16x16xf32>
    %c2_87 = arith.constant 2 : index
    %c0_88 = arith.constant 0 : index
    %c0_89 = arith.constant 0 : index
    %132 = vector.load %arg10[%c2_87, %c0_88, %c0_89] : memref<8x1x16xf32, #tpu.memory_space<vmem>>, vector<1x1x16xf32>
    %133 = vector.shape_cast %132 : vector<1x1x16xf32> to vector<1x16xf32>
    %134 = vector.broadcast %133 : vector<1x16xf32> to vector<16x16xf32>
    %135 = arith.addf %131, %134 : vector<16x16xf32>
    %c2_90 = arith.constant 2 : index
    %c0_91 = arith.constant 0 : index
    %c0_92 = arith.constant 0 : index
    %136 = vector.load %arg11[%c2_90, %c0_91, %c0_92] : memref<8x64x16xf32, #tpu.memory_space<vmem>>, vector<1x64x16xf32>
    %137 = vector.shape_cast %136 : vector<1x64x16xf32> to vector<64x16xf32>
    %cst_93 = arith.constant dense<0.000000e+00> : vector<16x16xf32>
    %138 = tpu.matmul %45, %137, %cst_93 {dimension_numbers = #tpu.dot_dimension_numbers<[1], [0], [0], [1], [0, 0, 1, 1], [], []>} : vector<16x64xf32>, vector<64x16xf32>, vector<16x16xf32> -> vector<16x16xf32>
    %c2_94 = arith.constant 2 : index
    %c0_95 = arith.constant 0 : index
    %c0_96 = arith.constant 0 : index
    %139 = vector.load %arg12[%c2_94, %c0_95, %c0_96] : memref<8x1x16xf32, #tpu.memory_space<vmem>>, vector<1x1x16xf32>
    %140 = vector.shape_cast %139 : vector<1x1x16xf32> to vector<1x16xf32>
    %141 = vector.broadcast %140 : vector<1x16xf32> to vector<16x16xf32>
    %142 = arith.addf %138, %141 : vector<16x16xf32>
    %c2_97 = arith.constant 2 : index
    %c0_98 = arith.constant 0 : index
    %c0_99 = arith.constant 0 : index
    %143 = vector.load %arg13[%c2_97, %c0_98, %c0_99] : memref<8x64x16xf32, #tpu.memory_space<vmem>>, vector<1x64x16xf32>
    %144 = vector.shape_cast %143 : vector<1x64x16xf32> to vector<64x16xf32>
    %cst_100 = arith.constant dense<0.000000e+00> : vector<16x16xf32>
    %145 = tpu.matmul %45, %144, %cst_100 {dimension_numbers = #tpu.dot_dimension_numbers<[1], [0], [0], [1], [0, 0, 1, 1], [], []>} : vector<16x64xf32>, vector<64x16xf32>, vector<16x16xf32> -> vector<16x16xf32>
    %c2_101 = arith.constant 2 : index
    %c0_102 = arith.constant 0 : index
    %c0_103 = arith.constant 0 : index
    %146 = vector.load %arg14[%c2_101, %c0_102, %c0_103] : memref<8x1x16xf32, #tpu.memory_space<vmem>>, vector<1x1x16xf32>
    %147 = vector.shape_cast %146 : vector<1x1x16xf32> to vector<1x16xf32>
    %148 = vector.broadcast %147 : vector<1x16xf32> to vector<16x16xf32>
    %149 = arith.addf %145, %148 : vector<16x16xf32>
    %150 = vector.shape_cast %135 : vector<16x16xf32> to vector<2x8x16xf32>
    %151 = vector.shape_cast %142 : vector<16x16xf32> to vector<2x8x16xf32>
    %152 = vector.shape_cast %149 : vector<16x16xf32> to vector<2x8x16xf32>
    "tpu.trace_start"() <{level = 10 : i32, message = "bqd,bkd->bqk"}> : () -> ()
    %cst_104 = arith.constant dense<0.000000e+00> : vector<2x8x8xf32>
    %153 = tpu.matmul %150, %151, %cst_104 {dimension_numbers = #tpu.dot_dimension_numbers<[2], [2], [1], [1], [0, 0, 0, 1, 1, 1], [0], [0]>} : vector<2x8x16xf32>, vector<2x8x16xf32>, vector<2x8x8xf32> -> vector<2x8x8xf32>
    "tpu.trace_stop"() : () -> ()
    %cst_105 = arith.constant dense<0xFF800000> : vector<2x8xf32>
    %154 = vector.multi_reduction <maximumf>, %153, %cst_105 [2] : vector<2x8x8xf32> to vector<2x8xf32>
    %155 = vector.shape_cast %154 : vector<2x8xf32> to vector<2x8x1xf32>
    %156 = vector.broadcast %155 : vector<2x8x1xf32> to vector<2x8x8xf32>
    %157 = arith.subf %153, %156 : vector<2x8x8xf32>
    %158 = math.exp %157 : vector<2x8x8xf32>
    %cst_106 = arith.constant dense<0.000000e+00> : vector<2x8xf32>
    %159 = vector.multi_reduction <add>, %158, %cst_106 [2] : vector<2x8x8xf32> to vector<2x8xf32>
    %160 = vector.shape_cast %159 : vector<2x8xf32> to vector<2x8x1xf32>
    %161 = vector.broadcast %160 : vector<2x8x1xf32> to vector<2x8x8xf32>
    %162 = arith.divf %158, %161 : vector<2x8x8xf32>
    "tpu.trace_start"() <{level = 10 : i32, message = "bqk,bkd->bqd"}> : () -> ()
    %cst_107 = arith.constant dense<0.000000e+00> : vector<2x8x16xf32>
    %163 = tpu.matmul %162, %152, %cst_107 {dimension_numbers = #tpu.dot_dimension_numbers<[2], [1], [1], [2], [0, 0, 0, 1, 1, 2], [0], [0]>} : vector<2x8x8xf32>, vector<2x8x16xf32>, vector<2x8x16xf32> -> vector<2x8x16xf32>
    "tpu.trace_stop"() : () -> ()
    %164 = vector.shape_cast %163 : vector<2x8x16xf32> to vector<16x16xf32>
    %c2_108 = arith.constant 2 : index
    %c0_109 = arith.constant 0 : index
    %c0_110 = arith.constant 0 : index
    %165 = vector.load %arg15[%c2_108, %c0_109, %c0_110] : memref<8x16x64xf32, #tpu.memory_space<vmem>>, vector<1x16x64xf32>
    %166 = vector.shape_cast %165 : vector<1x16x64xf32> to vector<16x64xf32>
    %cst_111 = arith.constant dense<0.000000e+00> : vector<16x64xf32>
    %167 = tpu.matmul %164, %166, %cst_111 {dimension_numbers = #tpu.dot_dimension_numbers<[1], [0], [0], [1], [0, 0, 1, 1], [], []>} : vector<16x16xf32>, vector<16x64xf32>, vector<16x64xf32> -> vector<16x64xf32>
    %168 = arith.addf %128, %167 : vector<16x64xf32>
    %c3 = arith.constant 3 : index
    %c0_112 = arith.constant 0 : index
    %c0_113 = arith.constant 0 : index
    %169 = vector.load %arg9[%c3, %c0_112, %c0_113] : memref<8x64x16xf32, #tpu.memory_space<vmem>>, vector<1x64x16xf32>
    %170 = vector.shape_cast %169 : vector<1x64x16xf32> to vector<64x16xf32>
    %cst_114 = arith.constant dense<0.000000e+00> : vector<16x16xf32>
    %171 = tpu.matmul %45, %170, %cst_114 {dimension_numbers = #tpu.dot_dimension_numbers<[1], [0], [0], [1], [0, 0, 1, 1], [], []>} : vector<16x64xf32>, vector<64x16xf32>, vector<16x16xf32> -> vector<16x16xf32>
    %c3_115 = arith.constant 3 : index
    %c0_116 = arith.constant 0 : index
    %c0_117 = arith.constant 0 : index
    %172 = vector.load %arg10[%c3_115, %c0_116, %c0_117] : memref<8x1x16xf32, #tpu.memory_space<vmem>>, vector<1x1x16xf32>
    %173 = vector.shape_cast %172 : vector<1x1x16xf32> to vector<1x16xf32>
    %174 = vector.broadcast %173 : vector<1x16xf32> to vector<16x16xf32>
    %175 = arith.addf %171, %174 : vector<16x16xf32>
    %c3_118 = arith.constant 3 : index
    %c0_119 = arith.constant 0 : index
    %c0_120 = arith.constant 0 : index
    %176 = vector.load %arg11[%c3_118, %c0_119, %c0_120] : memref<8x64x16xf32, #tpu.memory_space<vmem>>, vector<1x64x16xf32>
    %177 = vector.shape_cast %176 : vector<1x64x16xf32> to vector<64x16xf32>
    %cst_121 = arith.constant dense<0.000000e+00> : vector<16x16xf32>
    %178 = tpu.matmul %45, %177, %cst_121 {dimension_numbers = #tpu.dot_dimension_numbers<[1], [0], [0], [1], [0, 0, 1, 1], [], []>} : vector<16x64xf32>, vector<64x16xf32>, vector<16x16xf32> -> vector<16x16xf32>
    %c3_122 = arith.constant 3 : index
    %c0_123 = arith.constant 0 : index
    %c0_124 = arith.constant 0 : index
    %179 = vector.load %arg12[%c3_122, %c0_123, %c0_124] : memref<8x1x16xf32, #tpu.memory_space<vmem>>, vector<1x1x16xf32>
    %180 = vector.shape_cast %179 : vector<1x1x16xf32> to vector<1x16xf32>
    %181 = vector.broadcast %180 : vector<1x16xf32> to vector<16x16xf32>
    %182 = arith.addf %178, %181 : vector<16x16xf32>
    %c3_125 = arith.constant 3 : index
    %c0_126 = arith.constant 0 : index
    %c0_127 = arith.constant 0 : index
    %183 = vector.load %arg13[%c3_125, %c0_126, %c0_127] : memref<8x64x16xf32, #tpu.memory_space<vmem>>, vector<1x64x16xf32>
    %184 = vector.shape_cast %183 : vector<1x64x16xf32> to vector<64x16xf32>
    %cst_128 = arith.constant dense<0.000000e+00> : vector<16x16xf32>
    %185 = tpu.matmul %45, %184, %cst_128 {dimension_numbers = #tpu.dot_dimension_numbers<[1], [0], [0], [1], [0, 0, 1, 1], [], []>} : vector<16x64xf32>, vector<64x16xf32>, vector<16x16xf32> -> vector<16x16xf32>
    %c3_129 = arith.constant 3 : index
    %c0_130 = arith.constant 0 : index
    %c0_131 = arith.constant 0 : index
    %186 = vector.load %arg14[%c3_129, %c0_130, %c0_131] : memref<8x1x16xf32, #tpu.memory_space<vmem>>, vector<1x1x16xf32>
    %187 = vector.shape_cast %186 : vector<1x1x16xf32> to vector<1x16xf32>
    %188 = vector.broadcast %187 : vector<1x16xf32> to vector<16x16xf32>
    %189 = arith.addf %185, %188 : vector<16x16xf32>
    %190 = vector.shape_cast %175 : vector<16x16xf32> to vector<2x8x16xf32>
    %191 = vector.shape_cast %182 : vector<16x16xf32> to vector<2x8x16xf32>
    %192 = vector.shape_cast %189 : vector<16x16xf32> to vector<2x8x16xf32>
    "tpu.trace_start"() <{level = 10 : i32, message = "bqd,bkd->bqk"}> : () -> ()
    %cst_132 = arith.constant dense<0.000000e+00> : vector<2x8x8xf32>
    %193 = tpu.matmul %190, %191, %cst_132 {dimension_numbers = #tpu.dot_dimension_numbers<[2], [2], [1], [1], [0, 0, 0, 1, 1, 1], [0], [0]>} : vector<2x8x16xf32>, vector<2x8x16xf32>, vector<2x8x8xf32> -> vector<2x8x8xf32>
    "tpu.trace_stop"() : () -> ()
    %cst_133 = arith.constant dense<0xFF800000> : vector<2x8xf32>
    %194 = vector.multi_reduction <maximumf>, %193, %cst_133 [2] : vector<2x8x8xf32> to vector<2x8xf32>
    %195 = vector.shape_cast %194 : vector<2x8xf32> to vector<2x8x1xf32>
    %196 = vector.broadcast %195 : vector<2x8x1xf32> to vector<2x8x8xf32>
    %197 = arith.subf %193, %196 : vector<2x8x8xf32>
    %198 = math.exp %197 : vector<2x8x8xf32>
    %cst_134 = arith.constant dense<0.000000e+00> : vector<2x8xf32>
    %199 = vector.multi_reduction <add>, %198, %cst_134 [2] : vector<2x8x8xf32> to vector<2x8xf32>
    %200 = vector.shape_cast %199 : vector<2x8xf32> to vector<2x8x1xf32>
    %201 = vector.broadcast %200 : vector<2x8x1xf32> to vector<2x8x8xf32>
    %202 = arith.divf %198, %201 : vector<2x8x8xf32>
    "tpu.trace_start"() <{level = 10 : i32, message = "bqk,bkd->bqd"}> : () -> ()
    %cst_135 = arith.constant dense<0.000000e+00> : vector<2x8x16xf32>
    %203 = tpu.matmul %202, %192, %cst_135 {dimension_numbers = #tpu.dot_dimension_numbers<[2], [1], [1], [2], [0, 0, 0, 1, 1, 2], [0], [0]>} : vector<2x8x8xf32>, vector<2x8x16xf32>, vector<2x8x16xf32> -> vector<2x8x16xf32>
    "tpu.trace_stop"() : () -> ()
    %204 = vector.shape_cast %203 : vector<2x8x16xf32> to vector<16x16xf32>
    %c3_136 = arith.constant 3 : index
    %c0_137 = arith.constant 0 : index
    %c0_138 = arith.constant 0 : index
    %205 = vector.load %arg15[%c3_136, %c0_137, %c0_138] : memref<8x16x64xf32, #tpu.memory_space<vmem>>, vector<1x16x64xf32>
    %206 = vector.shape_cast %205 : vector<1x16x64xf32> to vector<16x64xf32>
    %cst_139 = arith.constant dense<0.000000e+00> : vector<16x64xf32>
    %207 = tpu.matmul %204, %206, %cst_139 {dimension_numbers = #tpu.dot_dimension_numbers<[1], [0], [0], [1], [0, 0, 1, 1], [], []>} : vector<16x16xf32>, vector<16x64xf32>, vector<16x64xf32> -> vector<16x64xf32>
    %208 = arith.addf %168, %207 : vector<16x64xf32>
    %209 = arith.addf %45, %208 : vector<16x64xf32>
    %cst_140 = arith.constant dense<0.000000e+00> : vector<16xf32>
    %210 = vector.multi_reduction <add>, %209, %cst_140 [1] : vector<16x64xf32> to vector<16xf32>
    %211 = vector.shape_cast %210 : vector<16xf32> to vector<16x1xf32>
    %cst_141 = arith.constant 6.400000e+01 : f32
    %212 = vector.broadcast %cst_141 : f32 to vector<16x1xf32>
    %213 = arith.divf %211, %212 : vector<16x1xf32>
    %214 = vector.broadcast %213 : vector<16x1xf32> to vector<16x64xf32>
    %215 = arith.subf %209, %214 : vector<16x64xf32>
    %216 = arith.mulf %215, %215 : vector<16x64xf32>
    %cst_142 = arith.constant dense<0.000000e+00> : vector<16xf32>
    %217 = vector.multi_reduction <add>, %216, %cst_142 [1] : vector<16x64xf32> to vector<16xf32>
    %218 = vector.shape_cast %217 : vector<16xf32> to vector<16x1xf32>
    %cst_143 = arith.constant 6.400000e+01 : f32
    %219 = vector.broadcast %cst_143 : f32 to vector<16x1xf32>
    %220 = arith.divf %218, %219 : vector<16x1xf32>
    %221 = vector.broadcast %213 : vector<16x1xf32> to vector<16x64xf32>
    %222 = arith.subf %209, %221 : vector<16x64xf32>
    %cst_144 = arith.constant 9.99999974E-6 : f32
    %223 = vector.broadcast %cst_144 : f32 to vector<16x1xf32>
    %224 = arith.addf %220, %223 : vector<16x1xf32>
    %225 = math.rsqrt %224 : vector<16x1xf32>
    %226 = vector.broadcast %225 : vector<16x1xf32> to vector<16x64xf32>
    %227 = arith.mulf %222, %226 : vector<16x64xf32>
    %c0_145 = arith.constant 0 : index
    %c0_146 = arith.constant 0 : index
    %c0_147 = arith.constant 0 : index
    %228 = vector.load %arg21[%c0_145, %c0_146, %c0_147] : memref<2x1x64xf32, #tpu.memory_space<vmem>>, vector<1x1x64xf32>
    %229 = vector.shape_cast %228 : vector<1x1x64xf32> to vector<1x64xf32>
    %230 = vector.broadcast %229 : vector<1x64xf32> to vector<16x64xf32>
    %231 = arith.mulf %227, %230 : vector<16x64xf32>
    %c0_148 = arith.constant 0 : index
    %c0_149 = arith.constant 0 : index
    %c0_150 = arith.constant 0 : index
    %232 = vector.load %arg22[%c0_148, %c0_149, %c0_150] : memref<2x1x64xf32, #tpu.memory_space<vmem>>, vector<1x1x64xf32>
    %233 = vector.shape_cast %232 : vector<1x1x64xf32> to vector<1x64xf32>
    %234 = vector.broadcast %233 : vector<1x64xf32> to vector<16x64xf32>
    %235 = arith.addf %231, %234 : vector<16x64xf32>
    %c0_151 = arith.constant 0 : index
    %c0_152 = arith.constant 0 : index
    %c0_153 = arith.constant 0 : index
    %236 = vector.load %arg17[%c0_151, %c0_152, %c0_153] : memref<2x64x64xf32, #tpu.memory_space<vmem>>, vector<1x64x64xf32>
    %237 = vector.shape_cast %236 : vector<1x64x64xf32> to vector<64x64xf32>
    %cst_154 = arith.constant dense<0.000000e+00> : vector<16x64xf32>
    %238 = tpu.matmul %235, %237, %cst_154 {dimension_numbers = #tpu.dot_dimension_numbers<[1], [0], [0], [1], [0, 0, 1, 1], [], []>} : vector<16x64xf32>, vector<64x64xf32>, vector<16x64xf32> -> vector<16x64xf32>
    %c0_155 = arith.constant 0 : index
    %c0_156 = arith.constant 0 : index
    %c0_157 = arith.constant 0 : index
    %239 = vector.load %arg18[%c0_155, %c0_156, %c0_157] : memref<2x1x64xf32, #tpu.memory_space<vmem>>, vector<1x1x64xf32>
    %240 = vector.shape_cast %239 : vector<1x1x64xf32> to vector<1x64xf32>
    %241 = vector.broadcast %240 : vector<1x64xf32> to vector<16x64xf32>
    %242 = arith.addf %238, %241 : vector<16x64xf32>
    %cst_158 = arith.constant 0.000000e+00 : f32
    %243 = vector.broadcast %cst_158 : f32 to vector<16x64xf32>
    %244 = arith.maximumf %242, %243 : vector<16x64xf32>
    %c0_159 = arith.constant 0 : index
    %c0_160 = arith.constant 0 : index
    %c0_161 = arith.constant 0 : index
    %245 = vector.load %arg19[%c0_159, %c0_160, %c0_161] : memref<2x64x64xf32, #tpu.memory_space<vmem>>, vector<1x64x64xf32>
    %246 = vector.shape_cast %245 : vector<1x64x64xf32> to vector<64x64xf32>
    %cst_162 = arith.constant dense<0.000000e+00> : vector<16x64xf32>
    %247 = tpu.matmul %244, %246, %cst_162 {dimension_numbers = #tpu.dot_dimension_numbers<[1], [0], [0], [1], [0, 0, 1, 1], [], []>} : vector<16x64xf32>, vector<64x64xf32>, vector<16x64xf32> -> vector<16x64xf32>
    %c0_163 = arith.constant 0 : index
    %c0_164 = arith.constant 0 : index
    %c0_165 = arith.constant 0 : index
    %248 = vector.load %arg20[%c0_163, %c0_164, %c0_165] : memref<2x1x64xf32, #tpu.memory_space<vmem>>, vector<1x1x64xf32>
    %249 = vector.shape_cast %248 : vector<1x1x64xf32> to vector<1x64xf32>
    %250 = vector.broadcast %249 : vector<1x64xf32> to vector<16x64xf32>
    %251 = arith.addf %247, %250 : vector<16x64xf32>
    %252 = arith.addf %235, %251 : vector<16x64xf32>
    %cst_166 = arith.constant dense<0.000000e+00> : vector<16xf32>
    %253 = vector.multi_reduction <add>, %252, %cst_166 [1] : vector<16x64xf32> to vector<16xf32>
    %254 = vector.shape_cast %253 : vector<16xf32> to vector<16x1xf32>
    %cst_167 = arith.constant 6.400000e+01 : f32
    %255 = vector.broadcast %cst_167 : f32 to vector<16x1xf32>
    %256 = arith.divf %254, %255 : vector<16x1xf32>
    %257 = vector.broadcast %256 : vector<16x1xf32> to vector<16x64xf32>
    %258 = arith.subf %252, %257 : vector<16x64xf32>
    %259 = arith.mulf %258, %258 : vector<16x64xf32>
    %cst_168 = arith.constant dense<0.000000e+00> : vector<16xf32>
    %260 = vector.multi_reduction <add>, %259, %cst_168 [1] : vector<16x64xf32> to vector<16xf32>
    %261 = vector.shape_cast %260 : vector<16xf32> to vector<16x1xf32>
    %cst_169 = arith.constant 6.400000e+01 : f32
    %262 = vector.broadcast %cst_169 : f32 to vector<16x1xf32>
    %263 = arith.divf %261, %262 : vector<16x1xf32>
    %264 = vector.broadcast %256 : vector<16x1xf32> to vector<16x64xf32>
    %265 = arith.subf %252, %264 : vector<16x64xf32>
    %cst_170 = arith.constant 9.99999974E-6 : f32
    %266 = vector.broadcast %cst_170 : f32 to vector<16x1xf32>
    %267 = arith.addf %263, %266 : vector<16x1xf32>
    %268 = math.rsqrt %267 : vector<16x1xf32>
    %269 = vector.broadcast %268 : vector<16x1xf32> to vector<16x64xf32>
    %270 = arith.mulf %265, %269 : vector<16x64xf32>
    %c0_171 = arith.constant 0 : index
    %c0_172 = arith.constant 0 : index
    %c0_173 = arith.constant 0 : index
    %271 = vector.load %arg23[%c0_171, %c0_172, %c0_173] : memref<2x1x64xf32, #tpu.memory_space<vmem>>, vector<1x1x64xf32>
    %272 = vector.shape_cast %271 : vector<1x1x64xf32> to vector<1x64xf32>
    %273 = vector.broadcast %272 : vector<1x64xf32> to vector<16x64xf32>
    %274 = arith.mulf %270, %273 : vector<16x64xf32>
    %c0_174 = arith.constant 0 : index
    %c0_175 = arith.constant 0 : index
    %c0_176 = arith.constant 0 : index
    %275 = vector.load %arg24[%c0_174, %c0_175, %c0_176] : memref<2x1x64xf32, #tpu.memory_space<vmem>>, vector<1x1x64xf32>
    %276 = vector.shape_cast %275 : vector<1x1x64xf32> to vector<1x64xf32>
    %277 = vector.broadcast %276 : vector<1x64xf32> to vector<16x64xf32>
    %278 = arith.addf %274, %277 : vector<16x64xf32>
    %c1_177 = arith.constant 1 : index
    %c0_178 = arith.constant 0 : index
    %c0_179 = arith.constant 0 : index
    %279 = vector.load %arg16[%c1_177, %c0_178, %c0_179] : memref<2x1x64xf32, #tpu.memory_space<vmem>>, vector<1x1x64xf32>
    %280 = vector.shape_cast %279 : vector<1x1x64xf32> to vector<1x64xf32>
    %c4 = arith.constant 4 : index
    %c0_180 = arith.constant 0 : index
    %c0_181 = arith.constant 0 : index
    %281 = vector.load %arg9[%c4, %c0_180, %c0_181] : memref<8x64x16xf32, #tpu.memory_space<vmem>>, vector<1x64x16xf32>
    %282 = vector.shape_cast %281 : vector<1x64x16xf32> to vector<64x16xf32>
    %cst_182 = arith.constant dense<0.000000e+00> : vector<16x16xf32>
    %283 = tpu.matmul %278, %282, %cst_182 {dimension_numbers = #tpu.dot_dimension_numbers<[1], [0], [0], [1], [0, 0, 1, 1], [], []>} : vector<16x64xf32>, vector<64x16xf32>, vector<16x16xf32> -> vector<16x16xf32>
    %c4_183 = arith.constant 4 : index
    %c0_184 = arith.constant 0 : index
    %c0_185 = arith.constant 0 : index
    %284 = vector.load %arg10[%c4_183, %c0_184, %c0_185] : memref<8x1x16xf32, #tpu.memory_space<vmem>>, vector<1x1x16xf32>
    %285 = vector.shape_cast %284 : vector<1x1x16xf32> to vector<1x16xf32>
    %286 = vector.broadcast %285 : vector<1x16xf32> to vector<16x16xf32>
    %287 = arith.addf %283, %286 : vector<16x16xf32>
    %c4_186 = arith.constant 4 : index
    %c0_187 = arith.constant 0 : index
    %c0_188 = arith.constant 0 : index
    %288 = vector.load %arg11[%c4_186, %c0_187, %c0_188] : memref<8x64x16xf32, #tpu.memory_space<vmem>>, vector<1x64x16xf32>
    %289 = vector.shape_cast %288 : vector<1x64x16xf32> to vector<64x16xf32>
    %cst_189 = arith.constant dense<0.000000e+00> : vector<16x16xf32>
    %290 = tpu.matmul %278, %289, %cst_189 {dimension_numbers = #tpu.dot_dimension_numbers<[1], [0], [0], [1], [0, 0, 1, 1], [], []>} : vector<16x64xf32>, vector<64x16xf32>, vector<16x16xf32> -> vector<16x16xf32>
    %c4_190 = arith.constant 4 : index
    %c0_191 = arith.constant 0 : index
    %c0_192 = arith.constant 0 : index
    %291 = vector.load %arg12[%c4_190, %c0_191, %c0_192] : memref<8x1x16xf32, #tpu.memory_space<vmem>>, vector<1x1x16xf32>
    %292 = vector.shape_cast %291 : vector<1x1x16xf32> to vector<1x16xf32>
    %293 = vector.broadcast %292 : vector<1x16xf32> to vector<16x16xf32>
    %294 = arith.addf %290, %293 : vector<16x16xf32>
    %c4_193 = arith.constant 4 : index
    %c0_194 = arith.constant 0 : index
    %c0_195 = arith.constant 0 : index
    %295 = vector.load %arg13[%c4_193, %c0_194, %c0_195] : memref<8x64x16xf32, #tpu.memory_space<vmem>>, vector<1x64x16xf32>
    %296 = vector.shape_cast %295 : vector<1x64x16xf32> to vector<64x16xf32>
    %cst_196 = arith.constant dense<0.000000e+00> : vector<16x16xf32>
    %297 = tpu.matmul %278, %296, %cst_196 {dimension_numbers = #tpu.dot_dimension_numbers<[1], [0], [0], [1], [0, 0, 1, 1], [], []>} : vector<16x64xf32>, vector<64x16xf32>, vector<16x16xf32> -> vector<16x16xf32>
    %c4_197 = arith.constant 4 : index
    %c0_198 = arith.constant 0 : index
    %c0_199 = arith.constant 0 : index
    %298 = vector.load %arg14[%c4_197, %c0_198, %c0_199] : memref<8x1x16xf32, #tpu.memory_space<vmem>>, vector<1x1x16xf32>
    %299 = vector.shape_cast %298 : vector<1x1x16xf32> to vector<1x16xf32>
    %300 = vector.broadcast %299 : vector<1x16xf32> to vector<16x16xf32>
    %301 = arith.addf %297, %300 : vector<16x16xf32>
    %302 = vector.shape_cast %287 : vector<16x16xf32> to vector<2x8x16xf32>
    %303 = vector.shape_cast %294 : vector<16x16xf32> to vector<2x8x16xf32>
    %304 = vector.shape_cast %301 : vector<16x16xf32> to vector<2x8x16xf32>
    "tpu.trace_start"() <{level = 10 : i32, message = "bqd,bkd->bqk"}> : () -> ()
    %cst_200 = arith.constant dense<0.000000e+00> : vector<2x8x8xf32>
    %305 = tpu.matmul %302, %303, %cst_200 {dimension_numbers = #tpu.dot_dimension_numbers<[2], [2], [1], [1], [0, 0, 0, 1, 1, 1], [0], [0]>} : vector<2x8x16xf32>, vector<2x8x16xf32>, vector<2x8x8xf32> -> vector<2x8x8xf32>
    "tpu.trace_stop"() : () -> ()
    %cst_201 = arith.constant dense<0xFF800000> : vector<2x8xf32>
    %306 = vector.multi_reduction <maximumf>, %305, %cst_201 [2] : vector<2x8x8xf32> to vector<2x8xf32>
    %307 = vector.shape_cast %306 : vector<2x8xf32> to vector<2x8x1xf32>
    %308 = vector.broadcast %307 : vector<2x8x1xf32> to vector<2x8x8xf32>
    %309 = arith.subf %305, %308 : vector<2x8x8xf32>
    %310 = math.exp %309 : vector<2x8x8xf32>
    %cst_202 = arith.constant dense<0.000000e+00> : vector<2x8xf32>
    %311 = vector.multi_reduction <add>, %310, %cst_202 [2] : vector<2x8x8xf32> to vector<2x8xf32>
    %312 = vector.shape_cast %311 : vector<2x8xf32> to vector<2x8x1xf32>
    %313 = vector.broadcast %312 : vector<2x8x1xf32> to vector<2x8x8xf32>
    %314 = arith.divf %310, %313 : vector<2x8x8xf32>
    "tpu.trace_start"() <{level = 10 : i32, message = "bqk,bkd->bqd"}> : () -> ()
    %cst_203 = arith.constant dense<0.000000e+00> : vector<2x8x16xf32>
    %315 = tpu.matmul %314, %304, %cst_203 {dimension_numbers = #tpu.dot_dimension_numbers<[2], [1], [1], [2], [0, 0, 0, 1, 1, 2], [0], [0]>} : vector<2x8x8xf32>, vector<2x8x16xf32>, vector<2x8x16xf32> -> vector<2x8x16xf32>
    "tpu.trace_stop"() : () -> ()
    %316 = vector.shape_cast %315 : vector<2x8x16xf32> to vector<16x16xf32>
    %c4_204 = arith.constant 4 : index
    %c0_205 = arith.constant 0 : index
    %c0_206 = arith.constant 0 : index
    %317 = vector.load %arg15[%c4_204, %c0_205, %c0_206] : memref<8x16x64xf32, #tpu.memory_space<vmem>>, vector<1x16x64xf32>
    %318 = vector.shape_cast %317 : vector<1x16x64xf32> to vector<16x64xf32>
    %cst_207 = arith.constant dense<0.000000e+00> : vector<16x64xf32>
    %319 = tpu.matmul %316, %318, %cst_207 {dimension_numbers = #tpu.dot_dimension_numbers<[1], [0], [0], [1], [0, 0, 1, 1], [], []>} : vector<16x16xf32>, vector<16x64xf32>, vector<16x64xf32> -> vector<16x64xf32>
    %320 = vector.broadcast %280 : vector<1x64xf32> to vector<16x64xf32>
    %321 = arith.addf %320, %319 : vector<16x64xf32>
    %c5 = arith.constant 5 : index
    %c0_208 = arith.constant 0 : index
    %c0_209 = arith.constant 0 : index
    %322 = vector.load %arg9[%c5, %c0_208, %c0_209] : memref<8x64x16xf32, #tpu.memory_space<vmem>>, vector<1x64x16xf32>
    %323 = vector.shape_cast %322 : vector<1x64x16xf32> to vector<64x16xf32>
    %cst_210 = arith.constant dense<0.000000e+00> : vector<16x16xf32>
    %324 = tpu.matmul %278, %323, %cst_210 {dimension_numbers = #tpu.dot_dimension_numbers<[1], [0], [0], [1], [0, 0, 1, 1], [], []>} : vector<16x64xf32>, vector<64x16xf32>, vector<16x16xf32> -> vector<16x16xf32>
    %c5_211 = arith.constant 5 : index
    %c0_212 = arith.constant 0 : index
    %c0_213 = arith.constant 0 : index
    %325 = vector.load %arg10[%c5_211, %c0_212, %c0_213] : memref<8x1x16xf32, #tpu.memory_space<vmem>>, vector<1x1x16xf32>
    %326 = vector.shape_cast %325 : vector<1x1x16xf32> to vector<1x16xf32>
    %327 = vector.broadcast %326 : vector<1x16xf32> to vector<16x16xf32>
    %328 = arith.addf %324, %327 : vector<16x16xf32>
    %c5_214 = arith.constant 5 : index
    %c0_215 = arith.constant 0 : index
    %c0_216 = arith.constant 0 : index
    %329 = vector.load %arg11[%c5_214, %c0_215, %c0_216] : memref<8x64x16xf32, #tpu.memory_space<vmem>>, vector<1x64x16xf32>
    %330 = vector.shape_cast %329 : vector<1x64x16xf32> to vector<64x16xf32>
    %cst_217 = arith.constant dense<0.000000e+00> : vector<16x16xf32>
    %331 = tpu.matmul %278, %330, %cst_217 {dimension_numbers = #tpu.dot_dimension_numbers<[1], [0], [0], [1], [0, 0, 1, 1], [], []>} : vector<16x64xf32>, vector<64x16xf32>, vector<16x16xf32> -> vector<16x16xf32>
    %c5_218 = arith.constant 5 : index
    %c0_219 = arith.constant 0 : index
    %c0_220 = arith.constant 0 : index
    %332 = vector.load %arg12[%c5_218, %c0_219, %c0_220] : memref<8x1x16xf32, #tpu.memory_space<vmem>>, vector<1x1x16xf32>
    %333 = vector.shape_cast %332 : vector<1x1x16xf32> to vector<1x16xf32>
    %334 = vector.broadcast %333 : vector<1x16xf32> to vector<16x16xf32>
    %335 = arith.addf %331, %334 : vector<16x16xf32>
    %c5_221 = arith.constant 5 : index
    %c0_222 = arith.constant 0 : index
    %c0_223 = arith.constant 0 : index
    %336 = vector.load %arg13[%c5_221, %c0_222, %c0_223] : memref<8x64x16xf32, #tpu.memory_space<vmem>>, vector<1x64x16xf32>
    %337 = vector.shape_cast %336 : vector<1x64x16xf32> to vector<64x16xf32>
    %cst_224 = arith.constant dense<0.000000e+00> : vector<16x16xf32>
    %338 = tpu.matmul %278, %337, %cst_224 {dimension_numbers = #tpu.dot_dimension_numbers<[1], [0], [0], [1], [0, 0, 1, 1], [], []>} : vector<16x64xf32>, vector<64x16xf32>, vector<16x16xf32> -> vector<16x16xf32>
    %c5_225 = arith.constant 5 : index
    %c0_226 = arith.constant 0 : index
    %c0_227 = arith.constant 0 : index
    %339 = vector.load %arg14[%c5_225, %c0_226, %c0_227] : memref<8x1x16xf32, #tpu.memory_space<vmem>>, vector<1x1x16xf32>
    %340 = vector.shape_cast %339 : vector<1x1x16xf32> to vector<1x16xf32>
    %341 = vector.broadcast %340 : vector<1x16xf32> to vector<16x16xf32>
    %342 = arith.addf %338, %341 : vector<16x16xf32>
    %343 = vector.shape_cast %328 : vector<16x16xf32> to vector<2x8x16xf32>
    %344 = vector.shape_cast %335 : vector<16x16xf32> to vector<2x8x16xf32>
    %345 = vector.shape_cast %342 : vector<16x16xf32> to vector<2x8x16xf32>
    "tpu.trace_start"() <{level = 10 : i32, message = "bqd,bkd->bqk"}> : () -> ()
    %cst_228 = arith.constant dense<0.000000e+00> : vector<2x8x8xf32>
    %346 = tpu.matmul %343, %344, %cst_228 {dimension_numbers = #tpu.dot_dimension_numbers<[2], [2], [1], [1], [0, 0, 0, 1, 1, 1], [0], [0]>} : vector<2x8x16xf32>, vector<2x8x16xf32>, vector<2x8x8xf32> -> vector<2x8x8xf32>
    "tpu.trace_stop"() : () -> ()
    %cst_229 = arith.constant dense<0xFF800000> : vector<2x8xf32>
    %347 = vector.multi_reduction <maximumf>, %346, %cst_229 [2] : vector<2x8x8xf32> to vector<2x8xf32>
    %348 = vector.shape_cast %347 : vector<2x8xf32> to vector<2x8x1xf32>
    %349 = vector.broadcast %348 : vector<2x8x1xf32> to vector<2x8x8xf32>
    %350 = arith.subf %346, %349 : vector<2x8x8xf32>
    %351 = math.exp %350 : vector<2x8x8xf32>
    %cst_230 = arith.constant dense<0.000000e+00> : vector<2x8xf32>
    %352 = vector.multi_reduction <add>, %351, %cst_230 [2] : vector<2x8x8xf32> to vector<2x8xf32>
    %353 = vector.shape_cast %352 : vector<2x8xf32> to vector<2x8x1xf32>
    %354 = vector.broadcast %353 : vector<2x8x1xf32> to vector<2x8x8xf32>
    %355 = arith.divf %351, %354 : vector<2x8x8xf32>
    "tpu.trace_start"() <{level = 10 : i32, message = "bqk,bkd->bqd"}> : () -> ()
    %cst_231 = arith.constant dense<0.000000e+00> : vector<2x8x16xf32>
    %356 = tpu.matmul %355, %345, %cst_231 {dimension_numbers = #tpu.dot_dimension_numbers<[2], [1], [1], [2], [0, 0, 0, 1, 1, 2], [0], [0]>} : vector<2x8x8xf32>, vector<2x8x16xf32>, vector<2x8x16xf32> -> vector<2x8x16xf32>
    "tpu.trace_stop"() : () -> ()
    %357 = vector.shape_cast %356 : vector<2x8x16xf32> to vector<16x16xf32>
    %c5_232 = arith.constant 5 : index
    %c0_233 = arith.constant 0 : index
    %c0_234 = arith.constant 0 : index
    %358 = vector.load %arg15[%c5_232, %c0_233, %c0_234] : memref<8x16x64xf32, #tpu.memory_space<vmem>>, vector<1x16x64xf32>
    %359 = vector.shape_cast %358 : vector<1x16x64xf32> to vector<16x64xf32>
    %cst_235 = arith.constant dense<0.000000e+00> : vector<16x64xf32>
    %360 = tpu.matmul %357, %359, %cst_235 {dimension_numbers = #tpu.dot_dimension_numbers<[1], [0], [0], [1], [0, 0, 1, 1], [], []>} : vector<16x16xf32>, vector<16x64xf32>, vector<16x64xf32> -> vector<16x64xf32>
    %361 = arith.addf %321, %360 : vector<16x64xf32>
    %c6 = arith.constant 6 : index
    %c0_236 = arith.constant 0 : index
    %c0_237 = arith.constant 0 : index
    %362 = vector.load %arg9[%c6, %c0_236, %c0_237] : memref<8x64x16xf32, #tpu.memory_space<vmem>>, vector<1x64x16xf32>
    %363 = vector.shape_cast %362 : vector<1x64x16xf32> to vector<64x16xf32>
    %cst_238 = arith.constant dense<0.000000e+00> : vector<16x16xf32>
    %364 = tpu.matmul %278, %363, %cst_238 {dimension_numbers = #tpu.dot_dimension_numbers<[1], [0], [0], [1], [0, 0, 1, 1], [], []>} : vector<16x64xf32>, vector<64x16xf32>, vector<16x16xf32> -> vector<16x16xf32>
    %c6_239 = arith.constant 6 : index
    %c0_240 = arith.constant 0 : index
    %c0_241 = arith.constant 0 : index
    %365 = vector.load %arg10[%c6_239, %c0_240, %c0_241] : memref<8x1x16xf32, #tpu.memory_space<vmem>>, vector<1x1x16xf32>
    %366 = vector.shape_cast %365 : vector<1x1x16xf32> to vector<1x16xf32>
    %367 = vector.broadcast %366 : vector<1x16xf32> to vector<16x16xf32>
    %368 = arith.addf %364, %367 : vector<16x16xf32>
    %c6_242 = arith.constant 6 : index
    %c0_243 = arith.constant 0 : index
    %c0_244 = arith.constant 0 : index
    %369 = vector.load %arg11[%c6_242, %c0_243, %c0_244] : memref<8x64x16xf32, #tpu.memory_space<vmem>>, vector<1x64x16xf32>
    %370 = vector.shape_cast %369 : vector<1x64x16xf32> to vector<64x16xf32>
    %cst_245 = arith.constant dense<0.000000e+00> : vector<16x16xf32>
    %371 = tpu.matmul %278, %370, %cst_245 {dimension_numbers = #tpu.dot_dimension_numbers<[1], [0], [0], [1], [0, 0, 1, 1], [], []>} : vector<16x64xf32>, vector<64x16xf32>, vector<16x16xf32> -> vector<16x16xf32>
    %c6_246 = arith.constant 6 : index
    %c0_247 = arith.constant 0 : index
    %c0_248 = arith.constant 0 : index
    %372 = vector.load %arg12[%c6_246, %c0_247, %c0_248] : memref<8x1x16xf32, #tpu.memory_space<vmem>>, vector<1x1x16xf32>
    %373 = vector.shape_cast %372 : vector<1x1x16xf32> to vector<1x16xf32>
    %374 = vector.broadcast %373 : vector<1x16xf32> to vector<16x16xf32>
    %375 = arith.addf %371, %374 : vector<16x16xf32>
    %c6_249 = arith.constant 6 : index
    %c0_250 = arith.constant 0 : index
    %c0_251 = arith.constant 0 : index
    %376 = vector.load %arg13[%c6_249, %c0_250, %c0_251] : memref<8x64x16xf32, #tpu.memory_space<vmem>>, vector<1x64x16xf32>
    %377 = vector.shape_cast %376 : vector<1x64x16xf32> to vector<64x16xf32>
    %cst_252 = arith.constant dense<0.000000e+00> : vector<16x16xf32>
    %378 = tpu.matmul %278, %377, %cst_252 {dimension_numbers = #tpu.dot_dimension_numbers<[1], [0], [0], [1], [0, 0, 1, 1], [], []>} : vector<16x64xf32>, vector<64x16xf32>, vector<16x16xf32> -> vector<16x16xf32>
    %c6_253 = arith.constant 6 : index
    %c0_254 = arith.constant 0 : index
    %c0_255 = arith.constant 0 : index
    %379 = vector.load %arg14[%c6_253, %c0_254, %c0_255] : memref<8x1x16xf32, #tpu.memory_space<vmem>>, vector<1x1x16xf32>
    %380 = vector.shape_cast %379 : vector<1x1x16xf32> to vector<1x16xf32>
    %381 = vector.broadcast %380 : vector<1x16xf32> to vector<16x16xf32>
    %382 = arith.addf %378, %381 : vector<16x16xf32>
    %383 = vector.shape_cast %368 : vector<16x16xf32> to vector<2x8x16xf32>
    %384 = vector.shape_cast %375 : vector<16x16xf32> to vector<2x8x16xf32>
    %385 = vector.shape_cast %382 : vector<16x16xf32> to vector<2x8x16xf32>
    "tpu.trace_start"() <{level = 10 : i32, message = "bqd,bkd->bqk"}> : () -> ()
    %cst_256 = arith.constant dense<0.000000e+00> : vector<2x8x8xf32>
    %386 = tpu.matmul %383, %384, %cst_256 {dimension_numbers = #tpu.dot_dimension_numbers<[2], [2], [1], [1], [0, 0, 0, 1, 1, 1], [0], [0]>} : vector<2x8x16xf32>, vector<2x8x16xf32>, vector<2x8x8xf32> -> vector<2x8x8xf32>
    "tpu.trace_stop"() : () -> ()
    %cst_257 = arith.constant dense<0xFF800000> : vector<2x8xf32>
    %387 = vector.multi_reduction <maximumf>, %386, %cst_257 [2] : vector<2x8x8xf32> to vector<2x8xf32>
    %388 = vector.shape_cast %387 : vector<2x8xf32> to vector<2x8x1xf32>
    %389 = vector.broadcast %388 : vector<2x8x1xf32> to vector<2x8x8xf32>
    %390 = arith.subf %386, %389 : vector<2x8x8xf32>
    %391 = math.exp %390 : vector<2x8x8xf32>
    %cst_258 = arith.constant dense<0.000000e+00> : vector<2x8xf32>
    %392 = vector.multi_reduction <add>, %391, %cst_258 [2] : vector<2x8x8xf32> to vector<2x8xf32>
    %393 = vector.shape_cast %392 : vector<2x8xf32> to vector<2x8x1xf32>
    %394 = vector.broadcast %393 : vector<2x8x1xf32> to vector<2x8x8xf32>
    %395 = arith.divf %391, %394 : vector<2x8x8xf32>
    "tpu.trace_start"() <{level = 10 : i32, message = "bqk,bkd->bqd"}> : () -> ()
    %cst_259 = arith.constant dense<0.000000e+00> : vector<2x8x16xf32>
    %396 = tpu.matmul %395, %385, %cst_259 {dimension_numbers = #tpu.dot_dimension_numbers<[2], [1], [1], [2], [0, 0, 0, 1, 1, 2], [0], [0]>} : vector<2x8x8xf32>, vector<2x8x16xf32>, vector<2x8x16xf32> -> vector<2x8x16xf32>
    "tpu.trace_stop"() : () -> ()
    %397 = vector.shape_cast %396 : vector<2x8x16xf32> to vector<16x16xf32>
    %c6_260 = arith.constant 6 : index
    %c0_261 = arith.constant 0 : index
    %c0_262 = arith.constant 0 : index
    %398 = vector.load %arg15[%c6_260, %c0_261, %c0_262] : memref<8x16x64xf32, #tpu.memory_space<vmem>>, vector<1x16x64xf32>
    %399 = vector.shape_cast %398 : vector<1x16x64xf32> to vector<16x64xf32>
    %cst_263 = arith.constant dense<0.000000e+00> : vector<16x64xf32>
    %400 = tpu.matmul %397, %399, %cst_263 {dimension_numbers = #tpu.dot_dimension_numbers<[1], [0], [0], [1], [0, 0, 1, 1], [], []>} : vector<16x16xf32>, vector<16x64xf32>, vector<16x64xf32> -> vector<16x64xf32>
    %401 = arith.addf %361, %400 : vector<16x64xf32>
    %c7 = arith.constant 7 : index
    %c0_264 = arith.constant 0 : index
    %c0_265 = arith.constant 0 : index
    %402 = vector.load %arg9[%c7, %c0_264, %c0_265] : memref<8x64x16xf32, #tpu.memory_space<vmem>>, vector<1x64x16xf32>
    %403 = vector.shape_cast %402 : vector<1x64x16xf32> to vector<64x16xf32>
    %cst_266 = arith.constant dense<0.000000e+00> : vector<16x16xf32>
    %404 = tpu.matmul %278, %403, %cst_266 {dimension_numbers = #tpu.dot_dimension_numbers<[1], [0], [0], [1], [0, 0, 1, 1], [], []>} : vector<16x64xf32>, vector<64x16xf32>, vector<16x16xf32> -> vector<16x16xf32>
    %c7_267 = arith.constant 7 : index
    %c0_268 = arith.constant 0 : index
    %c0_269 = arith.constant 0 : index
    %405 = vector.load %arg10[%c7_267, %c0_268, %c0_269] : memref<8x1x16xf32, #tpu.memory_space<vmem>>, vector<1x1x16xf32>
    %406 = vector.shape_cast %405 : vector<1x1x16xf32> to vector<1x16xf32>
    %407 = vector.broadcast %406 : vector<1x16xf32> to vector<16x16xf32>
    %408 = arith.addf %404, %407 : vector<16x16xf32>
    %c7_270 = arith.constant 7 : index
    %c0_271 = arith.constant 0 : index
    %c0_272 = arith.constant 0 : index
    %409 = vector.load %arg11[%c7_270, %c0_271, %c0_272] : memref<8x64x16xf32, #tpu.memory_space<vmem>>, vector<1x64x16xf32>
    %410 = vector.shape_cast %409 : vector<1x64x16xf32> to vector<64x16xf32>
    %cst_273 = arith.constant dense<0.000000e+00> : vector<16x16xf32>
    %411 = tpu.matmul %278, %410, %cst_273 {dimension_numbers = #tpu.dot_dimension_numbers<[1], [0], [0], [1], [0, 0, 1, 1], [], []>} : vector<16x64xf32>, vector<64x16xf32>, vector<16x16xf32> -> vector<16x16xf32>
    %c7_274 = arith.constant 7 : index
    %c0_275 = arith.constant 0 : index
    %c0_276 = arith.constant 0 : index
    %412 = vector.load %arg12[%c7_274, %c0_275, %c0_276] : memref<8x1x16xf32, #tpu.memory_space<vmem>>, vector<1x1x16xf32>
    %413 = vector.shape_cast %412 : vector<1x1x16xf32> to vector<1x16xf32>
    %414 = vector.broadcast %413 : vector<1x16xf32> to vector<16x16xf32>
    %415 = arith.addf %411, %414 : vector<16x16xf32>
    %c7_277 = arith.constant 7 : index
    %c0_278 = arith.constant 0 : index
    %c0_279 = arith.constant 0 : index
    %416 = vector.load %arg13[%c7_277, %c0_278, %c0_279] : memref<8x64x16xf32, #tpu.memory_space<vmem>>, vector<1x64x16xf32>
    %417 = vector.shape_cast %416 : vector<1x64x16xf32> to vector<64x16xf32>
    %cst_280 = arith.constant dense<0.000000e+00> : vector<16x16xf32>
    %418 = tpu.matmul %278, %417, %cst_280 {dimension_numbers = #tpu.dot_dimension_numbers<[1], [0], [0], [1], [0, 0, 1, 1], [], []>} : vector<16x64xf32>, vector<64x16xf32>, vector<16x16xf32> -> vector<16x16xf32>
    %c7_281 = arith.constant 7 : index
    %c0_282 = arith.constant 0 : index
    %c0_283 = arith.constant 0 : index
    %419 = vector.load %arg14[%c7_281, %c0_282, %c0_283] : memref<8x1x16xf32, #tpu.memory_space<vmem>>, vector<1x1x16xf32>
    %420 = vector.shape_cast %419 : vector<1x1x16xf32> to vector<1x16xf32>
    %421 = vector.broadcast %420 : vector<1x16xf32> to vector<16x16xf32>
    %422 = arith.addf %418, %421 : vector<16x16xf32>
    %423 = vector.shape_cast %408 : vector<16x16xf32> to vector<2x8x16xf32>
    %424 = vector.shape_cast %415 : vector<16x16xf32> to vector<2x8x16xf32>
    %425 = vector.shape_cast %422 : vector<16x16xf32> to vector<2x8x16xf32>
    "tpu.trace_start"() <{level = 10 : i32, message = "bqd,bkd->bqk"}> : () -> ()
    %cst_284 = arith.constant dense<0.000000e+00> : vector<2x8x8xf32>
    %426 = tpu.matmul %423, %424, %cst_284 {dimension_numbers = #tpu.dot_dimension_numbers<[2], [2], [1], [1], [0, 0, 0, 1, 1, 1], [0], [0]>} : vector<2x8x16xf32>, vector<2x8x16xf32>, vector<2x8x8xf32> -> vector<2x8x8xf32>
    "tpu.trace_stop"() : () -> ()
    %cst_285 = arith.constant dense<0xFF800000> : vector<2x8xf32>
    %427 = vector.multi_reduction <maximumf>, %426, %cst_285 [2] : vector<2x8x8xf32> to vector<2x8xf32>
    %428 = vector.shape_cast %427 : vector<2x8xf32> to vector<2x8x1xf32>
    %429 = vector.broadcast %428 : vector<2x8x1xf32> to vector<2x8x8xf32>
    %430 = arith.subf %426, %429 : vector<2x8x8xf32>
    %431 = math.exp %430 : vector<2x8x8xf32>
    %cst_286 = arith.constant dense<0.000000e+00> : vector<2x8xf32>
    %432 = vector.multi_reduction <add>, %431, %cst_286 [2] : vector<2x8x8xf32> to vector<2x8xf32>
    %433 = vector.shape_cast %432 : vector<2x8xf32> to vector<2x8x1xf32>
    %434 = vector.broadcast %433 : vector<2x8x1xf32> to vector<2x8x8xf32>
    %435 = arith.divf %431, %434 : vector<2x8x8xf32>
    "tpu.trace_start"() <{level = 10 : i32, message = "bqk,bkd->bqd"}> : () -> ()
    %cst_287 = arith.constant dense<0.000000e+00> : vector<2x8x16xf32>
    %436 = tpu.matmul %435, %425, %cst_287 {dimension_numbers = #tpu.dot_dimension_numbers<[2], [1], [1], [2], [0, 0, 0, 1, 1, 2], [0], [0]>} : vector<2x8x8xf32>, vector<2x8x16xf32>, vector<2x8x16xf32> -> vector<2x8x16xf32>
    "tpu.trace_stop"() : () -> ()
    %437 = vector.shape_cast %436 : vector<2x8x16xf32> to vector<16x16xf32>
    %c7_288 = arith.constant 7 : index
    %c0_289 = arith.constant 0 : index
    %c0_290 = arith.constant 0 : index
    %438 = vector.load %arg15[%c7_288, %c0_289, %c0_290] : memref<8x16x64xf32, #tpu.memory_space<vmem>>, vector<1x16x64xf32>
    %439 = vector.shape_cast %438 : vector<1x16x64xf32> to vector<16x64xf32>
    %cst_291 = arith.constant dense<0.000000e+00> : vector<16x64xf32>
    %440 = tpu.matmul %437, %439, %cst_291 {dimension_numbers = #tpu.dot_dimension_numbers<[1], [0], [0], [1], [0, 0, 1, 1], [], []>} : vector<16x16xf32>, vector<16x64xf32>, vector<16x64xf32> -> vector<16x64xf32>
    %441 = arith.addf %401, %440 : vector<16x64xf32>
    %442 = arith.addf %278, %441 : vector<16x64xf32>
    %cst_292 = arith.constant dense<0.000000e+00> : vector<16xf32>
    %443 = vector.multi_reduction <add>, %442, %cst_292 [1] : vector<16x64xf32> to vector<16xf32>
    %444 = vector.shape_cast %443 : vector<16xf32> to vector<16x1xf32>
    %cst_293 = arith.constant 6.400000e+01 : f32
    %445 = vector.broadcast %cst_293 : f32 to vector<16x1xf32>
    %446 = arith.divf %444, %445 : vector<16x1xf32>
    %447 = vector.broadcast %446 : vector<16x1xf32> to vector<16x64xf32>
    %448 = arith.subf %442, %447 : vector<16x64xf32>
    %449 = arith.mulf %448, %448 : vector<16x64xf32>
    %cst_294 = arith.constant dense<0.000000e+00> : vector<16xf32>
    %450 = vector.multi_reduction <add>, %449, %cst_294 [1] : vector<16x64xf32> to vector<16xf32>
    %451 = vector.shape_cast %450 : vector<16xf32> to vector<16x1xf32>
    %cst_295 = arith.constant 6.400000e+01 : f32
    %452 = vector.broadcast %cst_295 : f32 to vector<16x1xf32>
    %453 = arith.divf %451, %452 : vector<16x1xf32>
    %454 = vector.broadcast %446 : vector<16x1xf32> to vector<16x64xf32>
    %455 = arith.subf %442, %454 : vector<16x64xf32>
    %cst_296 = arith.constant 9.99999974E-6 : f32
    %456 = vector.broadcast %cst_296 : f32 to vector<16x1xf32>
    %457 = arith.addf %453, %456 : vector<16x1xf32>
    %458 = math.rsqrt %457 : vector<16x1xf32>
    %459 = vector.broadcast %458 : vector<16x1xf32> to vector<16x64xf32>
    %460 = arith.mulf %455, %459 : vector<16x64xf32>
    %c1_297 = arith.constant 1 : index
    %c0_298 = arith.constant 0 : index
    %c0_299 = arith.constant 0 : index
    %461 = vector.load %arg21[%c1_297, %c0_298, %c0_299] : memref<2x1x64xf32, #tpu.memory_space<vmem>>, vector<1x1x64xf32>
    %462 = vector.shape_cast %461 : vector<1x1x64xf32> to vector<1x64xf32>
    %463 = vector.broadcast %462 : vector<1x64xf32> to vector<16x64xf32>
    %464 = arith.mulf %460, %463 : vector<16x64xf32>
    %c1_300 = arith.constant 1 : index
    %c0_301 = arith.constant 0 : index
    %c0_302 = arith.constant 0 : index
    %465 = vector.load %arg22[%c1_300, %c0_301, %c0_302] : memref<2x1x64xf32, #tpu.memory_space<vmem>>, vector<1x1x64xf32>
    %466 = vector.shape_cast %465 : vector<1x1x64xf32> to vector<1x64xf32>
    %467 = vector.broadcast %466 : vector<1x64xf32> to vector<16x64xf32>
    %468 = arith.addf %464, %467 : vector<16x64xf32>
    %c1_303 = arith.constant 1 : index
    %c0_304 = arith.constant 0 : index
    %c0_305 = arith.constant 0 : index
    %469 = vector.load %arg17[%c1_303, %c0_304, %c0_305] : memref<2x64x64xf32, #tpu.memory_space<vmem>>, vector<1x64x64xf32>
    %470 = vector.shape_cast %469 : vector<1x64x64xf32> to vector<64x64xf32>
    %cst_306 = arith.constant dense<0.000000e+00> : vector<16x64xf32>
    %471 = tpu.matmul %468, %470, %cst_306 {dimension_numbers = #tpu.dot_dimension_numbers<[1], [0], [0], [1], [0, 0, 1, 1], [], []>} : vector<16x64xf32>, vector<64x64xf32>, vector<16x64xf32> -> vector<16x64xf32>
    %c1_307 = arith.constant 1 : index
    %c0_308 = arith.constant 0 : index
    %c0_309 = arith.constant 0 : index
    %472 = vector.load %arg18[%c1_307, %c0_308, %c0_309] : memref<2x1x64xf32, #tpu.memory_space<vmem>>, vector<1x1x64xf32>
    %473 = vector.shape_cast %472 : vector<1x1x64xf32> to vector<1x64xf32>
    %474 = vector.broadcast %473 : vector<1x64xf32> to vector<16x64xf32>
    %475 = arith.addf %471, %474 : vector<16x64xf32>
    %cst_310 = arith.constant 0.000000e+00 : f32
    %476 = vector.broadcast %cst_310 : f32 to vector<16x64xf32>
    %477 = arith.maximumf %475, %476 : vector<16x64xf32>
    %c1_311 = arith.constant 1 : index
    %c0_312 = arith.constant 0 : index
    %c0_313 = arith.constant 0 : index
    %478 = vector.load %arg19[%c1_311, %c0_312, %c0_313] : memref<2x64x64xf32, #tpu.memory_space<vmem>>, vector<1x64x64xf32>
    %479 = vector.shape_cast %478 : vector<1x64x64xf32> to vector<64x64xf32>
    %cst_314 = arith.constant dense<0.000000e+00> : vector<16x64xf32>
    %480 = tpu.matmul %477, %479, %cst_314 {dimension_numbers = #tpu.dot_dimension_numbers<[1], [0], [0], [1], [0, 0, 1, 1], [], []>} : vector<16x64xf32>, vector<64x64xf32>, vector<16x64xf32> -> vector<16x64xf32>
    %c1_315 = arith.constant 1 : index
    %c0_316 = arith.constant 0 : index
    %c0_317 = arith.constant 0 : index
    %481 = vector.load %arg20[%c1_315, %c0_316, %c0_317] : memref<2x1x64xf32, #tpu.memory_space<vmem>>, vector<1x1x64xf32>
    %482 = vector.shape_cast %481 : vector<1x1x64xf32> to vector<1x64xf32>
    %483 = vector.broadcast %482 : vector<1x64xf32> to vector<16x64xf32>
    %484 = arith.addf %480, %483 : vector<16x64xf32>
    %485 = arith.addf %468, %484 : vector<16x64xf32>
    %cst_318 = arith.constant dense<0.000000e+00> : vector<16xf32>
    %486 = vector.multi_reduction <add>, %485, %cst_318 [1] : vector<16x64xf32> to vector<16xf32>
    %487 = vector.shape_cast %486 : vector<16xf32> to vector<16x1xf32>
    %cst_319 = arith.constant 6.400000e+01 : f32
    %488 = vector.broadcast %cst_319 : f32 to vector<16x1xf32>
    %489 = arith.divf %487, %488 : vector<16x1xf32>
    %490 = vector.broadcast %489 : vector<16x1xf32> to vector<16x64xf32>
    %491 = arith.subf %485, %490 : vector<16x64xf32>
    %492 = arith.mulf %491, %491 : vector<16x64xf32>
    %cst_320 = arith.constant dense<0.000000e+00> : vector<16xf32>
    %493 = vector.multi_reduction <add>, %492, %cst_320 [1] : vector<16x64xf32> to vector<16xf32>
    %494 = vector.shape_cast %493 : vector<16xf32> to vector<16x1xf32>
    %cst_321 = arith.constant 6.400000e+01 : f32
    %495 = vector.broadcast %cst_321 : f32 to vector<16x1xf32>
    %496 = arith.divf %494, %495 : vector<16x1xf32>
    %497 = vector.broadcast %489 : vector<16x1xf32> to vector<16x64xf32>
    %498 = arith.subf %485, %497 : vector<16x64xf32>
    %cst_322 = arith.constant 9.99999974E-6 : f32
    %499 = vector.broadcast %cst_322 : f32 to vector<16x1xf32>
    %500 = arith.addf %496, %499 : vector<16x1xf32>
    %501 = math.rsqrt %500 : vector<16x1xf32>
    %502 = vector.broadcast %501 : vector<16x1xf32> to vector<16x64xf32>
    %503 = arith.mulf %498, %502 : vector<16x64xf32>
    %c1_323 = arith.constant 1 : index
    %c0_324 = arith.constant 0 : index
    %c0_325 = arith.constant 0 : index
    %504 = vector.load %arg23[%c1_323, %c0_324, %c0_325] : memref<2x1x64xf32, #tpu.memory_space<vmem>>, vector<1x1x64xf32>
    %505 = vector.shape_cast %504 : vector<1x1x64xf32> to vector<1x64xf32>
    %506 = vector.broadcast %505 : vector<1x64xf32> to vector<16x64xf32>
    %507 = arith.mulf %503, %506 : vector<16x64xf32>
    %c1_326 = arith.constant 1 : index
    %c0_327 = arith.constant 0 : index
    %c0_328 = arith.constant 0 : index
    %508 = vector.load %arg24[%c1_326, %c0_327, %c0_328] : memref<2x1x64xf32, #tpu.memory_space<vmem>>, vector<1x1x64xf32>
    %509 = vector.shape_cast %508 : vector<1x1x64xf32> to vector<1x64xf32>
    %510 = vector.broadcast %509 : vector<1x64xf32> to vector<16x64xf32>
    %511 = arith.addf %507, %510 : vector<16x64xf32>
    %c0_329 = arith.constant 0 : index
    %c0_330 = arith.constant 0 : index
    %512 = vector.load %arg25[%c0_329, %c0_330] : memref<16x64xf32, #tpu.memory_space<vmem>>, vector<16x64xf32>
    tpu.vector_store %arg25[%c0_329, %c0_330], %511 {strides = array<i32>} : memref<16x64xf32, #tpu.memory_space<vmem>>, vector<16x64xf32>,
    return
  }
  func.func @transform_0(%arg0: i32) -> (i32, i32) {
    %c0_i32 = arith.constant 0 : i32
    %c0_i32_0 = arith.constant 0 : i32
    %c0_i32_1 = arith.constant 0 : i32
    return %c0_i32, %c0_i32_0 : i32, i32
  }
  func.func @transform_1(%arg0: i32) -> (i32, i32) {
    %c0_i32 = arith.constant 0 : i32
    %c0_i32_0 = arith.constant 0 : i32
    %c0_i32_1 = arith.constant 0 : i32
    return %c0_i32, %c0_i32_0 : i32, i32
  }
  func.func @transform_2(%arg0: i32) -> (i32, i32) {
    %c0_i32 = arith.constant 0 : i32
    %c0_i32_0 = arith.constant 0 : i32
    %c0_i32_1 = arith.constant 0 : i32
    return %c0_i32, %c0_i32_0 : i32, i32
  }
  func.func @transform_3(%arg0: i32) -> (i32, i32) {
    %c0_i32 = arith.constant 0 : i32
    %c0_i32_0 = arith.constant 0 : i32
    %c0_i32_1 = arith.constant 0 : i32
    return %c0_i32, %c0_i32_0 : i32, i32
  }
  func.func @transform_4(%arg0: i32) -> (i32, i32) {
    %c0_i32 = arith.constant 0 : i32
    %c0_i32_0 = arith.constant 0 : i32
    %c0_i32_1 = arith.constant 0 : i32
    return %c0_i32, %c0_i32_0 : i32, i32
  }
  func.func @transform_5(%arg0: i32) -> (i32, i32) {
    %c0_i32 = arith.constant 0 : i32
    %c0_i32_0 = arith.constant 0 : i32
    %c0_i32_1 = arith.constant 0 : i32
    return %c0_i32, %c0_i32_0 : i32, i32
  }
  func.func @transform_6(%arg0: i32) -> (i32, i32) {
    %c0_i32 = arith.constant 0 : i32
    %c0_i32_0 = arith.constant 0 : i32
    %c0_i32_1 = arith.constant 0 : i32
    return %c0_i32, %c0_i32_0 : i32, i32
  }
  func.func @transform_7(%arg0: i32) -> (i32, i32) {
    %c0_i32 = arith.constant 0 : i32
    %c0_i32_0 = arith.constant 0 : i32
    %c0_i32_1 = arith.constant 0 : i32
    return %c0_i32, %c0_i32_0 : i32, i32
  }
  func.func @transform_8(%arg0: i32) -> (i32, i32, i32) {
    %c0_i32 = arith.constant 0 : i32
    %c0_i32_0 = arith.constant 0 : i32
    %c0_i32_1 = arith.constant 0 : i32
    %c0_i32_2 = arith.constant 0 : i32
    return %c0_i32, %c0_i32_0, %c0_i32_1 : i32, i32, i32
  }
  func.func @transform_9(%arg0: i32) -> (i32, i32, i32) {
    %c0_i32 = arith.constant 0 : i32
    %c0_i32_0 = arith.constant 0 : i32
    %c0_i32_1 = arith.constant 0 : i32
    %c0_i32_2 = arith.constant 0 : i32
    return %c0_i32, %c0_i32_0, %c0_i32_1 : i32, i32, i32
  }
  func.func @transform_10(%arg0: i32) -> (i32, i32, i32) {
    %c0_i32 = arith.constant 0 : i32
    %c0_i32_0 = arith.constant 0 : i32
    %c0_i32_1 = arith.constant 0 : i32
    %c0_i32_2 = arith.constant 0 : i32
    return %c0_i32, %c0_i32_0, %c0_i32_1 : i32, i32, i32
  }
  func.func @transform_11(%arg0: i32) -> (i32, i32, i32) {
    %c0_i32 = arith.constant 0 : i32
    %c0_i32_0 = arith.constant 0 : i32
    %c0_i32_1 = arith.constant 0 : i32
    %c0_i32_2 = arith.constant 0 : i32
    return %c0_i32, %c0_i32_0, %c0_i32_1 : i32, i32, i32
  }
  func.func @transform_12(%arg0: i32) -> (i32, i32, i32) {
    %c0_i32 = arith.constant 0 : i32
    %c0_i32_0 = arith.constant 0 : i32
    %c0_i32_1 = arith.constant 0 : i32
    %c0_i32_2 = arith.constant 0 : i32
    return %c0_i32, %c0_i32_0, %c0_i32_1 : i32, i32, i32
  }
  func.func @transform_13(%arg0: i32) -> (i32, i32, i32) {
    %c0_i32 = arith.constant 0 : i32
    %c0_i32_0 = arith.constant 0 : i32
    %c0_i32_1 = arith.constant 0 : i32
    %c0_i32_2 = arith.constant 0 : i32
    return %c0_i32, %c0_i32_0, %c0_i32_1 : i32, i32, i32
  }
  func.func @transform_14(%arg0: i32) -> (i32, i32, i32) {
    %c0_i32 = arith.constant 0 : i32
    %c0_i32_0 = arith.constant 0 : i32
    %c0_i32_1 = arith.constant 0 : i32
    %c0_i32_2 = arith.constant 0 : i32
    return %c0_i32, %c0_i32_0, %c0_i32_1 : i32, i32, i32
  }
  func.func @transform_15(%arg0: i32) -> (i32, i32, i32) {
    %c0_i32 = arith.constant 0 : i32
    %c0_i32_0 = arith.constant 0 : i32
    %c0_i32_1 = arith.constant 0 : i32
    %c0_i32_2 = arith.constant 0 : i32
    return %c0_i32, %c0_i32_0, %c0_i32_1 : i32, i32, i32
  }
  func.func @transform_16(%arg0: i32) -> (i32, i32, i32) {
    %c0_i32 = arith.constant 0 : i32
    %c0_i32_0 = arith.constant 0 : i32
    %c0_i32_1 = arith.constant 0 : i32
    %c0_i32_2 = arith.constant 0 : i32
    return %c0_i32, %c0_i32_0, %c0_i32_1 : i32, i32, i32
  }
  func.func @transform_17(%arg0: i32) -> (i32, i32, i32) {
    %c0_i32 = arith.constant 0 : i32
    %c0_i32_0 = arith.constant 0 : i32
    %c0_i32_1 = arith.constant 0 : i32
    %c0_i32_2 = arith.constant 0 : i32
    return %c0_i32, %c0_i32_0, %c0_i32_1 : i32, i32, i32
  }
  func.func @transform_18(%arg0: i32) -> (i32, i32, i32) {
    %c0_i32 = arith.constant 0 : i32
    %c0_i32_0 = arith.constant 0 : i32
    %c0_i32_1 = arith.constant 0 : i32
    %c0_i32_2 = arith.constant 0 : i32
    return %c0_i32, %c0_i32_0, %c0_i32_1 : i32, i32, i32
  }
  func.func @transform_19(%arg0: i32) -> (i32, i32, i32) {
    %c0_i32 = arith.constant 0 : i32
    %c0_i32_0 = arith.constant 0 : i32
    %c0_i32_1 = arith.constant 0 : i32
    %c0_i32_2 = arith.constant 0 : i32
    return %c0_i32, %c0_i32_0, %c0_i32_1 : i32, i32, i32
  }
  func.func @transform_20(%arg0: i32) -> (i32, i32, i32) {
    %c0_i32 = arith.constant 0 : i32
    %c0_i32_0 = arith.constant 0 : i32
    %c0_i32_1 = arith.constant 0 : i32
    %c0_i32_2 = arith.constant 0 : i32
    return %c0_i32, %c0_i32_0, %c0_i32_1 : i32, i32, i32
  }
  func.func @transform_21(%arg0: i32) -> (i32, i32, i32) {
    %c0_i32 = arith.constant 0 : i32
    %c0_i32_0 = arith.constant 0 : i32
    %c0_i32_1 = arith.constant 0 : i32
    %c0_i32_2 = arith.constant 0 : i32
    return %c0_i32, %c0_i32_0, %c0_i32_1 : i32, i32, i32
  }
  func.func @transform_22(%arg0: i32) -> (i32, i32, i32) {
    %c0_i32 = arith.constant 0 : i32
    %c0_i32_0 = arith.constant 0 : i32
    %c0_i32_1 = arith.constant 0 : i32
    %c0_i32_2 = arith.constant 0 : i32
    return %c0_i32, %c0_i32_0, %c0_i32_1 : i32, i32, i32
  }
  func.func @transform_23(%arg0: i32) -> (i32, i32, i32) {
    %c0_i32 = arith.constant 0 : i32
    %c0_i32_0 = arith.constant 0 : i32
    %c0_i32_1 = arith.constant 0 : i32
    %c0_i32_2 = arith.constant 0 : i32
    return %c0_i32, %c0_i32_0, %c0_i32_1 : i32, i32, i32
  }
  func.func @transform_24(%arg0: i32) -> (i32, i32) {
    %c0_i32 = arith.constant 0 : i32
    %c0_i32_0 = arith.constant 0 : i32
    %c0_i32_1 = arith.constant 0 : i32
    return %c0_i32, %c0_i32_0 : i32, i32
  }
}

</mosaic_0001>

<llo_original>
// kernel: tex_transformer_forward.1
$region0: #{tex_transformer_forward.1}
  #allocation0 [shape = 'u32[]', space=smem, size = 0x4, offset = 0x4, fixed_abs, tag = 'smem constant byte address 0x4 - core index']
  #allocation1 [shape = 'u32[144,128]{1,0:T(1,128)}', space=vmem, size = 0x12000, scoped, tag = 'internal scratch']
  %s0 = inlined_call_operand.vmem [shape: s32[16,1], index: 0, kind: input, shape index: {}]
  %s1 = inlined_call_operand.vmem [shape: f32[128,32], index: 1, kind: input, shape index: {}]
  %s2 = inlined_call_operand.vmem [shape: f32[1,64], index: 2, kind: input, shape index: {}]
  %s3 = inlined_call_operand.vmem [shape: f32[1,64], index: 3, kind: input, shape index: {}]
  %s4 = inlined_call_operand.vmem [shape: f32[64,64], index: 4, kind: input, shape index: {}]
  %s5 = inlined_call_operand.vmem [shape: f32[1,64], index: 5, kind: input, shape index: {}]
  %s6 = inlined_call_operand.vmem [shape: f32[64,32], index: 6, kind: input, shape index: {}]
  %s7 = inlined_call_operand.vmem [shape: f32[1,32], index: 7, kind: input, shape index: {}]
  %s8 = inlined_call_operand.vmem [shape: f32[8,64,16], index: 8, kind: input, shape index: {}]
  %s9 = inlined_call_operand.vmem [shape: f32[8,1,16], index: 9, kind: input, shape index: {}]
  %s10 = inlined_call_operand.vmem [shape: f32[8,64,16], index: 10, kind: input, shape index: {}]
  %s11 = inlined_call_operand.vmem [shape: f32[8,1,16], index: 11, kind: input, shape index: {}]
  %s12 = inlined_call_operand.vmem [shape: f32[8,64,16], index: 12, kind: input, shape index: {}]
  %s13 = inlined_call_operand.vmem [shape: f32[8,1,16], index: 13, kind: input, shape index: {}]
  %s14 = inlined_call_operand.vmem [shape: f32[8,16,64], index: 14, kind: input, shape index: {}]
  %s15 = inlined_call_operand.vmem [shape: f32[2,1,64], index: 15, kind: input, shape index: {}]
  %s16 = inlined_call_operand.vmem [shape: f32[2,64,64], index: 16, kind: input, shape index: {}]
  %s17 = inlined_call_operand.vmem [shape: f32[2,1,64], index: 17, kind: input, shape index: {}]
  %s18 = inlined_call_operand.vmem [shape: f32[2,64,64], index: 18, kind: input, shape index: {}]
  %s19 = inlined_call_operand.vmem [shape: f32[2,1,64], index: 19, kind: input, shape index: {}]
  %s20 = inlined_call_operand.vmem [shape: f32[2,1,64], index: 20, kind: input, shape index: {}]
  %s21 = inlined_call_operand.vmem [shape: f32[2,1,64], index: 21, kind: input, shape index: {}]
  %s22 = inlined_call_operand.vmem [shape: f32[2,1,64], index: 22, kind: input, shape index: {}]
  %s23 = inlined_call_operand.vmem [shape: f32[2,1,64], index: 23, kind: input, shape index: {}]
  %s24 = inlined_call_operand.hbm [shape: f32[16,64], index: 24, kind: output, shape index: {}]
  %s25 = sld [smem:[#allocation0]]
  $region106: #{tex_transformer_forward.1} parent=0
    _
  %s27 = ssub.s32 1, %s25
  %s28 = scalar_select 0, %s27, %s25
  $region1: #{tex_transformer_forward.1} parent=0
    #allocation2 [shape = 'u8[8192]{0}', space=vmem, size = 0x2000, scoped, tag = 'output window, operand 0, single buffered']
    #allocation3 [shape = 's32[1]{0}', space=sflag, size = 0x4, scoped, tag = 'scoped memory for tex_transformer_forward.1']
    %29 = vsyncpa [#allocation3], 0
    // Predicated region
    $region2: #{tex_transformer_forward.1} parent=1 // pred_check
      _
    $region3: #{tex_transformer_forward.1} parent=1 // pred_check_branch
      %31 = sbr.rel (0) target = $region5
    $region4: #{tex_transformer_forward.1} parent=1 // pred_region
      _
    $region5: #{tex_transformer_forward.1} parent=1 // pred_fallthru
      _
    // Predicated region
    $region6: #{tex_transformer_forward.1} parent=1 // pred_check
      _
    $region7: #{tex_transformer_forward.1} parent=1 // pred_check_branch
      %33 = sbr.rel (0) target = $region9
    $region8: #{tex_transformer_forward.1} parent=1 // pred_region
      _
    $region9: #{tex_transformer_forward.1} parent=1 // pred_fallthru
      _
    // Predicated region
    $region10: #{tex_transformer_forward.1} parent=1 // pred_check
      _
    $region11: #{tex_transformer_forward.1} parent=1 // pred_check_branch
      %35 = sbr.rel (0) target = $region13
    $region12: #{tex_transformer_forward.1} parent=1 // pred_region
      _
    $region13: #{tex_transformer_forward.1} parent=1 // pred_fallthru
      _
    // Predicated region
    $region14: #{tex_transformer_forward.1} parent=1 // pred_check
      _
    $region15: #{tex_transformer_forward.1} parent=1 // pred_check_branch
      %37 = sbr.rel (0) target = $region17
    $region16: #{tex_transformer_forward.1} parent=1 // pred_region
      _
    $region17: #{tex_transformer_forward.1} parent=1 // pred_fallthru
      _
    // Predicated region
    $region18: #{tex_transformer_forward.1} parent=1 // pred_check
      _
    $region19: #{tex_transformer_forward.1} parent=1 // pred_check_branch
      %39 = sbr.rel (0) target = $region21
    $region20: #{tex_transformer_forward.1} parent=1 // pred_region
      _
    $region21: #{tex_transformer_forward.1} parent=1 // pred_fallthru
      _
    // Predicated region
    $region22: #{tex_transformer_forward.1} parent=1 // pred_check
      _
    $region23: #{tex_transformer_forward.1} parent=1 // pred_check_branch
      %41 = sbr.rel (0) target = $region25
    $region24: #{tex_transformer_forward.1} parent=1 // pred_region
      _
    $region25: #{tex_transformer_forward.1} parent=1 // pred_fallthru
      _
    // Predicated region
    $region26: #{tex_transformer_forward.1} parent=1 // pred_check
      _
    $region27: #{tex_transformer_forward.1} parent=1 // pred_check_branch
      %43 = sbr.rel (0) target = $region29
    $region28: #{tex_transformer_forward.1} parent=1 // pred_region
      _
    $region29: #{tex_transformer_forward.1} parent=1 // pred_fallthru
      _
    // Predicated region
    $region30: #{tex_transformer_forward.1} parent=1 // pred_check
      _
    $region31: #{tex_transformer_forward.1} parent=1 // pred_check_branch
      %45 = sbr.rel (0) target = $region33
    $region32: #{tex_transformer_forward.1} parent=1 // pred_region
      _
    $region33: #{tex_transformer_forward.1} parent=1 // pred_fallthru
      _
    // Predicated region
    $region34: #{tex_transformer_forward.1} parent=1 // pred_check
      _
    $region35: #{tex_transformer_forward.1} parent=1 // pred_check_branch
      %47 = sbr.rel (0) target = $region37
    $region36: #{tex_transformer_forward.1} parent=1 // pred_region
      _
    $region37: #{tex_transformer_forward.1} parent=1 // pred_fallthru
      _
    // Predicated region
    $region38: #{tex_transformer_forward.1} parent=1 // pred_check
      _
    $region39: #{tex_transformer_forward.1} parent=1 // pred_check_branch
      %49 = sbr.rel (0) target = $region41
    $region40: #{tex_transformer_forward.1} parent=1 // pred_region
      _
    $region41: #{tex_transformer_forward.1} parent=1 // pred_fallthru
      _
    // Predicated region
    $region42: #{tex_transformer_forward.1} parent=1 // pred_check
      _
    $region43: #{tex_transformer_forward.1} parent=1 // pred_check_branch
      %51 = sbr.rel (0) target = $region45
    $region44: #{tex_transformer_forward.1} parent=1 // pred_region
      _
    $region45: #{tex_transformer_forward.1} parent=1 // pred_fallthru
      _
    // Predicated region
    $region46: #{tex_transformer_forward.1} parent=1 // pred_check
      _
    $region47: #{tex_transformer_forward.1} parent=1 // pred_check_branch
      %53 = sbr.rel (0) target = $region49
    $region48: #{tex_transformer_forward.1} parent=1 // pred_region
      _
    $region49: #{tex_transformer_forward.1} parent=1 // pred_fallthru
      _
    // Predicated region
    $region50: #{tex_transformer_forward.1} parent=1 // pred_check
      _
    $region51: #{tex_transformer_forward.1} parent=1 // pred_check_branch
      %55 = sbr.rel (0) target = $region53
    $region52: #{tex_transformer_forward.1} parent=1 // pred_region
      _
    $region53: #{tex_transformer_forward.1} parent=1 // pred_fallthru
      _
    // Predicated region
    $region54: #{tex_transformer_forward.1} parent=1 // pred_check
      _
    $region55: #{tex_transformer_forward.1} parent=1 // pred_check_branch
      %57 = sbr.rel (0) target = $region57
    $region56: #{tex_transformer_forward.1} parent=1 // pred_region
      _
    $region57: #{tex_transformer_forward.1} parent=1 // pred_fallthru
      _
    // Predicated region
    $region58: #{tex_transformer_forward.1} parent=1 // pred_check
      _
    $region59: #{tex_transformer_forward.1} parent=1 // pred_check_branch
      %59 = sbr.rel (0) target = $region61
    $region60: #{tex_transformer_forward.1} parent=1 // pred_region
      _
    $region61: #{tex_transformer_forward.1} parent=1 // pred_fallthru
      _
    // Predicated region
    $region62: #{tex_transformer_forward.1} parent=1 // pred_check
      _
    $region63: #{tex_transformer_forward.1} parent=1 // pred_check_branch
      %61 = sbr.rel (0) target = $region65
    $region64: #{tex_transformer_forward.1} parent=1 // pred_region
      _
    $region65: #{tex_transformer_forward.1} parent=1 // pred_fallthru
      _
    // Predicated region
    $region66: #{tex_transformer_forward.1} parent=1 // pred_check
      _
    $region67: #{tex_transformer_forward.1} parent=1 // pred_check_branch
      %63 = sbr.rel (0) target = $region69
    $region68: #{tex_transformer_forward.1} parent=1 // pred_region
      _
    $region69: #{tex_transformer_forward.1} parent=1 // pred_fallthru
      _
    // Predicated region
    $region70: #{tex_transformer_forward.1} parent=1 // pred_check
      _
    $region71: #{tex_transformer_forward.1} parent=1 // pred_check_branch
      %65 = sbr.rel (0) target = $region73
    $region72: #{tex_transformer_forward.1} parent=1 // pred_region
      _
    $region73: #{tex_transformer_forward.1} parent=1 // pred_fallthru
      _
    // Predicated region
    $region74: #{tex_transformer_forward.1} parent=1 // pred_check
      _
    $region75: #{tex_transformer_forward.1} parent=1 // pred_check_branch
      %67 = sbr.rel (0) target = $region77
    $region76: #{tex_transformer_forward.1} parent=1 // pred_region
      _
    $region77: #{tex_transformer_forward.1} parent=1 // pred_fallthru
      _
    // Predicated region
    $region78: #{tex_transformer_forward.1} parent=1 // pred_check
      _
    $region79: #{tex_transformer_forward.1} parent=1 // pred_check_branch
      %69 = sbr.rel (0) target = $region81
    $region80: #{tex_transformer_forward.1} parent=1 // pred_region
      _
    $region81: #{tex_transformer_forward.1} parent=1 // pred_fallthru
      _
    // Predicated region
    $region82: #{tex_transformer_forward.1} parent=1 // pred_check
      _
    $region83: #{tex_transformer_forward.1} parent=1 // pred_check_branch
      %71 = sbr.rel (0) target = $region85
    $region84: #{tex_transformer_forward.1} parent=1 // pred_region
      _
    $region85: #{tex_transformer_forward.1} parent=1 // pred_fallthru
      _
    // Predicated region
    $region86: #{tex_transformer_forward.1} parent=1 // pred_check
      _
    $region87: #{tex_transformer_forward.1} parent=1 // pred_check_branch
      %73 = sbr.rel (0) target = $region89
    $region88: #{tex_transformer_forward.1} parent=1 // pred_region
      _
    $region89: #{tex_transformer_forward.1} parent=1 // pred_fallthru
      _
    // Predicated region
    $region90: #{tex_transformer_forward.1} parent=1 // pred_check
      _
    $region91: #{tex_transformer_forward.1} parent=1 // pred_check_branch
      %75 = sbr.rel (0) target = $region93
    $region92: #{tex_transformer_forward.1} parent=1 // pred_region
      _
    $region93: #{tex_transformer_forward.1} parent=1 // pred_fallthru
      _
    // Predicated region
    $region94: #{tex_transformer_forward.1} parent=1 // pred_check
      _
    $region95: #{tex_transformer_forward.1} parent=1 // pred_check_branch
      %77 = sbr.rel (0) target = $region97
    $region96: #{tex_transformer_forward.1} parent=1 // pred_region
      _
    $region97: #{tex_transformer_forward.1} parent=1 // pred_fallthru
      _
    %v78 = vld [vmem:[%s0] sm:$0xff]
    %v79 = vld [vmem:[%s0 + $0x8] sm:$0xff]
    %v80 = vlaneseq
    %v81 = vand.u32 %v80, 127
    %82 = vset.pattern.permute.xlu0 0
    %83 = vperm.xlu0 %82, %v78
    %v84 = vpop.permute.xlu0 %83
    %85 = vset.pattern.permute.xlu0 0
    %86 = vperm.xlu0 %85, %v79
    %v87 = vpop.permute.xlu0 %86
    %vm88 = vcmp.eq.s32.totalorder %v81, %v84
    %vm89 = vcmp.eq.s32.totalorder %v81, %v87
    %v90 = vsel %vm88, 1, 0
    %v91 = vsel %vm89, 1, 0
    %v92 = vcvt.s32.f32 %v90
    %v93 = vcvt.s32.f32 %v91
    %v94 = vld [vmem:[%s1] sm:$0xff]
    %v95 = vld [vmem:[%s1 + $0x8] sm:$0xff]
    %v96 = vld [vmem:[%s1 + $0x10] sm:$0xff]
    %v97 = vld [vmem:[%s1 + $0x18] sm:$0xff]
    %v98 = vld [vmem:[%s1 + $0x20] sm:$0xff]
    %v99 = vld [vmem:[%s1 + $0x28] sm:$0xff]
    %v100 = vld [vmem:[%s1 + $0x30] sm:$0xff]
    %v101 = vld [vmem:[%s1 + $0x38] sm:$0xff]
    %v102 = vld [vmem:[%s1 + $0x40] sm:$0xff]
    %v103 = vld [vmem:[%s1 + $0x48] sm:$0xff]
    %v104 = vld [vmem:[%s1 + $0x50] sm:$0xff]
    %v105 = vld [vmem:[%s1 + $0x58] sm:$0xff]
    %v106 = vld [vmem:[%s1 + $0x60] sm:$0xff]
    %v107 = vld [vmem:[%s1 + $0x68] sm:$0xff]
    %v108 = vld [vmem:[%s1 + $0x70] sm:$0xff]
    %v109 = vld [vmem:[%s1 + $0x78] sm:$0xff]
    %110 = vmatprep.subr.mxu0 0.0
    %111 = vmatpush1.msra.mxu0 %v109
    %112 = vmatprep.subr.mxu0 0.0
    %113 = vmatpush1.msra.mxu0 %v108
    %114 = vmatprep.subr.mxu0 0.0
    %115 = vmatpush1.msra.mxu0 %v107
    %116 = vmatprep.subr.mxu0 0.0
    %117 = vmatpush1.msra.mxu0 %v106
    %118 = vmatprep.subr.mxu0 0.0
    %119 = vmatpush1.msra.mxu0 %v105
    %120 = vmatprep.subr.mxu0 0.0
    %121 = vmatpush1.msra.mxu0 %v104
    %122 = vmatprep.subr.mxu0 0.0
    %123 = vmatpush1.msra.mxu0 %v103
    %124 = vmatprep.subr.mxu0 0.0
    %125 = vmatpush1.msra.mxu0 %v102
    %126 = vmatprep.subr.mxu0 0.0
    %127 = vmatpush1.msra.mxu0 %v101
    %128 = vmatprep.subr.mxu0 0.0
    %129 = vmatpush1.msra.mxu0 %v100
    %130 = vmatprep.subr.mxu0 0.0
    %131 = vmatpush1.msra.mxu0 %v99
    %132 = vmatprep.subr.mxu0 0.0
    %133 = vmatpush1.msra.mxu0 %v98
    %134 = vmatprep.subr.mxu0 0.0
    %135 = vmatpush1.msra.mxu0 %v97
    %136 = vmatprep.subr.mxu0 0.0
    %137 = vmatpush1.msra.mxu0 %v96
    %138 = vmatprep.subr.mxu0 0.0
    %139 = vmatpush1.msra.mxu0 %v95
    %140 = vmatprep.subr.mxu0 0.0
    %141 = vmatpush1.msra.mxu0 %v94
    %142 = vmatprep.subr.mxu0 0.0
    %143 = vmatpush2.msra.mxu0 0.0
    %144 = vmatprep.subr.mxu0 0.0
    %145 = vmatpush2.msra.mxu0 0.0
    %146 = vmatprep.subr.mxu0 0.0
    %147 = vmatpush2.msra.mxu0 0.0
    %148 = vmatprep.subr.mxu0 0.0
    %149 = vmatpush2.msra.mxu0 0.0
    %150 = vmatprep.subr.mxu0 0.0
    %151 = vmatpush2.msra.mxu0 0.0
    %152 = vmatprep.subr.mxu0 0.0
    %153 = vmatpush2.msra.mxu0 0.0
    %154 = vmatprep.subr.mxu0 0.0
    %155 = vmatpush2.msra.mxu0 0.0
    %156 = vmatprep.subr.mxu0 0.0
    %157 = vmatpush2.msra.mxu0 0.0
    %158 = vmatprep.subr.mxu0 0.0
    %159 = vmatpush2.msra.mxu0 0.0
    %160 = vmatprep.subr.mxu0 0.0
    %161 = vmatpush2.msra.mxu0 0.0
    %162 = vmatprep.subr.mxu0 0.0
    %163 = vmatpush2.msra.mxu0 0.0
    %164 = vmatprep.subr.mxu0 0.0
    %165 = vmatpush2.msra.mxu0 0.0
    %166 = vmatprep.subr.mxu0 0.0
    %167 = vmatpush2.msra.mxu0 0.0
    %168 = vmatprep.subr.mxu0 0.0
    %169 = vmatpush2.msra.mxu0 0.0
    %170 = vmatprep.subr.mxu0 0.0
    %171 = vmatpush2.msra.mxu0 0.0
    %172 = vmatprep.subr.mxu0 0.0
    %173 = vmatpush2.msra.mxu0 0.0
    %174 = vmatprep.mubr.f32.mxu0 0.0
    %175 = vmatmul.mubr.f32.gmra.mxu0 %v92
    %v176 = vpop.f32.mrf.mxu0
    %v177 = vadd.f32 0.0, %v176
    %v178 = vpop.f32.mrf.mxu0
    %179 = vmatprep.mubr.f32.mxu0 0.0
    %180 = vmatmul.mubr.f32.gmra.mxu0 %v93
    %v181 = vpop.f32.mrf.mxu0
    %v182 = vadd.f32 0.0, %v181
    %v183 = vpop.f32.mrf.mxu0
    %184 = vdwg.mxu0
    %v185 = vlaneseq
    %v186 = vshrl.u32 %v185, 7
    %v187 = vcvt.s32.f32 %v186
    %v188 = vmul.f32 %v187, 0.125
    %v189 = vld [vmem:[%s2] sm:$0x1]
    %v191 = vlaneseq
    %v192 = vshrl.u32 %v191, 7
    %v193 = vsub.s32 0, %v192
    %v194 = vrot.slane %v189, %v193
    %v196 = vmul.f32 %v188, %v194
    %v197 = vld [vmem:[%s3] sm:$0x1]
    %v199 = vlaneseq
    %v200 = vshrl.u32 %v199, 7
    %v201 = vsub.s32 0, %v200
    %v202 = vrot.slane %v197, %v201
    %v204 = vadd.f32 %v196, %v202
    %vm205 = vcmp.ge.f32.partialorder %v204, 0.0
    %v206 = vmul.f32 %v204, 0.01
    %v207 = vsel %vm205, %v204, %v206
    %v208 = vld [vmem:[%s4] sm:$0xff]
    %v209 = vld [vmem:[%s4 + $0x8] sm:$0xff]
    %v210 = vld [vmem:[%s4 + $0x10] sm:$0xff]
    %v211 = vld [vmem:[%s4 + $0x18] sm:$0xff]
    %v212 = vld [vmem:[%s4 + $0x20] sm:$0xff]
    %v213 = vld [vmem:[%s4 + $0x28] sm:$0xff]
    %v214 = vld [vmem:[%s4 + $0x30] sm:$0xff]
    %v215 = vld [vmem:[%s4 + $0x38] sm:$0xff]
    %v216 = vld [vmem:[%s5] sm:$0x1]
    %v218 = vlaneseq
    %v219 = vshrl.u32 %v218, 7
    %v220 = vsub.s32 0, %v219
    %v221 = vrot.slane %v216, %v220
    %vm223 = vcmask 523264
    %v225 = vsel %vm223, %v207, 0
    %227 = vmatprep.subr.mxu0 0.0
    %228 = vmatpush1.msra.mxu0 0.0
    %229 = vmatprep.subr.mxu0 0.0
    %230 = vmatpush1.msra.mxu0 0.0
    %231 = vmatprep.subr.mxu0 0.0
    %232 = vmatpush1.msra.mxu0 0.0
    %233 = vmatprep.subr.mxu0 0.0
    %234 = vmatpush1.msra.mxu0 0.0
    %235 = vmatprep.subr.mxu0 0.0
    %236 = vmatpush1.msra.mxu0 0.0
    %237 = vmatprep.subr.mxu0 0.0
    %238 = vmatpush1.msra.mxu0 0.0
    %239 = vmatprep.subr.mxu0 0.0
    %240 = vmatpush1.msra.mxu0 0.0
    %241 = vmatprep.subr.mxu0 0.0
    %242 = vmatpush1.msra.mxu0 0.0
    %243 = vmatprep.subr.mxu0 0.0
    %244 = vmatpush1.msra.mxu0 %v215
    %245 = vmatprep.subr.mxu0 0.0
    %246 = vmatpush1.msra.mxu0 %v214
    %247 = vmatprep.subr.mxu0 0.0
    %248 = vmatpush1.msra.mxu0 %v213
    %249 = vmatprep.subr.mxu0 0.0
    %250 = vmatpush1.msra.mxu0 %v212
    %251 = vmatprep.subr.mxu0 0.0
    %252 = vmatpush1.msra.mxu0 %v211
    %253 = vmatprep.subr.mxu0 0.0
    %254 = vmatpush1.msra.mxu0 %v210
    %255 = vmatprep.subr.mxu0 0.0
    %256 = vmatpush1.msra.mxu0 %v209
    %257 = vmatprep.subr.mxu0 0.0
    %258 = vmatpush1.msra.mxu0 %v208
    %259 = vmatprep.subr.mxu0 0.0
    %260 = vmatpush2.msra.mxu0 0.0
    %261 = vmatprep.subr.mxu0 0.0
    %262 = vmatpush2.msra.mxu0 0.0
    %263 = vmatprep.subr.mxu0 0.0
    %264 = vmatpush2.msra.mxu0 0.0
    %265 = vmatprep.subr.mxu0 0.0
    %266 = vmatpush2.msra.mxu0 0.0
    %267 = vmatprep.subr.mxu0 0.0
    %268 = vmatpush2.msra.mxu0 0.0
    %269 = vmatprep.subr.mxu0 0.0
    %270 = vmatpush2.msra.mxu0 0.0
    %271 = vmatprep.subr.mxu0 0.0
    %272 = vmatpush2.msra.mxu0 0.0
    %273 = vmatprep.subr.mxu0 0.0
    %274 = vmatpush2.msra.mxu0 0.0
    %275 = vmatprep.subr.mxu0 0.0
    %276 = vmatpush2.msra.mxu0 0.0
    %277 = vmatprep.subr.mxu0 0.0
    %278 = vmatpush2.msra.mxu0 0.0
    %279 = vmatprep.subr.mxu0 0.0
    %280 = vmatpush2.msra.mxu0 0.0
    %281 = vmatprep.subr.mxu0 0.0
    %282 = vmatpush2.msra.mxu0 0.0
    %283 = vmatprep.subr.mxu0 0.0
    %284 = vmatpush2.msra.mxu0 0.0
    %285 = vmatprep.subr.mxu0 0.0
    %286 = vmatpush2.msra.mxu0 0.0
    %287 = vmatprep.subr.mxu0 0.0
    %288 = vmatpush2.msra.mxu0 0.0
    %289 = vmatprep.subr.mxu0 0.0
    %290 = vmatpush2.msra.mxu0 0.0
    %291 = vmatprep.mubr.f32.mxu0 0.0
    %292 = vmatmul.mubr.f32.gmra.mxu0 %v225
    %v293 = vpop.f32.mrf.mxu0
    %v294 = vadd.f32 %v221, %v293
    %v295 = vpop.f32.mrf.mxu0
    %296 = vmatprep.mubr.f32.mxu0 0.0
    %297 = vmatmul.mubr.f32.gmra.mxu0 %v225
    %v298 = vpop.f32.mrf.mxu0
    %v299 = vadd.f32 %v221, %v298
    %v300 = vpop.f32.mrf.mxu0
    %301 = vdwg.mxu0
    %vm302 = vcmp.ge.f32.partialorder %v294, 0.0
    %vm303 = vcmp.ge.f32.partialorder %v299, 0.0
    %v304 = vmul.f32 %v294, 0.01
    %v305 = vmul.f32 %v299, 0.01
    %v306 = vsel %vm302, %v294, %v304
    %v307 = vsel %vm303, %v299, %v305
    %v308 = vld [vmem:[%s6] sm:$0xff]
    %v309 = vld [vmem:[%s6 + $0x8] sm:$0xff]
    %v310 = vld [vmem:[%s6 + $0x10] sm:$0xff]
    %v311 = vld [vmem:[%s6 + $0x18] sm:$0xff]
    %v312 = vld [vmem:[%s6 + $0x20] sm:$0xff]
    %v313 = vld [vmem:[%s6 + $0x28] sm:$0xff]
    %v314 = vld [vmem:[%s6 + $0x30] sm:$0xff]
    %v315 = vld [vmem:[%s6 + $0x38] sm:$0xff]
    %v316 = vld [vmem:[%s7] sm:$0x1]
    %v318 = vlaneseq
    %v319 = vshrl.u32 %v318, 7
    %v320 = vsub.s32 0, %v319
    %v321 = vrot.slane %v316, %v320
    %v324 = vsel %vm223, %v306, 0
    %v327 = vsel %vm223, %v307, 0
    %329 = vmatprep.subr.mxu0 0.0
    %330 = vmatpush1.msra.mxu0 0.0
    %331 = vmatprep.subr.mxu0 0.0
    %332 = vmatpush1.msra.mxu0 0.0
    %333 = vmatprep.subr.mxu0 0.0
    %334 = vmatpush1.msra.mxu0 0.0
    %335 = vmatprep.subr.mxu0 0.0
    %336 = vmatpush1.msra.mxu0 0.0
    %337 = vmatprep.subr.mxu0 0.0
    %338 = vmatpush1.msra.mxu0 0.0
    %339 = vmatprep.subr.mxu0 0.0
    %340 = vmatpush1.msra.mxu0 0.0
    %341 = vmatprep.subr.mxu0 0.0
    %342 = vmatpush1.msra.mxu0 0.0
    %343 = vmatprep.subr.mxu0 0.0
    %344 = vmatpush1.msra.mxu0 0.0
    %345 = vmatprep.subr.mxu0 0.0
    %346 = vmatpush1.msra.mxu0 %v315
    %347 = vmatprep.subr.mxu0 0.0
    %348 = vmatpush1.msra.mxu0 %v314
    %349 = vmatprep.subr.mxu0 0.0
    %350 = vmatpush1.msra.mxu0 %v313
    %351 = vmatprep.subr.mxu0 0.0
    %352 = vmatpush1.msra.mxu0 %v312
    %353 = vmatprep.subr.mxu0 0.0
    %354 = vmatpush1.msra.mxu0 %v311
    %355 = vmatprep.subr.mxu0 0.0
    %356 = vmatpush1.msra.mxu0 %v310
    %357 = vmatprep.subr.mxu0 0.0
    %358 = vmatpush1.msra.mxu0 %v309
    %359 = vmatprep.subr.mxu0 0.0
    %360 = vmatpush1.msra.mxu0 %v308
    %361 = vmatprep.subr.mxu0 0.0
    %362 = vmatpush2.msra.mxu0 0.0
    %363 = vmatprep.subr.mxu0 0.0
    %364 = vmatpush2.msra.mxu0 0.0
    %365 = vmatprep.subr.mxu0 0.0
    %366 = vmatpush2.msra.mxu0 0.0
    %367 = vmatprep.subr.mxu0 0.0
    %368 = vmatpush2.msra.mxu0 0.0
    %369 = vmatprep.subr.mxu0 0.0
    %370 = vmatpush2.msra.mxu0 0.0
    %371 = vmatprep.subr.mxu0 0.0
    %372 = vmatpush2.msra.mxu0 0.0
    %373 = vmatprep.subr.mxu0 0.0
    %374 = vmatpush2.msra.mxu0 0.0
    %375 = vmatprep.subr.mxu0 0.0
    %376 = vmatpush2.msra.mxu0 0.0
    %377 = vmatprep.subr.mxu0 0.0
    %378 = vmatpush2.msra.mxu0 0.0
    %379 = vmatprep.subr.mxu0 0.0
    %380 = vmatpush2.msra.mxu0 0.0
    %381 = vmatprep.subr.mxu0 0.0
    %382 = vmatpush2.msra.mxu0 0.0
    %383 = vmatprep.subr.mxu0 0.0
    %384 = vmatpush2.msra.mxu0 0.0
    %385 = vmatprep.subr.mxu0 0.0
    %386 = vmatpush2.msra.mxu0 0.0
    %387 = vmatprep.subr.mxu0 0.0
    %388 = vmatpush2.msra.mxu0 0.0
    %389 = vmatprep.subr.mxu0 0.0
    %390 = vmatpush2.msra.mxu0 0.0
    %391 = vmatprep.subr.mxu0 0.0
    %392 = vmatpush2.msra.mxu0 0.0
    %393 = vmatprep.mubr.f32.mxu0 0.0
    %394 = vmatmul.mubr.f32.gmra.mxu0 %v324
    %v395 = vpop.f32.mrf.mxu0
    %v396 = vadd.f32 %v321, %v395
    %v397 = vpop.f32.mrf.mxu0
    %398 = vmatprep.mubr.f32.mxu0 0.0
    %399 = vmatmul.mubr.f32.gmra.mxu0 %v327
    %v400 = vpop.f32.mrf.mxu0
    %v401 = vadd.f32 %v321, %v400
    %v402 = vpop.f32.mrf.mxu0
    %403 = vdwg.mxu0
    %vm404 = vcmp.ge.f32.partialorder %v396, 0.0
    %vm405 = vcmp.ge.f32.partialorder %v401, 0.0
    %v406 = vmul.f32 %v396, 0.01
    %v407 = vmul.f32 %v401, 0.01
    %v408 = vsel %vm404, %v396, %v406
    %v409 = vsel %vm405, %v401, %v407
    %412 = vrot.lane.b32.xlu0 %v408, 32
    %v413 = vpop.permute.xlu0 %412
    %414 = vrot.lane.b32.xlu0 %v409, 32
    %v415 = vpop.permute.xlu0 %414
    %vm418 = vcmask 261120
    %v419 = vsel %vm418, %v177, %v413
    %v420 = vsel %vm418, %v182, %v415
    %v421 = vld [vmem:[%s15] sm:$0x1]
    %v422 = vld [vmem:[%s8] sm:$0xff]
    %v423 = vld [vmem:[%s8 + $0x8] sm:$0xff]
    %v424 = vld [vmem:[%s8 + $0x10] sm:$0xff]
    %v425 = vld [vmem:[%s8 + $0x18] sm:$0xff]
    %v426 = vld [vmem:[%s8 + $0x20] sm:$0xff]
    %v427 = vld [vmem:[%s8 + $0x28] sm:$0xff]
    %v428 = vld [vmem:[%s8 + $0x30] sm:$0xff]
    %v429 = vld [vmem:[%s8 + $0x38] sm:$0xff]
    %v430 = vld [vmem:[%s9] sm:$0x1]
    %v432 = vlaneseq
    %v433 = vshrl.u32 %v432, 7
    %v434 = vsub.s32 0, %v433
    %v435 = vrot.slane %v430, %v434
    %v438 = vsel %vm223, %v419, 0
    %v441 = vsel %vm223, %v420, 0
    %443 = vmatprep.subr.mxu0 0.0
    %444 = vmatpush1.msra.mxu0 0.0
    %445 = vmatprep.subr.mxu0 0.0
    %446 = vmatpush1.msra.mxu0 0.0
    %447 = vmatprep.subr.mxu0 0.0
    %448 = vmatpush1.msra.mxu0 0.0
    %449 = vmatprep.subr.mxu0 0.0
    %450 = vmatpush1.msra.mxu0 0.0
    %451 = vmatprep.subr.mxu0 0.0
    %452 = vmatpush1.msra.mxu0 0.0
    %453 = vmatprep.subr.mxu0 0.0
    %454 = vmatpush1.msra.mxu0 0.0
    %455 = vmatprep.subr.mxu0 0.0
    %456 = vmatpush1.msra.mxu0 0.0
    %457 = vmatprep.subr.mxu0 0.0
    %458 = vmatpush1.msra.mxu0 0.0
    %459 = vmatprep.subr.mxu0 0.0
    %460 = vmatpush1.msra.mxu0 %v429
    %461 = vmatprep.subr.mxu0 0.0
    %462 = vmatpush1.msra.mxu0 %v428
    %463 = vmatprep.subr.mxu0 0.0
    %464 = vmatpush1.msra.mxu0 %v427
    %465 = vmatprep.subr.mxu0 0.0
    %466 = vmatpush1.msra.mxu0 %v426
    %467 = vmatprep.subr.mxu0 0.0
    %468 = vmatpush1.msra.mxu0 %v425
    %469 = vmatprep.subr.mxu0 0.0
    %470 = vmatpush1.msra.mxu0 %v424
    %471 = vmatprep.subr.mxu0 0.0
    %472 = vmatpush1.msra.mxu0 %v423
    %473 = vmatprep.subr.mxu0 0.0
    %474 = vmatpush1.msra.mxu0 %v422
    %475 = vmatprep.subr.mxu0 0.0
    %476 = vmatpush2.msra.mxu0 0.0
    %477 = vmatprep.subr.mxu0 0.0
    %478 = vmatpush2.msra.mxu0 0.0
    %479 = vmatprep.subr.mxu0 0.0
    %480 = vmatpush2.msra.mxu0 0.0
    %481 = vmatprep.subr.mxu0 0.0
    %482 = vmatpush2.msra.mxu0 0.0
    %483 = vmatprep.subr.mxu0 0.0
    %484 = vmatpush2.msra.mxu0 0.0
    %485 = vmatprep.subr.mxu0 0.0
    %486 = vmatpush2.msra.mxu0 0.0
    %487 = vmatprep.subr.mxu0 0.0
    %488 = vmatpush2.msra.mxu0 0.0
    %489 = vmatprep.subr.mxu0 0.0
    %490 = vmatpush2.msra.mxu0 0.0
    %491 = vmatprep.subr.mxu0 0.0
    %492 = vmatpush2.msra.mxu0 0.0
    %493 = vmatprep.subr.mxu0 0.0
    %494 = vmatpush2.msra.mxu0 0.0
    %495 = vmatprep.subr.mxu0 0.0
    %496 = vmatpush2.msra.mxu0 0.0
    %497 = vmatprep.subr.mxu0 0.0
    %498 = vmatpush2.msra.mxu0 0.0
    %499 = vmatprep.subr.mxu0 0.0
    %500 = vmatpush2.msra.mxu0 0.0
    %501 = vmatprep.subr.mxu0 0.0
    %502 = vmatpush2.msra.mxu0 0.0
    %503 = vmatprep.subr.mxu0 0.0
    %504 = vmatpush2.msra.mxu0 0.0
    %505 = vmatprep.subr.mxu0 0.0
    %506 = vmatpush2.msra.mxu0 0.0
    %507 = vmatprep.mubr.f32.mxu0 0.0
    %508 = vmatmul.mubr.f32.gmra.mxu0 %v438
    %v509 = vpop.f32.mrf.mxu0
    %v510 = vadd.f32 %v435, %v509
    %v511 = vpop.f32.mrf.mxu0
    %512 = vmatprep.mubr.f32.mxu0 0.0
    %513 = vmatmul.mubr.f32.gmra.mxu0 %v441
    %v514 = vpop.f32.mrf.mxu0
    %v515 = vadd.f32 %v435, %v514
    %v516 = vpop.f32.mrf.mxu0
    %517 = vdwg.mxu0
    %v518 = vld [vmem:[%s10] sm:$0xff]
    %v519 = vld [vmem:[%s10 + $0x8] sm:$0xff]
    %v520 = vld [vmem:[%s10 + $0x10] sm:$0xff]
    %v521 = vld [vmem:[%s10 + $0x18] sm:$0xff]
    %v522 = vld [vmem:[%s10 + $0x20] sm:$0xff]
    %v523 = vld [vmem:[%s10 + $0x28] sm:$0xff]
    %v524 = vld [vmem:[%s10 + $0x30] sm:$0xff]
    %v525 = vld [vmem:[%s10 + $0x38] sm:$0xff]
    %v526 = vld [vmem:[%s11] sm:$0x1]
    %v528 = vlaneseq
    %v529 = vshrl.u32 %v528, 7
    %v530 = vsub.s32 0, %v529
    %v531 = vrot.slane %v526, %v530
    %533 = vmatprep.subr.mxu0 0.0
    %534 = vmatpush1.msra.mxu0 0.0
    %535 = vmatprep.subr.mxu0 0.0
    %536 = vmatpush1.msra.mxu0 0.0
    %537 = vmatprep.subr.mxu0 0.0
    %538 = vmatpush1.msra.mxu0 0.0
    %539 = vmatprep.subr.mxu0 0.0
    %540 = vmatpush1.msra.mxu0 0.0
    %541 = vmatprep.subr.mxu0 0.0
    %542 = vmatpush1.msra.mxu0 0.0
    %543 = vmatprep.subr.mxu0 0.0
    %544 = vmatpush1.msra.mxu0 0.0
    %545 = vmatprep.subr.mxu0 0.0
    %546 = vmatpush1.msra.mxu0 0.0
    %547 = vmatprep.subr.mxu0 0.0
    %548 = vmatpush1.msra.mxu0 0.0
    %549 = vmatprep.subr.mxu0 0.0
    %550 = vmatpush1.msra.mxu0 %v525
    %551 = vmatprep.subr.mxu0 0.0
    %552 = vmatpush1.msra.mxu0 %v524
    %553 = vmatprep.subr.mxu0 0.0
    %554 = vmatpush1.msra.mxu0 %v523
    %555 = vmatprep.subr.mxu0 0.0
    %556 = vmatpush1.msra.mxu0 %v522
    %557 = vmatprep.subr.mxu0 0.0
    %558 = vmatpush1.msra.mxu0 %v521
    %559 = vmatprep.subr.mxu0 0.0
    %560 = vmatpush1.msra.mxu0 %v520
    %561 = vmatprep.subr.mxu0 0.0
    %562 = vmatpush1.msra.mxu0 %v519
    %563 = vmatprep.subr.mxu0 0.0
    %564 = vmatpush1.msra.mxu0 %v518
    %565 = vmatprep.subr.mxu0 0.0
    %566 = vmatpush2.msra.mxu0 0.0
    %567 = vmatprep.subr.mxu0 0.0
    %568 = vmatpush2.msra.mxu0 0.0
    %569 = vmatprep.subr.mxu0 0.0
    %570 = vmatpush2.msra.mxu0 0.0
    %571 = vmatprep.subr.mxu0 0.0
    %572 = vmatpush2.msra.mxu0 0.0
    %573 = vmatprep.subr.mxu0 0.0
    %574 = vmatpush2.msra.mxu0 0.0
    %575 = vmatprep.subr.mxu0 0.0
    %576 = vmatpush2.msra.mxu0 0.0
    %577 = vmatprep.subr.mxu0 0.0
    %578 = vmatpush2.msra.mxu0 0.0
    %579 = vmatprep.subr.mxu0 0.0
    %580 = vmatpush2.msra.mxu0 0.0
    %581 = vmatprep.subr.mxu0 0.0
    %582 = vmatpush2.msra.mxu0 0.0
    %583 = vmatprep.subr.mxu0 0.0
    %584 = vmatpush2.msra.mxu0 0.0
    %585 = vmatprep.subr.mxu0 0.0
    %586 = vmatpush2.msra.mxu0 0.0
    %587 = vmatprep.subr.mxu0 0.0
    %588 = vmatpush2.msra.mxu0 0.0
    %589 = vmatprep.subr.mxu0 0.0
    %590 = vmatpush2.msra.mxu0 0.0
    %591 = vmatprep.subr.mxu0 0.0
    %592 = vmatpush2.msra.mxu0 0.0
    %593 = vmatprep.subr.mxu0 0.0
    %594 = vmatpush2.msra.mxu0 0.0
    %595 = vmatprep.subr.mxu0 0.0
    %596 = vmatpush2.msra.mxu0 0.0
    %597 = vmatprep.mubr.f32.mxu0 0.0
    %598 = vmatmul.mubr.f32.gmra.mxu0 %v438
    %v599 = vpop.f32.mrf.mxu0
    %v600 = vadd.f32 %v531, %v599
    %v601 = vpop.f32.mrf.mxu0
    %602 = vmatprep.mubr.f32.mxu0 0.0
    %603 = vmatmul.mubr.f32.gmra.mxu0 %v441
    %v604 = vpop.f32.mrf.mxu0
    %v605 = vadd.f32 %v531, %v604
    %v606 = vpop.f32.mrf.mxu0
    %607 = vdwg.mxu0
    %v608 = vld [vmem:[%s12] sm:$0xff]
    %v609 = vld [vmem:[%s12 + $0x8] sm:$0xff]
    %v610 = vld [vmem:[%s12 + $0x10] sm:$0xff]
    %v611 = vld [vmem:[%s12 + $0x18] sm:$0xff]
    %v612 = vld [vmem:[%s12 + $0x20] sm:$0xff]
    %v613 = vld [vmem:[%s12 + $0x28] sm:$0xff]
    %v614 = vld [vmem:[%s12 + $0x30] sm:$0xff]
    %v615 = vld [vmem:[%s12 + $0x38] sm:$0xff]
    %v616 = vld [vmem:[%s13] sm:$0x1]
    %v618 = vlaneseq
    %v619 = vshrl.u32 %v618, 7
    %v620 = vsub.s32 0, %v619
    %v621 = vrot.slane %v616, %v620
    %623 = vmatprep.subr.mxu0 0.0
    %624 = vmatpush1.msra.mxu0 0.0
    %625 = vmatprep.subr.mxu0 0.0
    %626 = vmatpush1.msra.mxu0 0.0
    %627 = vmatprep.subr.mxu0 0.0
    %628 = vmatpush1.msra.mxu0 0.0
    %629 = vmatprep.subr.mxu0 0.0
    %630 = vmatpush1.msra.mxu0 0.0
    %631 = vmatprep.subr.mxu0 0.0
    %632 = vmatpush1.msra.mxu0 0.0
    %633 = vmatprep.subr.mxu0 0.0
    %634 = vmatpush1.msra.mxu0 0.0
    %635 = vmatprep.subr.mxu0 0.0
    %636 = vmatpush1.msra.mxu0 0.0
    %637 = vmatprep.subr.mxu0 0.0
    %638 = vmatpush1.msra.mxu0 0.0
    %639 = vmatprep.subr.mxu0 0.0
    %640 = vmatpush1.msra.mxu0 %v615
    %641 = vmatprep.subr.mxu0 0.0
    %642 = vmatpush1.msra.mxu0 %v614
    %643 = vmatprep.subr.mxu0 0.0
    %644 = vmatpush1.msra.mxu0 %v613
    %645 = vmatprep.subr.mxu0 0.0
    %646 = vmatpush1.msra.mxu0 %v612
    %647 = vmatprep.subr.mxu0 0.0
    %648 = vmatpush1.msra.mxu0 %v611
    %649 = vmatprep.subr.mxu0 0.0
    %650 = vmatpush1.msra.mxu0 %v610
    %651 = vmatprep.subr.mxu0 0.0
    %652 = vmatpush1.msra.mxu0 %v609
    %653 = vmatprep.subr.mxu0 0.0
    %654 = vmatpush1.msra.mxu0 %v608
    %655 = vmatprep.subr.mxu0 0.0
    %656 = vmatpush2.msra.mxu0 0.0
    %657 = vmatprep.subr.mxu0 0.0
    %658 = vmatpush2.msra.mxu0 0.0
    %659 = vmatprep.subr.mxu0 0.0
    %660 = vmatpush2.msra.mxu0 0.0
    %661 = vmatprep.subr.mxu0 0.0
    %662 = vmatpush2.msra.mxu0 0.0
    %663 = vmatprep.subr.mxu0 0.0
    %664 = vmatpush2.msra.mxu0 0.0
    %665 = vmatprep.subr.mxu0 0.0
    %666 = vmatpush2.msra.mxu0 0.0
    %667 = vmatprep.subr.mxu0 0.0
    %668 = vmatpush2.msra.mxu0 0.0
    %669 = vmatprep.subr.mxu0 0.0
    %670 = vmatpush2.msra.mxu0 0.0
    %671 = vmatprep.subr.mxu0 0.0
    %672 = vmatpush2.msra.mxu0 0.0
    %673 = vmatprep.subr.mxu0 0.0
    %674 = vmatpush2.msra.mxu0 0.0
    %675 = vmatprep.subr.mxu0 0.0
    %676 = vmatpush2.msra.mxu0 0.0
    %677 = vmatprep.subr.mxu0 0.0
    %678 = vmatpush2.msra.mxu0 0.0
    %679 = vmatprep.subr.mxu0 0.0
    %680 = vmatpush2.msra.mxu0 0.0
    %681 = vmatprep.subr.mxu0 0.0
    %682 = vmatpush2.msra.mxu0 0.0
    %683 = vmatprep.subr.mxu0 0.0
    %684 = vmatpush2.msra.mxu0 0.0
    %685 = vmatprep.subr.mxu0 0.0
    %686 = vmatpush2.msra.mxu0 0.0
    %687 = vmatprep.mubr.f32.mxu0 0.0
    %688 = vmatmul.mubr.f32.gmra.mxu0 %v438
    %v689 = vpop.f32.mrf.mxu0
    %v690 = vadd.f32 %v621, %v689
    %v691 = vpop.f32.mrf.mxu0
    %692 = vmatprep.mubr.f32.mxu0 0.0
    %693 = vmatmul.mubr.f32.gmra.mxu0 %v441
    %v694 = vpop.f32.mrf.mxu0
    %v695 = vadd.f32 %v621, %v694
    %v696 = vpop.f32.mrf.mxu0
    %697 = vdwg.mxu0
    %vm698 = vcmask 130048
    %v700 = vsel %vm698, %v510, 0
    %v703 = vsel %vm698, %v600, 0
    %705 = vmatprep.subr.mxu0 0.0
    %706 = vmatpush1.xpose.msra.mxu0 0.0
    %707 = vmatprep.subr.mxu0 0.0
    %708 = vmatpush1.xpose.msra.mxu0 0.0
    %709 = vmatprep.subr.mxu0 0.0
    %710 = vmatpush1.xpose.msra.mxu0 0.0
    %711 = vmatprep.subr.mxu0 0.0
    %712 = vmatpush1.xpose.msra.mxu0 0.0
    %713 = vmatprep.subr.mxu0 0.0
    %714 = vmatpush1.xpose.msra.mxu0 0.0
    %715 = vmatprep.subr.mxu0 0.0
    %716 = vmatpush1.xpose.msra.mxu0 0.0
    %717 = vmatprep.subr.mxu0 0.0
    %718 = vmatpush1.xpose.msra.mxu0 0.0
    %719 = vmatprep.subr.mxu0 0.0
    %720 = vmatpush1.xpose.msra.mxu0 0.0
    %721 = vmatprep.subr.mxu0 0.0
    %722 = vmatpush1.xpose.msra.mxu0 0.0
    %723 = vmatprep.subr.mxu0 0.0
    %724 = vmatpush1.xpose.msra.mxu0 0.0
    %725 = vmatprep.subr.mxu0 0.0
    %726 = vmatpush1.xpose.msra.mxu0 0.0
    %727 = vmatprep.subr.mxu0 0.0
    %728 = vmatpush1.xpose.msra.mxu0 0.0
    %729 = vmatprep.subr.mxu0 0.0
    %730 = vmatpush1.xpose.msra.mxu0 0.0
    %731 = vmatprep.subr.mxu0 0.0
    %732 = vmatpush1.xpose.msra.mxu0 0.0
    %733 = vmatprep.subr.mxu0 0.0
    %734 = vmatpush1.xpose.msra.mxu0 0.0
    %735 = vmatprep.subr.mxu0 0.0
    %736 = vmatpush1.xpose.msra.mxu0 %v703
    %737 = vmatprep.subr.mxu0 0.0
    %738 = vmatpush2.xpose.msra.mxu0 0.0
    %739 = vmatprep.subr.mxu0 0.0
    %740 = vmatpush2.xpose.msra.mxu0 0.0
    %741 = vmatprep.subr.mxu0 0.0
    %742 = vmatpush2.xpose.msra.mxu0 0.0
    %743 = vmatprep.subr.mxu0 0.0
    %744 = vmatpush2.xpose.msra.mxu0 0.0
    %745 = vmatprep.subr.mxu0 0.0
    %746 = vmatpush2.xpose.msra.mxu0 0.0
    %747 = vmatprep.subr.mxu0 0.0
    %748 = vmatpush2.xpose.msra.mxu0 0.0
    %749 = vmatprep.subr.mxu0 0.0
    %750 = vmatpush2.xpose.msra.mxu0 0.0
    %751 = vmatprep.subr.mxu0 0.0
    %752 = vmatpush2.xpose.msra.mxu0 0.0
    %753 = vmatprep.subr.mxu0 0.0
    %754 = vmatpush2.xpose.msra.mxu0 0.0
    %755 = vmatprep.subr.mxu0 0.0
    %756 = vmatpush2.xpose.msra.mxu0 0.0
    %757 = vmatprep.subr.mxu0 0.0
    %758 = vmatpush2.xpose.msra.mxu0 0.0
    %759 = vmatprep.subr.mxu0 0.0
    %760 = vmatpush2.xpose.msra.mxu0 0.0
    %761 = vmatprep.subr.mxu0 0.0
    %762 = vmatpush2.xpose.msra.mxu0 0.0
    %763 = vmatprep.subr.mxu0 0.0
    %764 = vmatpush2.xpose.msra.mxu0 0.0
    %765 = vmatprep.subr.mxu0 0.0
    %766 = vmatpush2.xpose.msra.mxu0 0.0
    %767 = vmatprep.subr.mxu0 0.0
    %768 = vmatpush2.xpose.msra.mxu0 0.0
    %769 = vmatprep.mubr.f32.mxu0 0.0
    %770 = vmatmul.mubr.f32.gmra.mxu0 %v700
    %v771 = vpop.f32.mrf.mxu0
    %v772 = vadd.f32 0.0, %v771
    %v773 = vpop.f32.mrf.mxu0
    %774 = vdwg.mxu0
    %v776 = vsel %vm698, %v515, 0
    %v779 = vsel %vm698, %v605, 0
    %781 = vmatprep.subr.mxu0 0.0
    %782 = vmatpush1.xpose.msra.mxu0 0.0
    %783 = vmatprep.subr.mxu0 0.0
    %784 = vmatpush1.xpose.msra.mxu0 0.0
    %785 = vmatprep.subr.mxu0 0.0
    %786 = vmatpush1.xpose.msra.mxu0 0.0
    %787 = vmatprep.subr.mxu0 0.0
    %788 = vmatpush1.xpose.msra.mxu0 0.0
    %789 = vmatprep.subr.mxu0 0.0
    %790 = vmatpush1.xpose.msra.mxu0 0.0
    %791 = vmatprep.subr.mxu0 0.0
    %792 = vmatpush1.xpose.msra.mxu0 0.0
    %793 = vmatprep.subr.mxu0 0.0
    %794 = vmatpush1.xpose.msra.mxu0 0.0
    %795 = vmatprep.subr.mxu0 0.0
    %796 = vmatpush1.xpose.msra.mxu0 0.0
    %797 = vmatprep.subr.mxu0 0.0
    %798 = vmatpush1.xpose.msra.mxu0 0.0
    %799 = vmatprep.subr.mxu0 0.0
    %800 = vmatpush1.xpose.msra.mxu0 0.0
    %801 = vmatprep.subr.mxu0 0.0
    %802 = vmatpush1.xpose.msra.mxu0 0.0
    %803 = vmatprep.subr.mxu0 0.0
    %804 = vmatpush1.xpose.msra.mxu0 0.0
    %805 = vmatprep.subr.mxu0 0.0
    %806 = vmatpush1.xpose.msra.mxu0 0.0
    %807 = vmatprep.subr.mxu0 0.0
    %808 = vmatpush1.xpose.msra.mxu0 0.0
    %809 = vmatprep.subr.mxu0 0.0
    %810 = vmatpush1.xpose.msra.mxu0 0.0
    %811 = vmatprep.subr.mxu0 0.0
    %812 = vmatpush1.xpose.msra.mxu0 %v779
    %813 = vmatprep.subr.mxu0 0.0
    %814 = vmatpush2.xpose.msra.mxu0 0.0
    %815 = vmatprep.subr.mxu0 0.0
    %816 = vmatpush2.xpose.msra.mxu0 0.0
    %817 = vmatprep.subr.mxu0 0.0
    %818 = vmatpush2.xpose.msra.mxu0 0.0
    %819 = vmatprep.subr.mxu0 0.0
    %820 = vmatpush2.xpose.msra.mxu0 0.0
    %821 = vmatprep.subr.mxu0 0.0
    %822 = vmatpush2.xpose.msra.mxu0 0.0
    %823 = vmatprep.subr.mxu0 0.0
    %824 = vmatpush2.xpose.msra.mxu0 0.0
    %825 = vmatprep.subr.mxu0 0.0
    %826 = vmatpush2.xpose.msra.mxu0 0.0
    %827 = vmatprep.subr.mxu0 0.0
    %828 = vmatpush2.xpose.msra.mxu0 0.0
    %829 = vmatprep.subr.mxu0 0.0
    %830 = vmatpush2.xpose.msra.mxu0 0.0
    %831 = vmatprep.subr.mxu0 0.0
    %832 = vmatpush2.xpose.msra.mxu0 0.0
    %833 = vmatprep.subr.mxu0 0.0
    %834 = vmatpush2.xpose.msra.mxu0 0.0
    %835 = vmatprep.subr.mxu0 0.0
    %836 = vmatpush2.xpose.msra.mxu0 0.0
    %837 = vmatprep.subr.mxu0 0.0
    %838 = vmatpush2.xpose.msra.mxu0 0.0
    %839 = vmatprep.subr.mxu0 0.0
    %840 = vmatpush2.xpose.msra.mxu0 0.0
    %841 = vmatprep.subr.mxu0 0.0
    %842 = vmatpush2.xpose.msra.mxu0 0.0
    %843 = vmatprep.subr.mxu0 0.0
    %844 = vmatpush2.xpose.msra.mxu0 0.0
    %845 = vmatprep.mubr.f32.mxu0 0.0
    %846 = vmatmul.mubr.f32.gmra.mxu0 %v776
    %v847 = vpop.f32.mrf.mxu0
    %v848 = vadd.f32 0.0, %v847
    %v849 = vpop.f32.mrf.mxu0
    %850 = vdwg.mxu0
    %vm851 = vcmask 64512
    %v852 = vsel %vm851, %v772, -inf
    %853 = vmax.xlane.f32.xlu0 %v852
    %v854 = vpop.xlane.xlu0 %853
    %v855 = vsel %vm851, %v848, -inf
    %856 = vmax.xlane.f32.xlu0 %v855
    %v857 = vpop.xlane.xlu0 %856
    %v858 = vsub.f32 %v772, %v854
    %v859 = vsub.f32 %v848, %v857
    %v860 = vmul.f32 %v858, 1.442695
    %v861 = vpow.pop %v860
    %v862 = vmul.f32 %v859, 1.442695
    %v863 = vpow.pop %v862
    %v864 = vsel %vm851, %v861, 0.0
    %865 = vadd.xlane.f32.xlu0 %v864
    %v866 = vpop.xlane.xlu0 %865
    %v867 = vsel %vm851, %v863, 0.0
    %868 = vadd.xlane.f32.xlu0 %v867
    %v869 = vpop.xlane.xlu0 %868
    %v870 = vrcp.pop %v866
    %v871 = vmul.f32 %v861, %v870
    %v872 = vrcp.pop %v869
    %v873 = vmul.f32 %v863, %v872
    %v875 = vsel %vm851, %v871, 0
    %877 = vmatprep.subr.mxu0 0.0
    %878 = vmatpush1.msra.mxu0 0.0
    %879 = vmatprep.subr.mxu0 0.0
    %880 = vmatpush1.msra.mxu0 0.0
    %881 = vmatprep.subr.mxu0 0.0
    %882 = vmatpush1.msra.mxu0 0.0
    %883 = vmatprep.subr.mxu0 0.0
    %884 = vmatpush1.msra.mxu0 0.0
    %885 = vmatprep.subr.mxu0 0.0
    %886 = vmatpush1.msra.mxu0 0.0
    %887 = vmatprep.subr.mxu0 0.0
    %888 = vmatpush1.msra.mxu0 0.0
    %889 = vmatprep.subr.mxu0 0.0
    %890 = vmatpush1.msra.mxu0 0.0
    %891 = vmatprep.subr.mxu0 0.0
    %892 = vmatpush1.msra.mxu0 0.0
    %893 = vmatprep.subr.mxu0 0.0
    %894 = vmatpush1.msra.mxu0 0.0
    %895 = vmatprep.subr.mxu0 0.0
    %896 = vmatpush1.msra.mxu0 0.0
    %897 = vmatprep.subr.mxu0 0.0
    %898 = vmatpush1.msra.mxu0 0.0
    %899 = vmatprep.subr.mxu0 0.0
    %900 = vmatpush1.msra.mxu0 0.0
    %901 = vmatprep.subr.mxu0 0.0
    %902 = vmatpush1.msra.mxu0 0.0
    %903 = vmatprep.subr.mxu0 0.0
    %904 = vmatpush1.msra.mxu0 0.0
    %905 = vmatprep.subr.mxu0 0.0
    %906 = vmatpush1.msra.mxu0 0.0
    %907 = vmatprep.subr.mxu0 0.0
    %908 = vmatpush1.msra.mxu0 %v690
    %909 = vmatprep.subr.mxu0 0.0
    %910 = vmatpush2.msra.mxu0 0.0
    %911 = vmatprep.subr.mxu0 0.0
    %912 = vmatpush2.msra.mxu0 0.0
    %913 = vmatprep.subr.mxu0 0.0
    %914 = vmatpush2.msra.mxu0 0.0
    %915 = vmatprep.subr.mxu0 0.0
    %916 = vmatpush2.msra.mxu0 0.0
    %917 = vmatprep.subr.mxu0 0.0
    %918 = vmatpush2.msra.mxu0 0.0
    %919 = vmatprep.subr.mxu0 0.0
    %920 = vmatpush2.msra.mxu0 0.0
    %921 = vmatprep.subr.mxu0 0.0
    %922 = vmatpush2.msra.mxu0 0.0
    %923 = vmatprep.subr.mxu0 0.0
    %924 = vmatpush2.msra.mxu0 0.0
    %925 = vmatprep.subr.mxu0 0.0
    %926 = vmatpush2.msra.mxu0 0.0
    %927 = vmatprep.subr.mxu0 0.0
    %928 = vmatpush2.msra.mxu0 0.0
    %929 = vmatprep.subr.mxu0 0.0
    %930 = vmatpush2.msra.mxu0 0.0
    %931 = vmatprep.subr.mxu0 0.0
    %932 = vmatpush2.msra.mxu0 0.0
    %933 = vmatprep.subr.mxu0 0.0
    %934 = vmatpush2.msra.mxu0 0.0
    %935 = vmatprep.subr.mxu0 0.0
    %936 = vmatpush2.msra.mxu0 0.0
    %937 = vmatprep.subr.mxu0 0.0
    %938 = vmatpush2.msra.mxu0 0.0
    %939 = vmatprep.subr.mxu0 0.0
    %940 = vmatpush2.msra.mxu0 0.0
    %941 = vmatprep.mubr.f32.mxu0 0.0
    %942 = vmatmul.mubr.f32.gmra.mxu0 %v875
    %v943 = vpop.f32.mrf.mxu0
    %v944 = vadd.f32 0.0, %v943
    %v945 = vpop.f32.mrf.mxu0
    %946 = vdwg.mxu0
    %v948 = vsel %vm851, %v873, 0
    %950 = vmatprep.subr.mxu0 0.0
    %951 = vmatpush1.msra.mxu0 0.0
    %952 = vmatprep.subr.mxu0 0.0
    %953 = vmatpush1.msra.mxu0 0.0
    %954 = vmatprep.subr.mxu0 0.0
    %955 = vmatpush1.msra.mxu0 0.0
    %956 = vmatprep.subr.mxu0 0.0
    %957 = vmatpush1.msra.mxu0 0.0
    %958 = vmatprep.subr.mxu0 0.0
    %959 = vmatpush1.msra.mxu0 0.0
    %960 = vmatprep.subr.mxu0 0.0
    %961 = vmatpush1.msra.mxu0 0.0
    %962 = vmatprep.subr.mxu0 0.0
    %963 = vmatpush1.msra.mxu0 0.0
    %964 = vmatprep.subr.mxu0 0.0
    %965 = vmatpush1.msra.mxu0 0.0
    %966 = vmatprep.subr.mxu0 0.0
    %967 = vmatpush1.msra.mxu0 0.0
    %968 = vmatprep.subr.mxu0 0.0
    %969 = vmatpush1.msra.mxu0 0.0
    %970 = vmatprep.subr.mxu0 0.0
    %971 = vmatpush1.msra.mxu0 0.0
    %972 = vmatprep.subr.mxu0 0.0
    %973 = vmatpush1.msra.mxu0 0.0
    %974 = vmatprep.subr.mxu0 0.0
    %975 = vmatpush1.msra.mxu0 0.0
    %976 = vmatprep.subr.mxu0 0.0
    %977 = vmatpush1.msra.mxu0 0.0
    %978 = vmatprep.subr.mxu0 0.0
    %979 = vmatpush1.msra.mxu0 0.0
    %980 = vmatprep.subr.mxu0 0.0
    %981 = vmatpush1.msra.mxu0 %v695
    %982 = vmatprep.subr.mxu0 0.0
    %983 = vmatpush2.msra.mxu0 0.0
    %984 = vmatprep.subr.mxu0 0.0
    %985 = vmatpush2.msra.mxu0 0.0
    %986 = vmatprep.subr.mxu0 0.0
    %987 = vmatpush2.msra.mxu0 0.0
    %988 = vmatprep.subr.mxu0 0.0
    %989 = vmatpush2.msra.mxu0 0.0
    %990 = vmatprep.subr.mxu0 0.0
    %991 = vmatpush2.msra.mxu0 0.0
    %992 = vmatprep.subr.mxu0 0.0
    %993 = vmatpush2.msra.mxu0 0.0
    %994 = vmatprep.subr.mxu0 0.0
    %995 = vmatpush2.msra.mxu0 0.0
    %996 = vmatprep.subr.mxu0 0.0
    %997 = vmatpush2.msra.mxu0 0.0
    %998 = vmatprep.subr.mxu0 0.0
    %999 = vmatpush2.msra.mxu0 0.0
    %1000 = vmatprep.subr.mxu0 0.0
    %1001 = vmatpush2.msra.mxu0 0.0
    %1002 = vmatprep.subr.mxu0 0.0
    %1003 = vmatpush2.msra.mxu0 0.0
    %1004 = vmatprep.subr.mxu0 0.0
    %1005 = vmatpush2.msra.mxu0 0.0
    %1006 = vmatprep.subr.mxu0 0.0
    %1007 = vmatpush2.msra.mxu0 0.0
    %1008 = vmatprep.subr.mxu0 0.0
    %1009 = vmatpush2.msra.mxu0 0.0
    %1010 = vmatprep.subr.mxu0 0.0
    %1011 = vmatpush2.msra.mxu0 0.0
    %1012 = vmatprep.subr.mxu0 0.0
    %1013 = vmatpush2.msra.mxu0 0.0
    %1014 = vmatprep.mubr.f32.mxu0 0.0
    %1015 = vmatmul.mubr.f32.gmra.mxu0 %v948
    %v1016 = vpop.f32.mrf.mxu0
    %v1017 = vadd.f32 0.0, %v1016
    %v1018 = vpop.f32.mrf.mxu0
    %1019 = vdwg.mxu0
    %v1020 = vld [vmem:[%s14] sm:$0xff]
    %v1021 = vld [vmem:[%s14 + $0x8] sm:$0xff]
    %v1023 = vsel %vm698, %v944, 0
    %v1026 = vsel %vm698, %v1017, 0
    %1028 = vmatprep.subr.mxu0 0.0
    %1029 = vmatpush1.msra.mxu0 0.0
    %1030 = vmatprep.subr.mxu0 0.0
    %1031 = vmatpush1.msra.mxu0 0.0
    %1032 = vmatprep.subr.mxu0 0.0
    %1033 = vmatpush1.msra.mxu0 0.0
    %1034 = vmatprep.subr.mxu0 0.0
    %1035 = vmatpush1.msra.mxu0 0.0
    %1036 = vmatprep.subr.mxu0 0.0
    %1037 = vmatpush1.msra.mxu0 0.0
    %1038 = vmatprep.subr.mxu0 0.0
    %1039 = vmatpush1.msra.mxu0 0.0
    %1040 = vmatprep.subr.mxu0 0.0
    %1041 = vmatpush1.msra.mxu0 0.0
    %1042 = vmatprep.subr.mxu0 0.0
    %1043 = vmatpush1.msra.mxu0 0.0
    %1044 = vmatprep.subr.mxu0 0.0
    %1045 = vmatpush1.msra.mxu0 0.0
    %1046 = vmatprep.subr.mxu0 0.0
    %1047 = vmatpush1.msra.mxu0 0.0
    %1048 = vmatprep.subr.mxu0 0.0
    %1049 = vmatpush1.msra.mxu0 0.0
    %1050 = vmatprep.subr.mxu0 0.0
    %1051 = vmatpush1.msra.mxu0 0.0
    %1052 = vmatprep.subr.mxu0 0.0
    %1053 = vmatpush1.msra.mxu0 0.0
    %1054 = vmatprep.subr.mxu0 0.0
    %1055 = vmatpush1.msra.mxu0 0.0
    %1056 = vmatprep.subr.mxu0 0.0
    %1057 = vmatpush1.msra.mxu0 %v1021
    %1058 = vmatprep.subr.mxu0 0.0
    %1059 = vmatpush1.msra.mxu0 %v1020
    %1060 = vmatprep.subr.mxu0 0.0
    %1061 = vmatpush2.msra.mxu0 0.0
    %1062 = vmatprep.subr.mxu0 0.0
    %1063 = vmatpush2.msra.mxu0 0.0
    %1064 = vmatprep.subr.mxu0 0.0
    %1065 = vmatpush2.msra.mxu0 0.0
    %1066 = vmatprep.subr.mxu0 0.0
    %1067 = vmatpush2.msra.mxu0 0.0
    %1068 = vmatprep.subr.mxu0 0.0
    %1069 = vmatpush2.msra.mxu0 0.0
    %1070 = vmatprep.subr.mxu0 0.0
    %1071 = vmatpush2.msra.mxu0 0.0
    %1072 = vmatprep.subr.mxu0 0.0
    %1073 = vmatpush2.msra.mxu0 0.0
    %1074 = vmatprep.subr.mxu0 0.0
    %1075 = vmatpush2.msra.mxu0 0.0
    %1076 = vmatprep.subr.mxu0 0.0
    %1077 = vmatpush2.msra.mxu0 0.0
    %1078 = vmatprep.subr.mxu0 0.0
    %1079 = vmatpush2.msra.mxu0 0.0
    %1080 = vmatprep.subr.mxu0 0.0
    %1081 = vmatpush2.msra.mxu0 0.0
    %1082 = vmatprep.subr.mxu0 0.0
    %1083 = vmatpush2.msra.mxu0 0.0
    %1084 = vmatprep.subr.mxu0 0.0
    %1085 = vmatpush2.msra.mxu0 0.0
    %1086 = vmatprep.subr.mxu0 0.0
    %1087 = vmatpush2.msra.mxu0 0.0
    %1088 = vmatprep.subr.mxu0 0.0
    %1089 = vmatpush2.msra.mxu0 0.0
    %1090 = vmatprep.subr.mxu0 0.0
    %1091 = vmatpush2.msra.mxu0 0.0
    %1092 = vmatprep.mubr.f32.mxu0 0.0
    %1093 = vmatmul.mubr.f32.gmra.mxu0 %v1023
    %v1094 = vpop.f32.mrf.mxu0
    %v1095 = vadd.f32 0.0, %v1094
    %v1096 = vpop.f32.mrf.mxu0
    %1097 = vmatprep.mubr.f32.mxu0 0.0
    %1098 = vmatmul.mubr.f32.gmra.mxu0 %v1026
    %v1099 = vpop.f32.mrf.mxu0
    %v1100 = vadd.f32 0.0, %v1099
    %v1101 = vpop.f32.mrf.mxu0
    %1102 = vdwg.mxu0
    %v1104 = vlaneseq
    %v1105 = vshrl.u32 %v1104, 7
    %v1106 = vsub.s32 0, %v1105
    %v1107 = vrot.slane %v421, %v1106
    %v1109 = vadd.f32 %v1107, %v1095
    %v1110 = vadd.f32 %v1107, %v1100
    %s1111 = scalar_lea.vmem %s8, 64
    %v1112 = vld [vmem:[%s1111] sm:$0xff]
    %v1113 = vld [vmem:[%s1111 + $0x8] sm:$0xff]
    %v1114 = vld [vmem:[%s1111 + $0x10] sm:$0xff]
    %v1115 = vld [vmem:[%s1111 + $0x18] sm:$0xff]
    %v1116 = vld [vmem:[%s1111 + $0x20] sm:$0xff]
    %v1117 = vld [vmem:[%s1111 + $0x28] sm:$0xff]
    %v1118 = vld [vmem:[%s1111 + $0x30] sm:$0xff]
    %v1119 = vld [vmem:[%s1111 + $0x38] sm:$0xff]
    %s1120 = scalar_lea.vmem %s9, 1
    %v1121 = vld [vmem:[%s1120] sm:$0x1]
    %v1123 = vlaneseq
    %v1124 = vshrl.u32 %v1123, 7
    %v1125 = vsub.s32 0, %v1124
    %v1126 = vrot.slane %v1121, %v1125
    %1128 = vmatprep.subr.mxu0 0.0
    %1129 = vmatpush1.msra.mxu0 0.0
    %1130 = vmatprep.subr.mxu0 0.0
    %1131 = vmatpush1.msra.mxu0 0.0
    %1132 = vmatprep.subr.mxu0 0.0
    %1133 = vmatpush1.msra.mxu0 0.0
    %1134 = vmatprep.subr.mxu0 0.0
    %1135 = vmatpush1.msra.mxu0 0.0
    %1136 = vmatprep.subr.mxu0 0.0
    %1137 = vmatpush1.msra.mxu0 0.0
    %1138 = vmatprep.subr.mxu0 0.0
    %1139 = vmatpush1.msra.mxu0 0.0
    %1140 = vmatprep.subr.mxu0 0.0
    %1141 = vmatpush1.msra.mxu0 0.0
    %1142 = vmatprep.subr.mxu0 0.0
    %1143 = vmatpush1.msra.mxu0 0.0
    %1144 = vmatprep.subr.mxu0 0.0
    %1145 = vmatpush1.msra.mxu0 %v1119
    %1146 = vmatprep.subr.mxu0 0.0
    %1147 = vmatpush1.msra.mxu0 %v1118
    %1148 = vmatprep.subr.mxu0 0.0
    %1149 = vmatpush1.msra.mxu0 %v1117
    %1150 = vmatprep.subr.mxu0 0.0
    %1151 = vmatpush1.msra.mxu0 %v1116
    %1152 = vmatprep.subr.mxu0 0.0
    %1153 = vmatpush1.msra.mxu0 %v1115
    %1154 = vmatprep.subr.mxu0 0.0
    %1155 = vmatpush1.msra.mxu0 %v1114
    %1156 = vmatprep.subr.mxu0 0.0
    %1157 = vmatpush1.msra.mxu0 %v1113
    %1158 = vmatprep.subr.mxu0 0.0
    %1159 = vmatpush1.msra.mxu0 %v1112
    %1160 = vmatprep.subr.mxu0 0.0
    %1161 = vmatpush2.msra.mxu0 0.0
    %1162 = vmatprep.subr.mxu0 0.0
    %1163 = vmatpush2.msra.mxu0 0.0
    %1164 = vmatprep.subr.mxu0 0.0
    %1165 = vmatpush2.msra.mxu0 0.0
    %1166 = vmatprep.subr.mxu0 0.0
    %1167 = vmatpush2.msra.mxu0 0.0
    %1168 = vmatprep.subr.mxu0 0.0
    %1169 = vmatpush2.msra.mxu0 0.0
    %1170 = vmatprep.subr.mxu0 0.0
    %1171 = vmatpush2.msra.mxu0 0.0
    %1172 = vmatprep.subr.mxu0 0.0
    %1173 = vmatpush2.msra.mxu0 0.0
    %1174 = vmatprep.subr.mxu0 0.0
    %1175 = vmatpush2.msra.mxu0 0.0
    %1176 = vmatprep.subr.mxu0 0.0
    %1177 = vmatpush2.msra.mxu0 0.0
    %1178 = vmatprep.subr.mxu0 0.0
    %1179 = vmatpush2.msra.mxu0 0.0
    %1180 = vmatprep.subr.mxu0 0.0
    %1181 = vmatpush2.msra.mxu0 0.0
    %1182 = vmatprep.subr.mxu0 0.0
    %1183 = vmatpush2.msra.mxu0 0.0
    %1184 = vmatprep.subr.mxu0 0.0
    %1185 = vmatpush2.msra.mxu0 0.0
    %1186 = vmatprep.subr.mxu0 0.0
    %1187 = vmatpush2.msra.mxu0 0.0
    %1188 = vmatprep.subr.mxu0 0.0
    %1189 = vmatpush2.msra.mxu0 0.0
    %1190 = vmatprep.subr.mxu0 0.0
    %1191 = vmatpush2.msra.mxu0 0.0
    %1192 = vmatprep.mubr.f32.mxu0 0.0
    %1193 = vmatmul.mubr.f32.gmra.mxu0 %v438
    %v1194 = vpop.f32.mrf.mxu0
    %v1195 = vadd.f32 %v1126, %v1194
    %v1196 = vpop.f32.mrf.mxu0
    %1197 = vmatprep.mubr.f32.mxu0 0.0
    %1198 = vmatmul.mubr.f32.gmra.mxu0 %v441
    %v1199 = vpop.f32.mrf.mxu0
    %v1200 = vadd.f32 %v1126, %v1199
    %v1201 = vpop.f32.mrf.mxu0
    %1202 = vdwg.mxu0
    %s1203 = scalar_lea.vmem %s10, 64
    %v1204 = vld [vmem:[%s1203] sm:$0xff]
    %v1205 = vld [vmem:[%s1203 + $0x8] sm:$0xff]
    %v1206 = vld [vmem:[%s1203 + $0x10] sm:$0xff]
    %v1207 = vld [vmem:[%s1203 + $0x18] sm:$0xff]
    %v1208 = vld [vmem:[%s1203 + $0x20] sm:$0xff]
    %v1209 = vld [vmem:[%s1203 + $0x28] sm:$0xff]
    %v1210 = vld [vmem:[%s1203 + $0x30] sm:$0xff]
    %v1211 = vld [vmem:[%s1203 + $0x38] sm:$0xff]
    %s1212 = scalar_lea.vmem %s11, 1
    %v1213 = vld [vmem:[%s1212] sm:$0x1]
    %v1215 = vlaneseq
    %v1216 = vshrl.u32 %v1215, 7
    %v1217 = vsub.s32 0, %v1216
    %v1218 = vrot.slane %v1213, %v1217
    %1220 = vmatprep.subr.mxu0 0.0
    %1221 = vmatpush1.msra.mxu0 0.0
    %1222 = vmatprep.subr.mxu0 0.0
    %1223 = vmatpush1.msra.mxu0 0.0
    %1224 = vmatprep.subr.mxu0 0.0
    %1225 = vmatpush1.msra.mxu0 0.0
    %1226 = vmatprep.subr.mxu0 0.0
    %1227 = vmatpush1.msra.mxu0 0.0
    %1228 = vmatprep.subr.mxu0 0.0
    %1229 = vmatpush1.msra.mxu0 0.0
    %1230 = vmatprep.subr.mxu0 0.0
    %1231 = vmatpush1.msra.mxu0 0.0
    %1232 = vmatprep.subr.mxu0 0.0
    %1233 = vmatpush1.msra.mxu0 0.0
    %1234 = vmatprep.subr.mxu0 0.0
    %1235 = vmatpush1.msra.mxu0 0.0
    %1236 = vmatprep.subr.mxu0 0.0
    %1237 = vmatpush1.msra.mxu0 %v1211
    %1238 = vmatprep.subr.mxu0 0.0
    %1239 = vmatpush1.msra.mxu0 %v1210
    %1240 = vmatprep.subr.mxu0 0.0
    %1241 = vmatpush1.msra.mxu0 %v1209
    %1242 = vmatprep.subr.mxu0 0.0
    %1243 = vmatpush1.msra.mxu0 %v1208
    %1244 = vmatprep.subr.mxu0 0.0
    %1245 = vmatpush1.msra.mxu0 %v1207
    %1246 = vmatprep.subr.mxu0 0.0
    %1247 = vmatpush1.msra.mxu0 %v1206
    %1248 = vmatprep.subr.mxu0 0.0
    %1249 = vmatpush1.msra.mxu0 %v1205
    %1250 = vmatprep.subr.mxu0 0.0
    %1251 = vmatpush1.msra.mxu0 %v1204
    %1252 = vmatprep.subr.mxu0 0.0
    %1253 = vmatpush2.msra.mxu0 0.0
    %1254 = vmatprep.subr.mxu0 0.0
    %1255 = vmatpush2.msra.mxu0 0.0
    %1256 = vmatprep.subr.mxu0 0.0
    %1257 = vmatpush2.msra.mxu0 0.0
    %1258 = vmatprep.subr.mxu0 0.0
    %1259 = vmatpush2.msra.mxu0 0.0
    %1260 = vmatprep.subr.mxu0 0.0
    %1261 = vmatpush2.msra.mxu0 0.0
    %1262 = vmatprep.subr.mxu0 0.0
    %1263 = vmatpush2.msra.mxu0 0.0
    %1264 = vmatprep.subr.mxu0 0.0
    %1265 = vmatpush2.msra.mxu0 0.0
    %1266 = vmatprep.subr.mxu0 0.0
    %1267 = vmatpush2.msra.mxu0 0.0
    %1268 = vmatprep.subr.mxu0 0.0
    %1269 = vmatpush2.msra.mxu0 0.0
    %1270 = vmatprep.subr.mxu0 0.0
    %1271 = vmatpush2.msra.mxu0 0.0
    %1272 = vmatprep.subr.mxu0 0.0
    %1273 = vmatpush2.msra.mxu0 0.0
    %1274 = vmatprep.subr.mxu0 0.0
    %1275 = vmatpush2.msra.mxu0 0.0
    %1276 = vmatprep.subr.mxu0 0.0
    %1277 = vmatpush2.msra.mxu0 0.0
    %1278 = vmatprep.subr.mxu0 0.0
    %1279 = vmatpush2.msra.mxu0 0.0
    %1280 = vmatprep.subr.mxu0 0.0
    %1281 = vmatpush2.msra.mxu0 0.0
    %1282 = vmatprep.subr.mxu0 0.0
    %1283 = vmatpush2.msra.mxu0 0.0
    %1284 = vmatprep.mubr.f32.mxu0 0.0
    %1285 = vmatmul.mubr.f32.gmra.mxu0 %v438
    %v1286 = vpop.f32.mrf.mxu0
    %v1287 = vadd.f32 %v1218, %v1286
    %v1288 = vpop.f32.mrf.mxu0
    %1289 = vmatprep.mubr.f32.mxu0 0.0
    %1290 = vmatmul.mubr.f32.gmra.mxu0 %v441
    %v1291 = vpop.f32.mrf.mxu0
    %v1292 = vadd.f32 %v1218, %v1291
    %v1293 = vpop.f32.mrf.mxu0
    %1294 = vdwg.mxu0
    %s1295 = scalar_lea.vmem %s12, 64
    %v1296 = vld [vmem:[%s1295] sm:$0xff]
    %v1297 = vld [vmem:[%s1295 + $0x8] sm:$0xff]
    %v1298 = vld [vmem:[%s1295 + $0x10] sm:$0xff]
    %v1299 = vld [vmem:[%s1295 + $0x18] sm:$0xff]
    %v1300 = vld [vmem:[%s1295 + $0x20] sm:$0xff]
    %v1301 = vld [vmem:[%s1295 + $0x28] sm:$0xff]
    %v1302 = vld [vmem:[%s1295 + $0x30] sm:$0xff]
    %v1303 = vld [vmem:[%s1295 + $0x38] sm:$0xff]
    %s1304 = scalar_lea.vmem %s13, 1
    %v1305 = vld [vmem:[%s1304] sm:$0x1]
    %v1307 = vlaneseq
    %v1308 = vshrl.u32 %v1307, 7
    %v1309 = vsub.s32 0, %v1308
    %v1310 = vrot.slane %v1305, %v1309
    %1312 = vmatprep.subr.mxu0 0.0
    %1313 = vmatpush1.msra.mxu0 0.0
    %1314 = vmatprep.subr.mxu0 0.0
    %1315 = vmatpush1.msra.mxu0 0.0
    %1316 = vmatprep.subr.mxu0 0.0
    %1317 = vmatpush1.msra.mxu0 0.0
    %1318 = vmatprep.subr.mxu0 0.0
    %1319 = vmatpush1.msra.mxu0 0.0
    %1320 = vmatprep.subr.mxu0 0.0
    %1321 = vmatpush1.msra.mxu0 0.0
    %1322 = vmatprep.subr.mxu0 0.0
    %1323 = vmatpush1.msra.mxu0 0.0
    %1324 = vmatprep.subr.mxu0 0.0
    %1325 = vmatpush1.msra.mxu0 0.0
    %1326 = vmatprep.subr.mxu0 0.0
    %1327 = vmatpush1.msra.mxu0 0.0
    %1328 = vmatprep.subr.mxu0 0.0
    %1329 = vmatpush1.msra.mxu0 %v1303
    %1330 = vmatprep.subr.mxu0 0.0
    %1331 = vmatpush1.msra.mxu0 %v1302
    %1332 = vmatprep.subr.mxu0 0.0
    %1333 = vmatpush1.msra.mxu0 %v1301
    %1334 = vmatprep.subr.mxu0 0.0
    %1335 = vmatpush1.msra.mxu0 %v1300
    %1336 = vmatprep.subr.mxu0 0.0
    %1337 = vmatpush1.msra.mxu0 %v1299
    %1338 = vmatprep.subr.mxu0 0.0
    %1339 = vmatpush1.msra.mxu0 %v1298
    %1340 = vmatprep.subr.mxu0 0.0
    %1341 = vmatpush1.msra.mxu0 %v1297
    %1342 = vmatprep.subr.mxu0 0.0
    %1343 = vmatpush1.msra.mxu0 %v1296
    %1344 = vmatprep.subr.mxu0 0.0
    %1345 = vmatpush2.msra.mxu0 0.0
    %1346 = vmatprep.subr.mxu0 0.0
    %1347 = vmatpush2.msra.mxu0 0.0
    %1348 = vmatprep.subr.mxu0 0.0
    %1349 = vmatpush2.msra.mxu0 0.0
    %1350 = vmatprep.subr.mxu0 0.0
    %1351 = vmatpush2.msra.mxu0 0.0
    %1352 = vmatprep.subr.mxu0 0.0
    %1353 = vmatpush2.msra.mxu0 0.0
    %1354 = vmatprep.subr.mxu0 0.0
    %1355 = vmatpush2.msra.mxu0 0.0
    %1356 = vmatprep.subr.mxu0 0.0
    %1357 = vmatpush2.msra.mxu0 0.0
    %1358 = vmatprep.subr.mxu0 0.0
    %1359 = vmatpush2.msra.mxu0 0.0
    %1360 = vmatprep.subr.mxu0 0.0
    %1361 = vmatpush2.msra.mxu0 0.0
    %1362 = vmatprep.subr.mxu0 0.0
    %1363 = vmatpush2.msra.mxu0 0.0
    %1364 = vmatprep.subr.mxu0 0.0
    %1365 = vmatpush2.msra.mxu0 0.0
    %1366 = vmatprep.subr.mxu0 0.0
    %1367 = vmatpush2.msra.mxu0 0.0
    %1368 = vmatprep.subr.mxu0 0.0
    %1369 = vmatpush2.msra.mxu0 0.0
    %1370 = vmatprep.subr.mxu0 0.0
    %1371 = vmatpush2.msra.mxu0 0.0
    %1372 = vmatprep.subr.mxu0 0.0
    %1373 = vmatpush2.msra.mxu0 0.0
    %1374 = vmatprep.subr.mxu0 0.0
    %1375 = vmatpush2.msra.mxu0 0.0
    %1376 = vmatprep.mubr.f32.mxu0 0.0
    %1377 = vmatmul.mubr.f32.gmra.mxu0 %v438
    %v1378 = vpop.f32.mrf.mxu0
    %v1379 = vadd.f32 %v1310, %v1378
    %v1380 = vpop.f32.mrf.mxu0
    %1381 = vmatprep.mubr.f32.mxu0 0.0
    %1382 = vmatmul.mubr.f32.gmra.mxu0 %v441
    %v1383 = vpop.f32.mrf.mxu0
    %v1384 = vadd.f32 %v1310, %v1383
    %v1385 = vpop.f32.mrf.mxu0
    %1386 = vdwg.mxu0
    %v1388 = vsel %vm698, %v1195, 0
    %v1391 = vsel %vm698, %v1287, 0
    %1393 = vmatprep.subr.mxu0 0.0
    %1394 = vmatpush1.xpose.msra.mxu0 0.0
    %1395 = vmatprep.subr.mxu0 0.0
    %1396 = vmatpush1.xpose.msra.mxu0 0.0
    %1397 = vmatprep.subr.mxu0 0.0
    %1398 = vmatpush1.xpose.msra.mxu0 0.0
    %1399 = vmatprep.subr.mxu0 0.0
    %1400 = vmatpush1.xpose.msra.mxu0 0.0
    %1401 = vmatprep.subr.mxu0 0.0
    %1402 = vmatpush1.xpose.msra.mxu0 0.0
    %1403 = vmatprep.subr.mxu0 0.0
    %1404 = vmatpush1.xpose.msra.mxu0 0.0
    %1405 = vmatprep.subr.mxu0 0.0
    %1406 = vmatpush1.xpose.msra.mxu0 0.0
    %1407 = vmatprep.subr.mxu0 0.0
    %1408 = vmatpush1.xpose.msra.mxu0 0.0
    %1409 = vmatprep.subr.mxu0 0.0
    %1410 = vmatpush1.xpose.msra.mxu0 0.0
    %1411 = vmatprep.subr.mxu0 0.0
    %1412 = vmatpush1.xpose.msra.mxu0 0.0
    %1413 = vmatprep.subr.mxu0 0.0
    %1414 = vmatpush1.xpose.msra.mxu0 0.0
    %1415 = vmatprep.subr.mxu0 0.0
    %1416 = vmatpush1.xpose.msra.mxu0 0.0
    %1417 = vmatprep.subr.mxu0 0.0
    %1418 = vmatpush1.xpose.msra.mxu0 0.0
    %1419 = vmatprep.subr.mxu0 0.0
    %1420 = vmatpush1.xpose.msra.mxu0 0.0
    %1421 = vmatprep.subr.mxu0 0.0
    %1422 = vmatpush1.xpose.msra.mxu0 0.0
    %1423 = vmatprep.subr.mxu0 0.0
    %1424 = vmatpush1.xpose.msra.mxu0 %v1391
    %1425 = vmatprep.subr.mxu0 0.0
    %1426 = vmatpush2.xpose.msra.mxu0 0.0
    %1427 = vmatprep.subr.mxu0 0.0
    %1428 = vmatpush2.xpose.msra.mxu0 0.0
    %1429 = vmatprep.subr.mxu0 0.0
    %1430 = vmatpush2.xpose.msra.mxu0 0.0
    %1431 = vmatprep.subr.mxu0 0.0
    %1432 = vmatpush2.xpose.msra.mxu0 0.0
    %1433 = vmatprep.subr.mxu0 0.0
    %1434 = vmatpush2.xpose.msra.mxu0 0.0
    %1435 = vmatprep.subr.mxu0 0.0
    %1436 = vmatpush2.xpose.msra.mxu0 0.0
    %1437 = vmatprep.subr.mxu0 0.0
    %1438 = vmatpush2.xpose.msra.mxu0 0.0
    %1439 = vmatprep.subr.mxu0 0.0
    %1440 = vmatpush2.xpose.msra.mxu0 0.0
    %1441 = vmatprep.subr.mxu0 0.0
    %1442 = vmatpush2.xpose.msra.mxu0 0.0
    %1443 = vmatprep.subr.mxu0 0.0
    %1444 = vmatpush2.xpose.msra.mxu0 0.0
    %1445 = vmatprep.subr.mxu0 0.0
    %1446 = vmatpush2.xpose.msra.mxu0 0.0
    %1447 = vmatprep.subr.mxu0 0.0
    %1448 = vmatpush2.xpose.msra.mxu0 0.0
    %1449 = vmatprep.subr.mxu0 0.0
    %1450 = vmatpush2.xpose.msra.mxu0 0.0
    %1451 = vmatprep.subr.mxu0 0.0
    %1452 = vmatpush2.xpose.msra.mxu0 0.0
    %1453 = vmatprep.subr.mxu0 0.0
    %1454 = vmatpush2.xpose.msra.mxu0 0.0
    %1455 = vmatprep.subr.mxu0 0.0
    %1456 = vmatpush2.xpose.msra.mxu0 0.0
    %1457 = vmatprep.mubr.f32.mxu0 0.0
    %1458 = vmatmul.mubr.f32.gmra.mxu0 %v1388
    %v1459 = vpop.f32.mrf.mxu0
    %v1460 = vadd.f32 0.0, %v1459
    %v1461 = vpop.f32.mrf.mxu0
    %1462 = vdwg.mxu0
    %v1464 = vsel %vm698, %v1200, 0
    %v1467 = vsel %vm698, %v1292, 0
    %1469 = vmatprep.subr.mxu0 0.0
    %1470 = vmatpush1.xpose.msra.mxu0 0.0
    %1471 = vmatprep.subr.mxu0 0.0
    %1472 = vmatpush1.xpose.msra.mxu0 0.0
    %1473 = vmatprep.subr.mxu0 0.0
    %1474 = vmatpush1.xpose.msra.mxu0 0.0
    %1475 = vmatprep.subr.mxu0 0.0
    %1476 = vmatpush1.xpose.msra.mxu0 0.0
    %1477 = vmatprep.subr.mxu0 0.0
    %1478 = vmatpush1.xpose.msra.mxu0 0.0
    %1479 = vmatprep.subr.mxu0 0.0
    %1480 = vmatpush1.xpose.msra.mxu0 0.0
    %1481 = vmatprep.subr.mxu0 0.0
    %1482 = vmatpush1.xpose.msra.mxu0 0.0
    %1483 = vmatprep.subr.mxu0 0.0
    %1484 = vmatpush1.xpose.msra.mxu0 0.0
    %1485 = vmatprep.subr.mxu0 0.0
    %1486 = vmatpush1.xpose.msra.mxu0 0.0
    %1487 = vmatprep.subr.mxu0 0.0
    %1488 = vmatpush1.xpose.msra.mxu0 0.0
    %1489 = vmatprep.subr.mxu0 0.0
    %1490 = vmatpush1.xpose.msra.mxu0 0.0
    %1491 = vmatprep.subr.mxu0 0.0
    %1492 = vmatpush1.xpose.msra.mxu0 0.0
    %1493 = vmatprep.subr.mxu0 0.0
    %1494 = vmatpush1.xpose.msra.mxu0 0.0
    %1495 = vmatprep.subr.mxu0 0.0
    %1496 = vmatpush1.xpose.msra.mxu0 0.0
    %1497 = vmatprep.subr.mxu0 0.0
    %1498 = vmatpush1.xpose.msra.mxu0 0.0
    %1499 = vmatprep.subr.mxu0 0.0
    %1500 = vmatpush1.xpose.msra.mxu0 %v1467
    %1501 = vmatprep.subr.mxu0 0.0
    %1502 = vmatpush2.xpose.msra.mxu0 0.0
    %1503 = vmatprep.subr.mxu0 0.0
    %1504 = vmatpush2.xpose.msra.mxu0 0.0
    %1505 = vmatprep.subr.mxu0 0.0
    %1506 = vmatpush2.xpose.msra.mxu0 0.0
    %1507 = vmatprep.subr.mxu0 0.0
    %1508 = vmatpush2.xpose.msra.mxu0 0.0
    %1509 = vmatprep.subr.mxu0 0.0
    %1510 = vmatpush2.xpose.msra.mxu0 0.0
    %1511 = vmatprep.subr.mxu0 0.0
    %1512 = vmatpush2.xpose.msra.mxu0 0.0
    %1513 = vmatprep.subr.mxu0 0.0
    %1514 = vmatpush2.xpose.msra.mxu0 0.0
    %1515 = vmatprep.subr.mxu0 0.0
    %1516 = vmatpush2.xpose.msra.mxu0 0.0
    %1517 = vmatprep.subr.mxu0 0.0
    %1518 = vmatpush2.xpose.msra.mxu0 0.0
    %1519 = vmatprep.subr.mxu0 0.0
    %1520 = vmatpush2.xpose.msra.mxu0 0.0
    %1521 = vmatprep.subr.mxu0 0.0
    %1522 = vmatpush2.xpose.msra.mxu0 0.0
    %1523 = vmatprep.subr.mxu0 0.0
    %1524 = vmatpush2.xpose.msra.mxu0 0.0
    %1525 = vmatprep.subr.mxu0 0.0
    %1526 = vmatpush2.xpose.msra.mxu0 0.0
    %1527 = vmatprep.subr.mxu0 0.0
    %1528 = vmatpush2.xpose.msra.mxu0 0.0
    %1529 = vmatprep.subr.mxu0 0.0
    %1530 = vmatpush2.xpose.msra.mxu0 0.0
    %1531 = vmatprep.subr.mxu0 0.0
    %1532 = vmatpush2.xpose.msra.mxu0 0.0
    %1533 = vmatprep.mubr.f32.mxu0 0.0
    %1534 = vmatmul.mubr.f32.gmra.mxu0 %v1464
    %v1535 = vpop.f32.mrf.mxu0
    %v1536 = vadd.f32 0.0, %v1535
    %v1537 = vpop.f32.mrf.mxu0
    %1538 = vdwg.mxu0
    %v1539 = vsel %vm851, %v1460, -inf
    %1540 = vmax.xlane.f32.xlu0 %v1539
    %v1541 = vpop.xlane.xlu0 %1540
    %v1542 = vsel %vm851, %v1536, -inf
    %1543 = vmax.xlane.f32.xlu0 %v1542
    %v1544 = vpop.xlane.xlu0 %1543
    %v1545 = vsub.f32 %v1460, %v1541
    %v1546 = vsub.f32 %v1536, %v1544
    %v1547 = vmul.f32 %v1545, 1.442695
    %v1548 = vpow.pop %v1547
    %v1549 = vmul.f32 %v1546, 1.442695
    %v1550 = vpow.pop %v1549
    %v1551 = vsel %vm851, %v1548, 0.0
    %1552 = vadd.xlane.f32.xlu0 %v1551
    %v1553 = vpop.xlane.xlu0 %1552
    %v1554 = vsel %vm851, %v1550, 0.0
    %1555 = vadd.xlane.f32.xlu0 %v1554
    %v1556 = vpop.xlane.xlu0 %1555
    %v1557 = vrcp.pop %v1553
    %v1558 = vmul.f32 %v1548, %v1557
    %v1559 = vrcp.pop %v1556
    %v1560 = vmul.f32 %v1550, %v1559
    %v1562 = vsel %vm851, %v1558, 0
    %1564 = vmatprep.subr.mxu0 0.0
    %1565 = vmatpush1.msra.mxu0 0.0
    %1566 = vmatprep.subr.mxu0 0.0
    %1567 = vmatpush1.msra.mxu0 0.0
    %1568 = vmatprep.subr.mxu0 0.0
    %1569 = vmatpush1.msra.mxu0 0.0
    %1570 = vmatprep.subr.mxu0 0.0
    %1571 = vmatpush1.msra.mxu0 0.0
    %1572 = vmatprep.subr.mxu0 0.0
    %1573 = vmatpush1.msra.mxu0 0.0
    %1574 = vmatprep.subr.mxu0 0.0
    %1575 = vmatpush1.msra.mxu0 0.0
    %1576 = vmatprep.subr.mxu0 0.0
    %1577 = vmatpush1.msra.mxu0 0.0
    %1578 = vmatprep.subr.mxu0 0.0
    %1579 = vmatpush1.msra.mxu0 0.0
    %1580 = vmatprep.subr.mxu0 0.0
    %1581 = vmatpush1.msra.mxu0 0.0
    %1582 = vmatprep.subr.mxu0 0.0
    %1583 = vmatpush1.msra.mxu0 0.0
    %1584 = vmatprep.subr.mxu0 0.0
    %1585 = vmatpush1.msra.mxu0 0.0
    %1586 = vmatprep.subr.mxu0 0.0
    %1587 = vmatpush1.msra.mxu0 0.0
    %1588 = vmatprep.subr.mxu0 0.0
    %1589 = vmatpush1.msra.mxu0 0.0
    %1590 = vmatprep.subr.mxu0 0.0
    %1591 = vmatpush1.msra.mxu0 0.0
    %1592 = vmatprep.subr.mxu0 0.0
    %1593 = vmatpush1.msra.mxu0 0.0
    %1594 = vmatprep.subr.mxu0 0.0
    %1595 = vmatpush1.msra.mxu0 %v1379
    %1596 = vmatprep.subr.mxu0 0.0
    %1597 = vmatpush2.msra.mxu0 0.0
    %1598 = vmatprep.subr.mxu0 0.0
    %1599 = vmatpush2.msra.mxu0 0.0
    %1600 = vmatprep.subr.mxu0 0.0
    %1601 = vmatpush2.msra.mxu0 0.0
    %1602 = vmatprep.subr.mxu0 0.0
    %1603 = vmatpush2.msra.mxu0 0.0
    %1604 = vmatprep.subr.mxu0 0.0
    %1605 = vmatpush2.msra.mxu0 0.0
    %1606 = vmatprep.subr.mxu0 0.0
    %1607 = vmatpush2.msra.mxu0 0.0
    %1608 = vmatprep.subr.mxu0 0.0
    %1609 = vmatpush2.msra.mxu0 0.0
    %1610 = vmatprep.subr.mxu0 0.0
    %1611 = vmatpush2.msra.mxu0 0.0
    %1612 = vmatprep.subr.mxu0 0.0
    %1613 = vmatpush2.msra.mxu0 0.0
    %1614 = vmatprep.subr.mxu0 0.0
    %1615 = vmatpush2.msra.mxu0 0.0
    %1616 = vmatprep.subr.mxu0 0.0
    %1617 = vmatpush2.msra.mxu0 0.0
    %1618 = vmatprep.subr.mxu0 0.0
    %1619 = vmatpush2.msra.mxu0 0.0
    %1620 = vmatprep.subr.mxu0 0.0
    %1621 = vmatpush2.msra.mxu0 0.0
    %1622 = vmatprep.subr.mxu0 0.0
    %1623 = vmatpush2.msra.mxu0 0.0
    %1624 = vmatprep.subr.mxu0 0.0
    %1625 = vmatpush2.msra.mxu0 0.0
    %1626 = vmatprep.subr.mxu0 0.0
    %1627 = vmatpush2.msra.mxu0 0.0
    %1628 = vmatprep.mubr.f32.mxu0 0.0
    %1629 = vmatmul.mubr.f32.gmra.mxu0 %v1562
    %v1630 = vpop.f32.mrf.mxu0
    %v1631 = vadd.f32 0.0, %v1630
    %v1632 = vpop.f32.mrf.mxu0
    %1633 = vdwg.mxu0
    %v1635 = vsel %vm851, %v1560, 0
    %1637 = vmatprep.subr.mxu0 0.0
    %1638 = vmatpush1.msra.mxu0 0.0
    %1639 = vmatprep.subr.mxu0 0.0
    %1640 = vmatpush1.msra.mxu0 0.0
    %1641 = vmatprep.subr.mxu0 0.0
    %1642 = vmatpush1.msra.mxu0 0.0
    %1643 = vmatprep.subr.mxu0 0.0
    %1644 = vmatpush1.msra.mxu0 0.0
    %1645 = vmatprep.subr.mxu0 0.0
    %1646 = vmatpush1.msra.mxu0 0.0
    %1647 = vmatprep.subr.mxu0 0.0
    %1648 = vmatpush1.msra.mxu0 0.0
    %1649 = vmatprep.subr.mxu0 0.0
    %1650 = vmatpush1.msra.mxu0 0.0
    %1651 = vmatprep.subr.mxu0 0.0
    %1652 = vmatpush1.msra.mxu0 0.0
    %1653 = vmatprep.subr.mxu0 0.0
    %1654 = vmatpush1.msra.mxu0 0.0
    %1655 = vmatprep.subr.mxu0 0.0
    %1656 = vmatpush1.msra.mxu0 0.0
    %1657 = vmatprep.subr.mxu0 0.0
    %1658 = vmatpush1.msra.mxu0 0.0
    %1659 = vmatprep.subr.mxu0 0.0
    %1660 = vmatpush1.msra.mxu0 0.0
    %1661 = vmatprep.subr.mxu0 0.0
    %1662 = vmatpush1.msra.mxu0 0.0
    %1663 = vmatprep.subr.mxu0 0.0
    %1664 = vmatpush1.msra.mxu0 0.0
    %1665 = vmatprep.subr.mxu0 0.0
    %1666 = vmatpush1.msra.mxu0 0.0
    %1667 = vmatprep.subr.mxu0 0.0
    %1668 = vmatpush1.msra.mxu0 %v1384
    %1669 = vmatprep.subr.mxu0 0.0
    %1670 = vmatpush2.msra.mxu0 0.0
    %1671 = vmatprep.subr.mxu0 0.0
    %1672 = vmatpush2.msra.mxu0 0.0
    %1673 = vmatprep.subr.mxu0 0.0
    %1674 = vmatpush2.msra.mxu0 0.0
    %1675 = vmatprep.subr.mxu0 0.0
    %1676 = vmatpush2.msra.mxu0 0.0
    %1677 = vmatprep.subr.mxu0 0.0
    %1678 = vmatpush2.msra.mxu0 0.0
    %1679 = vmatprep.subr.mxu0 0.0
    %1680 = vmatpush2.msra.mxu0 0.0
    %1681 = vmatprep.subr.mxu0 0.0
    %1682 = vmatpush2.msra.mxu0 0.0
    %1683 = vmatprep.subr.mxu0 0.0
    %1684 = vmatpush2.msra.mxu0 0.0
    %1685 = vmatprep.subr.mxu0 0.0
    %1686 = vmatpush2.msra.mxu0 0.0
    %1687 = vmatprep.subr.mxu0 0.0
    %1688 = vmatpush2.msra.mxu0 0.0
    %1689 = vmatprep.subr.mxu0 0.0
    %1690 = vmatpush2.msra.mxu0 0.0
    %1691 = vmatprep.subr.mxu0 0.0
    %1692 = vmatpush2.msra.mxu0 0.0
    %1693 = vmatprep.subr.mxu0 0.0
    %1694 = vmatpush2.msra.mxu0 0.0
    %1695 = vmatprep.subr.mxu0 0.0
    %1696 = vmatpush2.msra.mxu0 0.0
    %1697 = vmatprep.subr.mxu0 0.0
    %1698 = vmatpush2.msra.mxu0 0.0
    %1699 = vmatprep.subr.mxu0 0.0
    %1700 = vmatpush2.msra.mxu0 0.0
    %1701 = vmatprep.mubr.f32.mxu0 0.0
    %1702 = vmatmul.mubr.f32.gmra.mxu0 %v1635
    %v1703 = vpop.f32.mrf.mxu0
    %v1704 = vadd.f32 0.0, %v1703
    %v1705 = vpop.f32.mrf.mxu0
    %1706 = vdwg.mxu0
    %s1707 = scalar_lea.vmem %s14, 16
    %v1708 = vld [vmem:[%s1707] sm:$0xff]
    %v1709 = vld [vmem:[%s1707 + $0x8] sm:$0xff]
    %v1711 = vsel %vm698, %v1631, 0
    %v1714 = vsel %vm698, %v1704, 0
    %1716 = vmatprep.subr.mxu0 0.0
    %1717 = vmatpush1.msra.mxu0 0.0
    %1718 = vmatprep.subr.mxu0 0.0
    %1719 = vmatpush1.msra.mxu0 0.0
    %1720 = vmatprep.subr.mxu0 0.0
    %1721 = vmatpush1.msra.mxu0 0.0
    %1722 = vmatprep.subr.mxu0 0.0
    %1723 = vmatpush1.msra.mxu0 0.0
    %1724 = vmatprep.subr.mxu0 0.0
    %1725 = vmatpush1.msra.mxu0 0.0
    %1726 = vmatprep.subr.mxu0 0.0
    %1727 = vmatpush1.msra.mxu0 0.0
    %1728 = vmatprep.subr.mxu0 0.0
    %1729 = vmatpush1.msra.mxu0 0.0
    %1730 = vmatprep.subr.mxu0 0.0
    %1731 = vmatpush1.msra.mxu0 0.0
    %1732 = vmatprep.subr.mxu0 0.0
    %1733 = vmatpush1.msra.mxu0 0.0
    %1734 = vmatprep.subr.mxu0 0.0
    %1735 = vmatpush1.msra.mxu0 0.0
    %1736 = vmatprep.subr.mxu0 0.0
    %1737 = vmatpush1.msra.mxu0 0.0
    %1738 = vmatprep.subr.mxu0 0.0
    %1739 = vmatpush1.msra.mxu0 0.0
    %1740 = vmatprep.subr.mxu0 0.0
    %1741 = vmatpush1.msra.mxu0 0.0
    %1742 = vmatprep.subr.mxu0 0.0
    %1743 = vmatpush1.msra.mxu0 0.0
    %1744 = vmatprep.subr.mxu0 0.0
    %1745 = vmatpush1.msra.mxu0 %v1709
    %1746 = vmatprep.subr.mxu0 0.0
    %1747 = vmatpush1.msra.mxu0 %v1708
    %1748 = vmatprep.subr.mxu0 0.0
    %1749 = vmatpush2.msra.mxu0 0.0
    %1750 = vmatprep.subr.mxu0 0.0
    %1751 = vmatpush2.msra.mxu0 0.0
    %1752 = vmatprep.subr.mxu0 0.0
    %1753 = vmatpush2.msra.mxu0 0.0
    %1754 = vmatprep.subr.mxu0 0.0
    %1755 = vmatpush2.msra.mxu0 0.0
    %1756 = vmatprep.subr.mxu0 0.0
    %1757 = vmatpush2.msra.mxu0 0.0
    %1758 = vmatprep.subr.mxu0 0.0
    %1759 = vmatpush2.msra.mxu0 0.0
    %1760 = vmatprep.subr.mxu0 0.0
    %1761 = vmatpush2.msra.mxu0 0.0
    %1762 = vmatprep.subr.mxu0 0.0
    %1763 = vmatpush2.msra.mxu0 0.0
    %1764 = vmatprep.subr.mxu0 0.0
    %1765 = vmatpush2.msra.mxu0 0.0
    %1766 = vmatprep.subr.mxu0 0.0
    %1767 = vmatpush2.msra.mxu0 0.0
    %1768 = vmatprep.subr.mxu0 0.0
    %1769 = vmatpush2.msra.mxu0 0.0
    %1770 = vmatprep.subr.mxu0 0.0
    %1771 = vmatpush2.msra.mxu0 0.0
    %1772 = vmatprep.subr.mxu0 0.0
    %1773 = vmatpush2.msra.mxu0 0.0
    %1774 = vmatprep.subr.mxu0 0.0
    %1775 = vmatpush2.msra.mxu0 0.0
    %1776 = vmatprep.subr.mxu0 0.0
    %1777 = vmatpush2.msra.mxu0 0.0
    %1778 = vmatprep.subr.mxu0 0.0
    %1779 = vmatpush2.msra.mxu0 0.0
    %1780 = vmatprep.mubr.f32.mxu0 0.0
    %1781 = vmatmul.mubr.f32.gmra.mxu0 %v1711
    %v1782 = vpop.f32.mrf.mxu0
    %v1783 = vadd.f32 0.0, %v1782
    %v1784 = vpop.f32.mrf.mxu0
    %1785 = vmatprep.mubr.f32.mxu0 0.0
    %1786 = vmatmul.mubr.f32.gmra.mxu0 %v1714
    %v1787 = vpop.f32.mrf.mxu0
    %v1788 = vadd.f32 0.0, %v1787
    %v1789 = vpop.f32.mrf.mxu0
    %1790 = vdwg.mxu0
    %v1791 = vadd.f32 %v1109, %v1783
    %v1792 = vadd.f32 %v1110, %v1788
    %s1793 = scalar_lea.vmem %s8, 128
    %v1794 = vld [vmem:[%s1793] sm:$0xff]
    %v1795 = vld [vmem:[%s1793 + $0x8] sm:$0xff]
    %v1796 = vld [vmem:[%s1793 + $0x10] sm:$0xff]
    %v1797 = vld [vmem:[%s1793 + $0x18] sm:$0xff]
    %v1798 = vld [vmem:[%s1793 + $0x20] sm:$0xff]
    %v1799 = vld [vmem:[%s1793 + $0x28] sm:$0xff]
    %v1800 = vld [vmem:[%s1793 + $0x30] sm:$0xff]
    %v1801 = vld [vmem:[%s1793 + $0x38] sm:$0xff]
    %s1802 = scalar_lea.vmem %s9, 2
    %v1803 = vld [vmem:[%s1802] sm:$0x1]
    %v1805 = vlaneseq
    %v1806 = vshrl.u32 %v1805, 7
    %v1807 = vsub.s32 0, %v1806
    %v1808 = vrot.slane %v1803, %v1807
    %1810 = vmatprep.subr.mxu0 0.0
    %1811 = vmatpush1.msra.mxu0 0.0
    %1812 = vmatprep.subr.mxu0 0.0
    %1813 = vmatpush1.msra.mxu0 0.0
    %1814 = vmatprep.subr.mxu0 0.0
    %1815 = vmatpush1.msra.mxu0 0.0
    %1816 = vmatprep.subr.mxu0 0.0
    %1817 = vmatpush1.msra.mxu0 0.0
    %1818 = vmatprep.subr.mxu0 0.0
    %1819 = vmatpush1.msra.mxu0 0.0
    %1820 = vmatprep.subr.mxu0 0.0
    %1821 = vmatpush1.msra.mxu0 0.0
    %1822 = vmatprep.subr.mxu0 0.0
    %1823 = vmatpush1.msra.mxu0 0.0
    %1824 = vmatprep.subr.mxu0 0.0
    %1825 = vmatpush1.msra.mxu0 0.0
    %1826 = vmatprep.subr.mxu0 0.0
    %1827 = vmatpush1.msra.mxu0 %v1801
    %1828 = vmatprep.subr.mxu0 0.0
    %1829 = vmatpush1.msra.mxu0 %v1800
    %1830 = vmatprep.subr.mxu0 0.0
    %1831 = vmatpush1.msra.mxu0 %v1799
    %1832 = vmatprep.subr.mxu0 0.0
    %1833 = vmatpush1.msra.mxu0 %v1798
    %1834 = vmatprep.subr.mxu0 0.0
    %1835 = vmatpush1.msra.mxu0 %v1797
    %1836 = vmatprep.subr.mxu0 0.0
    %1837 = vmatpush1.msra.mxu0 %v1796
    %1838 = vmatprep.subr.mxu0 0.0
    %1839 = vmatpush1.msra.mxu0 %v1795
    %1840 = vmatprep.subr.mxu0 0.0
    %1841 = vmatpush1.msra.mxu0 %v1794
    %1842 = vmatprep.subr.mxu0 0.0
    %1843 = vmatpush2.msra.mxu0 0.0
    %1844 = vmatprep.subr.mxu0 0.0
    %1845 = vmatpush2.msra.mxu0 0.0
    %1846 = vmatprep.subr.mxu0 0.0
    %1847 = vmatpush2.msra.mxu0 0.0
    %1848 = vmatprep.subr.mxu0 0.0
    %1849 = vmatpush2.msra.mxu0 0.0
    %1850 = vmatprep.subr.mxu0 0.0
    %1851 = vmatpush2.msra.mxu0 0.0
    %1852 = vmatprep.subr.mxu0 0.0
    %1853 = vmatpush2.msra.mxu0 0.0
    %1854 = vmatprep.subr.mxu0 0.0
    %1855 = vmatpush2.msra.mxu0 0.0
    %1856 = vmatprep.subr.mxu0 0.0
    %1857 = vmatpush2.msra.mxu0 0.0
    %1858 = vmatprep.subr.mxu0 0.0
    %1859 = vmatpush2.msra.mxu0 0.0
    %1860 = vmatprep.subr.mxu0 0.0
    %1861 = vmatpush2.msra.mxu0 0.0
    %1862 = vmatprep.subr.mxu0 0.0
    %1863 = vmatpush2.msra.mxu0 0.0
    %1864 = vmatprep.subr.mxu0 0.0
    %1865 = vmatpush2.msra.mxu0 0.0
    %1866 = vmatprep.subr.mxu0 0.0
    %1867 = vmatpush2.msra.mxu0 0.0
    %1868 = vmatprep.subr.mxu0 0.0
    %1869 = vmatpush2.msra.mxu0 0.0
    %1870 = vmatprep.subr.mxu0 0.0
    %1871 = vmatpush2.msra.mxu0 0.0
    %1872 = vmatprep.subr.mxu0 0.0
    %1873 = vmatpush2.msra.mxu0 0.0
    %1874 = vmatprep.mubr.f32.mxu0 0.0
    %1875 = vmatmul.mubr.f32.gmra.mxu0 %v438
    %v1876 = vpop.f32.mrf.mxu0
    %v1877 = vadd.f32 %v1808, %v1876
    %v1878 = vpop.f32.mrf.mxu0
    %1879 = vmatprep.mubr.f32.mxu0 0.0
    %1880 = vmatmul.mubr.f32.gmra.mxu0 %v441
    %v1881 = vpop.f32.mrf.mxu0
    %v1882 = vadd.f32 %v1808, %v1881
    %v1883 = vpop.f32.mrf.mxu0
    %1884 = vdwg.mxu0
    %s1885 = scalar_lea.vmem %s10, 128
    %v1886 = vld [vmem:[%s1885] sm:$0xff]
    %v1887 = vld [vmem:[%s1885 + $0x8] sm:$0xff]
    %v1888 = vld [vmem:[%s1885 + $0x10] sm:$0xff]
    %v1889 = vld [vmem:[%s1885 + $0x18] sm:$0xff]
    %v1890 = vld [vmem:[%s1885 + $0x20] sm:$0xff]
    %v1891 = vld [vmem:[%s1885 + $0x28] sm:$0xff]
    %v1892 = vld [vmem:[%s1885 + $0x30] sm:$0xff]
    %v1893 = vld [vmem:[%s1885 + $0x38] sm:$0xff]
    %s1894 = scalar_lea.vmem %s11, 2
    %v1895 = vld [vmem:[%s1894] sm:$0x1]
    %v1897 = vlaneseq
    %v1898 = vshrl.u32 %v1897, 7
    %v1899 = vsub.s32 0, %v1898
    %v1900 = vrot.slane %v1895, %v1899
    %1902 = vmatprep.subr.mxu0 0.0
    %1903 = vmatpush1.msra.mxu0 0.0
    %1904 = vmatprep.subr.mxu0 0.0
    %1905 = vmatpush1.msra.mxu0 0.0
    %1906 = vmatprep.subr.mxu0 0.0
    %1907 = vmatpush1.msra.mxu0 0.0
    %1908 = vmatprep.subr.mxu0 0.0
    %1909 = vmatpush1.msra.mxu0 0.0
    %1910 = vmatprep.subr.mxu0 0.0
    %1911 = vmatpush1.msra.mxu0 0.0
    %1912 = vmatprep.subr.mxu0 0.0
    %1913 = vmatpush1.msra.mxu0 0.0
    %1914 = vmatprep.subr.mxu0 0.0
    %1915 = vmatpush1.msra.mxu0 0.0
    %1916 = vmatprep.subr.mxu0 0.0
    %1917 = vmatpush1.msra.mxu0 0.0
    %1918 = vmatprep.subr.mxu0 0.0
    %1919 = vmatpush1.msra.mxu0 %v1893
    %1920 = vmatprep.subr.mxu0 0.0
    %1921 = vmatpush1.msra.mxu0 %v1892
    %1922 = vmatprep.subr.mxu0 0.0
    %1923 = vmatpush1.msra.mxu0 %v1891
    %1924 = vmatprep.subr.mxu0 0.0
    %1925 = vmatpush1.msra.mxu0 %v1890
    %1926 = vmatprep.subr.mxu0 0.0
    %1927 = vmatpush1.msra.mxu0 %v1889
    %1928 = vmatprep.subr.mxu0 0.0
    %1929 = vmatpush1.msra.mxu0 %v1888
    %1930 = vmatprep.subr.mxu0 0.0
    %1931 = vmatpush1.msra.mxu0 %v1887
    %1932 = vmatprep.subr.mxu0 0.0
    %1933 = vmatpush1.msra.mxu0 %v1886
    %1934 = vmatprep.subr.mxu0 0.0
    %1935 = vmatpush2.msra.mxu0 0.0
    %1936 = vmatprep.subr.mxu0 0.0
    %1937 = vmatpush2.msra.mxu0 0.0
    %1938 = vmatprep.subr.mxu0 0.0
    %1939 = vmatpush2.msra.mxu0 0.0
    %1940 = vmatprep.subr.mxu0 0.0
    %1941 = vmatpush2.msra.mxu0 0.0
    %1942 = vmatprep.subr.mxu0 0.0
    %1943 = vmatpush2.msra.mxu0 0.0
    %1944 = vmatprep.subr.mxu0 0.0
    %1945 = vmatpush2.msra.mxu0 0.0
    %1946 = vmatprep.subr.mxu0 0.0
    %1947 = vmatpush2.msra.mxu0 0.0
    %1948 = vmatprep.subr.mxu0 0.0
    %1949 = vmatpush2.msra.mxu0 0.0
    %1950 = vmatprep.subr.mxu0 0.0
    %1951 = vmatpush2.msra.mxu0 0.0
    %1952 = vmatprep.subr.mxu0 0.0
    %1953 = vmatpush2.msra.mxu0 0.0
    %1954 = vmatprep.subr.mxu0 0.0
    %1955 = vmatpush2.msra.mxu0 0.0
    %1956 = vmatprep.subr.mxu0 0.0
    %1957 = vmatpush2.msra.mxu0 0.0
    %1958 = vmatprep.subr.mxu0 0.0
    %1959 = vmatpush2.msra.mxu0 0.0
    %1960 = vmatprep.subr.mxu0 0.0
    %1961 = vmatpush2.msra.mxu0 0.0
    %1962 = vmatprep.subr.mxu0 0.0
    %1963 = vmatpush2.msra.mxu0 0.0
    %1964 = vmatprep.subr.mxu0 0.0
    %1965 = vmatpush2.msra.mxu0 0.0
    %1966 = vmatprep.mubr.f32.mxu0 0.0
    %1967 = vmatmul.mubr.f32.gmra.mxu0 %v438
    %v1968 = vpop.f32.mrf.mxu0
    %v1969 = vadd.f32 %v1900, %v1968
    %v1970 = vpop.f32.mrf.mxu0
    %1971 = vmatprep.mubr.f32.mxu0 0.0
    %1972 = vmatmul.mubr.f32.gmra.mxu0 %v441
    %v1973 = vpop.f32.mrf.mxu0
    %v1974 = vadd.f32 %v1900, %v1973
    %v1975 = vpop.f32.mrf.mxu0
    %1976 = vdwg.mxu0
    %s1977 = scalar_lea.vmem %s12, 128
    %v1978 = vld [vmem:[%s1977] sm:$0xff]
    %v1979 = vld [vmem:[%s1977 + $0x8] sm:$0xff]
    %v1980 = vld [vmem:[%s1977 + $0x10] sm:$0xff]
    %v1981 = vld [vmem:[%s1977 + $0x18] sm:$0xff]
    %v1982 = vld [vmem:[%s1977 + $0x20] sm:$0xff]
    %v1983 = vld [vmem:[%s1977 + $0x28] sm:$0xff]
    %v1984 = vld [vmem:[%s1977 + $0x30] sm:$0xff]
    %v1985 = vld [vmem:[%s1977 + $0x38] sm:$0xff]
    %s1986 = scalar_lea.vmem %s13, 2
    %v1987 = vld [vmem:[%s1986] sm:$0x1]
    %v1989 = vlaneseq
    %v1990 = vshrl.u32 %v1989, 7
    %v1991 = vsub.s32 0, %v1990
    %v1992 = vrot.slane %v1987, %v1991
    %1994 = vmatprep.subr.mxu0 0.0
    %1995 = vmatpush1.msra.mxu0 0.0
    %1996 = vmatprep.subr.mxu0 0.0
    %1997 = vmatpush1.msra.mxu0 0.0
    %1998 = vmatprep.subr.mxu0 0.0
    %1999 = vmatpush1.msra.mxu0 0.0
    %2000 = vmatprep.subr.mxu0 0.0
    %2001 = vmatpush1.msra.mxu0 0.0
    %2002 = vmatprep.subr.mxu0 0.0
    %2003 = vmatpush1.msra.mxu0 0.0
    %2004 = vmatprep.subr.mxu0 0.0
    %2005 = vmatpush1.msra.mxu0 0.0
    %2006 = vmatprep.subr.mxu0 0.0
    %2007 = vmatpush1.msra.mxu0 0.0
    %2008 = vmatprep.subr.mxu0 0.0
    %2009 = vmatpush1.msra.mxu0 0.0
    %2010 = vmatprep.subr.mxu0 0.0
    %2011 = vmatpush1.msra.mxu0 %v1985
    %2012 = vmatprep.subr.mxu0 0.0
    %2013 = vmatpush1.msra.mxu0 %v1984
    %2014 = vmatprep.subr.mxu0 0.0
    %2015 = vmatpush1.msra.mxu0 %v1983
    %2016 = vmatprep.subr.mxu0 0.0
    %2017 = vmatpush1.msra.mxu0 %v1982
    %2018 = vmatprep.subr.mxu0 0.0
    %2019 = vmatpush1.msra.mxu0 %v1981
    %2020 = vmatprep.subr.mxu0 0.0
    %2021 = vmatpush1.msra.mxu0 %v1980
    %2022 = vmatprep.subr.mxu0 0.0
    %2023 = vmatpush1.msra.mxu0 %v1979
    %2024 = vmatprep.subr.mxu0 0.0
    %2025 = vmatpush1.msra.mxu0 %v1978
    %2026 = vmatprep.subr.mxu0 0.0
    %2027 = vmatpush2.msra.mxu0 0.0
    %2028 = vmatprep.subr.mxu0 0.0
    %2029 = vmatpush2.msra.mxu0 0.0
    %2030 = vmatprep.subr.mxu0 0.0
    %2031 = vmatpush2.msra.mxu0 0.0
    %2032 = vmatprep.subr.mxu0 0.0
    %2033 = vmatpush2.msra.mxu0 0.0
    %2034 = vmatprep.subr.mxu0 0.0
    %2035 = vmatpush2.msra.mxu0 0.0
    %2036 = vmatprep.subr.mxu0 0.0
    %2037 = vmatpush2.msra.mxu0 0.0
    %2038 = vmatprep.subr.mxu0 0.0
    %2039 = vmatpush2.msra.mxu0 0.0
    %2040 = vmatprep.subr.mxu0 0.0
    %2041 = vmatpush2.msra.mxu0 0.0
    %2042 = vmatprep.subr.mxu0 0.0
    %2043 = vmatpush2.msra.mxu0 0.0
    %2044 = vmatprep.subr.mxu0 0.0
    %2045 = vmatpush2.msra.mxu0 0.0
    %2046 = vmatprep.subr.mxu0 0.0
    %2047 = vmatpush2.msra.mxu0 0.0
    %2048 = vmatprep.subr.mxu0 0.0
    %2049 = vmatpush2.msra.mxu0 0.0
    %2050 = vmatprep.subr.mxu0 0.0
    %2051 = vmatpush2.msra.mxu0 0.0
    %2052 = vmatprep.subr.mxu0 0.0
    %2053 = vmatpush2.msra.mxu0 0.0
    %2054 = vmatprep.subr.mxu0 0.0
    %2055 = vmatpush2.msra.mxu0 0.0
    %2056 = vmatprep.subr.mxu0 0.0
    %2057 = vmatpush2.msra.mxu0 0.0
    %2058 = vmatprep.mubr.f32.mxu0 0.0
    %2059 = vmatmul.mubr.f32.gmra.mxu0 %v438
    %v2060 = vpop.f32.mrf.mxu0
    %v2061 = vadd.f32 %v1992, %v2060
    %v2062 = vpop.f32.mrf.mxu0
    %2063 = vmatprep.mubr.f32.mxu0 0.0
    %2064 = vmatmul.mubr.f32.gmra.mxu0 %v441
    %v2065 = vpop.f32.mrf.mxu0
    %v2066 = vadd.f32 %v1992, %v2065
    %v2067 = vpop.f32.mrf.mxu0
    %2068 = vdwg.mxu0
    %v2070 = vsel %vm698, %v1877, 0
    %v2073 = vsel %vm698, %v1969, 0
    %2075 = vmatprep.subr.mxu0 0.0
    %2076 = vmatpush1.xpose.msra.mxu0 0.0
    %2077 = vmatprep.subr.mxu0 0.0
    %2078 = vmatpush1.xpose.msra.mxu0 0.0
    %2079 = vmatprep.subr.mxu0 0.0
    %2080 = vmatpush1.xpose.msra.mxu0 0.0
    %2081 = vmatprep.subr.mxu0 0.0
    %2082 = vmatpush1.xpose.msra.mxu0 0.0
    %2083 = vmatprep.subr.mxu0 0.0
    %2084 = vmatpush1.xpose.msra.mxu0 0.0
    %2085 = vmatprep.subr.mxu0 0.0
    %2086 = vmatpush1.xpose.msra.mxu0 0.0
    %2087 = vmatprep.subr.mxu0 0.0
    %2088 = vmatpush1.xpose.msra.mxu0 0.0
    %2089 = vmatprep.subr.mxu0 0.0
    %2090 = vmatpush1.xpose.msra.mxu0 0.0
    %2091 = vmatprep.subr.mxu0 0.0
    %2092 = vmatpush1.xpose.msra.mxu0 0.0
    %2093 = vmatprep.subr.mxu0 0.0
    %2094 = vmatpush1.xpose.msra.mxu0 0.0
    %2095 = vmatprep.subr.mxu0 0.0
    %2096 = vmatpush1.xpose.msra.mxu0 0.0
    %2097 = vmatprep.subr.mxu0 0.0
    %2098 = vmatpush1.xpose.msra.mxu0 0.0
    %2099 = vmatprep.subr.mxu0 0.0
    %2100 = vmatpush1.xpose.msra.mxu0 0.0
    %2101 = vmatprep.subr.mxu0 0.0
    %2102 = vmatpush1.xpose.msra.mxu0 0.0
    %2103 = vmatprep.subr.mxu0 0.0
    %2104 = vmatpush1.xpose.msra.mxu0 0.0
    %2105 = vmatprep.subr.mxu0 0.0
    %2106 = vmatpush1.xpose.msra.mxu0 %v2073
    %2107 = vmatprep.subr.mxu0 0.0
    %2108 = vmatpush2.xpose.msra.mxu0 0.0
    %2109 = vmatprep.subr.mxu0 0.0
    %2110 = vmatpush2.xpose.msra.mxu0 0.0
    %2111 = vmatprep.subr.mxu0 0.0
    %2112 = vmatpush2.xpose.msra.mxu0 0.0
    %2113 = vmatprep.subr.mxu0 0.0
    %2114 = vmatpush2.xpose.msra.mxu0 0.0
    %2115 = vmatprep.subr.mxu0 0.0
    %2116 = vmatpush2.xpose.msra.mxu0 0.0
    %2117 = vmatprep.subr.mxu0 0.0
    %2118 = vmatpush2.xpose.msra.mxu0 0.0
    %2119 = vmatprep.subr.mxu0 0.0
    %2120 = vmatpush2.xpose.msra.mxu0 0.0
    %2121 = vmatprep.subr.mxu0 0.0
    %2122 = vmatpush2.xpose.msra.mxu0 0.0
    %2123 = vmatprep.subr.mxu0 0.0
    %2124 = vmatpush2.xpose.msra.mxu0 0.0
    %2125 = vmatprep.subr.mxu0 0.0
    %2126 = vmatpush2.xpose.msra.mxu0 0.0
    %2127 = vmatprep.subr.mxu0 0.0
    %2128 = vmatpush2.xpose.msra.mxu0 0.0
    %2129 = vmatprep.subr.mxu0 0.0
    %2130 = vmatpush2.xpose.msra.mxu0 0.0
    %2131 = vmatprep.subr.mxu0 0.0
    %2132 = vmatpush2.xpose.msra.mxu0 0.0
    %2133 = vmatprep.subr.mxu0 0.0
    %2134 = vmatpush2.xpose.msra.mxu0 0.0
    %2135 = vmatprep.subr.mxu0 0.0
    %2136 = vmatpush2.xpose.msra.mxu0 0.0
    %2137 = vmatprep.subr.mxu0 0.0
    %2138 = vmatpush2.xpose.msra.mxu0 0.0
    %2139 = vmatprep.mubr.f32.mxu0 0.0
    %2140 = vmatmul.mubr.f32.gmra.mxu0 %v2070
    %v2141 = vpop.f32.mrf.mxu0
    %v2142 = vadd.f32 0.0, %v2141
    %v2143 = vpop.f32.mrf.mxu0
    %2144 = vdwg.mxu0
    %v2146 = vsel %vm698, %v1882, 0
    %v2149 = vsel %vm698, %v1974, 0
    %2151 = vmatprep.subr.mxu0 0.0
    %2152 = vmatpush1.xpose.msra.mxu0 0.0
    %2153 = vmatprep.subr.mxu0 0.0
    %2154 = vmatpush1.xpose.msra.mxu0 0.0
    %2155 = vmatprep.subr.mxu0 0.0
    %2156 = vmatpush1.xpose.msra.mxu0 0.0
    %2157 = vmatprep.subr.mxu0 0.0
    %2158 = vmatpush1.xpose.msra.mxu0 0.0
    %2159 = vmatprep.subr.mxu0 0.0
    %2160 = vmatpush1.xpose.msra.mxu0 0.0
    %2161 = vmatprep.subr.mxu0 0.0
    %2162 = vmatpush1.xpose.msra.mxu0 0.0
    %2163 = vmatprep.subr.mxu0 0.0
    %2164 = vmatpush1.xpose.msra.mxu0 0.0
    %2165 = vmatprep.subr.mxu0 0.0
    %2166 = vmatpush1.xpose.msra.mxu0 0.0
    %2167 = vmatprep.subr.mxu0 0.0
    %2168 = vmatpush1.xpose.msra.mxu0 0.0
    %2169 = vmatprep.subr.mxu0 0.0
    %2170 = vmatpush1.xpose.msra.mxu0 0.0
    %2171 = vmatprep.subr.mxu0 0.0
    %2172 = vmatpush1.xpose.msra.mxu0 0.0
    %2173 = vmatprep.subr.mxu0 0.0
    %2174 = vmatpush1.xpose.msra.mxu0 0.0
    %2175 = vmatprep.subr.mxu0 0.0
    %2176 = vmatpush1.xpose.msra.mxu0 0.0
    %2177 = vmatprep.subr.mxu0 0.0
    %2178 = vmatpush1.xpose.msra.mxu0 0.0
    %2179 = vmatprep.subr.mxu0 0.0
    %2180 = vmatpush1.xpose.msra.mxu0 0.0
    %2181 = vmatprep.subr.mxu0 0.0
    %2182 = vmatpush1.xpose.msra.mxu0 %v2149
    %2183 = vmatprep.subr.mxu0 0.0
    %2184 = vmatpush2.xpose.msra.mxu0 0.0
    %2185 = vmatprep.subr.mxu0 0.0
    %2186 = vmatpush2.xpose.msra.mxu0 0.0
    %2187 = vmatprep.subr.mxu0 0.0
    %2188 = vmatpush2.xpose.msra.mxu0 0.0
    %2189 = vmatprep.subr.mxu0 0.0
    %2190 = vmatpush2.xpose.msra.mxu0 0.0
    %2191 = vmatprep.subr.mxu0 0.0
    %2192 = vmatpush2.xpose.msra.mxu0 0.0
    %2193 = vmatprep.subr.mxu0 0.0
    %2194 = vmatpush2.xpose.msra.mxu0 0.0
    %2195 = vmatprep.subr.mxu0 0.0
    %2196 = vmatpush2.xpose.msra.mxu0 0.0
    %2197 = vmatprep.subr.mxu0 0.0
    %2198 = vmatpush2.xpose.msra.mxu0 0.0
    %2199 = vmatprep.subr.mxu0 0.0
    %2200 = vmatpush2.xpose.msra.mxu0 0.0
    %2201 = vmatprep.subr.mxu0 0.0
    %2202 = vmatpush2.xpose.msra.mxu0 0.0
    %2203 = vmatprep.subr.mxu0 0.0
    %2204 = vmatpush2.xpose.msra.mxu0 0.0
    %2205 = vmatprep.subr.mxu0 0.0
    %2206 = vmatpush2.xpose.msra.mxu0 0.0
    %2207 = vmatprep.subr.mxu0 0.0
    %2208 = vmatpush2.xpose.msra.mxu0 0.0
    %2209 = vmatprep.subr.mxu0 0.0
    %2210 = vmatpush2.xpose.msra.mxu0 0.0
    %2211 = vmatprep.subr.mxu0 0.0
    %2212 = vmatpush2.xpose.msra.mxu0 0.0
    %2213 = vmatprep.subr.mxu0 0.0
    %2214 = vmatpush2.xpose.msra.mxu0 0.0
    %2215 = vmatprep.mubr.f32.mxu0 0.0
    %2216 = vmatmul.mubr.f32.gmra.mxu0 %v2146
    %v2217 = vpop.f32.mrf.mxu0
    %v2218 = vadd.f32 0.0, %v2217
    %v2219 = vpop.f32.mrf.mxu0
    %2220 = vdwg.mxu0
    %v2221 = vsel %vm851, %v2142, -inf
    %2222 = vmax.xlane.f32.xlu0 %v2221
    %v2223 = vpop.xlane.xlu0 %2222
    %v2224 = vsel %vm851, %v2218, -inf
    %2225 = vmax.xlane.f32.xlu0 %v2224
    %v2226 = vpop.xlane.xlu0 %2225
    %v2227 = vsub.f32 %v2142, %v2223
    %v2228 = vsub.f32 %v2218, %v2226
    %v2229 = vmul.f32 %v2227, 1.442695
    %v2230 = vpow.pop %v2229
    %v2231 = vmul.f32 %v2228, 1.442695
    %v2232 = vpow.pop %v2231
    %v2233 = vsel %vm851, %v2230, 0.0
    %2234 = vadd.xlane.f32.xlu0 %v2233
    %v2235 = vpop.xlane.xlu0 %2234
    %v2236 = vsel %vm851, %v2232, 0.0
    %2237 = vadd.xlane.f32.xlu0 %v2236
    %v2238 = vpop.xlane.xlu0 %2237
    %v2239 = vrcp.pop %v2235
    %v2240 = vmul.f32 %v2230, %v2239
    %v2241 = vrcp.pop %v2238
    %v2242 = vmul.f32 %v2232, %v2241
    %v2244 = vsel %vm851, %v2240, 0
    %2246 = vmatprep.subr.mxu0 0.0
    %2247 = vmatpush1.msra.mxu0 0.0
    %2248 = vmatprep.subr.mxu0 0.0
    %2249 = vmatpush1.msra.mxu0 0.0
    %2250 = vmatprep.subr.mxu0 0.0
    %2251 = vmatpush1.msra.mxu0 0.0
    %2252 = vmatprep.subr.mxu0 0.0
    %2253 = vmatpush1.msra.mxu0 0.0
    %2254 = vmatprep.subr.mxu0 0.0
    %2255 = vmatpush1.msra.mxu0 0.0
    %2256 = vmatprep.subr.mxu0 0.0
    %2257 = vmatpush1.msra.mxu0 0.0
    %2258 = vmatprep.subr.mxu0 0.0
    %2259 = vmatpush1.msra.mxu0 0.0
    %2260 = vmatprep.subr.mxu0 0.0
    %2261 = vmatpush1.msra.mxu0 0.0
    %2262 = vmatprep.subr.mxu0 0.0
    %2263 = vmatpush1.msra.mxu0 0.0
    %2264 = vmatprep.subr.mxu0 0.0
    %2265 = vmatpush1.msra.mxu0 0.0
    %2266 = vmatprep.subr.mxu0 0.0
    %2267 = vmatpush1.msra.mxu0 0.0
    %2268 = vmatprep.subr.mxu0 0.0
    %2269 = vmatpush1.msra.mxu0 0.0
    %2270 = vmatprep.subr.mxu0 0.0
    %2271 = vmatpush1.msra.mxu0 0.0
    %2272 = vmatprep.subr.mxu0 0.0
    %2273 = vmatpush1.msra.mxu0 0.0
    %2274 = vmatprep.subr.mxu0 0.0
    %2275 = vmatpush1.msra.mxu0 0.0
    %2276 = vmatprep.subr.mxu0 0.0
    %2277 = vmatpush1.msra.mxu0 %v2061
    %2278 = vmatprep.subr.mxu0 0.0
    %2279 = vmatpush2.msra.mxu0 0.0
    %2280 = vmatprep.subr.mxu0 0.0
    %2281 = vmatpush2.msra.mxu0 0.0
    %2282 = vmatprep.subr.mxu0 0.0
    %2283 = vmatpush2.msra.mxu0 0.0
    %2284 = vmatprep.subr.mxu0 0.0
    %2285 = vmatpush2.msra.mxu0 0.0
    %2286 = vmatprep.subr.mxu0 0.0
    %2287 = vmatpush2.msra.mxu0 0.0
    %2288 = vmatprep.subr.mxu0 0.0
    %2289 = vmatpush2.msra.mxu0 0.0
    %2290 = vmatprep.subr.mxu0 0.0
    %2291 = vmatpush2.msra.mxu0 0.0
    %2292 = vmatprep.subr.mxu0 0.0
    %2293 = vmatpush2.msra.mxu0 0.0
    %2294 = vmatprep.subr.mxu0 0.0
    %2295 = vmatpush2.msra.mxu0 0.0
    %2296 = vmatprep.subr.mxu0 0.0
    %2297 = vmatpush2.msra.mxu0 0.0
    %2298 = vmatprep.subr.mxu0 0.0
    %2299 = vmatpush2.msra.mxu0 0.0
    %2300 = vmatprep.subr.mxu0 0.0
    %2301 = vmatpush2.msra.mxu0 0.0
    %2302 = vmatprep.subr.mxu0 0.0
    %2303 = vmatpush2.msra.mxu0 0.0
    %2304 = vmatprep.subr.mxu0 0.0
    %2305 = vmatpush2.msra.mxu0 0.0
    %2306 = vmatprep.subr.mxu0 0.0
    %2307 = vmatpush2.msra.mxu0 0.0
    %2308 = vmatprep.subr.mxu0 0.0
    %2309 = vmatpush2.msra.mxu0 0.0
    %2310 = vmatprep.mubr.f32.mxu0 0.0
    %2311 = vmatmul.mubr.f32.gmra.mxu0 %v2244
    %v2312 = vpop.f32.mrf.mxu0
    %v2313 = vadd.f32 0.0, %v2312
    %v2314 = vpop.f32.mrf.mxu0
    %2315 = vdwg.mxu0
    %v2317 = vsel %vm851, %v2242, 0
    %2319 = vmatprep.subr.mxu0 0.0
    %2320 = vmatpush1.msra.mxu0 0.0
    %2321 = vmatprep.subr.mxu0 0.0
    %2322 = vmatpush1.msra.mxu0 0.0
    %2323 = vmatprep.subr.mxu0 0.0
    %2324 = vmatpush1.msra.mxu0 0.0
    %2325 = vmatprep.subr.mxu0 0.0
    %2326 = vmatpush1.msra.mxu0 0.0
    %2327 = vmatprep.subr.mxu0 0.0
    %2328 = vmatpush1.msra.mxu0 0.0
    %2329 = vmatprep.subr.mxu0 0.0
    %2330 = vmatpush1.msra.mxu0 0.0
    %2331 = vmatprep.subr.mxu0 0.0
    %2332 = vmatpush1.msra.mxu0 0.0
    %2333 = vmatprep.subr.mxu0 0.0
    %2334 = vmatpush1.msra.mxu0 0.0
    %2335 = vmatprep.subr.mxu0 0.0
    %2336 = vmatpush1.msra.mxu0 0.0
    %2337 = vmatprep.subr.mxu0 0.0
    %2338 = vmatpush1.msra.mxu0 0.0
    %2339 = vmatprep.subr.mxu0 0.0
    %2340 = vmatpush1.msra.mxu0 0.0
    %2341 = vmatprep.subr.mxu0 0.0
    %2342 = vmatpush1.msra.mxu0 0.0
    %2343 = vmatprep.subr.mxu0 0.0
    %2344 = vmatpush1.msra.mxu0 0.0
    %2345 = vmatprep.subr.mxu0 0.0
    %2346 = vmatpush1.msra.mxu0 0.0
    %2347 = vmatprep.subr.mxu0 0.0
    %2348 = vmatpush1.msra.mxu0 0.0
    %2349 = vmatprep.subr.mxu0 0.0
    %2350 = vmatpush1.msra.mxu0 %v2066
    %2351 = vmatprep.subr.mxu0 0.0
    %2352 = vmatpush2.msra.mxu0 0.0
    %2353 = vmatprep.subr.mxu0 0.0
    %2354 = vmatpush2.msra.mxu0 0.0
    %2355 = vmatprep.subr.mxu0 0.0
    %2356 = vmatpush2.msra.mxu0 0.0
    %2357 = vmatprep.subr.mxu0 0.0
    %2358 = vmatpush2.msra.mxu0 0.0
    %2359 = vmatprep.subr.mxu0 0.0
    %2360 = vmatpush2.msra.mxu0 0.0
    %2361 = vmatprep.subr.mxu0 0.0
    %2362 = vmatpush2.msra.mxu0 0.0
    %2363 = vmatprep.subr.mxu0 0.0
    %2364 = vmatpush2.msra.mxu0 0.0
    %2365 = vmatprep.subr.mxu0 0.0
    %2366 = vmatpush2.msra.mxu0 0.0
    %2367 = vmatprep.subr.mxu0 0.0
    %2368 = vmatpush2.msra.mxu0 0.0
    %2369 = vmatprep.subr.mxu0 0.0
    %2370 = vmatpush2.msra.mxu0 0.0
    %2371 = vmatprep.subr.mxu0 0.0
    %2372 = vmatpush2.msra.mxu0 0.0
    %2373 = vmatprep.subr.mxu0 0.0
    %2374 = vmatpush2.msra.mxu0 0.0
    %2375 = vmatprep.subr.mxu0 0.0
    %2376 = vmatpush2.msra.mxu0 0.0
    %2377 = vmatprep.subr.mxu0 0.0
    %2378 = vmatpush2.msra.mxu0 0.0
    %2379 = vmatprep.subr.mxu0 0.0
    %2380 = vmatpush2.msra.mxu0 0.0
    %2381 = vmatprep.subr.mxu0 0.0
    %2382 = vmatpush2.msra.mxu0 0.0
    %2383 = vmatprep.mubr.f32.mxu0 0.0
    %2384 = vmatmul.mubr.f32.gmra.mxu0 %v2317
    %v2385 = vpop.f32.mrf.mxu0
    %v2386 = vadd.f32 0.0, %v2385
    %v2387 = vpop.f32.mrf.mxu0
    %2388 = vdwg.mxu0
    %s2389 = scalar_lea.vmem %s14, 32
    %v2390 = vld [vmem:[%s2389] sm:$0xff]
    %v2391 = vld [vmem:[%s2389 + $0x8] sm:$0xff]
    %v2393 = vsel %vm698, %v2313, 0
    %v2396 = vsel %vm698, %v2386, 0
    %2398 = vmatprep.subr.mxu0 0.0
    %2399 = vmatpush1.msra.mxu0 0.0
    %2400 = vmatprep.subr.mxu0 0.0
    %2401 = vmatpush1.msra.mxu0 0.0
    %2402 = vmatprep.subr.mxu0 0.0
    %2403 = vmatpush1.msra.mxu0 0.0
    %2404 = vmatprep.subr.mxu0 0.0
    %2405 = vmatpush1.msra.mxu0 0.0
    %2406 = vmatprep.subr.mxu0 0.0
    %2407 = vmatpush1.msra.mxu0 0.0
    %2408 = vmatprep.subr.mxu0 0.0
    %2409 = vmatpush1.msra.mxu0 0.0
    %2410 = vmatprep.subr.mxu0 0.0
    %2411 = vmatpush1.msra.mxu0 0.0
    %2412 = vmatprep.subr.mxu0 0.0
    %2413 = vmatpush1.msra.mxu0 0.0
    %2414 = vmatprep.subr.mxu0 0.0
    %2415 = vmatpush1.msra.mxu0 0.0
    %2416 = vmatprep.subr.mxu0 0.0
    %2417 = vmatpush1.msra.mxu0 0.0
    %2418 = vmatprep.subr.mxu0 0.0
    %2419 = vmatpush1.msra.mxu0 0.0
    %2420 = vmatprep.subr.mxu0 0.0
    %2421 = vmatpush1.msra.mxu0 0.0
    %2422 = vmatprep.subr.mxu0 0.0
    %2423 = vmatpush1.msra.mxu0 0.0
    %2424 = vmatprep.subr.mxu0 0.0
    %2425 = vmatpush1.msra.mxu0 0.0
    %2426 = vmatprep.subr.mxu0 0.0
    %2427 = vmatpush1.msra.mxu0 %v2391
    %2428 = vmatprep.subr.mxu0 0.0
    %2429 = vmatpush1.msra.mxu0 %v2390
    %2430 = vmatprep.subr.mxu0 0.0
    %2431 = vmatpush2.msra.mxu0 0.0
    %2432 = vmatprep.subr.mxu0 0.0
    %2433 = vmatpush2.msra.mxu0 0.0
    %2434 = vmatprep.subr.mxu0 0.0
    %2435 = vmatpush2.msra.mxu0 0.0
    %2436 = vmatprep.subr.mxu0 0.0
    %2437 = vmatpush2.msra.mxu0 0.0
    %2438 = vmatprep.subr.mxu0 0.0
    %2439 = vmatpush2.msra.mxu0 0.0
    %2440 = vmatprep.subr.mxu0 0.0
    %2441 = vmatpush2.msra.mxu0 0.0
    %2442 = vmatprep.subr.mxu0 0.0
    %2443 = vmatpush2.msra.mxu0 0.0
    %2444 = vmatprep.subr.mxu0 0.0
    %2445 = vmatpush2.msra.mxu0 0.0
    %2446 = vmatprep.subr.mxu0 0.0
    %2447 = vmatpush2.msra.mxu0 0.0
    %2448 = vmatprep.subr.mxu0 0.0
    %2449 = vmatpush2.msra.mxu0 0.0
    %2450 = vmatprep.subr.mxu0 0.0
    %2451 = vmatpush2.msra.mxu0 0.0
    %2452 = vmatprep.subr.mxu0 0.0
    %2453 = vmatpush2.msra.mxu0 0.0
    %2454 = vmatprep.subr.mxu0 0.0
    %2455 = vmatpush2.msra.mxu0 0.0
    %2456 = vmatprep.subr.mxu0 0.0
    %2457 = vmatpush2.msra.mxu0 0.0
    %2458 = vmatprep.subr.mxu0 0.0
    %2459 = vmatpush2.msra.mxu0 0.0
    %2460 = vmatprep.subr.mxu0 0.0
    %2461 = vmatpush2.msra.mxu0 0.0
    %2462 = vmatprep.mubr.f32.mxu0 0.0
    %2463 = vmatmul.mubr.f32.gmra.mxu0 %v2393
    %v2464 = vpop.f32.mrf.mxu0
    %v2465 = vadd.f32 0.0, %v2464
    %v2466 = vpop.f32.mrf.mxu0
    %2467 = vmatprep.mubr.f32.mxu0 0.0
    %2468 = vmatmul.mubr.f32.gmra.mxu0 %v2396
    %v2469 = vpop.f32.mrf.mxu0
    %v2470 = vadd.f32 0.0, %v2469
    %v2471 = vpop.f32.mrf.mxu0
    %2472 = vdwg.mxu0
    %v2473 = vadd.f32 %v1791, %v2465
    %v2474 = vadd.f32 %v1792, %v2470
    %s2475 = scalar_lea.vmem %s8, 192
    %v2476 = vld [vmem:[%s2475] sm:$0xff]
    %v2477 = vld [vmem:[%s2475 + $0x8] sm:$0xff]
    %v2478 = vld [vmem:[%s2475 + $0x10] sm:$0xff]
    %v2479 = vld [vmem:[%s2475 + $0x18] sm:$0xff]
    %v2480 = vld [vmem:[%s2475 + $0x20] sm:$0xff]
    %v2481 = vld [vmem:[%s2475 + $0x28] sm:$0xff]
    %v2482 = vld [vmem:[%s2475 + $0x30] sm:$0xff]
    %v2483 = vld [vmem:[%s2475 + $0x38] sm:$0xff]
    %s2484 = scalar_lea.vmem %s9, 3
    %v2485 = vld [vmem:[%s2484] sm:$0x1]
    %v2487 = vlaneseq
    %v2488 = vshrl.u32 %v2487, 7
    %v2489 = vsub.s32 0, %v2488
    %v2490 = vrot.slane %v2485, %v2489
    %2492 = vmatprep.subr.mxu0 0.0
    %2493 = vmatpush1.msra.mxu0 0.0
    %2494 = vmatprep.subr.mxu0 0.0
    %2495 = vmatpush1.msra.mxu0 0.0
    %2496 = vmatprep.subr.mxu0 0.0
    %2497 = vmatpush1.msra.mxu0 0.0
    %2498 = vmatprep.subr.mxu0 0.0
    %2499 = vmatpush1.msra.mxu0 0.0
    %2500 = vmatprep.subr.mxu0 0.0
    %2501 = vmatpush1.msra.mxu0 0.0
    %2502 = vmatprep.subr.mxu0 0.0
    %2503 = vmatpush1.msra.mxu0 0.0
    %2504 = vmatprep.subr.mxu0 0.0
    %2505 = vmatpush1.msra.mxu0 0.0
    %2506 = vmatprep.subr.mxu0 0.0
    %2507 = vmatpush1.msra.mxu0 0.0
    %2508 = vmatprep.subr.mxu0 0.0
    %2509 = vmatpush1.msra.mxu0 %v2483
    %2510 = vmatprep.subr.mxu0 0.0
    %2511 = vmatpush1.msra.mxu0 %v2482
    %2512 = vmatprep.subr.mxu0 0.0
    %2513 = vmatpush1.msra.mxu0 %v2481
    %2514 = vmatprep.subr.mxu0 0.0
    %2515 = vmatpush1.msra.mxu0 %v2480
    %2516 = vmatprep.subr.mxu0 0.0
    %2517 = vmatpush1.msra.mxu0 %v2479
    %2518 = vmatprep.subr.mxu0 0.0
    %2519 = vmatpush1.msra.mxu0 %v2478
    %2520 = vmatprep.subr.mxu0 0.0
    %2521 = vmatpush1.msra.mxu0 %v2477
    %2522 = vmatprep.subr.mxu0 0.0
    %2523 = vmatpush1.msra.mxu0 %v2476
    %2524 = vmatprep.subr.mxu0 0.0
    %2525 = vmatpush2.msra.mxu0 0.0
    %2526 = vmatprep.subr.mxu0 0.0
    %2527 = vmatpush2.msra.mxu0 0.0
    %2528 = vmatprep.subr.mxu0 0.0
    %2529 = vmatpush2.msra.mxu0 0.0
    %2530 = vmatprep.subr.mxu0 0.0
    %2531 = vmatpush2.msra.mxu0 0.0
    %2532 = vmatprep.subr.mxu0 0.0
    %2533 = vmatpush2.msra.mxu0 0.0
    %2534 = vmatprep.subr.mxu0 0.0
    %2535 = vmatpush2.msra.mxu0 0.0
    %2536 = vmatprep.subr.mxu0 0.0
    %2537 = vmatpush2.msra.mxu0 0.0
    %2538 = vmatprep.subr.mxu0 0.0
    %2539 = vmatpush2.msra.mxu0 0.0
    %2540 = vmatprep.subr.mxu0 0.0
    %2541 = vmatpush2.msra.mxu0 0.0
    %2542 = vmatprep.subr.mxu0 0.0
    %2543 = vmatpush2.msra.mxu0 0.0
    %2544 = vmatprep.subr.mxu0 0.0
    %2545 = vmatpush2.msra.mxu0 0.0
    %2546 = vmatprep.subr.mxu0 0.0
    %2547 = vmatpush2.msra.mxu0 0.0
    %2548 = vmatprep.subr.mxu0 0.0
    %2549 = vmatpush2.msra.mxu0 0.0
    %2550 = vmatprep.subr.mxu0 0.0
    %2551 = vmatpush2.msra.mxu0 0.0
    %2552 = vmatprep.subr.mxu0 0.0
    %2553 = vmatpush2.msra.mxu0 0.0
    %2554 = vmatprep.subr.mxu0 0.0
    %2555 = vmatpush2.msra.mxu0 0.0
    %2556 = vmatprep.mubr.f32.mxu0 0.0
    %2557 = vmatmul.mubr.f32.gmra.mxu0 %v438
    %v2558 = vpop.f32.mrf.mxu0
    %v2559 = vadd.f32 %v2490, %v2558
    %v2560 = vpop.f32.mrf.mxu0
    %2561 = vmatprep.mubr.f32.mxu0 0.0
    %2562 = vmatmul.mubr.f32.gmra.mxu0 %v441
    %v2563 = vpop.f32.mrf.mxu0
    %v2564 = vadd.f32 %v2490, %v2563
    %v2565 = vpop.f32.mrf.mxu0
    %2566 = vdwg.mxu0
    %s2567 = scalar_lea.vmem %s10, 192
    %v2568 = vld [vmem:[%s2567] sm:$0xff]
    %v2569 = vld [vmem:[%s2567 + $0x8] sm:$0xff]
    %v2570 = vld [vmem:[%s2567 + $0x10] sm:$0xff]
    %v2571 = vld [vmem:[%s2567 + $0x18] sm:$0xff]
    %v2572 = vld [vmem:[%s2567 + $0x20] sm:$0xff]
    %v2573 = vld [vmem:[%s2567 + $0x28] sm:$0xff]
    %v2574 = vld [vmem:[%s2567 + $0x30] sm:$0xff]
    %v2575 = vld [vmem:[%s2567 + $0x38] sm:$0xff]
    %s2576 = scalar_lea.vmem %s11, 3
    %v2577 = vld [vmem:[%s2576] sm:$0x1]
    %v2579 = vlaneseq
    %v2580 = vshrl.u32 %v2579, 7
    %v2581 = vsub.s32 0, %v2580
    %v2582 = vrot.slane %v2577, %v2581
    %2584 = vmatprep.subr.mxu0 0.0
    %2585 = vmatpush1.msra.mxu0 0.0
    %2586 = vmatprep.subr.mxu0 0.0
    %2587 = vmatpush1.msra.mxu0 0.0
    %2588 = vmatprep.subr.mxu0 0.0
    %2589 = vmatpush1.msra.mxu0 0.0
    %2590 = vmatprep.subr.mxu0 0.0
    %2591 = vmatpush1.msra.mxu0 0.0
    %2592 = vmatprep.subr.mxu0 0.0
    %2593 = vmatpush1.msra.mxu0 0.0
    %2594 = vmatprep.subr.mxu0 0.0
    %2595 = vmatpush1.msra.mxu0 0.0
    %2596 = vmatprep.subr.mxu0 0.0
    %2597 = vmatpush1.msra.mxu0 0.0
    %2598 = vmatprep.subr.mxu0 0.0
    %2599 = vmatpush1.msra.mxu0 0.0
    %2600 = vmatprep.subr.mxu0 0.0
    %2601 = vmatpush1.msra.mxu0 %v2575
    %2602 = vmatprep.subr.mxu0 0.0
    %2603 = vmatpush1.msra.mxu0 %v2574
    %2604 = vmatprep.subr.mxu0 0.0
    %2605 = vmatpush1.msra.mxu0 %v2573
    %2606 = vmatprep.subr.mxu0 0.0
    %2607 = vmatpush1.msra.mxu0 %v2572
    %2608 = vmatprep.subr.mxu0 0.0
    %2609 = vmatpush1.msra.mxu0 %v2571
    %2610 = vmatprep.subr.mxu0 0.0
    %2611 = vmatpush1.msra.mxu0 %v2570
    %2612 = vmatprep.subr.mxu0 0.0
    %2613 = vmatpush1.msra.mxu0 %v2569
    %2614 = vmatprep.subr.mxu0 0.0
    %2615 = vmatpush1.msra.mxu0 %v2568
    %2616 = vmatprep.subr.mxu0 0.0
    %2617 = vmatpush2.msra.mxu0 0.0
    %2618 = vmatprep.subr.mxu0 0.0
    %2619 = vmatpush2.msra.mxu0 0.0
    %2620 = vmatprep.subr.mxu0 0.0
    %2621 = vmatpush2.msra.mxu0 0.0
    %2622 = vmatprep.subr.mxu0 0.0
    %2623 = vmatpush2.msra.mxu0 0.0
    %2624 = vmatprep.subr.mxu0 0.0
    %2625 = vmatpush2.msra.mxu0 0.0
    %2626 = vmatprep.subr.mxu0 0.0
    %2627 = vmatpush2.msra.mxu0 0.0
    %2628 = vmatprep.subr.mxu0 0.0
    %2629 = vmatpush2.msra.mxu0 0.0
    %2630 = vmatprep.subr.mxu0 0.0
    %2631 = vmatpush2.msra.mxu0 0.0
    %2632 = vmatprep.subr.mxu0 0.0
    %2633 = vmatpush2.msra.mxu0 0.0
    %2634 = vmatprep.subr.mxu0 0.0
    %2635 = vmatpush2.msra.mxu0 0.0
    %2636 = vmatprep.subr.mxu0 0.0
    %2637 = vmatpush2.msra.mxu0 0.0
    %2638 = vmatprep.subr.mxu0 0.0
    %2639 = vmatpush2.msra.mxu0 0.0
    %2640 = vmatprep.subr.mxu0 0.0
    %2641 = vmatpush2.msra.mxu0 0.0
    %2642 = vmatprep.subr.mxu0 0.0
    %2643 = vmatpush2.msra.mxu0 0.0
    %2644 = vmatprep.subr.mxu0 0.0
    %2645 = vmatpush2.msra.mxu0 0.0
    %2646 = vmatprep.subr.mxu0 0.0
    %2647 = vmatpush2.msra.mxu0 0.0
    %2648 = vmatprep.mubr.f32.mxu0 0.0
    %2649 = vmatmul.mubr.f32.gmra.mxu0 %v438
    %v2650 = vpop.f32.mrf.mxu0
    %v2651 = vadd.f32 %v2582, %v2650
    %v2652 = vpop.f32.mrf.mxu0
    %2653 = vmatprep.mubr.f32.mxu0 0.0
    %2654 = vmatmul.mubr.f32.gmra.mxu0 %v441
    %v2655 = vpop.f32.mrf.mxu0
    %v2656 = vadd.f32 %v2582, %v2655
    %v2657 = vpop.f32.mrf.mxu0
    %2658 = vdwg.mxu0
    %s2659 = scalar_lea.vmem %s12, 192
    %v2660 = vld [vmem:[%s2659] sm:$0xff]
    %v2661 = vld [vmem:[%s2659 + $0x8] sm:$0xff]
    %v2662 = vld [vmem:[%s2659 + $0x10] sm:$0xff]
    %v2663 = vld [vmem:[%s2659 + $0x18] sm:$0xff]
    %v2664 = vld [vmem:[%s2659 + $0x20] sm:$0xff]
    %v2665 = vld [vmem:[%s2659 + $0x28] sm:$0xff]
    %v2666 = vld [vmem:[%s2659 + $0x30] sm:$0xff]
    %v2667 = vld [vmem:[%s2659 + $0x38] sm:$0xff]
    %s2668 = scalar_lea.vmem %s13, 3
    %v2669 = vld [vmem:[%s2668] sm:$0x1]
    %v2671 = vlaneseq
    %v2672 = vshrl.u32 %v2671, 7
    %v2673 = vsub.s32 0, %v2672
    %v2674 = vrot.slane %v2669, %v2673
    %2676 = vmatprep.subr.mxu0 0.0
    %2677 = vmatpush1.msra.mxu0 0.0
    %2678 = vmatprep.subr.mxu0 0.0
    %2679 = vmatpush1.msra.mxu0 0.0
    %2680 = vmatprep.subr.mxu0 0.0
    %2681 = vmatpush1.msra.mxu0 0.0
    %2682 = vmatprep.subr.mxu0 0.0
    %2683 = vmatpush1.msra.mxu0 0.0
    %2684 = vmatprep.subr.mxu0 0.0
    %2685 = vmatpush1.msra.mxu0 0.0
    %2686 = vmatprep.subr.mxu0 0.0
    %2687 = vmatpush1.msra.mxu0 0.0
    %2688 = vmatprep.subr.mxu0 0.0
    %2689 = vmatpush1.msra.mxu0 0.0
    %2690 = vmatprep.subr.mxu0 0.0
    %2691 = vmatpush1.msra.mxu0 0.0
    %2692 = vmatprep.subr.mxu0 0.0
    %2693 = vmatpush1.msra.mxu0 %v2667
    %2694 = vmatprep.subr.mxu0 0.0
    %2695 = vmatpush1.msra.mxu0 %v2666
    %2696 = vmatprep.subr.mxu0 0.0
    %2697 = vmatpush1.msra.mxu0 %v2665
    %2698 = vmatprep.subr.mxu0 0.0
    %2699 = vmatpush1.msra.mxu0 %v2664
    %2700 = vmatprep.subr.mxu0 0.0
    %2701 = vmatpush1.msra.mxu0 %v2663
    %2702 = vmatprep.subr.mxu0 0.0
    %2703 = vmatpush1.msra.mxu0 %v2662
    %2704 = vmatprep.subr.mxu0 0.0
    %2705 = vmatpush1.msra.mxu0 %v2661
    %2706 = vmatprep.subr.mxu0 0.0
    %2707 = vmatpush1.msra.mxu0 %v2660
    %2708 = vmatprep.subr.mxu0 0.0
    %2709 = vmatpush2.msra.mxu0 0.0
    %2710 = vmatprep.subr.mxu0 0.0
    %2711 = vmatpush2.msra.mxu0 0.0
    %2712 = vmatprep.subr.mxu0 0.0
    %2713 = vmatpush2.msra.mxu0 0.0
    %2714 = vmatprep.subr.mxu0 0.0
    %2715 = vmatpush2.msra.mxu0 0.0
    %2716 = vmatprep.subr.mxu0 0.0
    %2717 = vmatpush2.msra.mxu0 0.0
    %2718 = vmatprep.subr.mxu0 0.0
    %2719 = vmatpush2.msra.mxu0 0.0
    %2720 = vmatprep.subr.mxu0 0.0
    %2721 = vmatpush2.msra.mxu0 0.0
    %2722 = vmatprep.subr.mxu0 0.0
    %2723 = vmatpush2.msra.mxu0 0.0
    %2724 = vmatprep.subr.mxu0 0.0
    %2725 = vmatpush2.msra.mxu0 0.0
    %2726 = vmatprep.subr.mxu0 0.0
    %2727 = vmatpush2.msra.mxu0 0.0
    %2728 = vmatprep.subr.mxu0 0.0
    %2729 = vmatpush2.msra.mxu0 0.0
    %2730 = vmatprep.subr.mxu0 0.0
    %2731 = vmatpush2.msra.mxu0 0.0
    %2732 = vmatprep.subr.mxu0 0.0
    %2733 = vmatpush2.msra.mxu0 0.0
    %2734 = vmatprep.subr.mxu0 0.0
    %2735 = vmatpush2.msra.mxu0 0.0
    %2736 = vmatprep.subr.mxu0 0.0
    %2737 = vmatpush2.msra.mxu0 0.0
    %2738 = vmatprep.subr.mxu0 0.0
    %2739 = vmatpush2.msra.mxu0 0.0
    %2740 = vmatprep.mubr.f32.mxu0 0.0
    %2741 = vmatmul.mubr.f32.gmra.mxu0 %v438
    %v2742 = vpop.f32.mrf.mxu0
    %v2743 = vadd.f32 %v2674, %v2742
    %v2744 = vpop.f32.mrf.mxu0
    %2745 = vmatprep.mubr.f32.mxu0 0.0
    %2746 = vmatmul.mubr.f32.gmra.mxu0 %v441
    %v2747 = vpop.f32.mrf.mxu0
    %v2748 = vadd.f32 %v2674, %v2747
    %v2749 = vpop.f32.mrf.mxu0
    %2750 = vdwg.mxu0
    %v2752 = vsel %vm698, %v2559, 0
    %v2755 = vsel %vm698, %v2651, 0
    %2757 = vmatprep.subr.mxu0 0.0
    %2758 = vmatpush1.xpose.msra.mxu0 0.0
    %2759 = vmatprep.subr.mxu0 0.0
    %2760 = vmatpush1.xpose.msra.mxu0 0.0
    %2761 = vmatprep.subr.mxu0 0.0
    %2762 = vmatpush1.xpose.msra.mxu0 0.0
    %2763 = vmatprep.subr.mxu0 0.0
    %2764 = vmatpush1.xpose.msra.mxu0 0.0
    %2765 = vmatprep.subr.mxu0 0.0
    %2766 = vmatpush1.xpose.msra.mxu0 0.0
    %2767 = vmatprep.subr.mxu0 0.0
    %2768 = vmatpush1.xpose.msra.mxu0 0.0
    %2769 = vmatprep.subr.mxu0 0.0
    %2770 = vmatpush1.xpose.msra.mxu0 0.0
    %2771 = vmatprep.subr.mxu0 0.0
    %2772 = vmatpush1.xpose.msra.mxu0 0.0
    %2773 = vmatprep.subr.mxu0 0.0
    %2774 = vmatpush1.xpose.msra.mxu0 0.0
    %2775 = vmatprep.subr.mxu0 0.0
    %2776 = vmatpush1.xpose.msra.mxu0 0.0
    %2777 = vmatprep.subr.mxu0 0.0
    %2778 = vmatpush1.xpose.msra.mxu0 0.0
    %2779 = vmatprep.subr.mxu0 0.0
    %2780 = vmatpush1.xpose.msra.mxu0 0.0
    %2781 = vmatprep.subr.mxu0 0.0
    %2782 = vmatpush1.xpose.msra.mxu0 0.0
    %2783 = vmatprep.subr.mxu0 0.0
    %2784 = vmatpush1.xpose.msra.mxu0 0.0
    %2785 = vmatprep.subr.mxu0 0.0
    %2786 = vmatpush1.xpose.msra.mxu0 0.0
    %2787 = vmatprep.subr.mxu0 0.0
    %2788 = vmatpush1.xpose.msra.mxu0 %v2755
    %2789 = vmatprep.subr.mxu0 0.0
    %2790 = vmatpush2.xpose.msra.mxu0 0.0
    %2791 = vmatprep.subr.mxu0 0.0
    %2792 = vmatpush2.xpose.msra.mxu0 0.0
    %2793 = vmatprep.subr.mxu0 0.0
    %2794 = vmatpush2.xpose.msra.mxu0 0.0
    %2795 = vmatprep.subr.mxu0 0.0
    %2796 = vmatpush2.xpose.msra.mxu0 0.0
    %2797 = vmatprep.subr.mxu0 0.0
    %2798 = vmatpush2.xpose.msra.mxu0 0.0
    %2799 = vmatprep.subr.mxu0 0.0
    %2800 = vmatpush2.xpose.msra.mxu0 0.0
    %2801 = vmatprep.subr.mxu0 0.0
    %2802 = vmatpush2.xpose.msra.mxu0 0.0
    %2803 = vmatprep.subr.mxu0 0.0
    %2804 = vmatpush2.xpose.msra.mxu0 0.0
    %2805 = vmatprep.subr.mxu0 0.0
    %2806 = vmatpush2.xpose.msra.mxu0 0.0
    %2807 = vmatprep.subr.mxu0 0.0
    %2808 = vmatpush2.xpose.msra.mxu0 0.0
    %2809 = vmatprep.subr.mxu0 0.0
    %2810 = vmatpush2.xpose.msra.mxu0 0.0
    %2811 = vmatprep.subr.mxu0 0.0
    %2812 = vmatpush2.xpose.msra.mxu0 0.0
    %2813 = vmatprep.subr.mxu0 0.0
    %2814 = vmatpush2.xpose.msra.mxu0 0.0
    %2815 = vmatprep.subr.mxu0 0.0
    %2816 = vmatpush2.xpose.msra.mxu0 0.0
    %2817 = vmatprep.subr.mxu0 0.0
    %2818 = vmatpush2.xpose.msra.mxu0 0.0
    %2819 = vmatprep.subr.mxu0 0.0
    %2820 = vmatpush2.xpose.msra.mxu0 0.0
    %2821 = vmatprep.mubr.f32.mxu0 0.0
    %2822 = vmatmul.mubr.f32.gmra.mxu0 %v2752
    %v2823 = vpop.f32.mrf.mxu0
    %v2824 = vadd.f32 0.0, %v2823
    %v2825 = vpop.f32.mrf.mxu0
    %2826 = vdwg.mxu0
    %v2828 = vsel %vm698, %v2564, 0
    %v2831 = vsel %vm698, %v2656, 0
    %2833 = vmatprep.subr.mxu0 0.0
    %2834 = vmatpush1.xpose.msra.mxu0 0.0
    %2835 = vmatprep.subr.mxu0 0.0
    %2836 = vmatpush1.xpose.msra.mxu0 0.0
    %2837 = vmatprep.subr.mxu0 0.0
    %2838 = vmatpush1.xpose.msra.mxu0 0.0
    %2839 = vmatprep.subr.mxu0 0.0
    %2840 = vmatpush1.xpose.msra.mxu0 0.0
    %2841 = vmatprep.subr.mxu0 0.0
    %2842 = vmatpush1.xpose.msra.mxu0 0.0
    %2843 = vmatprep.subr.mxu0 0.0
    %2844 = vmatpush1.xpose.msra.mxu0 0.0
    %2845 = vmatprep.subr.mxu0 0.0
    %2846 = vmatpush1.xpose.msra.mxu0 0.0
    %2847 = vmatprep.subr.mxu0 0.0
    %2848 = vmatpush1.xpose.msra.mxu0 0.0
    %2849 = vmatprep.subr.mxu0 0.0
    %2850 = vmatpush1.xpose.msra.mxu0 0.0
    %2851 = vmatprep.subr.mxu0 0.0
    %2852 = vmatpush1.xpose.msra.mxu0 0.0
    %2853 = vmatprep.subr.mxu0 0.0
    %2854 = vmatpush1.xpose.msra.mxu0 0.0
    %2855 = vmatprep.subr.mxu0 0.0
    %2856 = vmatpush1.xpose.msra.mxu0 0.0
    %2857 = vmatprep.subr.mxu0 0.0
    %2858 = vmatpush1.xpose.msra.mxu0 0.0
    %2859 = vmatprep.subr.mxu0 0.0
    %2860 = vmatpush1.xpose.msra.mxu0 0.0
    %2861 = vmatprep.subr.mxu0 0.0
    %2862 = vmatpush1.xpose.msra.mxu0 0.0
    %2863 = vmatprep.subr.mxu0 0.0
    %2864 = vmatpush1.xpose.msra.mxu0 %v2831
    %2865 = vmatprep.subr.mxu0 0.0
    %2866 = vmatpush2.xpose.msra.mxu0 0.0
    %2867 = vmatprep.subr.mxu0 0.0
    %2868 = vmatpush2.xpose.msra.mxu0 0.0
    %2869 = vmatprep.subr.mxu0 0.0
    %2870 = vmatpush2.xpose.msra.mxu0 0.0
    %2871 = vmatprep.subr.mxu0 0.0
    %2872 = vmatpush2.xpose.msra.mxu0 0.0
    %2873 = vmatprep.subr.mxu0 0.0
    %2874 = vmatpush2.xpose.msra.mxu0 0.0
    %2875 = vmatprep.subr.mxu0 0.0
    %2876 = vmatpush2.xpose.msra.mxu0 0.0
    %2877 = vmatprep.subr.mxu0 0.0
    %2878 = vmatpush2.xpose.msra.mxu0 0.0
    %2879 = vmatprep.subr.mxu0 0.0
    %2880 = vmatpush2.xpose.msra.mxu0 0.0
    %2881 = vmatprep.subr.mxu0 0.0
    %2882 = vmatpush2.xpose.msra.mxu0 0.0
    %2883 = vmatprep.subr.mxu0 0.0
    %2884 = vmatpush2.xpose.msra.mxu0 0.0
    %2885 = vmatprep.subr.mxu0 0.0
    %2886 = vmatpush2.xpose.msra.mxu0 0.0
    %2887 = vmatprep.subr.mxu0 0.0
    %2888 = vmatpush2.xpose.msra.mxu0 0.0
    %2889 = vmatprep.subr.mxu0 0.0
    %2890 = vmatpush2.xpose.msra.mxu0 0.0
    %2891 = vmatprep.subr.mxu0 0.0
    %2892 = vmatpush2.xpose.msra.mxu0 0.0
    %2893 = vmatprep.subr.mxu0 0.0
    %2894 = vmatpush2.xpose.msra.mxu0 0.0
    %2895 = vmatprep.subr.mxu0 0.0
    %2896 = vmatpush2.xpose.msra.mxu0 0.0
    %2897 = vmatprep.mubr.f32.mxu0 0.0
    %2898 = vmatmul.mubr.f32.gmra.mxu0 %v2828
    %v2899 = vpop.f32.mrf.mxu0
    %v2900 = vadd.f32 0.0, %v2899
    %v2901 = vpop.f32.mrf.mxu0
    %2902 = vdwg.mxu0
    %v2903 = vsel %vm851, %v2824, -inf
    %2904 = vmax.xlane.f32.xlu0 %v2903
    %v2905 = vpop.xlane.xlu0 %2904
    %v2906 = vsel %vm851, %v2900, -inf
    %2907 = vmax.xlane.f32.xlu0 %v2906
    %v2908 = vpop.xlane.xlu0 %2907
    %v2909 = vsub.f32 %v2824, %v2905
    %v2910 = vsub.f32 %v2900, %v2908
    %v2911 = vmul.f32 %v2909, 1.442695
    %v2912 = vpow.pop %v2911
    %v2913 = vmul.f32 %v2910, 1.442695
    %v2914 = vpow.pop %v2913
    %v2915 = vsel %vm851, %v2912, 0.0
    %2916 = vadd.xlane.f32.xlu0 %v2915
    %v2917 = vpop.xlane.xlu0 %2916
    %v2918 = vsel %vm851, %v2914, 0.0
    %2919 = vadd.xlane.f32.xlu0 %v2918
    %v2920 = vpop.xlane.xlu0 %2919
    %v2921 = vrcp.pop %v2917
    %v2922 = vmul.f32 %v2912, %v2921
    %v2923 = vrcp.pop %v2920
    %v2924 = vmul.f32 %v2914, %v2923
    %v2926 = vsel %vm851, %v2922, 0
    %2928 = vmatprep.subr.mxu0 0.0
    %2929 = vmatpush1.msra.mxu0 0.0
    %2930 = vmatprep.subr.mxu0 0.0
    %2931 = vmatpush1.msra.mxu0 0.0
    %2932 = vmatprep.subr.mxu0 0.0
    %2933 = vmatpush1.msra.mxu0 0.0
    %2934 = vmatprep.subr.mxu0 0.0
    %2935 = vmatpush1.msra.mxu0 0.0
    %2936 = vmatprep.subr.mxu0 0.0
    %2937 = vmatpush1.msra.mxu0 0.0
    %2938 = vmatprep.subr.mxu0 0.0
    %2939 = vmatpush1.msra.mxu0 0.0
    %2940 = vmatprep.subr.mxu0 0.0
    %2941 = vmatpush1.msra.mxu0 0.0
    %2942 = vmatprep.subr.mxu0 0.0
    %2943 = vmatpush1.msra.mxu0 0.0
    %2944 = vmatprep.subr.mxu0 0.0
    %2945 = vmatpush1.msra.mxu0 0.0
    %2946 = vmatprep.subr.mxu0 0.0
    %2947 = vmatpush1.msra.mxu0 0.0
    %2948 = vmatprep.subr.mxu0 0.0
    %2949 = vmatpush1.msra.mxu0 0.0
    %2950 = vmatprep.subr.mxu0 0.0
    %2951 = vmatpush1.msra.mxu0 0.0
    %2952 = vmatprep.subr.mxu0 0.0
    %2953 = vmatpush1.msra.mxu0 0.0
    %2954 = vmatprep.subr.mxu0 0.0
    %2955 = vmatpush1.msra.mxu0 0.0
    %2956 = vmatprep.subr.mxu0 0.0
    %2957 = vmatpush1.msra.mxu0 0.0
    %2958 = vmatprep.subr.mxu0 0.0
    %2959 = vmatpush1.msra.mxu0 %v2743
    %2960 = vmatprep.subr.mxu0 0.0
    %2961 = vmatpush2.msra.mxu0 0.0
    %2962 = vmatprep.subr.mxu0 0.0
    %2963 = vmatpush2.msra.mxu0 0.0
    %2964 = vmatprep.subr.mxu0 0.0
    %2965 = vmatpush2.msra.mxu0 0.0
    %2966 = vmatprep.subr.mxu0 0.0
    %2967 = vmatpush2.msra.mxu0 0.0
    %2968 = vmatprep.subr.mxu0 0.0
    %2969 = vmatpush2.msra.mxu0 0.0
    %2970 = vmatprep.subr.mxu0 0.0
    %2971 = vmatpush2.msra.mxu0 0.0
    %2972 = vmatprep.subr.mxu0 0.0
    %2973 = vmatpush2.msra.mxu0 0.0
    %2974 = vmatprep.subr.mxu0 0.0
    %2975 = vmatpush2.msra.mxu0 0.0
    %2976 = vmatprep.subr.mxu0 0.0
    %2977 = vmatpush2.msra.mxu0 0.0
    %2978 = vmatprep.subr.mxu0 0.0
    %2979 = vmatpush2.msra.mxu0 0.0
    %2980 = vmatprep.subr.mxu0 0.0
    %2981 = vmatpush2.msra.mxu0 0.0
    %2982 = vmatprep.subr.mxu0 0.0
    %2983 = vmatpush2.msra.mxu0 0.0
    %2984 = vmatprep.subr.mxu0 0.0
    %2985 = vmatpush2.msra.mxu0 0.0
    %2986 = vmatprep.subr.mxu0 0.0
    %2987 = vmatpush2.msra.mxu0 0.0
    %2988 = vmatprep.subr.mxu0 0.0
    %2989 = vmatpush2.msra.mxu0 0.0
    %2990 = vmatprep.subr.mxu0 0.0
    %2991 = vmatpush2.msra.mxu0 0.0
    %2992 = vmatprep.mubr.f32.mxu0 0.0
    %2993 = vmatmul.mubr.f32.gmra.mxu0 %v2926
    %v2994 = vpop.f32.mrf.mxu0
    %v2995 = vadd.f32 0.0, %v2994
    %v2996 = vpop.f32.mrf.mxu0
    %2997 = vdwg.mxu0
    %v2999 = vsel %vm851, %v2924, 0
    %3001 = vmatprep.subr.mxu0 0.0
    %3002 = vmatpush1.msra.mxu0 0.0
    %3003 = vmatprep.subr.mxu0 0.0
    %3004 = vmatpush1.msra.mxu0 0.0
    %3005 = vmatprep.subr.mxu0 0.0
    %3006 = vmatpush1.msra.mxu0 0.0
    %3007 = vmatprep.subr.mxu0 0.0
    %3008 = vmatpush1.msra.mxu0 0.0
    %3009 = vmatprep.subr.mxu0 0.0
    %3010 = vmatpush1.msra.mxu0 0.0
    %3011 = vmatprep.subr.mxu0 0.0
    %3012 = vmatpush1.msra.mxu0 0.0
    %3013 = vmatprep.subr.mxu0 0.0
    %3014 = vmatpush1.msra.mxu0 0.0
    %3015 = vmatprep.subr.mxu0 0.0
    %3016 = vmatpush1.msra.mxu0 0.0
    %3017 = vmatprep.subr.mxu0 0.0
    %3018 = vmatpush1.msra.mxu0 0.0
    %3019 = vmatprep.subr.mxu0 0.0
    %3020 = vmatpush1.msra.mxu0 0.0
    %3021 = vmatprep.subr.mxu0 0.0
    %3022 = vmatpush1.msra.mxu0 0.0
    %3023 = vmatprep.subr.mxu0 0.0
    %3024 = vmatpush1.msra.mxu0 0.0
    %3025 = vmatprep.subr.mxu0 0.0
    %3026 = vmatpush1.msra.mxu0 0.0
    %3027 = vmatprep.subr.mxu0 0.0
    %3028 = vmatpush1.msra.mxu0 0.0
    %3029 = vmatprep.subr.mxu0 0.0
    %3030 = vmatpush1.msra.mxu0 0.0
    %3031 = vmatprep.subr.mxu0 0.0
    %3032 = vmatpush1.msra.mxu0 %v2748
    %3033 = vmatprep.subr.mxu0 0.0
    %3034 = vmatpush2.msra.mxu0 0.0
    %3035 = vmatprep.subr.mxu0 0.0
    %3036 = vmatpush2.msra.mxu0 0.0
    %3037 = vmatprep.subr.mxu0 0.0
    %3038 = vmatpush2.msra.mxu0 0.0
    %3039 = vmatprep.subr.mxu0 0.0
    %3040 = vmatpush2.msra.mxu0 0.0
    %3041 = vmatprep.subr.mxu0 0.0
    %3042 = vmatpush2.msra.mxu0 0.0
    %3043 = vmatprep.subr.mxu0 0.0
    %3044 = vmatpush2.msra.mxu0 0.0
    %3045 = vmatprep.subr.mxu0 0.0
    %3046 = vmatpush2.msra.mxu0 0.0
    %3047 = vmatprep.subr.mxu0 0.0
    %3048 = vmatpush2.msra.mxu0 0.0
    %3049 = vmatprep.subr.mxu0 0.0
    %3050 = vmatpush2.msra.mxu0 0.0
    %3051 = vmatprep.subr.mxu0 0.0
    %3052 = vmatpush2.msra.mxu0 0.0
    %3053 = vmatprep.subr.mxu0 0.0
    %3054 = vmatpush2.msra.mxu0 0.0
    %3055 = vmatprep.subr.mxu0 0.0
    %3056 = vmatpush2.msra.mxu0 0.0
    %3057 = vmatprep.subr.mxu0 0.0
    %3058 = vmatpush2.msra.mxu0 0.0
    %3059 = vmatprep.subr.mxu0 0.0
    %3060 = vmatpush2.msra.mxu0 0.0
    %3061 = vmatprep.subr.mxu0 0.0
    %3062 = vmatpush2.msra.mxu0 0.0
    %3063 = vmatprep.subr.mxu0 0.0
    %3064 = vmatpush2.msra.mxu0 0.0
    %3065 = vmatprep.mubr.f32.mxu0 0.0
    %3066 = vmatmul.mubr.f32.gmra.mxu0 %v2999
    %v3067 = vpop.f32.mrf.mxu0
    %v3068 = vadd.f32 0.0, %v3067
    %v3069 = vpop.f32.mrf.mxu0
    %3070 = vdwg.mxu0
    %s3071 = scalar_lea.vmem %s14, 48
    %v3072 = vld [vmem:[%s3071] sm:$0xff]
    %v3073 = vld [vmem:[%s3071 + $0x8] sm:$0xff]
    %v3075 = vsel %vm698, %v2995, 0
    %v3078 = vsel %vm698, %v3068, 0
    %3080 = vmatprep.subr.mxu0 0.0
    %3081 = vmatpush1.msra.mxu0 0.0
    %3082 = vmatprep.subr.mxu0 0.0
    %3083 = vmatpush1.msra.mxu0 0.0
    %3084 = vmatprep.subr.mxu0 0.0
    %3085 = vmatpush1.msra.mxu0 0.0
    %3086 = vmatprep.subr.mxu0 0.0
    %3087 = vmatpush1.msra.mxu0 0.0
    %3088 = vmatprep.subr.mxu0 0.0
    %3089 = vmatpush1.msra.mxu0 0.0
    %3090 = vmatprep.subr.mxu0 0.0
    %3091 = vmatpush1.msra.mxu0 0.0
    %3092 = vmatprep.subr.mxu0 0.0
    %3093 = vmatpush1.msra.mxu0 0.0
    %3094 = vmatprep.subr.mxu0 0.0
    %3095 = vmatpush1.msra.mxu0 0.0
    %3096 = vmatprep.subr.mxu0 0.0
    %3097 = vmatpush1.msra.mxu0 0.0
    %3098 = vmatprep.subr.mxu0 0.0
    %3099 = vmatpush1.msra.mxu0 0.0
    %3100 = vmatprep.subr.mxu0 0.0
    %3101 = vmatpush1.msra.mxu0 0.0
    %3102 = vmatprep.subr.mxu0 0.0
    %3103 = vmatpush1.msra.mxu0 0.0
    %3104 = vmatprep.subr.mxu0 0.0
    %3105 = vmatpush1.msra.mxu0 0.0
    %3106 = vmatprep.subr.mxu0 0.0
    %3107 = vmatpush1.msra.mxu0 0.0
    %3108 = vmatprep.subr.mxu0 0.0
    %3109 = vmatpush1.msra.mxu0 %v3073
    %3110 = vmatprep.subr.mxu0 0.0
    %3111 = vmatpush1.msra.mxu0 %v3072
    %3112 = vmatprep.subr.mxu0 0.0
    %3113 = vmatpush2.msra.mxu0 0.0
    %3114 = vmatprep.subr.mxu0 0.0
    %3115 = vmatpush2.msra.mxu0 0.0
    %3116 = vmatprep.subr.mxu0 0.0
    %3117 = vmatpush2.msra.mxu0 0.0
    %3118 = vmatprep.subr.mxu0 0.0
    %3119 = vmatpush2.msra.mxu0 0.0
    %3120 = vmatprep.subr.mxu0 0.0
    %3121 = vmatpush2.msra.mxu0 0.0
    %3122 = vmatprep.subr.mxu0 0.0
    %3123 = vmatpush2.msra.mxu0 0.0
    %3124 = vmatprep.subr.mxu0 0.0
    %3125 = vmatpush2.msra.mxu0 0.0
    %3126 = vmatprep.subr.mxu0 0.0
    %3127 = vmatpush2.msra.mxu0 0.0
    %3128 = vmatprep.subr.mxu0 0.0
    %3129 = vmatpush2.msra.mxu0 0.0
    %3130 = vmatprep.subr.mxu0 0.0
    %3131 = vmatpush2.msra.mxu0 0.0
    %3132 = vmatprep.subr.mxu0 0.0
    %3133 = vmatpush2.msra.mxu0 0.0
    %3134 = vmatprep.subr.mxu0 0.0
    %3135 = vmatpush2.msra.mxu0 0.0
    %3136 = vmatprep.subr.mxu0 0.0
    %3137 = vmatpush2.msra.mxu0 0.0
    %3138 = vmatprep.subr.mxu0 0.0
    %3139 = vmatpush2.msra.mxu0 0.0
    %3140 = vmatprep.subr.mxu0 0.0
    %3141 = vmatpush2.msra.mxu0 0.0
    %3142 = vmatprep.subr.mxu0 0.0
    %3143 = vmatpush2.msra.mxu0 0.0
    %3144 = vmatprep.mubr.f32.mxu0 0.0
    %3145 = vmatmul.mubr.f32.gmra.mxu0 %v3075
    %v3146 = vpop.f32.mrf.mxu0
    %v3147 = vadd.f32 0.0, %v3146
    %v3148 = vpop.f32.mrf.mxu0
    %3149 = vmatprep.mubr.f32.mxu0 0.0
    %3150 = vmatmul.mubr.f32.gmra.mxu0 %v3078
    %v3151 = vpop.f32.mrf.mxu0
    %v3152 = vadd.f32 0.0, %v3151
    %v3153 = vpop.f32.mrf.mxu0
    %3154 = vdwg.mxu0
    %v3155 = vadd.f32 %v2473, %v3147
    %v3156 = vadd.f32 %v2474, %v3152
    %v3157 = vadd.f32 %v419, %v3155
    %v3158 = vadd.f32 %v420, %v3156
    %v3159 = vsel %vm223, %v3157, 0.0
    %3160 = vadd.xlane.f32.xlu0 %v3159
    %v3161 = vpop.xlane.xlu0 %3160
    %v3162 = vsel %vm223, %v3158, 0.0
    %3163 = vadd.xlane.f32.xlu0 %v3162
    %v3164 = vpop.xlane.xlu0 %3163
    %v3165 = vrcp.pop 64.0
    %v3166 = vmul.f32 %v3161, %v3165
    %v3167 = vmul.f32 %v3164, %v3165
    %v3168 = vsub.f32 %v3157, %v3166
    %v3169 = vsub.f32 %v3158, %v3167
    %v3170 = vmul.f32 %v3168, %v3168
    %v3171 = vmul.f32 %v3169, %v3169
    %v3172 = vsel %vm223, %v3170, 0.0
    %3173 = vadd.xlane.f32.xlu0 %v3172
    %v3174 = vpop.xlane.xlu0 %3173
    %v3175 = vsel %vm223, %v3171, 0.0
    %3176 = vadd.xlane.f32.xlu0 %v3175
    %v3177 = vpop.xlane.xlu0 %3176
    %v3178 = vmul.f32 %v3174, %v3165
    %v3179 = vmul.f32 %v3177, %v3165
    %v3180 = vadd.f32 %v3178, 1e-05
    %v3181 = vadd.f32 %v3179, 1e-05
    %v3182 = vrsqrt.pop %v3180
    %v3183 = vrsqrt.pop %v3181
    %v3184 = vmul.f32 %v3168, %v3182
    %v3185 = vmul.f32 %v3169, %v3183
    %v3186 = vld [vmem:[%s20] sm:$0x1]
    %v3188 = vlaneseq
    %v3189 = vshrl.u32 %v3188, 7
    %v3190 = vsub.s32 0, %v3189
    %v3191 = vrot.slane %v3186, %v3190
    %v3193 = vmul.f32 %v3184, %v3191
    %v3194 = vmul.f32 %v3185, %v3191
    %v3195 = vld [vmem:[%s21] sm:$0x1]
    %v3197 = vlaneseq
    %v3198 = vshrl.u32 %v3197, 7
    %v3199 = vsub.s32 0, %v3198
    %v3200 = vrot.slane %v3195, %v3199
    %v3202 = vadd.f32 %v3193, %v3200
    %v3203 = vadd.f32 %v3194, %v3200
    %v3204 = vld [vmem:[%s16] sm:$0xff]
    %v3205 = vld [vmem:[%s16 + $0x8] sm:$0xff]
    %v3206 = vld [vmem:[%s16 + $0x10] sm:$0xff]
    %v3207 = vld [vmem:[%s16 + $0x18] sm:$0xff]
    %v3208 = vld [vmem:[%s16 + $0x20] sm:$0xff]
    %v3209 = vld [vmem:[%s16 + $0x28] sm:$0xff]
    %v3210 = vld [vmem:[%s16 + $0x30] sm:$0xff]
    %v3211 = vld [vmem:[%s16 + $0x38] sm:$0xff]
    %v3212 = vld [vmem:[%s17] sm:$0x1]
    %v3214 = vlaneseq
    %v3215 = vshrl.u32 %v3214, 7
    %v3216 = vsub.s32 0, %v3215
    %v3217 = vrot.slane %v3212, %v3216
    %v3220 = vsel %vm223, %v3202, 0
    %v3223 = vsel %vm223, %v3203, 0
    %3225 = vmatprep.subr.mxu0 0.0
    %3226 = vmatpush1.msra.mxu0 0.0
    %3227 = vmatprep.subr.mxu0 0.0
    %3228 = vmatpush1.msra.mxu0 0.0
    %3229 = vmatprep.subr.mxu0 0.0
    %3230 = vmatpush1.msra.mxu0 0.0
    %3231 = vmatprep.subr.mxu0 0.0
    %3232 = vmatpush1.msra.mxu0 0.0
    %3233 = vmatprep.subr.mxu0 0.0
    %3234 = vmatpush1.msra.mxu0 0.0
    %3235 = vmatprep.subr.mxu0 0.0
    %3236 = vmatpush1.msra.mxu0 0.0
    %3237 = vmatprep.subr.mxu0 0.0
    %3238 = vmatpush1.msra.mxu0 0.0
    %3239 = vmatprep.subr.mxu0 0.0
    %3240 = vmatpush1.msra.mxu0 0.0
    %3241 = vmatprep.subr.mxu0 0.0
    %3242 = vmatpush1.msra.mxu0 %v3211
    %3243 = vmatprep.subr.mxu0 0.0
    %3244 = vmatpush1.msra.mxu0 %v3210
    %3245 = vmatprep.subr.mxu0 0.0
    %3246 = vmatpush1.msra.mxu0 %v3209
    %3247 = vmatprep.subr.mxu0 0.0
    %3248 = vmatpush1.msra.mxu0 %v3208
    %3249 = vmatprep.subr.mxu0 0.0
    %3250 = vmatpush1.msra.mxu0 %v3207
    %3251 = vmatprep.subr.mxu0 0.0
    %3252 = vmatpush1.msra.mxu0 %v3206
    %3253 = vmatprep.subr.mxu0 0.0
    %3254 = vmatpush1.msra.mxu0 %v3205
    %3255 = vmatprep.subr.mxu0 0.0
    %3256 = vmatpush1.msra.mxu0 %v3204
    %3257 = vmatprep.subr.mxu0 0.0
    %3258 = vmatpush2.msra.mxu0 0.0
    %3259 = vmatprep.subr.mxu0 0.0
    %3260 = vmatpush2.msra.mxu0 0.0
    %3261 = vmatprep.subr.mxu0 0.0
    %3262 = vmatpush2.msra.mxu0 0.0
    %3263 = vmatprep.subr.mxu0 0.0
    %3264 = vmatpush2.msra.mxu0 0.0
    %3265 = vmatprep.subr.mxu0 0.0
    %3266 = vmatpush2.msra.mxu0 0.0
    %3267 = vmatprep.subr.mxu0 0.0
    %3268 = vmatpush2.msra.mxu0 0.0
    %3269 = vmatprep.subr.mxu0 0.0
    %3270 = vmatpush2.msra.mxu0 0.0
    %3271 = vmatprep.subr.mxu0 0.0
    %3272 = vmatpush2.msra.mxu0 0.0
    %3273 = vmatprep.subr.mxu0 0.0
    %3274 = vmatpush2.msra.mxu0 0.0
    %3275 = vmatprep.subr.mxu0 0.0
    %3276 = vmatpush2.msra.mxu0 0.0
    %3277 = vmatprep.subr.mxu0 0.0
    %3278 = vmatpush2.msra.mxu0 0.0
    %3279 = vmatprep.subr.mxu0 0.0
    %3280 = vmatpush2.msra.mxu0 0.0
    %3281 = vmatprep.subr.mxu0 0.0
    %3282 = vmatpush2.msra.mxu0 0.0
    %3283 = vmatprep.subr.mxu0 0.0
    %3284 = vmatpush2.msra.mxu0 0.0
    %3285 = vmatprep.subr.mxu0 0.0
    %3286 = vmatpush2.msra.mxu0 0.0
    %3287 = vmatprep.subr.mxu0 0.0
    %3288 = vmatpush2.msra.mxu0 0.0
    %3289 = vmatprep.mubr.f32.mxu0 0.0
    %3290 = vmatmul.mubr.f32.gmra.mxu0 %v3220
    %v3291 = vpop.f32.mrf.mxu0
    %v3292 = vadd.f32 %v3217, %v3291
    %v3293 = vpop.f32.mrf.mxu0
    %3294 = vmatprep.mubr.f32.mxu0 0.0
    %3295 = vmatmul.mubr.f32.gmra.mxu0 %v3223
    %v3296 = vpop.f32.mrf.mxu0
    %v3297 = vadd.f32 %v3217, %v3296
    %v3298 = vpop.f32.mrf.mxu0
    %3299 = vdwg.mxu0
    %v3300 = vmax.f32 %v3292, 0.0
    %v3301 = vmax.f32 %v3297, 0.0
    %v3302 = vld [vmem:[%s18] sm:$0xff]
    %v3303 = vld [vmem:[%s18 + $0x8] sm:$0xff]
    %v3304 = vld [vmem:[%s18 + $0x10] sm:$0xff]
    %v3305 = vld [vmem:[%s18 + $0x18] sm:$0xff]
    %v3306 = vld [vmem:[%s18 + $0x20] sm:$0xff]
    %v3307 = vld [vmem:[%s18 + $0x28] sm:$0xff]
    %v3308 = vld [vmem:[%s18 + $0x30] sm:$0xff]
    %v3309 = vld [vmem:[%s18 + $0x38] sm:$0xff]
    %v3310 = vld [vmem:[%s19] sm:$0x1]
    %v3312 = vlaneseq
    %v3313 = vshrl.u32 %v3312, 7
    %v3314 = vsub.s32 0, %v3313
    %v3315 = vrot.slane %v3310, %v3314
    %v3318 = vsel %vm223, %v3300, 0
    %v3321 = vsel %vm223, %v3301, 0
    %3323 = vmatprep.subr.mxu0 0.0
    %3324 = vmatpush1.msra.mxu0 0.0
    %3325 = vmatprep.subr.mxu0 0.0
    %3326 = vmatpush1.msra.mxu0 0.0
    %3327 = vmatprep.subr.mxu0 0.0
    %3328 = vmatpush1.msra.mxu0 0.0
    %3329 = vmatprep.subr.mxu0 0.0
    %3330 = vmatpush1.msra.mxu0 0.0
    %3331 = vmatprep.subr.mxu0 0.0
    %3332 = vmatpush1.msra.mxu0 0.0
    %3333 = vmatprep.subr.mxu0 0.0
    %3334 = vmatpush1.msra.mxu0 0.0
    %3335 = vmatprep.subr.mxu0 0.0
    %3336 = vmatpush1.msra.mxu0 0.0
    %3337 = vmatprep.subr.mxu0 0.0
    %3338 = vmatpush1.msra.mxu0 0.0
    %3339 = vmatprep.subr.mxu0 0.0
    %3340 = vmatpush1.msra.mxu0 %v3309
    %3341 = vmatprep.subr.mxu0 0.0
    %3342 = vmatpush1.msra.mxu0 %v3308
    %3343 = vmatprep.subr.mxu0 0.0
    %3344 = vmatpush1.msra.mxu0 %v3307
    %3345 = vmatprep.subr.mxu0 0.0
    %3346 = vmatpush1.msra.mxu0 %v3306
    %3347 = vmatprep.subr.mxu0 0.0
    %3348 = vmatpush1.msra.mxu0 %v3305
    %3349 = vmatprep.subr.mxu0 0.0
    %3350 = vmatpush1.msra.mxu0 %v3304
    %3351 = vmatprep.subr.mxu0 0.0
    %3352 = vmatpush1.msra.mxu0 %v3303
    %3353 = vmatprep.subr.mxu0 0.0
    %3354 = vmatpush1.msra.mxu0 %v3302
    %3355 = vmatprep.subr.mxu0 0.0
    %3356 = vmatpush2.msra.mxu0 0.0
    %3357 = vmatprep.subr.mxu0 0.0
    %3358 = vmatpush2.msra.mxu0 0.0
    %3359 = vmatprep.subr.mxu0 0.0
    %3360 = vmatpush2.msra.mxu0 0.0
    %3361 = vmatprep.subr.mxu0 0.0
    %3362 = vmatpush2.msra.mxu0 0.0
    %3363 = vmatprep.subr.mxu0 0.0
    %3364 = vmatpush2.msra.mxu0 0.0
    %3365 = vmatprep.subr.mxu0 0.0
    %3366 = vmatpush2.msra.mxu0 0.0
    %3367 = vmatprep.subr.mxu0 0.0
    %3368 = vmatpush2.msra.mxu0 0.0
    %3369 = vmatprep.subr.mxu0 0.0
    %3370 = vmatpush2.msra.mxu0 0.0
    %3371 = vmatprep.subr.mxu0 0.0
    %3372 = vmatpush2.msra.mxu0 0.0
    %3373 = vmatprep.subr.mxu0 0.0
    %3374 = vmatpush2.msra.mxu0 0.0
    %3375 = vmatprep.subr.mxu0 0.0
    %3376 = vmatpush2.msra.mxu0 0.0
    %3377 = vmatprep.subr.mxu0 0.0
    %3378 = vmatpush2.msra.mxu0 0.0
    %3379 = vmatprep.subr.mxu0 0.0
    %3380 = vmatpush2.msra.mxu0 0.0
    %3381 = vmatprep.subr.mxu0 0.0
    %3382 = vmatpush2.msra.mxu0 0.0
    %3383 = vmatprep.subr.mxu0 0.0
    %3384 = vmatpush2.msra.mxu0 0.0
    %3385 = vmatprep.subr.mxu0 0.0
    %3386 = vmatpush2.msra.mxu0 0.0
    %3387 = vmatprep.mubr.f32.mxu0 0.0
    %3388 = vmatmul.mubr.f32.gmra.mxu0 %v3318
    %v3389 = vpop.f32.mrf.mxu0
    %v3390 = vadd.f32 %v3315, %v3389
    %v3391 = vpop.f32.mrf.mxu0
    %3392 = vmatprep.mubr.f32.mxu0 0.0
    %3393 = vmatmul.mubr.f32.gmra.mxu0 %v3321
    %v3394 = vpop.f32.mrf.mxu0
    %v3395 = vadd.f32 %v3315, %v3394
    %v3396 = vpop.f32.mrf.mxu0
    %3397 = vdwg.mxu0
    %v3398 = vadd.f32 %v3202, %v3390
    %v3399 = vadd.f32 %v3203, %v3395
    %v3400 = vsel %vm223, %v3398, 0.0
    %3401 = vadd.xlane.f32.xlu0 %v3400
    %v3402 = vpop.xlane.xlu0 %3401
    %v3403 = vsel %vm223, %v3399, 0.0
    %3404 = vadd.xlane.f32.xlu0 %v3403
    %v3405 = vpop.xlane.xlu0 %3404
    %v3406 = vmul.f32 %v3402, %v3165
    %v3407 = vmul.f32 %v3405, %v3165
    %v3408 = vsub.f32 %v3398, %v3406
    %v3409 = vsub.f32 %v3399, %v3407
    %v3410 = vmul.f32 %v3408, %v3408
    %v3411 = vmul.f32 %v3409, %v3409
    %v3412 = vsel %vm223, %v3410, 0.0
    %3413 = vadd.xlane.f32.xlu0 %v3412
    %v3414 = vpop.xlane.xlu0 %3413
    %v3415 = vsel %vm223, %v3411, 0.0
    %3416 = vadd.xlane.f32.xlu0 %v3415
    %v3417 = vpop.xlane.xlu0 %3416
    %v3418 = vmul.f32 %v3414, %v3165
    %v3419 = vmul.f32 %v3417, %v3165
    %v3420 = vadd.f32 %v3418, 1e-05
    %v3421 = vadd.f32 %v3419, 1e-05
    %v3422 = vrsqrt.pop %v3420
    %v3423 = vrsqrt.pop %v3421
    %v3424 = vmul.f32 %v3408, %v3422
    %v3425 = vmul.f32 %v3409, %v3423
    %v3426 = vld [vmem:[%s22] sm:$0x1]
    %v3428 = vlaneseq
    %v3429 = vshrl.u32 %v3428, 7
    %v3430 = vsub.s32 0, %v3429
    %v3431 = vrot.slane %v3426, %v3430
    %v3433 = vmul.f32 %v3424, %v3431
    %v3434 = vmul.f32 %v3425, %v3431
    %v3435 = vld [vmem:[%s23] sm:$0x1]
    %v3437 = vlaneseq
    %v3438 = vshrl.u32 %v3437, 7
    %v3439 = vsub.s32 0, %v3438
    %v3440 = vrot.slane %v3435, %v3439
    %v3442 = vadd.f32 %v3433, %v3440
    %v3443 = vadd.f32 %v3434, %v3440
    %s3444 = scalar_lea.vmem %s15, 1
    %v3445 = vld [vmem:[%s3444] sm:$0x1]
    %s3446 = scalar_lea.vmem %s8, 256
    %v3447 = vld [vmem:[%s3446] sm:$0xff]
    %v3448 = vld [vmem:[%s3446 + $0x8] sm:$0xff]
    %v3449 = vld [vmem:[%s3446 + $0x10] sm:$0xff]
    %v3450 = vld [vmem:[%s3446 + $0x18] sm:$0xff]
    %v3451 = vld [vmem:[%s3446 + $0x20] sm:$0xff]
    %v3452 = vld [vmem:[%s3446 + $0x28] sm:$0xff]
    %v3453 = vld [vmem:[%s3446 + $0x30] sm:$0xff]
    %v3454 = vld [vmem:[%s3446 + $0x38] sm:$0xff]
    %s3455 = scalar_lea.vmem %s9, 4
    %v3456 = vld [vmem:[%s3455] sm:$0x1]
    %v3458 = vlaneseq
    %v3459 = vshrl.u32 %v3458, 7
    %v3460 = vsub.s32 0, %v3459
    %v3461 = vrot.slane %v3456, %v3460
    %v3464 = vsel %vm223, %v3442, 0
    %v3467 = vsel %vm223, %v3443, 0
    %3469 = vmatprep.subr.mxu0 0.0
    %3470 = vmatpush1.msra.mxu0 0.0
    %3471 = vmatprep.subr.mxu0 0.0
    %3472 = vmatpush1.msra.mxu0 0.0
    %3473 = vmatprep.subr.mxu0 0.0
    %3474 = vmatpush1.msra.mxu0 0.0
    %3475 = vmatprep.subr.mxu0 0.0
    %3476 = vmatpush1.msra.mxu0 0.0
    %3477 = vmatprep.subr.mxu0 0.0
    %3478 = vmatpush1.msra.mxu0 0.0
    %3479 = vmatprep.subr.mxu0 0.0
    %3480 = vmatpush1.msra.mxu0 0.0
    %3481 = vmatprep.subr.mxu0 0.0
    %3482 = vmatpush1.msra.mxu0 0.0
    %3483 = vmatprep.subr.mxu0 0.0
    %3484 = vmatpush1.msra.mxu0 0.0
    %3485 = vmatprep.subr.mxu0 0.0
    %3486 = vmatpush1.msra.mxu0 %v3454
    %3487 = vmatprep.subr.mxu0 0.0
    %3488 = vmatpush1.msra.mxu0 %v3453
    %3489 = vmatprep.subr.mxu0 0.0
    %3490 = vmatpush1.msra.mxu0 %v3452
    %3491 = vmatprep.subr.mxu0 0.0
    %3492 = vmatpush1.msra.mxu0 %v3451
    %3493 = vmatprep.subr.mxu0 0.0
    %3494 = vmatpush1.msra.mxu0 %v3450
    %3495 = vmatprep.subr.mxu0 0.0
    %3496 = vmatpush1.msra.mxu0 %v3449
    %3497 = vmatprep.subr.mxu0 0.0
    %3498 = vmatpush1.msra.mxu0 %v3448
    %3499 = vmatprep.subr.mxu0 0.0
    %3500 = vmatpush1.msra.mxu0 %v3447
    %3501 = vmatprep.subr.mxu0 0.0
    %3502 = vmatpush2.msra.mxu0 0.0
    %3503 = vmatprep.subr.mxu0 0.0
    %3504 = vmatpush2.msra.mxu0 0.0
    %3505 = vmatprep.subr.mxu0 0.0
    %3506 = vmatpush2.msra.mxu0 0.0
    %3507 = vmatprep.subr.mxu0 0.0
    %3508 = vmatpush2.msra.mxu0 0.0
    %3509 = vmatprep.subr.mxu0 0.0
    %3510 = vmatpush2.msra.mxu0 0.0
    %3511 = vmatprep.subr.mxu0 0.0
    %3512 = vmatpush2.msra.mxu0 0.0
    %3513 = vmatprep.subr.mxu0 0.0
    %3514 = vmatpush2.msra.mxu0 0.0
    %3515 = vmatprep.subr.mxu0 0.0
    %3516 = vmatpush2.msra.mxu0 0.0
    %3517 = vmatprep.subr.mxu0 0.0
    %3518 = vmatpush2.msra.mxu0 0.0
    %3519 = vmatprep.subr.mxu0 0.0
    %3520 = vmatpush2.msra.mxu0 0.0
    %3521 = vmatprep.subr.mxu0 0.0
    %3522 = vmatpush2.msra.mxu0 0.0
    %3523 = vmatprep.subr.mxu0 0.0
    %3524 = vmatpush2.msra.mxu0 0.0
    %3525 = vmatprep.subr.mxu0 0.0
    %3526 = vmatpush2.msra.mxu0 0.0
    %3527 = vmatprep.subr.mxu0 0.0
    %3528 = vmatpush2.msra.mxu0 0.0
    %3529 = vmatprep.subr.mxu0 0.0
    %3530 = vmatpush2.msra.mxu0 0.0
    %3531 = vmatprep.subr.mxu0 0.0
    %3532 = vmatpush2.msra.mxu0 0.0
    %3533 = vmatprep.mubr.f32.mxu0 0.0
    %3534 = vmatmul.mubr.f32.gmra.mxu0 %v3464
    %v3535 = vpop.f32.mrf.mxu0
    %v3536 = vadd.f32 %v3461, %v3535
    %v3537 = vpop.f32.mrf.mxu0
    %3538 = vmatprep.mubr.f32.mxu0 0.0
    %3539 = vmatmul.mubr.f32.gmra.mxu0 %v3467
    %v3540 = vpop.f32.mrf.mxu0
    %v3541 = vadd.f32 %v3461, %v3540
    %v3542 = vpop.f32.mrf.mxu0
    %3543 = vdwg.mxu0
    %s3544 = scalar_lea.vmem %s10, 256
    %v3545 = vld [vmem:[%s3544] sm:$0xff]
    %v3546 = vld [vmem:[%s3544 + $0x8] sm:$0xff]
    %v3547 = vld [vmem:[%s3544 + $0x10] sm:$0xff]
    %v3548 = vld [vmem:[%s3544 + $0x18] sm:$0xff]
    %v3549 = vld [vmem:[%s3544 + $0x20] sm:$0xff]
    %v3550 = vld [vmem:[%s3544 + $0x28] sm:$0xff]
    %v3551 = vld [vmem:[%s3544 + $0x30] sm:$0xff]
    %v3552 = vld [vmem:[%s3544 + $0x38] sm:$0xff]
    %s3553 = scalar_lea.vmem %s11, 4
    %v3554 = vld [vmem:[%s3553] sm:$0x1]
    %v3556 = vlaneseq
    %v3557 = vshrl.u32 %v3556, 7
    %v3558 = vsub.s32 0, %v3557
    %v3559 = vrot.slane %v3554, %v3558
    %3561 = vmatprep.subr.mxu0 0.0
    %3562 = vmatpush1.msra.mxu0 0.0
    %3563 = vmatprep.subr.mxu0 0.0
    %3564 = vmatpush1.msra.mxu0 0.0
    %3565 = vmatprep.subr.mxu0 0.0
    %3566 = vmatpush1.msra.mxu0 0.0
    %3567 = vmatprep.subr.mxu0 0.0
    %3568 = vmatpush1.msra.mxu0 0.0
    %3569 = vmatprep.subr.mxu0 0.0
    %3570 = vmatpush1.msra.mxu0 0.0
    %3571 = vmatprep.subr.mxu0 0.0
    %3572 = vmatpush1.msra.mxu0 0.0
    %3573 = vmatprep.subr.mxu0 0.0
    %3574 = vmatpush1.msra.mxu0 0.0
    %3575 = vmatprep.subr.mxu0 0.0
    %3576 = vmatpush1.msra.mxu0 0.0
    %3577 = vmatprep.subr.mxu0 0.0
    %3578 = vmatpush1.msra.mxu0 %v3552
    %3579 = vmatprep.subr.mxu0 0.0
    %3580 = vmatpush1.msra.mxu0 %v3551
    %3581 = vmatprep.subr.mxu0 0.0
    %3582 = vmatpush1.msra.mxu0 %v3550
    %3583 = vmatprep.subr.mxu0 0.0
    %3584 = vmatpush1.msra.mxu0 %v3549
    %3585 = vmatprep.subr.mxu0 0.0
    %3586 = vmatpush1.msra.mxu0 %v3548
    %3587 = vmatprep.subr.mxu0 0.0
    %3588 = vmatpush1.msra.mxu0 %v3547
    %3589 = vmatprep.subr.mxu0 0.0
    %3590 = vmatpush1.msra.mxu0 %v3546
    %3591 = vmatprep.subr.mxu0 0.0
    %3592 = vmatpush1.msra.mxu0 %v3545
    %3593 = vmatprep.subr.mxu0 0.0
    %3594 = vmatpush2.msra.mxu0 0.0
    %3595 = vmatprep.subr.mxu0 0.0
    %3596 = vmatpush2.msra.mxu0 0.0
    %3597 = vmatprep.subr.mxu0 0.0
    %3598 = vmatpush2.msra.mxu0 0.0
    %3599 = vmatprep.subr.mxu0 0.0
    %3600 = vmatpush2.msra.mxu0 0.0
    %3601 = vmatprep.subr.mxu0 0.0
    %3602 = vmatpush2.msra.mxu0 0.0
    %3603 = vmatprep.subr.mxu0 0.0
    %3604 = vmatpush2.msra.mxu0 0.0
    %3605 = vmatprep.subr.mxu0 0.0
    %3606 = vmatpush2.msra.mxu0 0.0
    %3607 = vmatprep.subr.mxu0 0.0
    %3608 = vmatpush2.msra.mxu0 0.0
    %3609 = vmatprep.subr.mxu0 0.0
    %3610 = vmatpush2.msra.mxu0 0.0
    %3611 = vmatprep.subr.mxu0 0.0
    %3612 = vmatpush2.msra.mxu0 0.0
    %3613 = vmatprep.subr.mxu0 0.0
    %3614 = vmatpush2.msra.mxu0 0.0
    %3615 = vmatprep.subr.mxu0 0.0
    %3616 = vmatpush2.msra.mxu0 0.0
    %3617 = vmatprep.subr.mxu0 0.0
    %3618 = vmatpush2.msra.mxu0 0.0
    %3619 = vmatprep.subr.mxu0 0.0
    %3620 = vmatpush2.msra.mxu0 0.0
    %3621 = vmatprep.subr.mxu0 0.0
    %3622 = vmatpush2.msra.mxu0 0.0
    %3623 = vmatprep.subr.mxu0 0.0
    %3624 = vmatpush2.msra.mxu0 0.0
    %3625 = vmatprep.mubr.f32.mxu0 0.0
    %3626 = vmatmul.mubr.f32.gmra.mxu0 %v3464
    %v3627 = vpop.f32.mrf.mxu0
    %v3628 = vadd.f32 %v3559, %v3627
    %v3629 = vpop.f32.mrf.mxu0
    %3630 = vmatprep.mubr.f32.mxu0 0.0
    %3631 = vmatmul.mubr.f32.gmra.mxu0 %v3467
    %v3632 = vpop.f32.mrf.mxu0
    %v3633 = vadd.f32 %v3559, %v3632
    %v3634 = vpop.f32.mrf.mxu0
    %3635 = vdwg.mxu0
    %s3636 = scalar_lea.vmem %s12, 256
    %v3637 = vld [vmem:[%s3636] sm:$0xff]
    %v3638 = vld [vmem:[%s3636 + $0x8] sm:$0xff]
    %v3639 = vld [vmem:[%s3636 + $0x10] sm:$0xff]
    %v3640 = vld [vmem:[%s3636 + $0x18] sm:$0xff]
    %v3641 = vld [vmem:[%s3636 + $0x20] sm:$0xff]
    %v3642 = vld [vmem:[%s3636 + $0x28] sm:$0xff]
    %v3643 = vld [vmem:[%s3636 + $0x30] sm:$0xff]
    %v3644 = vld [vmem:[%s3636 + $0x38] sm:$0xff]
    %s3645 = scalar_lea.vmem %s13, 4
    %v3646 = vld [vmem:[%s3645] sm:$0x1]
    %v3648 = vlaneseq
    %v3649 = vshrl.u32 %v3648, 7
    %v3650 = vsub.s32 0, %v3649
    %v3651 = vrot.slane %v3646, %v3650
    %3653 = vmatprep.subr.mxu0 0.0
    %3654 = vmatpush1.msra.mxu0 0.0
    %3655 = vmatprep.subr.mxu0 0.0
    %3656 = vmatpush1.msra.mxu0 0.0
    %3657 = vmatprep.subr.mxu0 0.0
    %3658 = vmatpush1.msra.mxu0 0.0
    %3659 = vmatprep.subr.mxu0 0.0
    %3660 = vmatpush1.msra.mxu0 0.0
    %3661 = vmatprep.subr.mxu0 0.0
    %3662 = vmatpush1.msra.mxu0 0.0
    %3663 = vmatprep.subr.mxu0 0.0
    %3664 = vmatpush1.msra.mxu0 0.0
    %3665 = vmatprep.subr.mxu0 0.0
    %3666 = vmatpush1.msra.mxu0 0.0
    %3667 = vmatprep.subr.mxu0 0.0
    %3668 = vmatpush1.msra.mxu0 0.0
    %3669 = vmatprep.subr.mxu0 0.0
    %3670 = vmatpush1.msra.mxu0 %v3644
    %3671 = vmatprep.subr.mxu0 0.0
    %3672 = vmatpush1.msra.mxu0 %v3643
    %3673 = vmatprep.subr.mxu0 0.0
    %3674 = vmatpush1.msra.mxu0 %v3642
    %3675 = vmatprep.subr.mxu0 0.0
    %3676 = vmatpush1.msra.mxu0 %v3641
    %3677 = vmatprep.subr.mxu0 0.0
    %3678 = vmatpush1.msra.mxu0 %v3640
    %3679 = vmatprep.subr.mxu0 0.0
    %3680 = vmatpush1.msra.mxu0 %v3639
    %3681 = vmatprep.subr.mxu0 0.0
    %3682 = vmatpush1.msra.mxu0 %v3638
    %3683 = vmatprep.subr.mxu0 0.0
    %3684 = vmatpush1.msra.mxu0 %v3637
    %3685 = vmatprep.subr.mxu0 0.0
    %3686 = vmatpush2.msra.mxu0 0.0
    %3687 = vmatprep.subr.mxu0 0.0
    %3688 = vmatpush2.msra.mxu0 0.0
    %3689 = vmatprep.subr.mxu0 0.0
    %3690 = vmatpush2.msra.mxu0 0.0
    %3691 = vmatprep.subr.mxu0 0.0
    %3692 = vmatpush2.msra.mxu0 0.0
    %3693 = vmatprep.subr.mxu0 0.0
    %3694 = vmatpush2.msra.mxu0 0.0
    %3695 = vmatprep.subr.mxu0 0.0
    %3696 = vmatpush2.msra.mxu0 0.0
    %3697 = vmatprep.subr.mxu0 0.0
    %3698 = vmatpush2.msra.mxu0 0.0
    %3699 = vmatprep.subr.mxu0 0.0
    %3700 = vmatpush2.msra.mxu0 0.0
    %3701 = vmatprep.subr.mxu0 0.0
    %3702 = vmatpush2.msra.mxu0 0.0
    %3703 = vmatprep.subr.mxu0 0.0
    %3704 = vmatpush2.msra.mxu0 0.0
    %3705 = vmatprep.subr.mxu0 0.0
    %3706 = vmatpush2.msra.mxu0 0.0
    %3707 = vmatprep.subr.mxu0 0.0
    %3708 = vmatpush2.msra.mxu0 0.0
    %3709 = vmatprep.subr.mxu0 0.0
    %3710 = vmatpush2.msra.mxu0 0.0
    %3711 = vmatprep.subr.mxu0 0.0
    %3712 = vmatpush2.msra.mxu0 0.0
    %3713 = vmatprep.subr.mxu0 0.0
    %3714 = vmatpush2.msra.mxu0 0.0
    %3715 = vmatprep.subr.mxu0 0.0
    %3716 = vmatpush2.msra.mxu0 0.0
    %3717 = vmatprep.mubr.f32.mxu0 0.0
    %3718 = vmatmul.mubr.f32.gmra.mxu0 %v3464
    %v3719 = vpop.f32.mrf.mxu0
    %v3720 = vadd.f32 %v3651, %v3719
    %v3721 = vpop.f32.mrf.mxu0
    %3722 = vmatprep.mubr.f32.mxu0 0.0
    %3723 = vmatmul.mubr.f32.gmra.mxu0 %v3467
    %v3724 = vpop.f32.mrf.mxu0
    %v3725 = vadd.f32 %v3651, %v3724
    %v3726 = vpop.f32.mrf.mxu0
    %3727 = vdwg.mxu0
    %v3729 = vsel %vm698, %v3536, 0
    %v3732 = vsel %vm698, %v3628, 0
    %3734 = vmatprep.subr.mxu0 0.0
    %3735 = vmatpush1.xpose.msra.mxu0 0.0
    %3736 = vmatprep.subr.mxu0 0.0
    %3737 = vmatpush1.xpose.msra.mxu0 0.0
    %3738 = vmatprep.subr.mxu0 0.0
    %3739 = vmatpush1.xpose.msra.mxu0 0.0
    %3740 = vmatprep.subr.mxu0 0.0
    %3741 = vmatpush1.xpose.msra.mxu0 0.0
    %3742 = vmatprep.subr.mxu0 0.0
    %3743 = vmatpush1.xpose.msra.mxu0 0.0
    %3744 = vmatprep.subr.mxu0 0.0
    %3745 = vmatpush1.xpose.msra.mxu0 0.0
    %3746 = vmatprep.subr.mxu0 0.0
    %3747 = vmatpush1.xpose.msra.mxu0 0.0
    %3748 = vmatprep.subr.mxu0 0.0
    %3749 = vmatpush1.xpose.msra.mxu0 0.0
    %3750 = vmatprep.subr.mxu0 0.0
    %3751 = vmatpush1.xpose.msra.mxu0 0.0
    %3752 = vmatprep.subr.mxu0 0.0
    %3753 = vmatpush1.xpose.msra.mxu0 0.0
    %3754 = vmatprep.subr.mxu0 0.0
    %3755 = vmatpush1.xpose.msra.mxu0 0.0
    %3756 = vmatprep.subr.mxu0 0.0
    %3757 = vmatpush1.xpose.msra.mxu0 0.0
    %3758 = vmatprep.subr.mxu0 0.0
    %3759 = vmatpush1.xpose.msra.mxu0 0.0
    %3760 = vmatprep.subr.mxu0 0.0
    %3761 = vmatpush1.xpose.msra.mxu0 0.0
    %3762 = vmatprep.subr.mxu0 0.0
    %3763 = vmatpush1.xpose.msra.mxu0 0.0
    %3764 = vmatprep.subr.mxu0 0.0
    %3765 = vmatpush1.xpose.msra.mxu0 %v3732
    %3766 = vmatprep.subr.mxu0 0.0
    %3767 = vmatpush2.xpose.msra.mxu0 0.0
    %3768 = vmatprep.subr.mxu0 0.0
    %3769 = vmatpush2.xpose.msra.mxu0 0.0
    %3770 = vmatprep.subr.mxu0 0.0
    %3771 = vmatpush2.xpose.msra.mxu0 0.0
    %3772 = vmatprep.subr.mxu0 0.0
    %3773 = vmatpush2.xpose.msra.mxu0 0.0
    %3774 = vmatprep.subr.mxu0 0.0
    %3775 = vmatpush2.xpose.msra.mxu0 0.0
    %3776 = vmatprep.subr.mxu0 0.0
    %3777 = vmatpush2.xpose.msra.mxu0 0.0
    %3778 = vmatprep.subr.mxu0 0.0
    %3779 = vmatpush2.xpose.msra.mxu0 0.0
    %3780 = vmatprep.subr.mxu0 0.0
    %3781 = vmatpush2.xpose.msra.mxu0 0.0
    %3782 = vmatprep.subr.mxu0 0.0
    %3783 = vmatpush2.xpose.msra.mxu0 0.0
    %3784 = vmatprep.subr.mxu0 0.0
    %3785 = vmatpush2.xpose.msra.mxu0 0.0
    %3786 = vmatprep.subr.mxu0 0.0
    %3787 = vmatpush2.xpose.msra.mxu0 0.0
    %3788 = vmatprep.subr.mxu0 0.0
    %3789 = vmatpush2.xpose.msra.mxu0 0.0
    %3790 = vmatprep.subr.mxu0 0.0
    %3791 = vmatpush2.xpose.msra.mxu0 0.0
    %3792 = vmatprep.subr.mxu0 0.0
    %3793 = vmatpush2.xpose.msra.mxu0 0.0
    %3794 = vmatprep.subr.mxu0 0.0
    %3795 = vmatpush2.xpose.msra.mxu0 0.0
    %3796 = vmatprep.subr.mxu0 0.0
    %3797 = vmatpush2.xpose.msra.mxu0 0.0
    %3798 = vmatprep.mubr.f32.mxu0 0.0
    %3799 = vmatmul.mubr.f32.gmra.mxu0 %v3729
    %v3800 = vpop.f32.mrf.mxu0
    %v3801 = vadd.f32 0.0, %v3800
    %v3802 = vpop.f32.mrf.mxu0
    %3803 = vdwg.mxu0
    %v3805 = vsel %vm698, %v3541, 0
    %v3808 = vsel %vm698, %v3633, 0
    %3810 = vmatprep.subr.mxu0 0.0
    %3811 = vmatpush1.xpose.msra.mxu0 0.0
    %3812 = vmatprep.subr.mxu0 0.0
    %3813 = vmatpush1.xpose.msra.mxu0 0.0
    %3814 = vmatprep.subr.mxu0 0.0
    %3815 = vmatpush1.xpose.msra.mxu0 0.0
    %3816 = vmatprep.subr.mxu0 0.0
    %3817 = vmatpush1.xpose.msra.mxu0 0.0
    %3818 = vmatprep.subr.mxu0 0.0
    %3819 = vmatpush1.xpose.msra.mxu0 0.0
    %3820 = vmatprep.subr.mxu0 0.0
    %3821 = vmatpush1.xpose.msra.mxu0 0.0
    %3822 = vmatprep.subr.mxu0 0.0
    %3823 = vmatpush1.xpose.msra.mxu0 0.0
    %3824 = vmatprep.subr.mxu0 0.0
    %3825 = vmatpush1.xpose.msra.mxu0 0.0
    %3826 = vmatprep.subr.mxu0 0.0
    %3827 = vmatpush1.xpose.msra.mxu0 0.0
    %3828 = vmatprep.subr.mxu0 0.0
    %3829 = vmatpush1.xpose.msra.mxu0 0.0
    %3830 = vmatprep.subr.mxu0 0.0
    %3831 = vmatpush1.xpose.msra.mxu0 0.0
    %3832 = vmatprep.subr.mxu0 0.0
    %3833 = vmatpush1.xpose.msra.mxu0 0.0
    %3834 = vmatprep.subr.mxu0 0.0
    %3835 = vmatpush1.xpose.msra.mxu0 0.0
    %3836 = vmatprep.subr.mxu0 0.0
    %3837 = vmatpush1.xpose.msra.mxu0 0.0
    %3838 = vmatprep.subr.mxu0 0.0
    %3839 = vmatpush1.xpose.msra.mxu0 0.0
    %3840 = vmatprep.subr.mxu0 0.0
    %3841 = vmatpush1.xpose.msra.mxu0 %v3808
    %3842 = vmatprep.subr.mxu0 0.0
    %3843 = vmatpush2.xpose.msra.mxu0 0.0
    %3844 = vmatprep.subr.mxu0 0.0
    %3845 = vmatpush2.xpose.msra.mxu0 0.0
    %3846 = vmatprep.subr.mxu0 0.0
    %3847 = vmatpush2.xpose.msra.mxu0 0.0
    %3848 = vmatprep.subr.mxu0 0.0
    %3849 = vmatpush2.xpose.msra.mxu0 0.0
    %3850 = vmatprep.subr.mxu0 0.0
    %3851 = vmatpush2.xpose.msra.mxu0 0.0
    %3852 = vmatprep.subr.mxu0 0.0
    %3853 = vmatpush2.xpose.msra.mxu0 0.0
    %3854 = vmatprep.subr.mxu0 0.0
    %3855 = vmatpush2.xpose.msra.mxu0 0.0
    %3856 = vmatprep.subr.mxu0 0.0
    %3857 = vmatpush2.xpose.msra.mxu0 0.0
    %3858 = vmatprep.subr.mxu0 0.0
    %3859 = vmatpush2.xpose.msra.mxu0 0.0
    %3860 = vmatprep.subr.mxu0 0.0
    %3861 = vmatpush2.xpose.msra.mxu0 0.0
    %3862 = vmatprep.subr.mxu0 0.0
    %3863 = vmatpush2.xpose.msra.mxu0 0.0
    %3864 = vmatprep.subr.mxu0 0.0
    %3865 = vmatpush2.xpose.msra.mxu0 0.0
    %3866 = vmatprep.subr.mxu0 0.0
    %3867 = vmatpush2.xpose.msra.mxu0 0.0
    %3868 = vmatprep.subr.mxu0 0.0
    %3869 = vmatpush2.xpose.msra.mxu0 0.0
    %3870 = vmatprep.subr.mxu0 0.0
    %3871 = vmatpush2.xpose.msra.mxu0 0.0
    %3872 = vmatprep.subr.mxu0 0.0
    %3873 = vmatpush2.xpose.msra.mxu0 0.0
    %3874 = vmatprep.mubr.f32.mxu0 0.0
    %3875 = vmatmul.mubr.f32.gmra.mxu0 %v3805
    %v3876 = vpop.f32.mrf.mxu0
    %v3877 = vadd.f32 0.0, %v3876
    %v3878 = vpop.f32.mrf.mxu0
    %3879 = vdwg.mxu0
    %v3880 = vsel %vm851, %v3801, -inf
    %3881 = vmax.xlane.f32.xlu0 %v3880
    %v3882 = vpop.xlane.xlu0 %3881
    %v3883 = vsel %vm851, %v3877, -inf
    %3884 = vmax.xlane.f32.xlu0 %v3883
    %v3885 = vpop.xlane.xlu0 %3884
    %v3886 = vsub.f32 %v3801, %v3882
    %v3887 = vsub.f32 %v3877, %v3885
    %v3888 = vmul.f32 %v3886, 1.442695
    %v3889 = vpow.pop %v3888
    %v3890 = vmul.f32 %v3887, 1.442695
    %v3891 = vpow.pop %v3890
    %v3892 = vsel %vm851, %v3889, 0.0
    %3893 = vadd.xlane.f32.xlu0 %v3892
    %v3894 = vpop.xlane.xlu0 %3893
    %v3895 = vsel %vm851, %v3891, 0.0
    %3896 = vadd.xlane.f32.xlu0 %v3895
    %v3897 = vpop.xlane.xlu0 %3896
    %v3898 = vrcp.pop %v3894
    %v3899 = vmul.f32 %v3889, %v3898
    %v3900 = vrcp.pop %v3897
    %v3901 = vmul.f32 %v3891, %v3900
    %v3903 = vsel %vm851, %v3899, 0
    %3905 = vmatprep.subr.mxu0 0.0
    %3906 = vmatpush1.msra.mxu0 0.0
    %3907 = vmatprep.subr.mxu0 0.0
    %3908 = vmatpush1.msra.mxu0 0.0
    %3909 = vmatprep.subr.mxu0 0.0
    %3910 = vmatpush1.msra.mxu0 0.0
    %3911 = vmatprep.subr.mxu0 0.0
    %3912 = vmatpush1.msra.mxu0 0.0
    %3913 = vmatprep.subr.mxu0 0.0
    %3914 = vmatpush1.msra.mxu0 0.0
    %3915 = vmatprep.subr.mxu0 0.0
    %3916 = vmatpush1.msra.mxu0 0.0
    %3917 = vmatprep.subr.mxu0 0.0
    %3918 = vmatpush1.msra.mxu0 0.0
    %3919 = vmatprep.subr.mxu0 0.0
    %3920 = vmatpush1.msra.mxu0 0.0
    %3921 = vmatprep.subr.mxu0 0.0
    %3922 = vmatpush1.msra.mxu0 0.0
    %3923 = vmatprep.subr.mxu0 0.0
    %3924 = vmatpush1.msra.mxu0 0.0
    %3925 = vmatprep.subr.mxu0 0.0
    %3926 = vmatpush1.msra.mxu0 0.0
    %3927 = vmatprep.subr.mxu0 0.0
    %3928 = vmatpush1.msra.mxu0 0.0
    %3929 = vmatprep.subr.mxu0 0.0
    %3930 = vmatpush1.msra.mxu0 0.0
    %3931 = vmatprep.subr.mxu0 0.0
    %3932 = vmatpush1.msra.mxu0 0.0
    %3933 = vmatprep.subr.mxu0 0.0
    %3934 = vmatpush1.msra.mxu0 0.0
    %3935 = vmatprep.subr.mxu0 0.0
    %3936 = vmatpush1.msra.mxu0 %v3720
    %3937 = vmatprep.subr.mxu0 0.0
    %3938 = vmatpush2.msra.mxu0 0.0
    %3939 = vmatprep.subr.mxu0 0.0
    %3940 = vmatpush2.msra.mxu0 0.0
    %3941 = vmatprep.subr.mxu0 0.0
    %3942 = vmatpush2.msra.mxu0 0.0
    %3943 = vmatprep.subr.mxu0 0.0
    %3944 = vmatpush2.msra.mxu0 0.0
    %3945 = vmatprep.subr.mxu0 0.0
    %3946 = vmatpush2.msra.mxu0 0.0
    %3947 = vmatprep.subr.mxu0 0.0
    %3948 = vmatpush2.msra.mxu0 0.0
    %3949 = vmatprep.subr.mxu0 0.0
    %3950 = vmatpush2.msra.mxu0 0.0
    %3951 = vmatprep.subr.mxu0 0.0
    %3952 = vmatpush2.msra.mxu0 0.0
    %3953 = vmatprep.subr.mxu0 0.0
    %3954 = vmatpush2.msra.mxu0 0.0
    %3955 = vmatprep.subr.mxu0 0.0
    %3956 = vmatpush2.msra.mxu0 0.0
    %3957 = vmatprep.subr.mxu0 0.0
    %3958 = vmatpush2.msra.mxu0 0.0
    %3959 = vmatprep.subr.mxu0 0.0
    %3960 = vmatpush2.msra.mxu0 0.0
    %3961 = vmatprep.subr.mxu0 0.0
    %3962 = vmatpush2.msra.mxu0 0.0
    %3963 = vmatprep.subr.mxu0 0.0
    %3964 = vmatpush2.msra.mxu0 0.0
    %3965 = vmatprep.subr.mxu0 0.0
    %3966 = vmatpush2.msra.mxu0 0.0
    %3967 = vmatprep.subr.mxu0 0.0
    %3968 = vmatpush2.msra.mxu0 0.0
    %3969 = vmatprep.mubr.f32.mxu0 0.0
    %3970 = vmatmul.mubr.f32.gmra.mxu0 %v3903
    %v3971 = vpop.f32.mrf.mxu0
    %v3972 = vadd.f32 0.0, %v3971
    %v3973 = vpop.f32.mrf.mxu0
    %3974 = vdwg.mxu0
    %v3976 = vsel %vm851, %v3901, 0
    %3978 = vmatprep.subr.mxu0 0.0
    %3979 = vmatpush1.msra.mxu0 0.0
    %3980 = vmatprep.subr.mxu0 0.0
    %3981 = vmatpush1.msra.mxu0 0.0
    %3982 = vmatprep.subr.mxu0 0.0
    %3983 = vmatpush1.msra.mxu0 0.0
    %3984 = vmatprep.subr.mxu0 0.0
    %3985 = vmatpush1.msra.mxu0 0.0
    %3986 = vmatprep.subr.mxu0 0.0
    %3987 = vmatpush1.msra.mxu0 0.0
    %3988 = vmatprep.subr.mxu0 0.0
    %3989 = vmatpush1.msra.mxu0 0.0
    %3990 = vmatprep.subr.mxu0 0.0
    %3991 = vmatpush1.msra.mxu0 0.0
    %3992 = vmatprep.subr.mxu0 0.0
    %3993 = vmatpush1.msra.mxu0 0.0
    %3994 = vmatprep.subr.mxu0 0.0
    %3995 = vmatpush1.msra.mxu0 0.0
    %3996 = vmatprep.subr.mxu0 0.0
    %3997 = vmatpush1.msra.mxu0 0.0
    %3998 = vmatprep.subr.mxu0 0.0
    %3999 = vmatpush1.msra.mxu0 0.0
    %4000 = vmatprep.subr.mxu0 0.0
    %4001 = vmatpush1.msra.mxu0 0.0
    %4002 = vmatprep.subr.mxu0 0.0
    %4003 = vmatpush1.msra.mxu0 0.0
    %4004 = vmatprep.subr.mxu0 0.0
    %4005 = vmatpush1.msra.mxu0 0.0
    %4006 = vmatprep.subr.mxu0 0.0
    %4007 = vmatpush1.msra.mxu0 0.0
    %4008 = vmatprep.subr.mxu0 0.0
    %4009 = vmatpush1.msra.mxu0 %v3725
    %4010 = vmatprep.subr.mxu0 0.0
    %4011 = vmatpush2.msra.mxu0 0.0
    %4012 = vmatprep.subr.mxu0 0.0
    %4013 = vmatpush2.msra.mxu0 0.0
    %4014 = vmatprep.subr.mxu0 0.0
    %4015 = vmatpush2.msra.mxu0 0.0
    %4016 = vmatprep.subr.mxu0 0.0
    %4017 = vmatpush2.msra.mxu0 0.0
    %4018 = vmatprep.subr.mxu0 0.0
    %4019 = vmatpush2.msra.mxu0 0.0
    %4020 = vmatprep.subr.mxu0 0.0
    %4021 = vmatpush2.msra.mxu0 0.0
    %4022 = vmatprep.subr.mxu0 0.0
    %4023 = vmatpush2.msra.mxu0 0.0
    %4024 = vmatprep.subr.mxu0 0.0
    %4025 = vmatpush2.msra.mxu0 0.0
    %4026 = vmatprep.subr.mxu0 0.0
    %4027 = vmatpush2.msra.mxu0 0.0
    %4028 = vmatprep.subr.mxu0 0.0
    %4029 = vmatpush2.msra.mxu0 0.0
    %4030 = vmatprep.subr.mxu0 0.0
    %4031 = vmatpush2.msra.mxu0 0.0
    %4032 = vmatprep.subr.mxu0 0.0
    %4033 = vmatpush2.msra.mxu0 0.0
    %4034 = vmatprep.subr.mxu0 0.0
    %4035 = vmatpush2.msra.mxu0 0.0
    %4036 = vmatprep.subr.mxu0 0.0
    %4037 = vmatpush2.msra.mxu0 0.0
    %4038 = vmatprep.subr.mxu0 0.0
    %4039 = vmatpush2.msra.mxu0 0.0
    %4040 = vmatprep.subr.mxu0 0.0
    %4041 = vmatpush2.msra.mxu0 0.0
    %4042 = vmatprep.mubr.f32.mxu0 0.0
    %4043 = vmatmul.mubr.f32.gmra.mxu0 %v3976
    %v4044 = vpop.f32.mrf.mxu0
    %v4045 = vadd.f32 0.0, %v4044
    %v4046 = vpop.f32.mrf.mxu0
    %4047 = vdwg.mxu0
    %s4048 = scalar_lea.vmem %s14, 64
    %v4049 = vld [vmem:[%s4048] sm:$0xff]
    %v4050 = vld [vmem:[%s4048 + $0x8] sm:$0xff]
    %v4052 = vsel %vm698, %v3972, 0
    %v4055 = vsel %vm698, %v4045, 0
    %4057 = vmatprep.subr.mxu0 0.0
    %4058 = vmatpush1.msra.mxu0 0.0
    %4059 = vmatprep.subr.mxu0 0.0
    %4060 = vmatpush1.msra.mxu0 0.0
    %4061 = vmatprep.subr.mxu0 0.0
    %4062 = vmatpush1.msra.mxu0 0.0
    %4063 = vmatprep.subr.mxu0 0.0
    %4064 = vmatpush1.msra.mxu0 0.0
    %4065 = vmatprep.subr.mxu0 0.0
    %4066 = vmatpush1.msra.mxu0 0.0
    %4067 = vmatprep.subr.mxu0 0.0
    %4068 = vmatpush1.msra.mxu0 0.0
    %4069 = vmatprep.subr.mxu0 0.0
    %4070 = vmatpush1.msra.mxu0 0.0
    %4071 = vmatprep.subr.mxu0 0.0
    %4072 = vmatpush1.msra.mxu0 0.0
    %4073 = vmatprep.subr.mxu0 0.0
    %4074 = vmatpush1.msra.mxu0 0.0
    %4075 = vmatprep.subr.mxu0 0.0
    %4076 = vmatpush1.msra.mxu0 0.0
    %4077 = vmatprep.subr.mxu0 0.0
    %4078 = vmatpush1.msra.mxu0 0.0
    %4079 = vmatprep.subr.mxu0 0.0
    %4080 = vmatpush1.msra.mxu0 0.0
    %4081 = vmatprep.subr.mxu0 0.0
    %4082 = vmatpush1.msra.mxu0 0.0
    %4083 = vmatprep.subr.mxu0 0.0
    %4084 = vmatpush1.msra.mxu0 0.0
    %4085 = vmatprep.subr.mxu0 0.0
    %4086 = vmatpush1.msra.mxu0 %v4050
    %4087 = vmatprep.subr.mxu0 0.0
    %4088 = vmatpush1.msra.mxu0 %v4049
    %4089 = vmatprep.subr.mxu0 0.0
    %4090 = vmatpush2.msra.mxu0 0.0
    %4091 = vmatprep.subr.mxu0 0.0
    %4092 = vmatpush2.msra.mxu0 0.0
    %4093 = vmatprep.subr.mxu0 0.0
    %4094 = vmatpush2.msra.mxu0 0.0
    %4095 = vmatprep.subr.mxu0 0.0
    %4096 = vmatpush2.msra.mxu0 0.0
    %4097 = vmatprep.subr.mxu0 0.0
    %4098 = vmatpush2.msra.mxu0 0.0
    %4099 = vmatprep.subr.mxu0 0.0
    %4100 = vmatpush2.msra.mxu0 0.0
    %4101 = vmatprep.subr.mxu0 0.0
    %4102 = vmatpush2.msra.mxu0 0.0
    %4103 = vmatprep.subr.mxu0 0.0
    %4104 = vmatpush2.msra.mxu0 0.0
    %4105 = vmatprep.subr.mxu0 0.0
    %4106 = vmatpush2.msra.mxu0 0.0
    %4107 = vmatprep.subr.mxu0 0.0
    %4108 = vmatpush2.msra.mxu0 0.0
    %4109 = vmatprep.subr.mxu0 0.0
    %4110 = vmatpush2.msra.mxu0 0.0
    %4111 = vmatprep.subr.mxu0 0.0
    %4112 = vmatpush2.msra.mxu0 0.0
    %4113 = vmatprep.subr.mxu0 0.0
    %4114 = vmatpush2.msra.mxu0 0.0
    %4115 = vmatprep.subr.mxu0 0.0
    %4116 = vmatpush2.msra.mxu0 0.0
    %4117 = vmatprep.subr.mxu0 0.0
    %4118 = vmatpush2.msra.mxu0 0.0
    %4119 = vmatprep.subr.mxu0 0.0
    %4120 = vmatpush2.msra.mxu0 0.0
    %4121 = vmatprep.mubr.f32.mxu0 0.0
    %4122 = vmatmul.mubr.f32.gmra.mxu0 %v4052
    %v4123 = vpop.f32.mrf.mxu0
    %v4124 = vadd.f32 0.0, %v4123
    %v4125 = vpop.f32.mrf.mxu0
    %4126 = vmatprep.mubr.f32.mxu0 0.0
    %4127 = vmatmul.mubr.f32.gmra.mxu0 %v4055
    %v4128 = vpop.f32.mrf.mxu0
    %v4129 = vadd.f32 0.0, %v4128
    %v4130 = vpop.f32.mrf.mxu0
    %4131 = vdwg.mxu0
    %v4133 = vlaneseq
    %v4134 = vshrl.u32 %v4133, 7
    %v4135 = vsub.s32 0, %v4134
    %v4136 = vrot.slane %v3445, %v4135
    %v4138 = vadd.f32 %v4136, %v4124
    %v4139 = vadd.f32 %v4136, %v4129
    %s4140 = scalar_lea.vmem %s8, 320
    %v4141 = vld [vmem:[%s4140] sm:$0xff]
    %v4142 = vld [vmem:[%s4140 + $0x8] sm:$0xff]
    %v4143 = vld [vmem:[%s4140 + $0x10] sm:$0xff]
    %v4144 = vld [vmem:[%s4140 + $0x18] sm:$0xff]
    %v4145 = vld [vmem:[%s4140 + $0x20] sm:$0xff]
    %v4146 = vld [vmem:[%s4140 + $0x28] sm:$0xff]
    %v4147 = vld [vmem:[%s4140 + $0x30] sm:$0xff]
    %v4148 = vld [vmem:[%s4140 + $0x38] sm:$0xff]
    %s4149 = scalar_lea.vmem %s9, 5
    %v4150 = vld [vmem:[%s4149] sm:$0x1]
    %v4152 = vlaneseq
    %v4153 = vshrl.u32 %v4152, 7
    %v4154 = vsub.s32 0, %v4153
    %v4155 = vrot.slane %v4150, %v4154
    %4157 = vmatprep.subr.mxu0 0.0
    %4158 = vmatpush1.msra.mxu0 0.0
    %4159 = vmatprep.subr.mxu0 0.0
    %4160 = vmatpush1.msra.mxu0 0.0
    %4161 = vmatprep.subr.mxu0 0.0
    %4162 = vmatpush1.msra.mxu0 0.0
    %4163 = vmatprep.subr.mxu0 0.0
    %4164 = vmatpush1.msra.mxu0 0.0
    %4165 = vmatprep.subr.mxu0 0.0
    %4166 = vmatpush1.msra.mxu0 0.0
    %4167 = vmatprep.subr.mxu0 0.0
    %4168 = vmatpush1.msra.mxu0 0.0
    %4169 = vmatprep.subr.mxu0 0.0
    %4170 = vmatpush1.msra.mxu0 0.0
    %4171 = vmatprep.subr.mxu0 0.0
    %4172 = vmatpush1.msra.mxu0 0.0
    %4173 = vmatprep.subr.mxu0 0.0
    %4174 = vmatpush1.msra.mxu0 %v4148
    %4175 = vmatprep.subr.mxu0 0.0
    %4176 = vmatpush1.msra.mxu0 %v4147
    %4177 = vmatprep.subr.mxu0 0.0
    %4178 = vmatpush1.msra.mxu0 %v4146
    %4179 = vmatprep.subr.mxu0 0.0
    %4180 = vmatpush1.msra.mxu0 %v4145
    %4181 = vmatprep.subr.mxu0 0.0
    %4182 = vmatpush1.msra.mxu0 %v4144
    %4183 = vmatprep.subr.mxu0 0.0
    %4184 = vmatpush1.msra.mxu0 %v4143
    %4185 = vmatprep.subr.mxu0 0.0
    %4186 = vmatpush1.msra.mxu0 %v4142
    %4187 = vmatprep.subr.mxu0 0.0
    %4188 = vmatpush1.msra.mxu0 %v4141
    %4189 = vmatprep.subr.mxu0 0.0
    %4190 = vmatpush2.msra.mxu0 0.0
    %4191 = vmatprep.subr.mxu0 0.0
    %4192 = vmatpush2.msra.mxu0 0.0
    %4193 = vmatprep.subr.mxu0 0.0
    %4194 = vmatpush2.msra.mxu0 0.0
    %4195 = vmatprep.subr.mxu0 0.0
    %4196 = vmatpush2.msra.mxu0 0.0
    %4197 = vmatprep.subr.mxu0 0.0
    %4198 = vmatpush2.msra.mxu0 0.0
    %4199 = vmatprep.subr.mxu0 0.0
    %4200 = vmatpush2.msra.mxu0 0.0
    %4201 = vmatprep.subr.mxu0 0.0
    %4202 = vmatpush2.msra.mxu0 0.0
    %4203 = vmatprep.subr.mxu0 0.0
    %4204 = vmatpush2.msra.mxu0 0.0
    %4205 = vmatprep.subr.mxu0 0.0
    %4206 = vmatpush2.msra.mxu0 0.0
    %4207 = vmatprep.subr.mxu0 0.0
    %4208 = vmatpush2.msra.mxu0 0.0
    %4209 = vmatprep.subr.mxu0 0.0
    %4210 = vmatpush2.msra.mxu0 0.0
    %4211 = vmatprep.subr.mxu0 0.0
    %4212 = vmatpush2.msra.mxu0 0.0
    %4213 = vmatprep.subr.mxu0 0.0
    %4214 = vmatpush2.msra.mxu0 0.0
    %4215 = vmatprep.subr.mxu0 0.0
    %4216 = vmatpush2.msra.mxu0 0.0
    %4217 = vmatprep.subr.mxu0 0.0
    %4218 = vmatpush2.msra.mxu0 0.0
    %4219 = vmatprep.subr.mxu0 0.0
    %4220 = vmatpush2.msra.mxu0 0.0
    %4221 = vmatprep.mubr.f32.mxu0 0.0
    %4222 = vmatmul.mubr.f32.gmra.mxu0 %v3464
    %v4223 = vpop.f32.mrf.mxu0
    %v4224 = vadd.f32 %v4155, %v4223
    %v4225 = vpop.f32.mrf.mxu0
    %4226 = vmatprep.mubr.f32.mxu0 0.0
    %4227 = vmatmul.mubr.f32.gmra.mxu0 %v3467
    %v4228 = vpop.f32.mrf.mxu0
    %v4229 = vadd.f32 %v4155, %v4228
    %v4230 = vpop.f32.mrf.mxu0
    %4231 = vdwg.mxu0
    %s4232 = scalar_lea.vmem %s10, 320
    %v4233 = vld [vmem:[%s4232] sm:$0xff]
    %v4234 = vld [vmem:[%s4232 + $0x8] sm:$0xff]
    %v4235 = vld [vmem:[%s4232 + $0x10] sm:$0xff]
    %v4236 = vld [vmem:[%s4232 + $0x18] sm:$0xff]
    %v4237 = vld [vmem:[%s4232 + $0x20] sm:$0xff]
    %v4238 = vld [vmem:[%s4232 + $0x28] sm:$0xff]
    %v4239 = vld [vmem:[%s4232 + $0x30] sm:$0xff]
    %v4240 = vld [vmem:[%s4232 + $0x38] sm:$0xff]
    %s4241 = scalar_lea.vmem %s11, 5
    %v4242 = vld [vmem:[%s4241] sm:$0x1]
    %v4244 = vlaneseq
    %v4245 = vshrl.u32 %v4244, 7
    %v4246 = vsub.s32 0, %v4245
    %v4247 = vrot.slane %v4242, %v4246
    %4249 = vmatprep.subr.mxu0 0.0
    %4250 = vmatpush1.msra.mxu0 0.0
    %4251 = vmatprep.subr.mxu0 0.0
    %4252 = vmatpush1.msra.mxu0 0.0
    %4253 = vmatprep.subr.mxu0 0.0
    %4254 = vmatpush1.msra.mxu0 0.0
    %4255 = vmatprep.subr.mxu0 0.0
    %4256 = vmatpush1.msra.mxu0 0.0
    %4257 = vmatprep.subr.mxu0 0.0
    %4258 = vmatpush1.msra.mxu0 0.0
    %4259 = vmatprep.subr.mxu0 0.0
    %4260 = vmatpush1.msra.mxu0 0.0
    %4261 = vmatprep.subr.mxu0 0.0
    %4262 = vmatpush1.msra.mxu0 0.0
    %4263 = vmatprep.subr.mxu0 0.0
    %4264 = vmatpush1.msra.mxu0 0.0
    %4265 = vmatprep.subr.mxu0 0.0
    %4266 = vmatpush1.msra.mxu0 %v4240
    %4267 = vmatprep.subr.mxu0 0.0
    %4268 = vmatpush1.msra.mxu0 %v4239
    %4269 = vmatprep.subr.mxu0 0.0
    %4270 = vmatpush1.msra.mxu0 %v4238
    %4271 = vmatprep.subr.mxu0 0.0
    %4272 = vmatpush1.msra.mxu0 %v4237
    %4273 = vmatprep.subr.mxu0 0.0
    %4274 = vmatpush1.msra.mxu0 %v4236
    %4275 = vmatprep.subr.mxu0 0.0
    %4276 = vmatpush1.msra.mxu0 %v4235
    %4277 = vmatprep.subr.mxu0 0.0
    %4278 = vmatpush1.msra.mxu0 %v4234
    %4279 = vmatprep.subr.mxu0 0.0
    %4280 = vmatpush1.msra.mxu0 %v4233
    %4281 = vmatprep.subr.mxu0 0.0
    %4282 = vmatpush2.msra.mxu0 0.0
    %4283 = vmatprep.subr.mxu0 0.0
    %4284 = vmatpush2.msra.mxu0 0.0
    %4285 = vmatprep.subr.mxu0 0.0
    %4286 = vmatpush2.msra.mxu0 0.0
    %4287 = vmatprep.subr.mxu0 0.0
    %4288 = vmatpush2.msra.mxu0 0.0
    %4289 = vmatprep.subr.mxu0 0.0
    %4290 = vmatpush2.msra.mxu0 0.0
    %4291 = vmatprep.subr.mxu0 0.0
    %4292 = vmatpush2.msra.mxu0 0.0
    %4293 = vmatprep.subr.mxu0 0.0
    %4294 = vmatpush2.msra.mxu0 0.0
    %4295 = vmatprep.subr.mxu0 0.0
    %4296 = vmatpush2.msra.mxu0 0.0
    %4297 = vmatprep.subr.mxu0 0.0
    %4298 = vmatpush2.msra.mxu0 0.0
    %4299 = vmatprep.subr.mxu0 0.0
    %4300 = vmatpush2.msra.mxu0 0.0
    %4301 = vmatprep.subr.mxu0 0.0
    %4302 = vmatpush2.msra.mxu0 0.0
    %4303 = vmatprep.subr.mxu0 0.0
    %4304 = vmatpush2.msra.mxu0 0.0
    %4305 = vmatprep.subr.mxu0 0.0
    %4306 = vmatpush2.msra.mxu0 0.0
    %4307 = vmatprep.subr.mxu0 0.0
    %4308 = vmatpush2.msra.mxu0 0.0
    %4309 = vmatprep.subr.mxu0 0.0
    %4310 = vmatpush2.msra.mxu0 0.0
    %4311 = vmatprep.subr.mxu0 0.0
    %4312 = vmatpush2.msra.mxu0 0.0
    %4313 = vmatprep.mubr.f32.mxu0 0.0
    %4314 = vmatmul.mubr.f32.gmra.mxu0 %v3464
    %v4315 = vpop.f32.mrf.mxu0
    %v4316 = vadd.f32 %v4247, %v4315
    %v4317 = vpop.f32.mrf.mxu0
    %4318 = vmatprep.mubr.f32.mxu0 0.0
    %4319 = vmatmul.mubr.f32.gmra.mxu0 %v3467
    %v4320 = vpop.f32.mrf.mxu0
    %v4321 = vadd.f32 %v4247, %v4320
    %v4322 = vpop.f32.mrf.mxu0
    %4323 = vdwg.mxu0
    %s4324 = scalar_lea.vmem %s12, 320
    %v4325 = vld [vmem:[%s4324] sm:$0xff]
    %v4326 = vld [vmem:[%s4324 + $0x8] sm:$0xff]
    %v4327 = vld [vmem:[%s4324 + $0x10] sm:$0xff]
    %v4328 = vld [vmem:[%s4324 + $0x18] sm:$0xff]
    %v4329 = vld [vmem:[%s4324 + $0x20] sm:$0xff]
    %v4330 = vld [vmem:[%s4324 + $0x28] sm:$0xff]
    %v4331 = vld [vmem:[%s4324 + $0x30] sm:$0xff]
    %v4332 = vld [vmem:[%s4324 + $0x38] sm:$0xff]
    %s4333 = scalar_lea.vmem %s13, 5
    %v4334 = vld [vmem:[%s4333] sm:$0x1]
    %v4336 = vlaneseq
    %v4337 = vshrl.u32 %v4336, 7
    %v4338 = vsub.s32 0, %v4337
    %v4339 = vrot.slane %v4334, %v4338
    %4341 = vmatprep.subr.mxu0 0.0
    %4342 = vmatpush1.msra.mxu0 0.0
    %4343 = vmatprep.subr.mxu0 0.0
    %4344 = vmatpush1.msra.mxu0 0.0
    %4345 = vmatprep.subr.mxu0 0.0
    %4346 = vmatpush1.msra.mxu0 0.0
    %4347 = vmatprep.subr.mxu0 0.0
    %4348 = vmatpush1.msra.mxu0 0.0
    %4349 = vmatprep.subr.mxu0 0.0
    %4350 = vmatpush1.msra.mxu0 0.0
    %4351 = vmatprep.subr.mxu0 0.0
    %4352 = vmatpush1.msra.mxu0 0.0
    %4353 = vmatprep.subr.mxu0 0.0
    %4354 = vmatpush1.msra.mxu0 0.0
    %4355 = vmatprep.subr.mxu0 0.0
    %4356 = vmatpush1.msra.mxu0 0.0
    %4357 = vmatprep.subr.mxu0 0.0
    %4358 = vmatpush1.msra.mxu0 %v4332
    %4359 = vmatprep.subr.mxu0 0.0
    %4360 = vmatpush1.msra.mxu0 %v4331
    %4361 = vmatprep.subr.mxu0 0.0
    %4362 = vmatpush1.msra.mxu0 %v4330
    %4363 = vmatprep.subr.mxu0 0.0
    %4364 = vmatpush1.msra.mxu0 %v4329
    %4365 = vmatprep.subr.mxu0 0.0
    %4366 = vmatpush1.msra.mxu0 %v4328
    %4367 = vmatprep.subr.mxu0 0.0
    %4368 = vmatpush1.msra.mxu0 %v4327
    %4369 = vmatprep.subr.mxu0 0.0
    %4370 = vmatpush1.msra.mxu0 %v4326
    %4371 = vmatprep.subr.mxu0 0.0
    %4372 = vmatpush1.msra.mxu0 %v4325
    %4373 = vmatprep.subr.mxu0 0.0
    %4374 = vmatpush2.msra.mxu0 0.0
    %4375 = vmatprep.subr.mxu0 0.0
    %4376 = vmatpush2.msra.mxu0 0.0
    %4377 = vmatprep.subr.mxu0 0.0
    %4378 = vmatpush2.msra.mxu0 0.0
    %4379 = vmatprep.subr.mxu0 0.0
    %4380 = vmatpush2.msra.mxu0 0.0
    %4381 = vmatprep.subr.mxu0 0.0
    %4382 = vmatpush2.msra.mxu0 0.0
    %4383 = vmatprep.subr.mxu0 0.0
    %4384 = vmatpush2.msra.mxu0 0.0
    %4385 = vmatprep.subr.mxu0 0.0
    %4386 = vmatpush2.msra.mxu0 0.0
    %4387 = vmatprep.subr.mxu0 0.0
    %4388 = vmatpush2.msra.mxu0 0.0
    %4389 = vmatprep.subr.mxu0 0.0
    %4390 = vmatpush2.msra.mxu0 0.0
    %4391 = vmatprep.subr.mxu0 0.0
    %4392 = vmatpush2.msra.mxu0 0.0
    %4393 = vmatprep.subr.mxu0 0.0
    %4394 = vmatpush2.msra.mxu0 0.0
    %4395 = vmatprep.subr.mxu0 0.0
    %4396 = vmatpush2.msra.mxu0 0.0
    %4397 = vmatprep.subr.mxu0 0.0
    %4398 = vmatpush2.msra.mxu0 0.0
    %4399 = vmatprep.subr.mxu0 0.0
    %4400 = vmatpush2.msra.mxu0 0.0
    %4401 = vmatprep.subr.mxu0 0.0
    %4402 = vmatpush2.msra.mxu0 0.0
    %4403 = vmatprep.subr.mxu0 0.0
    %4404 = vmatpush2.msra.mxu0 0.0
    %4405 = vmatprep.mubr.f32.mxu0 0.0
    %4406 = vmatmul.mubr.f32.gmra.mxu0 %v3464
    %v4407 = vpop.f32.mrf.mxu0
    %v4408 = vadd.f32 %v4339, %v4407
    %v4409 = vpop.f32.mrf.mxu0
    %4410 = vmatprep.mubr.f32.mxu0 0.0
    %4411 = vmatmul.mubr.f32.gmra.mxu0 %v3467
    %v4412 = vpop.f32.mrf.mxu0
    %v4413 = vadd.f32 %v4339, %v4412
    %v4414 = vpop.f32.mrf.mxu0
    %4415 = vdwg.mxu0
    %v4417 = vsel %vm698, %v4224, 0
    %v4420 = vsel %vm698, %v4316, 0
    %4422 = vmatprep.subr.mxu0 0.0
    %4423 = vmatpush1.xpose.msra.mxu0 0.0
    %4424 = vmatprep.subr.mxu0 0.0
    %4425 = vmatpush1.xpose.msra.mxu0 0.0
    %4426 = vmatprep.subr.mxu0 0.0
    %4427 = vmatpush1.xpose.msra.mxu0 0.0
    %4428 = vmatprep.subr.mxu0 0.0
    %4429 = vmatpush1.xpose.msra.mxu0 0.0
    %4430 = vmatprep.subr.mxu0 0.0
    %4431 = vmatpush1.xpose.msra.mxu0 0.0
    %4432 = vmatprep.subr.mxu0 0.0
    %4433 = vmatpush1.xpose.msra.mxu0 0.0
    %4434 = vmatprep.subr.mxu0 0.0
    %4435 = vmatpush1.xpose.msra.mxu0 0.0
    %4436 = vmatprep.subr.mxu0 0.0
    %4437 = vmatpush1.xpose.msra.mxu0 0.0
    %4438 = vmatprep.subr.mxu0 0.0
    %4439 = vmatpush1.xpose.msra.mxu0 0.0
    %4440 = vmatprep.subr.mxu0 0.0
    %4441 = vmatpush1.xpose.msra.mxu0 0.0
    %4442 = vmatprep.subr.mxu0 0.0
    %4443 = vmatpush1.xpose.msra.mxu0 0.0
    %4444 = vmatprep.subr.mxu0 0.0
    %4445 = vmatpush1.xpose.msra.mxu0 0.0
    %4446 = vmatprep.subr.mxu0 0.0
    %4447 = vmatpush1.xpose.msra.mxu0 0.0
    %4448 = vmatprep.subr.mxu0 0.0
    %4449 = vmatpush1.xpose.msra.mxu0 0.0
    %4450 = vmatprep.subr.mxu0 0.0
    %4451 = vmatpush1.xpose.msra.mxu0 0.0
    %4452 = vmatprep.subr.mxu0 0.0
    %4453 = vmatpush1.xpose.msra.mxu0 %v4420
    %4454 = vmatprep.subr.mxu0 0.0
    %4455 = vmatpush2.xpose.msra.mxu0 0.0
    %4456 = vmatprep.subr.mxu0 0.0
    %4457 = vmatpush2.xpose.msra.mxu0 0.0
    %4458 = vmatprep.subr.mxu0 0.0
    %4459 = vmatpush2.xpose.msra.mxu0 0.0
    %4460 = vmatprep.subr.mxu0 0.0
    %4461 = vmatpush2.xpose.msra.mxu0 0.0
    %4462 = vmatprep.subr.mxu0 0.0
    %4463 = vmatpush2.xpose.msra.mxu0 0.0
    %4464 = vmatprep.subr.mxu0 0.0
    %4465 = vmatpush2.xpose.msra.mxu0 0.0
    %4466 = vmatprep.subr.mxu0 0.0
    %4467 = vmatpush2.xpose.msra.mxu0 0.0
    %4468 = vmatprep.subr.mxu0 0.0
    %4469 = vmatpush2.xpose.msra.mxu0 0.0
    %4470 = vmatprep.subr.mxu0 0.0
    %4471 = vmatpush2.xpose.msra.mxu0 0.0
    %4472 = vmatprep.subr.mxu0 0.0
    %4473 = vmatpush2.xpose.msra.mxu0 0.0
    %4474 = vmatprep.subr.mxu0 0.0
    %4475 = vmatpush2.xpose.msra.mxu0 0.0
    %4476 = vmatprep.subr.mxu0 0.0
    %4477 = vmatpush2.xpose.msra.mxu0 0.0
    %4478 = vmatprep.subr.mxu0 0.0
    %4479 = vmatpush2.xpose.msra.mxu0 0.0
    %4480 = vmatprep.subr.mxu0 0.0
    %4481 = vmatpush2.xpose.msra.mxu0 0.0
    %4482 = vmatprep.subr.mxu0 0.0
    %4483 = vmatpush2.xpose.msra.mxu0 0.0
    %4484 = vmatprep.subr.mxu0 0.0
    %4485 = vmatpush2.xpose.msra.mxu0 0.0
    %4486 = vmatprep.mubr.f32.mxu0 0.0
    %4487 = vmatmul.mubr.f32.gmra.mxu0 %v4417
    %v4488 = vpop.f32.mrf.mxu0
    %v4489 = vadd.f32 0.0, %v4488
    %v4490 = vpop.f32.mrf.mxu0
    %4491 = vdwg.mxu0
    %v4493 = vsel %vm698, %v4229, 0
    %v4496 = vsel %vm698, %v4321, 0
    %4498 = vmatprep.subr.mxu0 0.0
    %4499 = vmatpush1.xpose.msra.mxu0 0.0
    %4500 = vmatprep.subr.mxu0 0.0
    %4501 = vmatpush1.xpose.msra.mxu0 0.0
    %4502 = vmatprep.subr.mxu0 0.0
    %4503 = vmatpush1.xpose.msra.mxu0 0.0
    %4504 = vmatprep.subr.mxu0 0.0
    %4505 = vmatpush1.xpose.msra.mxu0 0.0
    %4506 = vmatprep.subr.mxu0 0.0
    %4507 = vmatpush1.xpose.msra.mxu0 0.0
    %4508 = vmatprep.subr.mxu0 0.0
    %4509 = vmatpush1.xpose.msra.mxu0 0.0
    %4510 = vmatprep.subr.mxu0 0.0
    %4511 = vmatpush1.xpose.msra.mxu0 0.0
    %4512 = vmatprep.subr.mxu0 0.0
    %4513 = vmatpush1.xpose.msra.mxu0 0.0
    %4514 = vmatprep.subr.mxu0 0.0
    %4515 = vmatpush1.xpose.msra.mxu0 0.0
    %4516 = vmatprep.subr.mxu0 0.0
    %4517 = vmatpush1.xpose.msra.mxu0 0.0
    %4518 = vmatprep.subr.mxu0 0.0
    %4519 = vmatpush1.xpose.msra.mxu0 0.0
    %4520 = vmatprep.subr.mxu0 0.0
    %4521 = vmatpush1.xpose.msra.mxu0 0.0
    %4522 = vmatprep.subr.mxu0 0.0
    %4523 = vmatpush1.xpose.msra.mxu0 0.0
    %4524 = vmatprep.subr.mxu0 0.0
    %4525 = vmatpush1.xpose.msra.mxu0 0.0
    %4526 = vmatprep.subr.mxu0 0.0
    %4527 = vmatpush1.xpose.msra.mxu0 0.0
    %4528 = vmatprep.subr.mxu0 0.0
    %4529 = vmatpush1.xpose.msra.mxu0 %v4496
    %4530 = vmatprep.subr.mxu0 0.0
    %4531 = vmatpush2.xpose.msra.mxu0 0.0
    %4532 = vmatprep.subr.mxu0 0.0
    %4533 = vmatpush2.xpose.msra.mxu0 0.0
    %4534 = vmatprep.subr.mxu0 0.0
    %4535 = vmatpush2.xpose.msra.mxu0 0.0
    %4536 = vmatprep.subr.mxu0 0.0
    %4537 = vmatpush2.xpose.msra.mxu0 0.0
    %4538 = vmatprep.subr.mxu0 0.0
    %4539 = vmatpush2.xpose.msra.mxu0 0.0
    %4540 = vmatprep.subr.mxu0 0.0
    %4541 = vmatpush2.xpose.msra.mxu0 0.0
    %4542 = vmatprep.subr.mxu0 0.0
    %4543 = vmatpush2.xpose.msra.mxu0 0.0
    %4544 = vmatprep.subr.mxu0 0.0
    %4545 = vmatpush2.xpose.msra.mxu0 0.0
    %4546 = vmatprep.subr.mxu0 0.0
    %4547 = vmatpush2.xpose.msra.mxu0 0.0
    %4548 = vmatprep.subr.mxu0 0.0
    %4549 = vmatpush2.xpose.msra.mxu0 0.0
    %4550 = vmatprep.subr.mxu0 0.0
    %4551 = vmatpush2.xpose.msra.mxu0 0.0
    %4552 = vmatprep.subr.mxu0 0.0
    %4553 = vmatpush2.xpose.msra.mxu0 0.0
    %4554 = vmatprep.subr.mxu0 0.0
    %4555 = vmatpush2.xpose.msra.mxu0 0.0
    %4556 = vmatprep.subr.mxu0 0.0
    %4557 = vmatpush2.xpose.msra.mxu0 0.0
    %4558 = vmatprep.subr.mxu0 0.0
    %4559 = vmatpush2.xpose.msra.mxu0 0.0
    %4560 = vmatprep.subr.mxu0 0.0
    %4561 = vmatpush2.xpose.msra.mxu0 0.0
    %4562 = vmatprep.mubr.f32.mxu0 0.0
    %4563 = vmatmul.mubr.f32.gmra.mxu0 %v4493
    %v4564 = vpop.f32.mrf.mxu0
    %v4565 = vadd.f32 0.0, %v4564
    %v4566 = vpop.f32.mrf.mxu0
    %4567 = vdwg.mxu0
    %v4568 = vsel %vm851, %v4489, -inf
    %4569 = vmax.xlane.f32.xlu0 %v4568
    %v4570 = vpop.xlane.xlu0 %4569
    %v4571 = vsel %vm851, %v4565, -inf
    %4572 = vmax.xlane.f32.xlu0 %v4571
    %v4573 = vpop.xlane.xlu0 %4572
    %v4574 = vsub.f32 %v4489, %v4570
    %v4575 = vsub.f32 %v4565, %v4573
    %v4576 = vmul.f32 %v4574, 1.442695
    %v4577 = vpow.pop %v4576
    %v4578 = vmul.f32 %v4575, 1.442695
    %v4579 = vpow.pop %v4578
    %v4580 = vsel %vm851, %v4577, 0.0
    %4581 = vadd.xlane.f32.xlu0 %v4580
    %v4582 = vpop.xlane.xlu0 %4581
    %v4583 = vsel %vm851, %v4579, 0.0
    %4584 = vadd.xlane.f32.xlu0 %v4583
    %v4585 = vpop.xlane.xlu0 %4584
    %v4586 = vrcp.pop %v4582
    %v4587 = vmul.f32 %v4577, %v4586
    %v4588 = vrcp.pop %v4585
    %v4589 = vmul.f32 %v4579, %v4588
    %v4591 = vsel %vm851, %v4587, 0
    %4593 = vmatprep.subr.mxu0 0.0
    %4594 = vmatpush1.msra.mxu0 0.0
    %4595 = vmatprep.subr.mxu0 0.0
    %4596 = vmatpush1.msra.mxu0 0.0
    %4597 = vmatprep.subr.mxu0 0.0
    %4598 = vmatpush1.msra.mxu0 0.0
    %4599 = vmatprep.subr.mxu0 0.0
    %4600 = vmatpush1.msra.mxu0 0.0
    %4601 = vmatprep.subr.mxu0 0.0
    %4602 = vmatpush1.msra.mxu0 0.0
    %4603 = vmatprep.subr.mxu0 0.0
    %4604 = vmatpush1.msra.mxu0 0.0
    %4605 = vmatprep.subr.mxu0 0.0
    %4606 = vmatpush1.msra.mxu0 0.0
    %4607 = vmatprep.subr.mxu0 0.0
    %4608 = vmatpush1.msra.mxu0 0.0
    %4609 = vmatprep.subr.mxu0 0.0
    %4610 = vmatpush1.msra.mxu0 0.0
    %4611 = vmatprep.subr.mxu0 0.0
    %4612 = vmatpush1.msra.mxu0 0.0
    %4613 = vmatprep.subr.mxu0 0.0
    %4614 = vmatpush1.msra.mxu0 0.0
    %4615 = vmatprep.subr.mxu0 0.0
    %4616 = vmatpush1.msra.mxu0 0.0
    %4617 = vmatprep.subr.mxu0 0.0
    %4618 = vmatpush1.msra.mxu0 0.0
    %4619 = vmatprep.subr.mxu0 0.0
    %4620 = vmatpush1.msra.mxu0 0.0
    %4621 = vmatprep.subr.mxu0 0.0
    %4622 = vmatpush1.msra.mxu0 0.0
    %4623 = vmatprep.subr.mxu0 0.0
    %4624 = vmatpush1.msra.mxu0 %v4408
    %4625 = vmatprep.subr.mxu0 0.0
    %4626 = vmatpush2.msra.mxu0 0.0
    %4627 = vmatprep.subr.mxu0 0.0
    %4628 = vmatpush2.msra.mxu0 0.0
    %4629 = vmatprep.subr.mxu0 0.0
    %4630 = vmatpush2.msra.mxu0 0.0
    %4631 = vmatprep.subr.mxu0 0.0
    %4632 = vmatpush2.msra.mxu0 0.0
    %4633 = vmatprep.subr.mxu0 0.0
    %4634 = vmatpush2.msra.mxu0 0.0
    %4635 = vmatprep.subr.mxu0 0.0
    %4636 = vmatpush2.msra.mxu0 0.0
    %4637 = vmatprep.subr.mxu0 0.0
    %4638 = vmatpush2.msra.mxu0 0.0
    %4639 = vmatprep.subr.mxu0 0.0
    %4640 = vmatpush2.msra.mxu0 0.0
    %4641 = vmatprep.subr.mxu0 0.0
    %4642 = vmatpush2.msra.mxu0 0.0
    %4643 = vmatprep.subr.mxu0 0.0
    %4644 = vmatpush2.msra.mxu0 0.0
    %4645 = vmatprep.subr.mxu0 0.0
    %4646 = vmatpush2.msra.mxu0 0.0
    %4647 = vmatprep.subr.mxu0 0.0
    %4648 = vmatpush2.msra.mxu0 0.0
    %4649 = vmatprep.subr.mxu0 0.0
    %4650 = vmatpush2.msra.mxu0 0.0
    %4651 = vmatprep.subr.mxu0 0.0
    %4652 = vmatpush2.msra.mxu0 0.0
    %4653 = vmatprep.subr.mxu0 0.0
    %4654 = vmatpush2.msra.mxu0 0.0
    %4655 = vmatprep.subr.mxu0 0.0
    %4656 = vmatpush2.msra.mxu0 0.0
    %4657 = vmatprep.mubr.f32.mxu0 0.0
    %4658 = vmatmul.mubr.f32.gmra.mxu0 %v4591
    %v4659 = vpop.f32.mrf.mxu0
    %v4660 = vadd.f32 0.0, %v4659
    %v4661 = vpop.f32.mrf.mxu0
    %4662 = vdwg.mxu0
    %v4664 = vsel %vm851, %v4589, 0
    %4666 = vmatprep.subr.mxu0 0.0
    %4667 = vmatpush1.msra.mxu0 0.0
    %4668 = vmatprep.subr.mxu0 0.0
    %4669 = vmatpush1.msra.mxu0 0.0
    %4670 = vmatprep.subr.mxu0 0.0
    %4671 = vmatpush1.msra.mxu0 0.0
    %4672 = vmatprep.subr.mxu0 0.0
    %4673 = vmatpush1.msra.mxu0 0.0
    %4674 = vmatprep.subr.mxu0 0.0
    %4675 = vmatpush1.msra.mxu0 0.0
    %4676 = vmatprep.subr.mxu0 0.0
    %4677 = vmatpush1.msra.mxu0 0.0
    %4678 = vmatprep.subr.mxu0 0.0
    %4679 = vmatpush1.msra.mxu0 0.0
    %4680 = vmatprep.subr.mxu0 0.0
    %4681 = vmatpush1.msra.mxu0 0.0
    %4682 = vmatprep.subr.mxu0 0.0
    %4683 = vmatpush1.msra.mxu0 0.0
    %4684 = vmatprep.subr.mxu0 0.0
    %4685 = vmatpush1.msra.mxu0 0.0
    %4686 = vmatprep.subr.mxu0 0.0
    %4687 = vmatpush1.msra.mxu0 0.0
    %4688 = vmatprep.subr.mxu0 0.0
    %4689 = vmatpush1.msra.mxu0 0.0
    %4690 = vmatprep.subr.mxu0 0.0
    %4691 = vmatpush1.msra.mxu0 0.0
    %4692 = vmatprep.subr.mxu0 0.0
    %4693 = vmatpush1.msra.mxu0 0.0
    %4694 = vmatprep.subr.mxu0 0.0
    %4695 = vmatpush1.msra.mxu0 0.0
    %4696 = vmatprep.subr.mxu0 0.0
    %4697 = vmatpush1.msra.mxu0 %v4413
    %4698 = vmatprep.subr.mxu0 0.0
    %4699 = vmatpush2.msra.mxu0 0.0
    %4700 = vmatprep.subr.mxu0 0.0
    %4701 = vmatpush2.msra.mxu0 0.0
    %4702 = vmatprep.subr.mxu0 0.0
    %4703 = vmatpush2.msra.mxu0 0.0
    %4704 = vmatprep.subr.mxu0 0.0
    %4705 = vmatpush2.msra.mxu0 0.0
    %4706 = vmatprep.subr.mxu0 0.0
    %4707 = vmatpush2.msra.mxu0 0.0
    %4708 = vmatprep.subr.mxu0 0.0
    %4709 = vmatpush2.msra.mxu0 0.0
    %4710 = vmatprep.subr.mxu0 0.0
    %4711 = vmatpush2.msra.mxu0 0.0
    %4712 = vmatprep.subr.mxu0 0.0
    %4713 = vmatpush2.msra.mxu0 0.0
    %4714 = vmatprep.subr.mxu0 0.0
    %4715 = vmatpush2.msra.mxu0 0.0
    %4716 = vmatprep.subr.mxu0 0.0
    %4717 = vmatpush2.msra.mxu0 0.0
    %4718 = vmatprep.subr.mxu0 0.0
    %4719 = vmatpush2.msra.mxu0 0.0
    %4720 = vmatprep.subr.mxu0 0.0
    %4721 = vmatpush2.msra.mxu0 0.0
    %4722 = vmatprep.subr.mxu0 0.0
    %4723 = vmatpush2.msra.mxu0 0.0
    %4724 = vmatprep.subr.mxu0 0.0
    %4725 = vmatpush2.msra.mxu0 0.0
    %4726 = vmatprep.subr.mxu0 0.0
    %4727 = vmatpush2.msra.mxu0 0.0
    %4728 = vmatprep.subr.mxu0 0.0
    %4729 = vmatpush2.msra.mxu0 0.0
    %4730 = vmatprep.mubr.f32.mxu0 0.0
    %4731 = vmatmul.mubr.f32.gmra.mxu0 %v4664
    %v4732 = vpop.f32.mrf.mxu0
    %v4733 = vadd.f32 0.0, %v4732
    %v4734 = vpop.f32.mrf.mxu0
    %4735 = vdwg.mxu0
    %s4736 = scalar_lea.vmem %s14, 80
    %v4737 = vld [vmem:[%s4736] sm:$0xff]
    %v4738 = vld [vmem:[%s4736 + $0x8] sm:$0xff]
    %v4740 = vsel %vm698, %v4660, 0
    %v4743 = vsel %vm698, %v4733, 0
    %4745 = vmatprep.subr.mxu0 0.0
    %4746 = vmatpush1.msra.mxu0 0.0
    %4747 = vmatprep.subr.mxu0 0.0
    %4748 = vmatpush1.msra.mxu0 0.0
    %4749 = vmatprep.subr.mxu0 0.0
    %4750 = vmatpush1.msra.mxu0 0.0
    %4751 = vmatprep.subr.mxu0 0.0
    %4752 = vmatpush1.msra.mxu0 0.0
    %4753 = vmatprep.subr.mxu0 0.0
    %4754 = vmatpush1.msra.mxu0 0.0
    %4755 = vmatprep.subr.mxu0 0.0
    %4756 = vmatpush1.msra.mxu0 0.0
    %4757 = vmatprep.subr.mxu0 0.0
    %4758 = vmatpush1.msra.mxu0 0.0
    %4759 = vmatprep.subr.mxu0 0.0
    %4760 = vmatpush1.msra.mxu0 0.0
    %4761 = vmatprep.subr.mxu0 0.0
    %4762 = vmatpush1.msra.mxu0 0.0
    %4763 = vmatprep.subr.mxu0 0.0
    %4764 = vmatpush1.msra.mxu0 0.0
    %4765 = vmatprep.subr.mxu0 0.0
    %4766 = vmatpush1.msra.mxu0 0.0
    %4767 = vmatprep.subr.mxu0 0.0
    %4768 = vmatpush1.msra.mxu0 0.0
    %4769 = vmatprep.subr.mxu0 0.0
    %4770 = vmatpush1.msra.mxu0 0.0
    %4771 = vmatprep.subr.mxu0 0.0
    %4772 = vmatpush1.msra.mxu0 0.0
    %4773 = vmatprep.subr.mxu0 0.0
    %4774 = vmatpush1.msra.mxu0 %v4738
    %4775 = vmatprep.subr.mxu0 0.0
    %4776 = vmatpush1.msra.mxu0 %v4737
    %4777 = vmatprep.subr.mxu0 0.0
    %4778 = vmatpush2.msra.mxu0 0.0
    %4779 = vmatprep.subr.mxu0 0.0
    %4780 = vmatpush2.msra.mxu0 0.0
    %4781 = vmatprep.subr.mxu0 0.0
    %4782 = vmatpush2.msra.mxu0 0.0
    %4783 = vmatprep.subr.mxu0 0.0
    %4784 = vmatpush2.msra.mxu0 0.0
    %4785 = vmatprep.subr.mxu0 0.0
    %4786 = vmatpush2.msra.mxu0 0.0
    %4787 = vmatprep.subr.mxu0 0.0
    %4788 = vmatpush2.msra.mxu0 0.0
    %4789 = vmatprep.subr.mxu0 0.0
    %4790 = vmatpush2.msra.mxu0 0.0
    %4791 = vmatprep.subr.mxu0 0.0
    %4792 = vmatpush2.msra.mxu0 0.0
    %4793 = vmatprep.subr.mxu0 0.0
    %4794 = vmatpush2.msra.mxu0 0.0
    %4795 = vmatprep.subr.mxu0 0.0
    %4796 = vmatpush2.msra.mxu0 0.0
    %4797 = vmatprep.subr.mxu0 0.0
    %4798 = vmatpush2.msra.mxu0 0.0
    %4799 = vmatprep.subr.mxu0 0.0
    %4800 = vmatpush2.msra.mxu0 0.0
    %4801 = vmatprep.subr.mxu0 0.0
    %4802 = vmatpush2.msra.mxu0 0.0
    %4803 = vmatprep.subr.mxu0 0.0
    %4804 = vmatpush2.msra.mxu0 0.0
    %4805 = vmatprep.subr.mxu0 0.0
    %4806 = vmatpush2.msra.mxu0 0.0
    %4807 = vmatprep.subr.mxu0 0.0
    %4808 = vmatpush2.msra.mxu0 0.0
    %4809 = vmatprep.mubr.f32.mxu0 0.0
    %4810 = vmatmul.mubr.f32.gmra.mxu0 %v4740
    %v4811 = vpop.f32.mrf.mxu0
    %v4812 = vadd.f32 0.0, %v4811
    %v4813 = vpop.f32.mrf.mxu0
    %4814 = vmatprep.mubr.f32.mxu0 0.0
    %4815 = vmatmul.mubr.f32.gmra.mxu0 %v4743
    %v4816 = vpop.f32.mrf.mxu0
    %v4817 = vadd.f32 0.0, %v4816
    %v4818 = vpop.f32.mrf.mxu0
    %4819 = vdwg.mxu0
    %v4820 = vadd.f32 %v4138, %v4812
    %v4821 = vadd.f32 %v4139, %v4817
    %s4822 = scalar_lea.vmem %s8, 384
    %v4823 = vld [vmem:[%s4822] sm:$0xff]
    %v4824 = vld [vmem:[%s4822 + $0x8] sm:$0xff]
    %v4825 = vld [vmem:[%s4822 + $0x10] sm:$0xff]
    %v4826 = vld [vmem:[%s4822 + $0x18] sm:$0xff]
    %v4827 = vld [vmem:[%s4822 + $0x20] sm:$0xff]
    %v4828 = vld [vmem:[%s4822 + $0x28] sm:$0xff]
    %v4829 = vld [vmem:[%s4822 + $0x30] sm:$0xff]
    %v4830 = vld [vmem:[%s4822 + $0x38] sm:$0xff]
    %s4831 = scalar_lea.vmem %s9, 6
    %v4832 = vld [vmem:[%s4831] sm:$0x1]
    %v4834 = vlaneseq
    %v4835 = vshrl.u32 %v4834, 7
    %v4836 = vsub.s32 0, %v4835
    %v4837 = vrot.slane %v4832, %v4836
    %4839 = vmatprep.subr.mxu0 0.0
    %4840 = vmatpush1.msra.mxu0 0.0
    %4841 = vmatprep.subr.mxu0 0.0
    %4842 = vmatpush1.msra.mxu0 0.0
    %4843 = vmatprep.subr.mxu0 0.0
    %4844 = vmatpush1.msra.mxu0 0.0
    %4845 = vmatprep.subr.mxu0 0.0
    %4846 = vmatpush1.msra.mxu0 0.0
    %4847 = vmatprep.subr.mxu0 0.0
    %4848 = vmatpush1.msra.mxu0 0.0
    %4849 = vmatprep.subr.mxu0 0.0
    %4850 = vmatpush1.msra.mxu0 0.0
    %4851 = vmatprep.subr.mxu0 0.0
    %4852 = vmatpush1.msra.mxu0 0.0
    %4853 = vmatprep.subr.mxu0 0.0
    %4854 = vmatpush1.msra.mxu0 0.0
    %4855 = vmatprep.subr.mxu0 0.0
    %4856 = vmatpush1.msra.mxu0 %v4830
    %4857 = vmatprep.subr.mxu0 0.0
    %4858 = vmatpush1.msra.mxu0 %v4829
    %4859 = vmatprep.subr.mxu0 0.0
    %4860 = vmatpush1.msra.mxu0 %v4828
    %4861 = vmatprep.subr.mxu0 0.0
    %4862 = vmatpush1.msra.mxu0 %v4827
    %4863 = vmatprep.subr.mxu0 0.0
    %4864 = vmatpush1.msra.mxu0 %v4826
    %4865 = vmatprep.subr.mxu0 0.0
    %4866 = vmatpush1.msra.mxu0 %v4825
    %4867 = vmatprep.subr.mxu0 0.0
    %4868 = vmatpush1.msra.mxu0 %v4824
    %4869 = vmatprep.subr.mxu0 0.0
    %4870 = vmatpush1.msra.mxu0 %v4823
    %4871 = vmatprep.subr.mxu0 0.0
    %4872 = vmatpush2.msra.mxu0 0.0
    %4873 = vmatprep.subr.mxu0 0.0
    %4874 = vmatpush2.msra.mxu0 0.0
    %4875 = vmatprep.subr.mxu0 0.0
    %4876 = vmatpush2.msra.mxu0 0.0
    %4877 = vmatprep.subr.mxu0 0.0
    %4878 = vmatpush2.msra.mxu0 0.0
    %4879 = vmatprep.subr.mxu0 0.0
    %4880 = vmatpush2.msra.mxu0 0.0
    %4881 = vmatprep.subr.mxu0 0.0
    %4882 = vmatpush2.msra.mxu0 0.0
    %4883 = vmatprep.subr.mxu0 0.0
    %4884 = vmatpush2.msra.mxu0 0.0
    %4885 = vmatprep.subr.mxu0 0.0
    %4886 = vmatpush2.msra.mxu0 0.0
    %4887 = vmatprep.subr.mxu0 0.0
    %4888 = vmatpush2.msra.mxu0 0.0
    %4889 = vmatprep.subr.mxu0 0.0
    %4890 = vmatpush2.msra.mxu0 0.0
    %4891 = vmatprep.subr.mxu0 0.0
    %4892 = vmatpush2.msra.mxu0 0.0
    %4893 = vmatprep.subr.mxu0 0.0
    %4894 = vmatpush2.msra.mxu0 0.0
    %4895 = vmatprep.subr.mxu0 0.0
    %4896 = vmatpush2.msra.mxu0 0.0
    %4897 = vmatprep.subr.mxu0 0.0
    %4898 = vmatpush2.msra.mxu0 0.0
    %4899 = vmatprep.subr.mxu0 0.0
    %4900 = vmatpush2.msra.mxu0 0.0
    %4901 = vmatprep.subr.mxu0 0.0
    %4902 = vmatpush2.msra.mxu0 0.0
    %4903 = vmatprep.mubr.f32.mxu0 0.0
    %4904 = vmatmul.mubr.f32.gmra.mxu0 %v3464
    %v4905 = vpop.f32.mrf.mxu0
    %v4906 = vadd.f32 %v4837, %v4905
    %v4907 = vpop.f32.mrf.mxu0
    %4908 = vmatprep.mubr.f32.mxu0 0.0
    %4909 = vmatmul.mubr.f32.gmra.mxu0 %v3467
    %v4910 = vpop.f32.mrf.mxu0
    %v4911 = vadd.f32 %v4837, %v4910
    %v4912 = vpop.f32.mrf.mxu0
    %4913 = vdwg.mxu0
    %s4914 = scalar_lea.vmem %s10, 384
    %v4915 = vld [vmem:[%s4914] sm:$0xff]
    %v4916 = vld [vmem:[%s4914 + $0x8] sm:$0xff]
    %v4917 = vld [vmem:[%s4914 + $0x10] sm:$0xff]
    %v4918 = vld [vmem:[%s4914 + $0x18] sm:$0xff]
    %v4919 = vld [vmem:[%s4914 + $0x20] sm:$0xff]
    %v4920 = vld [vmem:[%s4914 + $0x28] sm:$0xff]
    %v4921 = vld [vmem:[%s4914 + $0x30] sm:$0xff]
    %v4922 = vld [vmem:[%s4914 + $0x38] sm:$0xff]
    %s4923 = scalar_lea.vmem %s11, 6
    %v4924 = vld [vmem:[%s4923] sm:$0x1]
    %v4926 = vlaneseq
    %v4927 = vshrl.u32 %v4926, 7
    %v4928 = vsub.s32 0, %v4927
    %v4929 = vrot.slane %v4924, %v4928
    %4931 = vmatprep.subr.mxu0 0.0
    %4932 = vmatpush1.msra.mxu0 0.0
    %4933 = vmatprep.subr.mxu0 0.0
    %4934 = vmatpush1.msra.mxu0 0.0
    %4935 = vmatprep.subr.mxu0 0.0
    %4936 = vmatpush1.msra.mxu0 0.0
    %4937 = vmatprep.subr.mxu0 0.0
    %4938 = vmatpush1.msra.mxu0 0.0
    %4939 = vmatprep.subr.mxu0 0.0
    %4940 = vmatpush1.msra.mxu0 0.0
    %4941 = vmatprep.subr.mxu0 0.0
    %4942 = vmatpush1.msra.mxu0 0.0
    %4943 = vmatprep.subr.mxu0 0.0
    %4944 = vmatpush1.msra.mxu0 0.0
    %4945 = vmatprep.subr.mxu0 0.0
    %4946 = vmatpush1.msra.mxu0 0.0
    %4947 = vmatprep.subr.mxu0 0.0
    %4948 = vmatpush1.msra.mxu0 %v4922
    %4949 = vmatprep.subr.mxu0 0.0
    %4950 = vmatpush1.msra.mxu0 %v4921
    %4951 = vmatprep.subr.mxu0 0.0
    %4952 = vmatpush1.msra.mxu0 %v4920
    %4953 = vmatprep.subr.mxu0 0.0
    %4954 = vmatpush1.msra.mxu0 %v4919
    %4955 = vmatprep.subr.mxu0 0.0
    %4956 = vmatpush1.msra.mxu0 %v4918
    %4957 = vmatprep.subr.mxu0 0.0
    %4958 = vmatpush1.msra.mxu0 %v4917
    %4959 = vmatprep.subr.mxu0 0.0
    %4960 = vmatpush1.msra.mxu0 %v4916
    %4961 = vmatprep.subr.mxu0 0.0
    %4962 = vmatpush1.msra.mxu0 %v4915
    %4963 = vmatprep.subr.mxu0 0.0
    %4964 = vmatpush2.msra.mxu0 0.0
    %4965 = vmatprep.subr.mxu0 0.0
    %4966 = vmatpush2.msra.mxu0 0.0
    %4967 = vmatprep.subr.mxu0 0.0
    %4968 = vmatpush2.msra.mxu0 0.0
    %4969 = vmatprep.subr.mxu0 0.0
    %4970 = vmatpush2.msra.mxu0 0.0
    %4971 = vmatprep.subr.mxu0 0.0
    %4972 = vmatpush2.msra.mxu0 0.0
    %4973 = vmatprep.subr.mxu0 0.0
    %4974 = vmatpush2.msra.mxu0 0.0
    %4975 = vmatprep.subr.mxu0 0.0
    %4976 = vmatpush2.msra.mxu0 0.0
    %4977 = vmatprep.subr.mxu0 0.0
    %4978 = vmatpush2.msra.mxu0 0.0
    %4979 = vmatprep.subr.mxu0 0.0
    %4980 = vmatpush2.msra.mxu0 0.0
    %4981 = vmatprep.subr.mxu0 0.0
    %4982 = vmatpush2.msra.mxu0 0.0
    %4983 = vmatprep.subr.mxu0 0.0
    %4984 = vmatpush2.msra.mxu0 0.0
    %4985 = vmatprep.subr.mxu0 0.0
    %4986 = vmatpush2.msra.mxu0 0.0
    %4987 = vmatprep.subr.mxu0 0.0
    %4988 = vmatpush2.msra.mxu0 0.0
    %4989 = vmatprep.subr.mxu0 0.0
    %4990 = vmatpush2.msra.mxu0 0.0
    %4991 = vmatprep.subr.mxu0 0.0
    %4992 = vmatpush2.msra.mxu0 0.0
    %4993 = vmatprep.subr.mxu0 0.0
    %4994 = vmatpush2.msra.mxu0 0.0
    %4995 = vmatprep.mubr.f32.mxu0 0.0
    %4996 = vmatmul.mubr.f32.gmra.mxu0 %v3464
    %v4997 = vpop.f32.mrf.mxu0
    %v4998 = vadd.f32 %v4929, %v4997
    %v4999 = vpop.f32.mrf.mxu0
    %5000 = vmatprep.mubr.f32.mxu0 0.0
    %5001 = vmatmul.mubr.f32.gmra.mxu0 %v3467
    %v5002 = vpop.f32.mrf.mxu0
    %v5003 = vadd.f32 %v4929, %v5002
    %v5004 = vpop.f32.mrf.mxu0
    %5005 = vdwg.mxu0
    %s5006 = scalar_lea.vmem %s12, 384
    %v5007 = vld [vmem:[%s5006] sm:$0xff]
    %v5008 = vld [vmem:[%s5006 + $0x8] sm:$0xff]
    %v5009 = vld [vmem:[%s5006 + $0x10] sm:$0xff]
    %v5010 = vld [vmem:[%s5006 + $0x18] sm:$0xff]
    %v5011 = vld [vmem:[%s5006 + $0x20] sm:$0xff]
    %v5012 = vld [vmem:[%s5006 + $0x28] sm:$0xff]
    %v5013 = vld [vmem:[%s5006 + $0x30] sm:$0xff]
    %v5014 = vld [vmem:[%s5006 + $0x38] sm:$0xff]
    %s5015 = scalar_lea.vmem %s13, 6
    %v5016 = vld [vmem:[%s5015] sm:$0x1]
    %v5018 = vlaneseq
    %v5019 = vshrl.u32 %v5018, 7
    %v5020 = vsub.s32 0, %v5019
    %v5021 = vrot.slane %v5016, %v5020
    %5023 = vmatprep.subr.mxu0 0.0
    %5024 = vmatpush1.msra.mxu0 0.0
    %5025 = vmatprep.subr.mxu0 0.0
    %5026 = vmatpush1.msra.mxu0 0.0
    %5027 = vmatprep.subr.mxu0 0.0
    %5028 = vmatpush1.msra.mxu0 0.0
    %5029 = vmatprep.subr.mxu0 0.0
    %5030 = vmatpush1.msra.mxu0 0.0
    %5031 = vmatprep.subr.mxu0 0.0
    %5032 = vmatpush1.msra.mxu0 0.0
    %5033 = vmatprep.subr.mxu0 0.0
    %5034 = vmatpush1.msra.mxu0 0.0
    %5035 = vmatprep.subr.mxu0 0.0
    %5036 = vmatpush1.msra.mxu0 0.0
    %5037 = vmatprep.subr.mxu0 0.0
    %5038 = vmatpush1.msra.mxu0 0.0
    %5039 = vmatprep.subr.mxu0 0.0
    %5040 = vmatpush1.msra.mxu0 %v5014
    %5041 = vmatprep.subr.mxu0 0.0
    %5042 = vmatpush1.msra.mxu0 %v5013
    %5043 = vmatprep.subr.mxu0 0.0
    %5044 = vmatpush1.msra.mxu0 %v5012
    %5045 = vmatprep.subr.mxu0 0.0
    %5046 = vmatpush1.msra.mxu0 %v5011
    %5047 = vmatprep.subr.mxu0 0.0
    %5048 = vmatpush1.msra.mxu0 %v5010
    %5049 = vmatprep.subr.mxu0 0.0
    %5050 = vmatpush1.msra.mxu0 %v5009
    %5051 = vmatprep.subr.mxu0 0.0
    %5052 = vmatpush1.msra.mxu0 %v5008
    %5053 = vmatprep.subr.mxu0 0.0
    %5054 = vmatpush1.msra.mxu0 %v5007
    %5055 = vmatprep.subr.mxu0 0.0
    %5056 = vmatpush2.msra.mxu0 0.0
    %5057 = vmatprep.subr.mxu0 0.0
    %5058 = vmatpush2.msra.mxu0 0.0
    %5059 = vmatprep.subr.mxu0 0.0
    %5060 = vmatpush2.msra.mxu0 0.0
    %5061 = vmatprep.subr.mxu0 0.0
    %5062 = vmatpush2.msra.mxu0 0.0
    %5063 = vmatprep.subr.mxu0 0.0
    %5064 = vmatpush2.msra.mxu0 0.0
    %5065 = vmatprep.subr.mxu0 0.0
    %5066 = vmatpush2.msra.mxu0 0.0
    %5067 = vmatprep.subr.mxu0 0.0
    %5068 = vmatpush2.msra.mxu0 0.0
    %5069 = vmatprep.subr.mxu0 0.0
    %5070 = vmatpush2.msra.mxu0 0.0
    %5071 = vmatprep.subr.mxu0 0.0
    %5072 = vmatpush2.msra.mxu0 0.0
    %5073 = vmatprep.subr.mxu0 0.0
    %5074 = vmatpush2.msra.mxu0 0.0
    %5075 = vmatprep.subr.mxu0 0.0
    %5076 = vmatpush2.msra.mxu0 0.0
    %5077 = vmatprep.subr.mxu0 0.0
    %5078 = vmatpush2.msra.mxu0 0.0
    %5079 = vmatprep.subr.mxu0 0.0
    %5080 = vmatpush2.msra.mxu0 0.0
    %5081 = vmatprep.subr.mxu0 0.0
    %5082 = vmatpush2.msra.mxu0 0.0
    %5083 = vmatprep.subr.mxu0 0.0
    %5084 = vmatpush2.msra.mxu0 0.0
    %5085 = vmatprep.subr.mxu0 0.0
    %5086 = vmatpush2.msra.mxu0 0.0
    %5087 = vmatprep.mubr.f32.mxu0 0.0
    %5088 = vmatmul.mubr.f32.gmra.mxu0 %v3464
    %v5089 = vpop.f32.mrf.mxu0
    %v5090 = vadd.f32 %v5021, %v5089
    %v5091 = vpop.f32.mrf.mxu0
    %5092 = vmatprep.mubr.f32.mxu0 0.0
    %5093 = vmatmul.mubr.f32.gmra.mxu0 %v3467
    %v5094 = vpop.f32.mrf.mxu0
    %v5095 = vadd.f32 %v5021, %v5094
    %v5096 = vpop.f32.mrf.mxu0
    %5097 = vdwg.mxu0
    %v5099 = vsel %vm698, %v4906, 0
    %v5102 = vsel %vm698, %v4998, 0
    %5104 = vmatprep.subr.mxu0 0.0
    %5105 = vmatpush1.xpose.msra.mxu0 0.0
    %5106 = vmatprep.subr.mxu0 0.0
    %5107 = vmatpush1.xpose.msra.mxu0 0.0
    %5108 = vmatprep.subr.mxu0 0.0
    %5109 = vmatpush1.xpose.msra.mxu0 0.0
    %5110 = vmatprep.subr.mxu0 0.0
    %5111 = vmatpush1.xpose.msra.mxu0 0.0
    %5112 = vmatprep.subr.mxu0 0.0
    %5113 = vmatpush1.xpose.msra.mxu0 0.0
    %5114 = vmatprep.subr.mxu0 0.0
    %5115 = vmatpush1.xpose.msra.mxu0 0.0
    %5116 = vmatprep.subr.mxu0 0.0
    %5117 = vmatpush1.xpose.msra.mxu0 0.0
    %5118 = vmatprep.subr.mxu0 0.0
    %5119 = vmatpush1.xpose.msra.mxu0 0.0
    %5120 = vmatprep.subr.mxu0 0.0
    %5121 = vmatpush1.xpose.msra.mxu0 0.0
    %5122 = vmatprep.subr.mxu0 0.0
    %5123 = vmatpush1.xpose.msra.mxu0 0.0
    %5124 = vmatprep.subr.mxu0 0.0
    %5125 = vmatpush1.xpose.msra.mxu0 0.0
    %5126 = vmatprep.subr.mxu0 0.0
    %5127 = vmatpush1.xpose.msra.mxu0 0.0
    %5128 = vmatprep.subr.mxu0 0.0
    %5129 = vmatpush1.xpose.msra.mxu0 0.0
    %5130 = vmatprep.subr.mxu0 0.0
    %5131 = vmatpush1.xpose.msra.mxu0 0.0
    %5132 = vmatprep.subr.mxu0 0.0
    %5133 = vmatpush1.xpose.msra.mxu0 0.0
    %5134 = vmatprep.subr.mxu0 0.0
    %5135 = vmatpush1.xpose.msra.mxu0 %v5102
    %5136 = vmatprep.subr.mxu0 0.0
    %5137 = vmatpush2.xpose.msra.mxu0 0.0
    %5138 = vmatprep.subr.mxu0 0.0
    %5139 = vmatpush2.xpose.msra.mxu0 0.0
    %5140 = vmatprep.subr.mxu0 0.0
    %5141 = vmatpush2.xpose.msra.mxu0 0.0
    %5142 = vmatprep.subr.mxu0 0.0
    %5143 = vmatpush2.xpose.msra.mxu0 0.0
    %5144 = vmatprep.subr.mxu0 0.0
    %5145 = vmatpush2.xpose.msra.mxu0 0.0
    %5146 = vmatprep.subr.mxu0 0.0
    %5147 = vmatpush2.xpose.msra.mxu0 0.0
    %5148 = vmatprep.subr.mxu0 0.0
    %5149 = vmatpush2.xpose.msra.mxu0 0.0
    %5150 = vmatprep.subr.mxu0 0.0
    %5151 = vmatpush2.xpose.msra.mxu0 0.0
    %5152 = vmatprep.subr.mxu0 0.0
    %5153 = vmatpush2.xpose.msra.mxu0 0.0
    %5154 = vmatprep.subr.mxu0 0.0
    %5155 = vmatpush2.xpose.msra.mxu0 0.0
    %5156 = vmatprep.subr.mxu0 0.0
    %5157 = vmatpush2.xpose.msra.mxu0 0.0
    %5158 = vmatprep.subr.mxu0 0.0
    %5159 = vmatpush2.xpose.msra.mxu0 0.0
    %5160 = vmatprep.subr.mxu0 0.0
    %5161 = vmatpush2.xpose.msra.mxu0 0.0
    %5162 = vmatprep.subr.mxu0 0.0
    %5163 = vmatpush2.xpose.msra.mxu0 0.0
    %5164 = vmatprep.subr.mxu0 0.0
    %5165 = vmatpush2.xpose.msra.mxu0 0.0
    %5166 = vmatprep.subr.mxu0 0.0
    %5167 = vmatpush2.xpose.msra.mxu0 0.0
    %5168 = vmatprep.mubr.f32.mxu0 0.0
    %5169 = vmatmul.mubr.f32.gmra.mxu0 %v5099
    %v5170 = vpop.f32.mrf.mxu0
    %v5171 = vadd.f32 0.0, %v5170
    %v5172 = vpop.f32.mrf.mxu0
    %5173 = vdwg.mxu0
    %v5175 = vsel %vm698, %v4911, 0
    %v5178 = vsel %vm698, %v5003, 0
    %5180 = vmatprep.subr.mxu0 0.0
    %5181 = vmatpush1.xpose.msra.mxu0 0.0
    %5182 = vmatprep.subr.mxu0 0.0
    %5183 = vmatpush1.xpose.msra.mxu0 0.0
    %5184 = vmatprep.subr.mxu0 0.0
    %5185 = vmatpush1.xpose.msra.mxu0 0.0
    %5186 = vmatprep.subr.mxu0 0.0
    %5187 = vmatpush1.xpose.msra.mxu0 0.0
    %5188 = vmatprep.subr.mxu0 0.0
    %5189 = vmatpush1.xpose.msra.mxu0 0.0
    %5190 = vmatprep.subr.mxu0 0.0
    %5191 = vmatpush1.xpose.msra.mxu0 0.0
    %5192 = vmatprep.subr.mxu0 0.0
    %5193 = vmatpush1.xpose.msra.mxu0 0.0
    %5194 = vmatprep.subr.mxu0 0.0
    %5195 = vmatpush1.xpose.msra.mxu0 0.0
    %5196 = vmatprep.subr.mxu0 0.0
    %5197 = vmatpush1.xpose.msra.mxu0 0.0
    %5198 = vmatprep.subr.mxu0 0.0
    %5199 = vmatpush1.xpose.msra.mxu0 0.0
    %5200 = vmatprep.subr.mxu0 0.0
    %5201 = vmatpush1.xpose.msra.mxu0 0.0
    %5202 = vmatprep.subr.mxu0 0.0
    %5203 = vmatpush1.xpose.msra.mxu0 0.0
    %5204 = vmatprep.subr.mxu0 0.0
    %5205 = vmatpush1.xpose.msra.mxu0 0.0
    %5206 = vmatprep.subr.mxu0 0.0
    %5207 = vmatpush1.xpose.msra.mxu0 0.0
    %5208 = vmatprep.subr.mxu0 0.0
    %5209 = vmatpush1.xpose.msra.mxu0 0.0
    %5210 = vmatprep.subr.mxu0 0.0
    %5211 = vmatpush1.xpose.msra.mxu0 %v5178
    %5212 = vmatprep.subr.mxu0 0.0
    %5213 = vmatpush2.xpose.msra.mxu0 0.0
    %5214 = vmatprep.subr.mxu0 0.0
    %5215 = vmatpush2.xpose.msra.mxu0 0.0
    %5216 = vmatprep.subr.mxu0 0.0
    %5217 = vmatpush2.xpose.msra.mxu0 0.0
    %5218 = vmatprep.subr.mxu0 0.0
    %5219 = vmatpush2.xpose.msra.mxu0 0.0
    %5220 = vmatprep.subr.mxu0 0.0
    %5221 = vmatpush2.xpose.msra.mxu0 0.0
    %5222 = vmatprep.subr.mxu0 0.0
    %5223 = vmatpush2.xpose.msra.mxu0 0.0
    %5224 = vmatprep.subr.mxu0 0.0
    %5225 = vmatpush2.xpose.msra.mxu0 0.0
    %5226 = vmatprep.subr.mxu0 0.0
    %5227 = vmatpush2.xpose.msra.mxu0 0.0
    %5228 = vmatprep.subr.mxu0 0.0
    %5229 = vmatpush2.xpose.msra.mxu0 0.0
    %5230 = vmatprep.subr.mxu0 0.0
    %5231 = vmatpush2.xpose.msra.mxu0 0.0
    %5232 = vmatprep.subr.mxu0 0.0
    %5233 = vmatpush2.xpose.msra.mxu0 0.0
    %5234 = vmatprep.subr.mxu0 0.0
    %5235 = vmatpush2.xpose.msra.mxu0 0.0
    %5236 = vmatprep.subr.mxu0 0.0
    %5237 = vmatpush2.xpose.msra.mxu0 0.0
    %5238 = vmatprep.subr.mxu0 0.0
    %5239 = vmatpush2.xpose.msra.mxu0 0.0
    %5240 = vmatprep.subr.mxu0 0.0
    %5241 = vmatpush2.xpose.msra.mxu0 0.0
    %5242 = vmatprep.subr.mxu0 0.0
    %5243 = vmatpush2.xpose.msra.mxu0 0.0
    %5244 = vmatprep.mubr.f32.mxu0 0.0
    %5245 = vmatmul.mubr.f32.gmra.mxu0 %v5175
    %v5246 = vpop.f32.mrf.mxu0
    %v5247 = vadd.f32 0.0, %v5246
    %v5248 = vpop.f32.mrf.mxu0
    %5249 = vdwg.mxu0
    %v5250 = vsel %vm851, %v5171, -inf
    %5251 = vmax.xlane.f32.xlu0 %v5250
    %v5252 = vpop.xlane.xlu0 %5251
    %v5253 = vsel %vm851, %v5247, -inf
    %5254 = vmax.xlane.f32.xlu0 %v5253
    %v5255 = vpop.xlane.xlu0 %5254
    %v5256 = vsub.f32 %v5171, %v5252
    %v5257 = vsub.f32 %v5247, %v5255
    %v5258 = vmul.f32 %v5256, 1.442695
    %v5259 = vpow.pop %v5258
    %v5260 = vmul.f32 %v5257, 1.442695
    %v5261 = vpow.pop %v5260
    %v5262 = vsel %vm851, %v5259, 0.0
    %5263 = vadd.xlane.f32.xlu0 %v5262
    %v5264 = vpop.xlane.xlu0 %5263
    %v5265 = vsel %vm851, %v5261, 0.0
    %5266 = vadd.xlane.f32.xlu0 %v5265
    %v5267 = vpop.xlane.xlu0 %5266
    %v5268 = vrcp.pop %v5264
    %v5269 = vmul.f32 %v5259, %v5268
    %v5270 = vrcp.pop %v5267
    %v5271 = vmul.f32 %v5261, %v5270
    %v5273 = vsel %vm851, %v5269, 0
    %5275 = vmatprep.subr.mxu0 0.0
    %5276 = vmatpush1.msra.mxu0 0.0
    %5277 = vmatprep.subr.mxu0 0.0
    %5278 = vmatpush1.msra.mxu0 0.0
    %5279 = vmatprep.subr.mxu0 0.0
    %5280 = vmatpush1.msra.mxu0 0.0
    %5281 = vmatprep.subr.mxu0 0.0
    %5282 = vmatpush1.msra.mxu0 0.0
    %5283 = vmatprep.subr.mxu0 0.0
    %5284 = vmatpush1.msra.mxu0 0.0
    %5285 = vmatprep.subr.mxu0 0.0
    %5286 = vmatpush1.msra.mxu0 0.0
    %5287 = vmatprep.subr.mxu0 0.0
    %5288 = vmatpush1.msra.mxu0 0.0
    %5289 = vmatprep.subr.mxu0 0.0
    %5290 = vmatpush1.msra.mxu0 0.0
    %5291 = vmatprep.subr.mxu0 0.0
    %5292 = vmatpush1.msra.mxu0 0.0
    %5293 = vmatprep.subr.mxu0 0.0
    %5294 = vmatpush1.msra.mxu0 0.0
    %5295 = vmatprep.subr.mxu0 0.0
    %5296 = vmatpush1.msra.mxu0 0.0
    %5297 = vmatprep.subr.mxu0 0.0
    %5298 = vmatpush1.msra.mxu0 0.0
    %5299 = vmatprep.subr.mxu0 0.0
    %5300 = vmatpush1.msra.mxu0 0.0
    %5301 = vmatprep.subr.mxu0 0.0
    %5302 = vmatpush1.msra.mxu0 0.0
    %5303 = vmatprep.subr.mxu0 0.0
    %5304 = vmatpush1.msra.mxu0 0.0
    %5305 = vmatprep.subr.mxu0 0.0
    %5306 = vmatpush1.msra.mxu0 %v5090
    %5307 = vmatprep.subr.mxu0 0.0
    %5308 = vmatpush2.msra.mxu0 0.0
    %5309 = vmatprep.subr.mxu0 0.0
    %5310 = vmatpush2.msra.mxu0 0.0
    %5311 = vmatprep.subr.mxu0 0.0
    %5312 = vmatpush2.msra.mxu0 0.0
    %5313 = vmatprep.subr.mxu0 0.0
    %5314 = vmatpush2.msra.mxu0 0.0
    %5315 = vmatprep.subr.mxu0 0.0
    %5316 = vmatpush2.msra.mxu0 0.0
    %5317 = vmatprep.subr.mxu0 0.0
    %5318 = vmatpush2.msra.mxu0 0.0
    %5319 = vmatprep.subr.mxu0 0.0
    %5320 = vmatpush2.msra.mxu0 0.0
    %5321 = vmatprep.subr.mxu0 0.0
    %5322 = vmatpush2.msra.mxu0 0.0
    %5323 = vmatprep.subr.mxu0 0.0
    %5324 = vmatpush2.msra.mxu0 0.0
    %5325 = vmatprep.subr.mxu0 0.0
    %5326 = vmatpush2.msra.mxu0 0.0
    %5327 = vmatprep.subr.mxu0 0.0
    %5328 = vmatpush2.msra.mxu0 0.0
    %5329 = vmatprep.subr.mxu0 0.0
    %5330 = vmatpush2.msra.mxu0 0.0
    %5331 = vmatprep.subr.mxu0 0.0
    %5332 = vmatpush2.msra.mxu0 0.0
    %5333 = vmatprep.subr.mxu0 0.0
    %5334 = vmatpush2.msra.mxu0 0.0
    %5335 = vmatprep.subr.mxu0 0.0
    %5336 = vmatpush2.msra.mxu0 0.0
    %5337 = vmatprep.subr.mxu0 0.0
    %5338 = vmatpush2.msra.mxu0 0.0
    %5339 = vmatprep.mubr.f32.mxu0 0.0
    %5340 = vmatmul.mubr.f32.gmra.mxu0 %v5273
    %v5341 = vpop.f32.mrf.mxu0
    %v5342 = vadd.f32 0.0, %v5341
    %v5343 = vpop.f32.mrf.mxu0
    %5344 = vdwg.mxu0
    %v5346 = vsel %vm851, %v5271, 0
    %5348 = vmatprep.subr.mxu0 0.0
    %5349 = vmatpush1.msra.mxu0 0.0
    %5350 = vmatprep.subr.mxu0 0.0
    %5351 = vmatpush1.msra.mxu0 0.0
    %5352 = vmatprep.subr.mxu0 0.0
    %5353 = vmatpush1.msra.mxu0 0.0
    %5354 = vmatprep.subr.mxu0 0.0
    %5355 = vmatpush1.msra.mxu0 0.0
    %5356 = vmatprep.subr.mxu0 0.0
    %5357 = vmatpush1.msra.mxu0 0.0
    %5358 = vmatprep.subr.mxu0 0.0
    %5359 = vmatpush1.msra.mxu0 0.0
    %5360 = vmatprep.subr.mxu0 0.0
    %5361 = vmatpush1.msra.mxu0 0.0
    %5362 = vmatprep.subr.mxu0 0.0
    %5363 = vmatpush1.msra.mxu0 0.0
    %5364 = vmatprep.subr.mxu0 0.0
    %5365 = vmatpush1.msra.mxu0 0.0
    %5366 = vmatprep.subr.mxu0 0.0
    %5367 = vmatpush1.msra.mxu0 0.0
    %5368 = vmatprep.subr.mxu0 0.0
    %5369 = vmatpush1.msra.mxu0 0.0
    %5370 = vmatprep.subr.mxu0 0.0
    %5371 = vmatpush1.msra.mxu0 0.0
    %5372 = vmatprep.subr.mxu0 0.0
    %5373 = vmatpush1.msra.mxu0 0.0
    %5374 = vmatprep.subr.mxu0 0.0
    %5375 = vmatpush1.msra.mxu0 0.0
    %5376 = vmatprep.subr.mxu0 0.0
    %5377 = vmatpush1.msra.mxu0 0.0
    %5378 = vmatprep.subr.mxu0 0.0
    %5379 = vmatpush1.msra.mxu0 %v5095
    %5380 = vmatprep.subr.mxu0 0.0
    %5381 = vmatpush2.msra.mxu0 0.0
    %5382 = vmatprep.subr.mxu0 0.0
    %5383 = vmatpush2.msra.mxu0 0.0
    %5384 = vmatprep.subr.mxu0 0.0
    %5385 = vmatpush2.msra.mxu0 0.0
    %5386 = vmatprep.subr.mxu0 0.0
    %5387 = vmatpush2.msra.mxu0 0.0
    %5388 = vmatprep.subr.mxu0 0.0
    %5389 = vmatpush2.msra.mxu0 0.0
    %5390 = vmatprep.subr.mxu0 0.0
    %5391 = vmatpush2.msra.mxu0 0.0
    %5392 = vmatprep.subr.mxu0 0.0
    %5393 = vmatpush2.msra.mxu0 0.0
    %5394 = vmatprep.subr.mxu0 0.0
    %5395 = vmatpush2.msra.mxu0 0.0
    %5396 = vmatprep.subr.mxu0 0.0
    %5397 = vmatpush2.msra.mxu0 0.0
    %5398 = vmatprep.subr.mxu0 0.0
    %5399 = vmatpush2.msra.mxu0 0.0
    %5400 = vmatprep.subr.mxu0 0.0
    %5401 = vmatpush2.msra.mxu0 0.0
    %5402 = vmatprep.subr.mxu0 0.0
    %5403 = vmatpush2.msra.mxu0 0.0
    %5404 = vmatprep.subr.mxu0 0.0
    %5405 = vmatpush2.msra.mxu0 0.0
    %5406 = vmatprep.subr.mxu0 0.0
    %5407 = vmatpush2.msra.mxu0 0.0
    %5408 = vmatprep.subr.mxu0 0.0
    %5409 = vmatpush2.msra.mxu0 0.0
    %5410 = vmatprep.subr.mxu0 0.0
    %5411 = vmatpush2.msra.mxu0 0.0
    %5412 = vmatprep.mubr.f32.mxu0 0.0
    %5413 = vmatmul.mubr.f32.gmra.mxu0 %v5346
    %v5414 = vpop.f32.mrf.mxu0
    %v5415 = vadd.f32 0.0, %v5414
    %v5416 = vpop.f32.mrf.mxu0
    %5417 = vdwg.mxu0
    %s5418 = scalar_lea.vmem %s14, 96
    %v5419 = vld [vmem:[%s5418] sm:$0xff]
    %v5420 = vld [vmem:[%s5418 + $0x8] sm:$0xff]
    %v5422 = vsel %vm698, %v5342, 0
    %v5425 = vsel %vm698, %v5415, 0
    %5427 = vmatprep.subr.mxu0 0.0
    %5428 = vmatpush1.msra.mxu0 0.0
    %5429 = vmatprep.subr.mxu0 0.0
    %5430 = vmatpush1.msra.mxu0 0.0
    %5431 = vmatprep.subr.mxu0 0.0
    %5432 = vmatpush1.msra.mxu0 0.0
    %5433 = vmatprep.subr.mxu0 0.0
    %5434 = vmatpush1.msra.mxu0 0.0
    %5435 = vmatprep.subr.mxu0 0.0
    %5436 = vmatpush1.msra.mxu0 0.0
    %5437 = vmatprep.subr.mxu0 0.0
    %5438 = vmatpush1.msra.mxu0 0.0
    %5439 = vmatprep.subr.mxu0 0.0
    %5440 = vmatpush1.msra.mxu0 0.0
    %5441 = vmatprep.subr.mxu0 0.0
    %5442 = vmatpush1.msra.mxu0 0.0
    %5443 = vmatprep.subr.mxu0 0.0
    %5444 = vmatpush1.msra.mxu0 0.0
    %5445 = vmatprep.subr.mxu0 0.0
    %5446 = vmatpush1.msra.mxu0 0.0
    %5447 = vmatprep.subr.mxu0 0.0
    %5448 = vmatpush1.msra.mxu0 0.0
    %5449 = vmatprep.subr.mxu0 0.0
    %5450 = vmatpush1.msra.mxu0 0.0
    %5451 = vmatprep.subr.mxu0 0.0
    %5452 = vmatpush1.msra.mxu0 0.0
    %5453 = vmatprep.subr.mxu0 0.0
    %5454 = vmatpush1.msra.mxu0 0.0
    %5455 = vmatprep.subr.mxu0 0.0
    %5456 = vmatpush1.msra.mxu0 %v5420
    %5457 = vmatprep.subr.mxu0 0.0
    %5458 = vmatpush1.msra.mxu0 %v5419
    %5459 = vmatprep.subr.mxu0 0.0
    %5460 = vmatpush2.msra.mxu0 0.0
    %5461 = vmatprep.subr.mxu0 0.0
    %5462 = vmatpush2.msra.mxu0 0.0
    %5463 = vmatprep.subr.mxu0 0.0
    %5464 = vmatpush2.msra.mxu0 0.0
    %5465 = vmatprep.subr.mxu0 0.0
    %5466 = vmatpush2.msra.mxu0 0.0
    %5467 = vmatprep.subr.mxu0 0.0
    %5468 = vmatpush2.msra.mxu0 0.0
    %5469 = vmatprep.subr.mxu0 0.0
    %5470 = vmatpush2.msra.mxu0 0.0
    %5471 = vmatprep.subr.mxu0 0.0
    %5472 = vmatpush2.msra.mxu0 0.0
    %5473 = vmatprep.subr.mxu0 0.0
    %5474 = vmatpush2.msra.mxu0 0.0
    %5475 = vmatprep.subr.mxu0 0.0
    %5476 = vmatpush2.msra.mxu0 0.0
    %5477 = vmatprep.subr.mxu0 0.0
    %5478 = vmatpush2.msra.mxu0 0.0
    %5479 = vmatprep.subr.mxu0 0.0
    %5480 = vmatpush2.msra.mxu0 0.0
    %5481 = vmatprep.subr.mxu0 0.0
    %5482 = vmatpush2.msra.mxu0 0.0
    %5483 = vmatprep.subr.mxu0 0.0
    %5484 = vmatpush2.msra.mxu0 0.0
    %5485 = vmatprep.subr.mxu0 0.0
    %5486 = vmatpush2.msra.mxu0 0.0
    %5487 = vmatprep.subr.mxu0 0.0
    %5488 = vmatpush2.msra.mxu0 0.0
    %5489 = vmatprep.subr.mxu0 0.0
    %5490 = vmatpush2.msra.mxu0 0.0
    %5491 = vmatprep.mubr.f32.mxu0 0.0
    %5492 = vmatmul.mubr.f32.gmra.mxu0 %v5422
    %v5493 = vpop.f32.mrf.mxu0
    %v5494 = vadd.f32 0.0, %v5493
    %v5495 = vpop.f32.mrf.mxu0
    %5496 = vmatprep.mubr.f32.mxu0 0.0
    %5497 = vmatmul.mubr.f32.gmra.mxu0 %v5425
    %v5498 = vpop.f32.mrf.mxu0
    %v5499 = vadd.f32 0.0, %v5498
    %v5500 = vpop.f32.mrf.mxu0
    %5501 = vdwg.mxu0
    %v5502 = vadd.f32 %v4820, %v5494
    %v5503 = vadd.f32 %v4821, %v5499
    %s5504 = scalar_lea.vmem %s8, 448
    %v5505 = vld [vmem:[%s5504] sm:$0xff]
    %v5506 = vld [vmem:[%s5504 + $0x8] sm:$0xff]
    %v5507 = vld [vmem:[%s5504 + $0x10] sm:$0xff]
    %v5508 = vld [vmem:[%s5504 + $0x18] sm:$0xff]
    %v5509 = vld [vmem:[%s5504 + $0x20] sm:$0xff]
    %v5510 = vld [vmem:[%s5504 + $0x28] sm:$0xff]
    %v5511 = vld [vmem:[%s5504 + $0x30] sm:$0xff]
    %v5512 = vld [vmem:[%s5504 + $0x38] sm:$0xff]
    %s5513 = scalar_lea.vmem %s9, 7
    %v5514 = vld [vmem:[%s5513] sm:$0x1]
    %v5516 = vlaneseq
    %v5517 = vshrl.u32 %v5516, 7
    %v5518 = vsub.s32 0, %v5517
    %v5519 = vrot.slane %v5514, %v5518
    %5521 = vmatprep.subr.mxu0 0.0
    %5522 = vmatpush1.msra.mxu0 0.0
    %5523 = vmatprep.subr.mxu0 0.0
    %5524 = vmatpush1.msra.mxu0 0.0
    %5525 = vmatprep.subr.mxu0 0.0
    %5526 = vmatpush1.msra.mxu0 0.0
    %5527 = vmatprep.subr.mxu0 0.0
    %5528 = vmatpush1.msra.mxu0 0.0
    %5529 = vmatprep.subr.mxu0 0.0
    %5530 = vmatpush1.msra.mxu0 0.0
    %5531 = vmatprep.subr.mxu0 0.0
    %5532 = vmatpush1.msra.mxu0 0.0
    %5533 = vmatprep.subr.mxu0 0.0
    %5534 = vmatpush1.msra.mxu0 0.0
    %5535 = vmatprep.subr.mxu0 0.0
    %5536 = vmatpush1.msra.mxu0 0.0
    %5537 = vmatprep.subr.mxu0 0.0
    %5538 = vmatpush1.msra.mxu0 %v5512
    %5539 = vmatprep.subr.mxu0 0.0
    %5540 = vmatpush1.msra.mxu0 %v5511
    %5541 = vmatprep.subr.mxu0 0.0
    %5542 = vmatpush1.msra.mxu0 %v5510
    %5543 = vmatprep.subr.mxu0 0.0
    %5544 = vmatpush1.msra.mxu0 %v5509
    %5545 = vmatprep.subr.mxu0 0.0
    %5546 = vmatpush1.msra.mxu0 %v5508
    %5547 = vmatprep.subr.mxu0 0.0
    %5548 = vmatpush1.msra.mxu0 %v5507
    %5549 = vmatprep.subr.mxu0 0.0
    %5550 = vmatpush1.msra.mxu0 %v5506
    %5551 = vmatprep.subr.mxu0 0.0
    %5552 = vmatpush1.msra.mxu0 %v5505
    %5553 = vmatprep.subr.mxu0 0.0
    %5554 = vmatpush2.msra.mxu0 0.0
    %5555 = vmatprep.subr.mxu0 0.0
    %5556 = vmatpush2.msra.mxu0 0.0
    %5557 = vmatprep.subr.mxu0 0.0
    %5558 = vmatpush2.msra.mxu0 0.0
    %5559 = vmatprep.subr.mxu0 0.0
    %5560 = vmatpush2.msra.mxu0 0.0
    %5561 = vmatprep.subr.mxu0 0.0
    %5562 = vmatpush2.msra.mxu0 0.0
    %5563 = vmatprep.subr.mxu0 0.0
    %5564 = vmatpush2.msra.mxu0 0.0
    %5565 = vmatprep.subr.mxu0 0.0
    %5566 = vmatpush2.msra.mxu0 0.0
    %5567 = vmatprep.subr.mxu0 0.0
    %5568 = vmatpush2.msra.mxu0 0.0
    %5569 = vmatprep.subr.mxu0 0.0
    %5570 = vmatpush2.msra.mxu0 0.0
    %5571 = vmatprep.subr.mxu0 0.0
    %5572 = vmatpush2.msra.mxu0 0.0
    %5573 = vmatprep.subr.mxu0 0.0
    %5574 = vmatpush2.msra.mxu0 0.0
    %5575 = vmatprep.subr.mxu0 0.0
    %5576 = vmatpush2.msra.mxu0 0.0
    %5577 = vmatprep.subr.mxu0 0.0
    %5578 = vmatpush2.msra.mxu0 0.0
    %5579 = vmatprep.subr.mxu0 0.0
    %5580 = vmatpush2.msra.mxu0 0.0
    %5581 = vmatprep.subr.mxu0 0.0
    %5582 = vmatpush2.msra.mxu0 0.0
    %5583 = vmatprep.subr.mxu0 0.0
    %5584 = vmatpush2.msra.mxu0 0.0
    %5585 = vmatprep.mubr.f32.mxu0 0.0
    %5586 = vmatmul.mubr.f32.gmra.mxu0 %v3464
    %v5587 = vpop.f32.mrf.mxu0
    %v5588 = vadd.f32 %v5519, %v5587
    %v5589 = vpop.f32.mrf.mxu0
    %5590 = vmatprep.mubr.f32.mxu0 0.0
    %5591 = vmatmul.mubr.f32.gmra.mxu0 %v3467
    %v5592 = vpop.f32.mrf.mxu0
    %v5593 = vadd.f32 %v5519, %v5592
    %v5594 = vpop.f32.mrf.mxu0
    %5595 = vdwg.mxu0
    %s5596 = scalar_lea.vmem %s10, 448
    %v5597 = vld [vmem:[%s5596] sm:$0xff]
    %v5598 = vld [vmem:[%s5596 + $0x8] sm:$0xff]
    %v5599 = vld [vmem:[%s5596 + $0x10] sm:$0xff]
    %v5600 = vld [vmem:[%s5596 + $0x18] sm:$0xff]
    %v5601 = vld [vmem:[%s5596 + $0x20] sm:$0xff]
    %v5602 = vld [vmem:[%s5596 + $0x28] sm:$0xff]
    %v5603 = vld [vmem:[%s5596 + $0x30] sm:$0xff]
    %v5604 = vld [vmem:[%s5596 + $0x38] sm:$0xff]
    %s5605 = scalar_lea.vmem %s11, 7
    %v5606 = vld [vmem:[%s5605] sm:$0x1]
    %v5608 = vlaneseq
    %v5609 = vshrl.u32 %v5608, 7
    %v5610 = vsub.s32 0, %v5609
    %v5611 = vrot.slane %v5606, %v5610
    %5613 = vmatprep.subr.mxu0 0.0
    %5614 = vmatpush1.msra.mxu0 0.0
    %5615 = vmatprep.subr.mxu0 0.0
    %5616 = vmatpush1.msra.mxu0 0.0
    %5617 = vmatprep.subr.mxu0 0.0
    %5618 = vmatpush1.msra.mxu0 0.0
    %5619 = vmatprep.subr.mxu0 0.0
    %5620 = vmatpush1.msra.mxu0 0.0
    %5621 = vmatprep.subr.mxu0 0.0
    %5622 = vmatpush1.msra.mxu0 0.0
    %5623 = vmatprep.subr.mxu0 0.0
    %5624 = vmatpush1.msra.mxu0 0.0
    %5625 = vmatprep.subr.mxu0 0.0
    %5626 = vmatpush1.msra.mxu0 0.0
    %5627 = vmatprep.subr.mxu0 0.0
    %5628 = vmatpush1.msra.mxu0 0.0
    %5629 = vmatprep.subr.mxu0 0.0
    %5630 = vmatpush1.msra.mxu0 %v5604
    %5631 = vmatprep.subr.mxu0 0.0
    %5632 = vmatpush1.msra.mxu0 %v5603
    %5633 = vmatprep.subr.mxu0 0.0
    %5634 = vmatpush1.msra.mxu0 %v5602
    %5635 = vmatprep.subr.mxu0 0.0
    %5636 = vmatpush1.msra.mxu0 %v5601
    %5637 = vmatprep.subr.mxu0 0.0
    %5638 = vmatpush1.msra.mxu0 %v5600
    %5639 = vmatprep.subr.mxu0 0.0
    %5640 = vmatpush1.msra.mxu0 %v5599
    %5641 = vmatprep.subr.mxu0 0.0
    %5642 = vmatpush1.msra.mxu0 %v5598
    %5643 = vmatprep.subr.mxu0 0.0
    %5644 = vmatpush1.msra.mxu0 %v5597
    %5645 = vmatprep.subr.mxu0 0.0
    %5646 = vmatpush2.msra.mxu0 0.0
    %5647 = vmatprep.subr.mxu0 0.0
    %5648 = vmatpush2.msra.mxu0 0.0
    %5649 = vmatprep.subr.mxu0 0.0
    %5650 = vmatpush2.msra.mxu0 0.0
    %5651 = vmatprep.subr.mxu0 0.0
    %5652 = vmatpush2.msra.mxu0 0.0
    %5653 = vmatprep.subr.mxu0 0.0
    %5654 = vmatpush2.msra.mxu0 0.0
    %5655 = vmatprep.subr.mxu0 0.0
    %5656 = vmatpush2.msra.mxu0 0.0
    %5657 = vmatprep.subr.mxu0 0.0
    %5658 = vmatpush2.msra.mxu0 0.0
    %5659 = vmatprep.subr.mxu0 0.0
    %5660 = vmatpush2.msra.mxu0 0.0
    %5661 = vmatprep.subr.mxu0 0.0
    %5662 = vmatpush2.msra.mxu0 0.0
    %5663 = vmatprep.subr.mxu0 0.0
    %5664 = vmatpush2.msra.mxu0 0.0
    %5665 = vmatprep.subr.mxu0 0.0
    %5666 = vmatpush2.msra.mxu0 0.0
    %5667 = vmatprep.subr.mxu0 0.0
    %5668 = vmatpush2.msra.mxu0 0.0
    %5669 = vmatprep.subr.mxu0 0.0
    %5670 = vmatpush2.msra.mxu0 0.0
    %5671 = vmatprep.subr.mxu0 0.0
    %5672 = vmatpush2.msra.mxu0 0.0
    %5673 = vmatprep.subr.mxu0 0.0
    %5674 = vmatpush2.msra.mxu0 0.0
    %5675 = vmatprep.subr.mxu0 0.0
    %5676 = vmatpush2.msra.mxu0 0.0
    %5677 = vmatprep.mubr.f32.mxu0 0.0
    %5678 = vmatmul.mubr.f32.gmra.mxu0 %v3464
    %v5679 = vpop.f32.mrf.mxu0
    %v5680 = vadd.f32 %v5611, %v5679
    %v5681 = vpop.f32.mrf.mxu0
    %5682 = vmatprep.mubr.f32.mxu0 0.0
    %5683 = vmatmul.mubr.f32.gmra.mxu0 %v3467
    %v5684 = vpop.f32.mrf.mxu0
    %v5685 = vadd.f32 %v5611, %v5684
    %v5686 = vpop.f32.mrf.mxu0
    %5687 = vdwg.mxu0
    %s5688 = scalar_lea.vmem %s12, 448
    %v5689 = vld [vmem:[%s5688] sm:$0xff]
    %v5690 = vld [vmem:[%s5688 + $0x8] sm:$0xff]
    %v5691 = vld [vmem:[%s5688 + $0x10] sm:$0xff]
    %v5692 = vld [vmem:[%s5688 + $0x18] sm:$0xff]
    %v5693 = vld [vmem:[%s5688 + $0x20] sm:$0xff]
    %v5694 = vld [vmem:[%s5688 + $0x28] sm:$0xff]
    %v5695 = vld [vmem:[%s5688 + $0x30] sm:$0xff]
    %v5696 = vld [vmem:[%s5688 + $0x38] sm:$0xff]
    %s5697 = scalar_lea.vmem %s13, 7
    %v5698 = vld [vmem:[%s5697] sm:$0x1]
    %v5700 = vlaneseq
    %v5701 = vshrl.u32 %v5700, 7
    %v5702 = vsub.s32 0, %v5701
    %v5703 = vrot.slane %v5698, %v5702
    %5705 = vmatprep.subr.mxu0 0.0
    %5706 = vmatpush1.msra.mxu0 0.0
    %5707 = vmatprep.subr.mxu0 0.0
    %5708 = vmatpush1.msra.mxu0 0.0
    %5709 = vmatprep.subr.mxu0 0.0
    %5710 = vmatpush1.msra.mxu0 0.0
    %5711 = vmatprep.subr.mxu0 0.0
    %5712 = vmatpush1.msra.mxu0 0.0
    %5713 = vmatprep.subr.mxu0 0.0
    %5714 = vmatpush1.msra.mxu0 0.0
    %5715 = vmatprep.subr.mxu0 0.0
    %5716 = vmatpush1.msra.mxu0 0.0
    %5717 = vmatprep.subr.mxu0 0.0
    %5718 = vmatpush1.msra.mxu0 0.0
    %5719 = vmatprep.subr.mxu0 0.0
    %5720 = vmatpush1.msra.mxu0 0.0
    %5721 = vmatprep.subr.mxu0 0.0
    %5722 = vmatpush1.msra.mxu0 %v5696
    %5723 = vmatprep.subr.mxu0 0.0
    %5724 = vmatpush1.msra.mxu0 %v5695
    %5725 = vmatprep.subr.mxu0 0.0
    %5726 = vmatpush1.msra.mxu0 %v5694
    %5727 = vmatprep.subr.mxu0 0.0
    %5728 = vmatpush1.msra.mxu0 %v5693
    %5729 = vmatprep.subr.mxu0 0.0
    %5730 = vmatpush1.msra.mxu0 %v5692
    %5731 = vmatprep.subr.mxu0 0.0
    %5732 = vmatpush1.msra.mxu0 %v5691
    %5733 = vmatprep.subr.mxu0 0.0
    %5734 = vmatpush1.msra.mxu0 %v5690
    %5735 = vmatprep.subr.mxu0 0.0
    %5736 = vmatpush1.msra.mxu0 %v5689
    %5737 = vmatprep.subr.mxu0 0.0
    %5738 = vmatpush2.msra.mxu0 0.0
    %5739 = vmatprep.subr.mxu0 0.0
    %5740 = vmatpush2.msra.mxu0 0.0
    %5741 = vmatprep.subr.mxu0 0.0
    %5742 = vmatpush2.msra.mxu0 0.0
    %5743 = vmatprep.subr.mxu0 0.0
    %5744 = vmatpush2.msra.mxu0 0.0
    %5745 = vmatprep.subr.mxu0 0.0
    %5746 = vmatpush2.msra.mxu0 0.0
    %5747 = vmatprep.subr.mxu0 0.0
    %5748 = vmatpush2.msra.mxu0 0.0
    %5749 = vmatprep.subr.mxu0 0.0
    %5750 = vmatpush2.msra.mxu0 0.0
    %5751 = vmatprep.subr.mxu0 0.0
    %5752 = vmatpush2.msra.mxu0 0.0
    %5753 = vmatprep.subr.mxu0 0.0
    %5754 = vmatpush2.msra.mxu0 0.0
    %5755 = vmatprep.subr.mxu0 0.0
    %5756 = vmatpush2.msra.mxu0 0.0
    %5757 = vmatprep.subr.mxu0 0.0
    %5758 = vmatpush2.msra.mxu0 0.0
    %5759 = vmatprep.subr.mxu0 0.0
    %5760 = vmatpush2.msra.mxu0 0.0
    %5761 = vmatprep.subr.mxu0 0.0
    %5762 = vmatpush2.msra.mxu0 0.0
    %5763 = vmatprep.subr.mxu0 0.0
    %5764 = vmatpush2.msra.mxu0 0.0
    %5765 = vmatprep.subr.mxu0 0.0
    %5766 = vmatpush2.msra.mxu0 0.0
    %5767 = vmatprep.subr.mxu0 0.0
    %5768 = vmatpush2.msra.mxu0 0.0
    %5769 = vmatprep.mubr.f32.mxu0 0.0
    %5770 = vmatmul.mubr.f32.gmra.mxu0 %v3464
    %v5771 = vpop.f32.mrf.mxu0
    %v5772 = vadd.f32 %v5703, %v5771
    %v5773 = vpop.f32.mrf.mxu0
    %5774 = vmatprep.mubr.f32.mxu0 0.0
    %5775 = vmatmul.mubr.f32.gmra.mxu0 %v3467
    %v5776 = vpop.f32.mrf.mxu0
    %v5777 = vadd.f32 %v5703, %v5776
    %v5778 = vpop.f32.mrf.mxu0
    %5779 = vdwg.mxu0
    %v5781 = vsel %vm698, %v5588, 0
    %v5784 = vsel %vm698, %v5680, 0
    %5786 = vmatprep.subr.mxu0 0.0
    %5787 = vmatpush1.xpose.msra.mxu0 0.0
    %5788 = vmatprep.subr.mxu0 0.0
    %5789 = vmatpush1.xpose.msra.mxu0 0.0
    %5790 = vmatprep.subr.mxu0 0.0
    %5791 = vmatpush1.xpose.msra.mxu0 0.0
    %5792 = vmatprep.subr.mxu0 0.0
    %5793 = vmatpush1.xpose.msra.mxu0 0.0
    %5794 = vmatprep.subr.mxu0 0.0
    %5795 = vmatpush1.xpose.msra.mxu0 0.0
    %5796 = vmatprep.subr.mxu0 0.0
    %5797 = vmatpush1.xpose.msra.mxu0 0.0
    %5798 = vmatprep.subr.mxu0 0.0
    %5799 = vmatpush1.xpose.msra.mxu0 0.0
    %5800 = vmatprep.subr.mxu0 0.0
    %5801 = vmatpush1.xpose.msra.mxu0 0.0
    %5802 = vmatprep.subr.mxu0 0.0
    %5803 = vmatpush1.xpose.msra.mxu0 0.0
    %5804 = vmatprep.subr.mxu0 0.0
    %5805 = vmatpush1.xpose.msra.mxu0 0.0
    %5806 = vmatprep.subr.mxu0 0.0
    %5807 = vmatpush1.xpose.msra.mxu0 0.0
    %5808 = vmatprep.subr.mxu0 0.0
    %5809 = vmatpush1.xpose.msra.mxu0 0.0
    %5810 = vmatprep.subr.mxu0 0.0
    %5811 = vmatpush1.xpose.msra.mxu0 0.0
    %5812 = vmatprep.subr.mxu0 0.0
    %5813 = vmatpush1.xpose.msra.mxu0 0.0
    %5814 = vmatprep.subr.mxu0 0.0
    %5815 = vmatpush1.xpose.msra.mxu0 0.0
    %5816 = vmatprep.subr.mxu0 0.0
    %5817 = vmatpush1.xpose.msra.mxu0 %v5784
    %5818 = vmatprep.subr.mxu0 0.0
    %5819 = vmatpush2.xpose.msra.mxu0 0.0
    %5820 = vmatprep.subr.mxu0 0.0
    %5821 = vmatpush2.xpose.msra.mxu0 0.0
    %5822 = vmatprep.subr.mxu0 0.0
    %5823 = vmatpush2.xpose.msra.mxu0 0.0
    %5824 = vmatprep.subr.mxu0 0.0
    %5825 = vmatpush2.xpose.msra.mxu0 0.0
    %5826 = vmatprep.subr.mxu0 0.0
    %5827 = vmatpush2.xpose.msra.mxu0 0.0
    %5828 = vmatprep.subr.mxu0 0.0
    %5829 = vmatpush2.xpose.msra.mxu0 0.0
    %5830 = vmatprep.subr.mxu0 0.0
    %5831 = vmatpush2.xpose.msra.mxu0 0.0
    %5832 = vmatprep.subr.mxu0 0.0
    %5833 = vmatpush2.xpose.msra.mxu0 0.0
    %5834 = vmatprep.subr.mxu0 0.0
    %5835 = vmatpush2.xpose.msra.mxu0 0.0
    %5836 = vmatprep.subr.mxu0 0.0
    %5837 = vmatpush2.xpose.msra.mxu0 0.0
    %5838 = vmatprep.subr.mxu0 0.0
    %5839 = vmatpush2.xpose.msra.mxu0 0.0
    %5840 = vmatprep.subr.mxu0 0.0
    %5841 = vmatpush2.xpose.msra.mxu0 0.0
    %5842 = vmatprep.subr.mxu0 0.0
    %5843 = vmatpush2.xpose.msra.mxu0 0.0
    %5844 = vmatprep.subr.mxu0 0.0
    %5845 = vmatpush2.xpose.msra.mxu0 0.0
    %5846 = vmatprep.subr.mxu0 0.0
    %5847 = vmatpush2.xpose.msra.mxu0 0.0
    %5848 = vmatprep.subr.mxu0 0.0
    %5849 = vmatpush2.xpose.msra.mxu0 0.0
    %5850 = vmatprep.mubr.f32.mxu0 0.0
    %5851 = vmatmul.mubr.f32.gmra.mxu0 %v5781
    %v5852 = vpop.f32.mrf.mxu0
    %v5853 = vadd.f32 0.0, %v5852
    %v5854 = vpop.f32.mrf.mxu0
    %5855 = vdwg.mxu0
    %v5857 = vsel %vm698, %v5593, 0
    %v5860 = vsel %vm698, %v5685, 0
    %5862 = vmatprep.subr.mxu0 0.0
    %5863 = vmatpush1.xpose.msra.mxu0 0.0
    %5864 = vmatprep.subr.mxu0 0.0
    %5865 = vmatpush1.xpose.msra.mxu0 0.0
    %5866 = vmatprep.subr.mxu0 0.0
    %5867 = vmatpush1.xpose.msra.mxu0 0.0
    %5868 = vmatprep.subr.mxu0 0.0
    %5869 = vmatpush1.xpose.msra.mxu0 0.0
    %5870 = vmatprep.subr.mxu0 0.0
    %5871 = vmatpush1.xpose.msra.mxu0 0.0
    %5872 = vmatprep.subr.mxu0 0.0
    %5873 = vmatpush1.xpose.msra.mxu0 0.0
    %5874 = vmatprep.subr.mxu0 0.0
    %5875 = vmatpush1.xpose.msra.mxu0 0.0
    %5876 = vmatprep.subr.mxu0 0.0
    %5877 = vmatpush1.xpose.msra.mxu0 0.0
    %5878 = vmatprep.subr.mxu0 0.0
    %5879 = vmatpush1.xpose.msra.mxu0 0.0
    %5880 = vmatprep.subr.mxu0 0.0
    %5881 = vmatpush1.xpose.msra.mxu0 0.0
    %5882 = vmatprep.subr.mxu0 0.0
    %5883 = vmatpush1.xpose.msra.mxu0 0.0
    %5884 = vmatprep.subr.mxu0 0.0
    %5885 = vmatpush1.xpose.msra.mxu0 0.0
    %5886 = vmatprep.subr.mxu0 0.0
    %5887 = vmatpush1.xpose.msra.mxu0 0.0
    %5888 = vmatprep.subr.mxu0 0.0
    %5889 = vmatpush1.xpose.msra.mxu0 0.0
    %5890 = vmatprep.subr.mxu0 0.0
    %5891 = vmatpush1.xpose.msra.mxu0 0.0
    %5892 = vmatprep.subr.mxu0 0.0
    %5893 = vmatpush1.xpose.msra.mxu0 %v5860
    %5894 = vmatprep.subr.mxu0 0.0
    %5895 = vmatpush2.xpose.msra.mxu0 0.0
    %5896 = vmatprep.subr.mxu0 0.0
    %5897 = vmatpush2.xpose.msra.mxu0 0.0
    %5898 = vmatprep.subr.mxu0 0.0
    %5899 = vmatpush2.xpose.msra.mxu0 0.0
    %5900 = vmatprep.subr.mxu0 0.0
    %5901 = vmatpush2.xpose.msra.mxu0 0.0
    %5902 = vmatprep.subr.mxu0 0.0
    %5903 = vmatpush2.xpose.msra.mxu0 0.0
    %5904 = vmatprep.subr.mxu0 0.0
    %5905 = vmatpush2.xpose.msra.mxu0 0.0
    %5906 = vmatprep.subr.mxu0 0.0
    %5907 = vmatpush2.xpose.msra.mxu0 0.0
    %5908 = vmatprep.subr.mxu0 0.0
    %5909 = vmatpush2.xpose.msra.mxu0 0.0
    %5910 = vmatprep.subr.mxu0 0.0
    %5911 = vmatpush2.xpose.msra.mxu0 0.0
    %5912 = vmatprep.subr.mxu0 0.0
    %5913 = vmatpush2.xpose.msra.mxu0 0.0
    %5914 = vmatprep.subr.mxu0 0.0
    %5915 = vmatpush2.xpose.msra.mxu0 0.0
    %5916 = vmatprep.subr.mxu0 0.0
    %5917 = vmatpush2.xpose.msra.mxu0 0.0
    %5918 = vmatprep.subr.mxu0 0.0
    %5919 = vmatpush2.xpose.msra.mxu0 0.0
    %5920 = vmatprep.subr.mxu0 0.0
    %5921 = vmatpush2.xpose.msra.mxu0 0.0
    %5922 = vmatprep.subr.mxu0 0.0
    %5923 = vmatpush2.xpose.msra.mxu0 0.0
    %5924 = vmatprep.subr.mxu0 0.0
    %5925 = vmatpush2.xpose.msra.mxu0 0.0
    %5926 = vmatprep.mubr.f32.mxu0 0.0
    %5927 = vmatmul.mubr.f32.gmra.mxu0 %v5857
    %v5928 = vpop.f32.mrf.mxu0
    %v5929 = vadd.f32 0.0, %v5928
    %v5930 = vpop.f32.mrf.mxu0
    %5931 = vdwg.mxu0
    %v5932 = vsel %vm851, %v5853, -inf
    %5933 = vmax.xlane.f32.xlu0 %v5932
    %v5934 = vpop.xlane.xlu0 %5933
    %v5935 = vsel %vm851, %v5929, -inf
    %5936 = vmax.xlane.f32.xlu0 %v5935
    %v5937 = vpop.xlane.xlu0 %5936
    %v5938 = vsub.f32 %v5853, %v5934
    %v5939 = vsub.f32 %v5929, %v5937
    %v5940 = vmul.f32 %v5938, 1.442695
    %v5941 = vpow.pop %v5940
    %v5942 = vmul.f32 %v5939, 1.442695
    %v5943 = vpow.pop %v5942
    %v5944 = vsel %vm851, %v5941, 0.0
    %5945 = vadd.xlane.f32.xlu0 %v5944
    %v5946 = vpop.xlane.xlu0 %5945
    %v5947 = vsel %vm851, %v5943, 0.0
    %5948 = vadd.xlane.f32.xlu0 %v5947
    %v5949 = vpop.xlane.xlu0 %5948
    %v5950 = vrcp.pop %v5946
    %v5951 = vmul.f32 %v5941, %v5950
    %v5952 = vrcp.pop %v5949
    %v5953 = vmul.f32 %v5943, %v5952
    %v5955 = vsel %vm851, %v5951, 0
    %5957 = vmatprep.subr.mxu0 0.0
    %5958 = vmatpush1.msra.mxu0 0.0
    %5959 = vmatprep.subr.mxu0 0.0
    %5960 = vmatpush1.msra.mxu0 0.0
    %5961 = vmatprep.subr.mxu0 0.0
    %5962 = vmatpush1.msra.mxu0 0.0
    %5963 = vmatprep.subr.mxu0 0.0
    %5964 = vmatpush1.msra.mxu0 0.0
    %5965 = vmatprep.subr.mxu0 0.0
    %5966 = vmatpush1.msra.mxu0 0.0
    %5967 = vmatprep.subr.mxu0 0.0
    %5968 = vmatpush1.msra.mxu0 0.0
    %5969 = vmatprep.subr.mxu0 0.0
    %5970 = vmatpush1.msra.mxu0 0.0
    %5971 = vmatprep.subr.mxu0 0.0
    %5972 = vmatpush1.msra.mxu0 0.0
    %5973 = vmatprep.subr.mxu0 0.0
    %5974 = vmatpush1.msra.mxu0 0.0
    %5975 = vmatprep.subr.mxu0 0.0
    %5976 = vmatpush1.msra.mxu0 0.0
    %5977 = vmatprep.subr.mxu0 0.0
    %5978 = vmatpush1.msra.mxu0 0.0
    %5979 = vmatprep.subr.mxu0 0.0
    %5980 = vmatpush1.msra.mxu0 0.0
    %5981 = vmatprep.subr.mxu0 0.0
    %5982 = vmatpush1.msra.mxu0 0.0
    %5983 = vmatprep.subr.mxu0 0.0
    %5984 = vmatpush1.msra.mxu0 0.0
    %5985 = vmatprep.subr.mxu0 0.0
    %5986 = vmatpush1.msra.mxu0 0.0
    %5987 = vmatprep.subr.mxu0 0.0
    %5988 = vmatpush1.msra.mxu0 %v5772
    %5989 = vmatprep.subr.mxu0 0.0
    %5990 = vmatpush2.msra.mxu0 0.0
    %5991 = vmatprep.subr.mxu0 0.0
    %5992 = vmatpush2.msra.mxu0 0.0
    %5993 = vmatprep.subr.mxu0 0.0
    %5994 = vmatpush2.msra.mxu0 0.0
    %5995 = vmatprep.subr.mxu0 0.0
    %5996 = vmatpush2.msra.mxu0 0.0
    %5997 = vmatprep.subr.mxu0 0.0
    %5998 = vmatpush2.msra.mxu0 0.0
    %5999 = vmatprep.subr.mxu0 0.0
    %6000 = vmatpush2.msra.mxu0 0.0
    %6001 = vmatprep.subr.mxu0 0.0
    %6002 = vmatpush2.msra.mxu0 0.0
    %6003 = vmatprep.subr.mxu0 0.0
    %6004 = vmatpush2.msra.mxu0 0.0
    %6005 = vmatprep.subr.mxu0 0.0
    %6006 = vmatpush2.msra.mxu0 0.0
    %6007 = vmatprep.subr.mxu0 0.0
    %6008 = vmatpush2.msra.mxu0 0.0
    %6009 = vmatprep.subr.mxu0 0.0
    %6010 = vmatpush2.msra.mxu0 0.0
    %6011 = vmatprep.subr.mxu0 0.0
    %6012 = vmatpush2.msra.mxu0 0.0
    %6013 = vmatprep.subr.mxu0 0.0
    %6014 = vmatpush2.msra.mxu0 0.0
    %6015 = vmatprep.subr.mxu0 0.0
    %6016 = vmatpush2.msra.mxu0 0.0
    %6017 = vmatprep.subr.mxu0 0.0
    %6018 = vmatpush2.msra.mxu0 0.0
    %6019 = vmatprep.subr.mxu0 0.0
    %6020 = vmatpush2.msra.mxu0 0.0
    %6021 = vmatprep.mubr.f32.mxu0 0.0
    %6022 = vmatmul.mubr.f32.gmra.mxu0 %v5955
    %v6023 = vpop.f32.mrf.mxu0
    %v6024 = vadd.f32 0.0, %v6023
    %v6025 = vpop.f32.mrf.mxu0
    %6026 = vdwg.mxu0
    %v6028 = vsel %vm851, %v5953, 0
    %6030 = vmatprep.subr.mxu0 0.0
    %6031 = vmatpush1.msra.mxu0 0.0
    %6032 = vmatprep.subr.mxu0 0.0
    %6033 = vmatpush1.msra.mxu0 0.0
    %6034 = vmatprep.subr.mxu0 0.0
    %6035 = vmatpush1.msra.mxu0 0.0
    %6036 = vmatprep.subr.mxu0 0.0
    %6037 = vmatpush1.msra.mxu0 0.0
    %6038 = vmatprep.subr.mxu0 0.0
    %6039 = vmatpush1.msra.mxu0 0.0
    %6040 = vmatprep.subr.mxu0 0.0
    %6041 = vmatpush1.msra.mxu0 0.0
    %6042 = vmatprep.subr.mxu0 0.0
    %6043 = vmatpush1.msra.mxu0 0.0
    %6044 = vmatprep.subr.mxu0 0.0
    %6045 = vmatpush1.msra.mxu0 0.0
    %6046 = vmatprep.subr.mxu0 0.0
    %6047 = vmatpush1.msra.mxu0 0.0
    %6048 = vmatprep.subr.mxu0 0.0
    %6049 = vmatpush1.msra.mxu0 0.0
    %6050 = vmatprep.subr.mxu0 0.0
    %6051 = vmatpush1.msra.mxu0 0.0
    %6052 = vmatprep.subr.mxu0 0.0
    %6053 = vmatpush1.msra.mxu0 0.0
    %6054 = vmatprep.subr.mxu0 0.0
    %6055 = vmatpush1.msra.mxu0 0.0
    %6056 = vmatprep.subr.mxu0 0.0
    %6057 = vmatpush1.msra.mxu0 0.0
    %6058 = vmatprep.subr.mxu0 0.0
    %6059 = vmatpush1.msra.mxu0 0.0
    %6060 = vmatprep.subr.mxu0 0.0
    %6061 = vmatpush1.msra.mxu0 %v5777
    %6062 = vmatprep.subr.mxu0 0.0
    %6063 = vmatpush2.msra.mxu0 0.0
    %6064 = vmatprep.subr.mxu0 0.0
    %6065 = vmatpush2.msra.mxu0 0.0
    %6066 = vmatprep.subr.mxu0 0.0
    %6067 = vmatpush2.msra.mxu0 0.0
    %6068 = vmatprep.subr.mxu0 0.0
    %6069 = vmatpush2.msra.mxu0 0.0
    %6070 = vmatprep.subr.mxu0 0.0
    %6071 = vmatpush2.msra.mxu0 0.0
    %6072 = vmatprep.subr.mxu0 0.0
    %6073 = vmatpush2.msra.mxu0 0.0
    %6074 = vmatprep.subr.mxu0 0.0
    %6075 = vmatpush2.msra.mxu0 0.0
    %6076 = vmatprep.subr.mxu0 0.0
    %6077 = vmatpush2.msra.mxu0 0.0
    %6078 = vmatprep.subr.mxu0 0.0
    %6079 = vmatpush2.msra.mxu0 0.0
    %6080 = vmatprep.subr.mxu0 0.0
    %6081 = vmatpush2.msra.mxu0 0.0
    %6082 = vmatprep.subr.mxu0 0.0
    %6083 = vmatpush2.msra.mxu0 0.0
    %6084 = vmatprep.subr.mxu0 0.0
    %6085 = vmatpush2.msra.mxu0 0.0
    %6086 = vmatprep.subr.mxu0 0.0
    %6087 = vmatpush2.msra.mxu0 0.0
    %6088 = vmatprep.subr.mxu0 0.0
    %6089 = vmatpush2.msra.mxu0 0.0
    %6090 = vmatprep.subr.mxu0 0.0
    %6091 = vmatpush2.msra.mxu0 0.0
    %6092 = vmatprep.subr.mxu0 0.0
    %6093 = vmatpush2.msra.mxu0 0.0
    %6094 = vmatprep.mubr.f32.mxu0 0.0
    %6095 = vmatmul.mubr.f32.gmra.mxu0 %v6028
    %v6096 = vpop.f32.mrf.mxu0
    %v6097 = vadd.f32 0.0, %v6096
    %v6098 = vpop.f32.mrf.mxu0
    %6099 = vdwg.mxu0
    %s6100 = scalar_lea.vmem %s14, 112
    %v6101 = vld [vmem:[%s6100] sm:$0xff]
    %v6102 = vld [vmem:[%s6100 + $0x8] sm:$0xff]
    %v6104 = vsel %vm698, %v6024, 0
    %v6107 = vsel %vm698, %v6097, 0
    %6109 = vmatprep.subr.mxu0 0.0
    %6110 = vmatpush1.msra.mxu0 0.0
    %6111 = vmatprep.subr.mxu0 0.0
    %6112 = vmatpush1.msra.mxu0 0.0
    %6113 = vmatprep.subr.mxu0 0.0
    %6114 = vmatpush1.msra.mxu0 0.0
    %6115 = vmatprep.subr.mxu0 0.0
    %6116 = vmatpush1.msra.mxu0 0.0
    %6117 = vmatprep.subr.mxu0 0.0
    %6118 = vmatpush1.msra.mxu0 0.0
    %6119 = vmatprep.subr.mxu0 0.0
    %6120 = vmatpush1.msra.mxu0 0.0
    %6121 = vmatprep.subr.mxu0 0.0
    %6122 = vmatpush1.msra.mxu0 0.0
    %6123 = vmatprep.subr.mxu0 0.0
    %6124 = vmatpush1.msra.mxu0 0.0
    %6125 = vmatprep.subr.mxu0 0.0
    %6126 = vmatpush1.msra.mxu0 0.0
    %6127 = vmatprep.subr.mxu0 0.0
    %6128 = vmatpush1.msra.mxu0 0.0
    %6129 = vmatprep.subr.mxu0 0.0
    %6130 = vmatpush1.msra.mxu0 0.0
    %6131 = vmatprep.subr.mxu0 0.0
    %6132 = vmatpush1.msra.mxu0 0.0
    %6133 = vmatprep.subr.mxu0 0.0
    %6134 = vmatpush1.msra.mxu0 0.0
    %6135 = vmatprep.subr.mxu0 0.0
    %6136 = vmatpush1.msra.mxu0 0.0
    %6137 = vmatprep.subr.mxu0 0.0
    %6138 = vmatpush1.msra.mxu0 %v6102
    %6139 = vmatprep.subr.mxu0 0.0
    %6140 = vmatpush1.msra.mxu0 %v6101
    %6141 = vmatprep.subr.mxu0 0.0
    %6142 = vmatpush2.msra.mxu0 0.0
    %6143 = vmatprep.subr.mxu0 0.0
    %6144 = vmatpush2.msra.mxu0 0.0
    %6145 = vmatprep.subr.mxu0 0.0
    %6146 = vmatpush2.msra.mxu0 0.0
    %6147 = vmatprep.subr.mxu0 0.0
    %6148 = vmatpush2.msra.mxu0 0.0
    %6149 = vmatprep.subr.mxu0 0.0
    %6150 = vmatpush2.msra.mxu0 0.0
    %6151 = vmatprep.subr.mxu0 0.0
    %6152 = vmatpush2.msra.mxu0 0.0
    %6153 = vmatprep.subr.mxu0 0.0
    %6154 = vmatpush2.msra.mxu0 0.0
    %6155 = vmatprep.subr.mxu0 0.0
    %6156 = vmatpush2.msra.mxu0 0.0
    %6157 = vmatprep.subr.mxu0 0.0
    %6158 = vmatpush2.msra.mxu0 0.0
    %6159 = vmatprep.subr.mxu0 0.0
    %6160 = vmatpush2.msra.mxu0 0.0
    %6161 = vmatprep.subr.mxu0 0.0
    %6162 = vmatpush2.msra.mxu0 0.0
    %6163 = vmatprep.subr.mxu0 0.0
    %6164 = vmatpush2.msra.mxu0 0.0
    %6165 = vmatprep.subr.mxu0 0.0
    %6166 = vmatpush2.msra.mxu0 0.0
    %6167 = vmatprep.subr.mxu0 0.0
    %6168 = vmatpush2.msra.mxu0 0.0
    %6169 = vmatprep.subr.mxu0 0.0
    %6170 = vmatpush2.msra.mxu0 0.0
    %6171 = vmatprep.subr.mxu0 0.0
    %6172 = vmatpush2.msra.mxu0 0.0
    %6173 = vmatprep.mubr.f32.mxu0 0.0
    %6174 = vmatmul.mubr.f32.gmra.mxu0 %v6104
    %v6175 = vpop.f32.mrf.mxu0
    %v6176 = vadd.f32 0.0, %v6175
    %v6177 = vpop.f32.mrf.mxu0
    %6178 = vmatprep.mubr.f32.mxu0 0.0
    %6179 = vmatmul.mubr.f32.gmra.mxu0 %v6107
    %v6180 = vpop.f32.mrf.mxu0
    %v6181 = vadd.f32 0.0, %v6180
    %v6182 = vpop.f32.mrf.mxu0
    %6183 = vdwg.mxu0
    %v6184 = vadd.f32 %v5502, %v6176
    %v6185 = vadd.f32 %v5503, %v6181
    %v6186 = vadd.f32 %v3442, %v6184
    %v6187 = vadd.f32 %v3443, %v6185
    %v6188 = vsel %vm223, %v6186, 0.0
    %6189 = vadd.xlane.f32.xlu0 %v6188
    %v6190 = vpop.xlane.xlu0 %6189
    %v6191 = vsel %vm223, %v6187, 0.0
    %6192 = vadd.xlane.f32.xlu0 %v6191
    %v6193 = vpop.xlane.xlu0 %6192
    %v6194 = vmul.f32 %v6190, %v3165
    %v6195 = vmul.f32 %v6193, %v3165
    %v6196 = vsub.f32 %v6186, %v6194
    %v6197 = vsub.f32 %v6187, %v6195
    %v6198 = vmul.f32 %v6196, %v6196
    %v6199 = vmul.f32 %v6197, %v6197
    %v6200 = vsel %vm223, %v6198, 0.0
    %6201 = vadd.xlane.f32.xlu0 %v6200
    %v6202 = vpop.xlane.xlu0 %6201
    %v6203 = vsel %vm223, %v6199, 0.0
    %6204 = vadd.xlane.f32.xlu0 %v6203
    %v6205 = vpop.xlane.xlu0 %6204
    %v6206 = vmul.f32 %v6202, %v3165
    %v6207 = vmul.f32 %v6205, %v3165
    %v6208 = vadd.f32 %v6206, 1e-05
    %v6209 = vadd.f32 %v6207, 1e-05
    %v6210 = vrsqrt.pop %v6208
    %v6211 = vrsqrt.pop %v6209
    %v6212 = vmul.f32 %v6196, %v6210
    %v6213 = vmul.f32 %v6197, %v6211
    %s6214 = scalar_lea.vmem %s20, 1
    %v6215 = vld [vmem:[%s6214] sm:$0x1]
    %v6217 = vlaneseq
    %v6218 = vshrl.u32 %v6217, 7
    %v6219 = vsub.s32 0, %v6218
    %v6220 = vrot.slane %v6215, %v6219
    %v6222 = vmul.f32 %v6212, %v6220
    %v6223 = vmul.f32 %v6213, %v6220
    %s6224 = scalar_lea.vmem %s21, 1
    %v6225 = vld [vmem:[%s6224] sm:$0x1]
    %v6227 = vlaneseq
    %v6228 = vshrl.u32 %v6227, 7
    %v6229 = vsub.s32 0, %v6228
    %v6230 = vrot.slane %v6225, %v6229
    %v6232 = vadd.f32 %v6222, %v6230
    %v6233 = vadd.f32 %v6223, %v6230
    %s6234 = scalar_lea.vmem %s16, 64
    %v6235 = vld [vmem:[%s6234] sm:$0xff]
    %v6236 = vld [vmem:[%s6234 + $0x8] sm:$0xff]
    %v6237 = vld [vmem:[%s6234 + $0x10] sm:$0xff]
    %v6238 = vld [vmem:[%s6234 + $0x18] sm:$0xff]
    %v6239 = vld [vmem:[%s6234 + $0x20] sm:$0xff]
    %v6240 = vld [vmem:[%s6234 + $0x28] sm:$0xff]
    %v6241 = vld [vmem:[%s6234 + $0x30] sm:$0xff]
    %v6242 = vld [vmem:[%s6234 + $0x38] sm:$0xff]
    %s6243 = scalar_lea.vmem %s17, 1
    %v6244 = vld [vmem:[%s6243] sm:$0x1]
    %v6246 = vlaneseq
    %v6247 = vshrl.u32 %v6246, 7
    %v6248 = vsub.s32 0, %v6247
    %v6249 = vrot.slane %v6244, %v6248
    %v6252 = vsel %vm223, %v6232, 0
    %v6255 = vsel %vm223, %v6233, 0
    %6257 = vmatprep.subr.mxu0 0.0
    %6258 = vmatpush1.msra.mxu0 0.0
    %6259 = vmatprep.subr.mxu0 0.0
    %6260 = vmatpush1.msra.mxu0 0.0
    %6261 = vmatprep.subr.mxu0 0.0
    %6262 = vmatpush1.msra.mxu0 0.0
    %6263 = vmatprep.subr.mxu0 0.0
    %6264 = vmatpush1.msra.mxu0 0.0
    %6265 = vmatprep.subr.mxu0 0.0
    %6266 = vmatpush1.msra.mxu0 0.0
    %6267 = vmatprep.subr.mxu0 0.0
    %6268 = vmatpush1.msra.mxu0 0.0
    %6269 = vmatprep.subr.mxu0 0.0
    %6270 = vmatpush1.msra.mxu0 0.0
    %6271 = vmatprep.subr.mxu0 0.0
    %6272 = vmatpush1.msra.mxu0 0.0
    %6273 = vmatprep.subr.mxu0 0.0
    %6274 = vmatpush1.msra.mxu0 %v6242
    %6275 = vmatprep.subr.mxu0 0.0
    %6276 = vmatpush1.msra.mxu0 %v6241
    %6277 = vmatprep.subr.mxu0 0.0
    %6278 = vmatpush1.msra.mxu0 %v6240
    %6279 = vmatprep.subr.mxu0 0.0
    %6280 = vmatpush1.msra.mxu0 %v6239
    %6281 = vmatprep.subr.mxu0 0.0
    %6282 = vmatpush1.msra.mxu0 %v6238
    %6283 = vmatprep.subr.mxu0 0.0
    %6284 = vmatpush1.msra.mxu0 %v6237
    %6285 = vmatprep.subr.mxu0 0.0
    %6286 = vmatpush1.msra.mxu0 %v6236
    %6287 = vmatprep.subr.mxu0 0.0
    %6288 = vmatpush1.msra.mxu0 %v6235
    %6289 = vmatprep.subr.mxu0 0.0
    %6290 = vmatpush2.msra.mxu0 0.0
    %6291 = vmatprep.subr.mxu0 0.0
    %6292 = vmatpush2.msra.mxu0 0.0
    %6293 = vmatprep.subr.mxu0 0.0
    %6294 = vmatpush2.msra.mxu0 0.0
    %6295 = vmatprep.subr.mxu0 0.0
    %6296 = vmatpush2.msra.mxu0 0.0
    %6297 = vmatprep.subr.mxu0 0.0
    %6298 = vmatpush2.msra.mxu0 0.0
    %6299 = vmatprep.subr.mxu0 0.0
    %6300 = vmatpush2.msra.mxu0 0.0
    %6301 = vmatprep.subr.mxu0 0.0
    %6302 = vmatpush2.msra.mxu0 0.0
    %6303 = vmatprep.subr.mxu0 0.0
    %6304 = vmatpush2.msra.mxu0 0.0
    %6305 = vmatprep.subr.mxu0 0.0
    %6306 = vmatpush2.msra.mxu0 0.0
    %6307 = vmatprep.subr.mxu0 0.0
    %6308 = vmatpush2.msra.mxu0 0.0
    %6309 = vmatprep.subr.mxu0 0.0
    %6310 = vmatpush2.msra.mxu0 0.0
    %6311 = vmatprep.subr.mxu0 0.0
    %6312 = vmatpush2.msra.mxu0 0.0
    %6313 = vmatprep.subr.mxu0 0.0
    %6314 = vmatpush2.msra.mxu0 0.0
    %6315 = vmatprep.subr.mxu0 0.0
    %6316 = vmatpush2.msra.mxu0 0.0
    %6317 = vmatprep.subr.mxu0 0.0
    %6318 = vmatpush2.msra.mxu0 0.0
    %6319 = vmatprep.subr.mxu0 0.0
    %6320 = vmatpush2.msra.mxu0 0.0
    %6321 = vmatprep.mubr.f32.mxu0 0.0
    %6322 = vmatmul.mubr.f32.gmra.mxu0 %v6252
    %v6323 = vpop.f32.mrf.mxu0
    %v6324 = vadd.f32 %v6249, %v6323
    %v6325 = vpop.f32.mrf.mxu0
    %6326 = vmatprep.mubr.f32.mxu0 0.0
    %6327 = vmatmul.mubr.f32.gmra.mxu0 %v6255
    %v6328 = vpop.f32.mrf.mxu0
    %v6329 = vadd.f32 %v6249, %v6328
    %v6330 = vpop.f32.mrf.mxu0
    %6331 = vdwg.mxu0
    %v6332 = vmax.f32 %v6324, 0.0
    %v6333 = vmax.f32 %v6329, 0.0
    %s6334 = scalar_lea.vmem %s18, 64
    %v6335 = vld [vmem:[%s6334] sm:$0xff]
    %v6336 = vld [vmem:[%s6334 + $0x8] sm:$0xff]
    %v6337 = vld [vmem:[%s6334 + $0x10] sm:$0xff]
    %v6338 = vld [vmem:[%s6334 + $0x18] sm:$0xff]
    %v6339 = vld [vmem:[%s6334 + $0x20] sm:$0xff]
    %v6340 = vld [vmem:[%s6334 + $0x28] sm:$0xff]
    %v6341 = vld [vmem:[%s6334 + $0x30] sm:$0xff]
    %v6342 = vld [vmem:[%s6334 + $0x38] sm:$0xff]
    %s6343 = scalar_lea.vmem %s19, 1
    %v6344 = vld [vmem:[%s6343] sm:$0x1]
    %v6346 = vlaneseq
    %v6347 = vshrl.u32 %v6346, 7
    %v6348 = vsub.s32 0, %v6347
    %v6349 = vrot.slane %v6344, %v6348
    %v6352 = vsel %vm223, %v6332, 0
    %v6355 = vsel %vm223, %v6333, 0
    %6357 = vmatprep.subr.mxu0 0.0
    %6358 = vmatpush1.msra.mxu0 0.0
    %6359 = vmatprep.subr.mxu0 0.0
    %6360 = vmatpush1.msra.mxu0 0.0
    %6361 = vmatprep.subr.mxu0 0.0
    %6362 = vmatpush1.msra.mxu0 0.0
    %6363 = vmatprep.subr.mxu0 0.0
    %6364 = vmatpush1.msra.mxu0 0.0
    %6365 = vmatprep.subr.mxu0 0.0
    %6366 = vmatpush1.msra.mxu0 0.0
    %6367 = vmatprep.subr.mxu0 0.0
    %6368 = vmatpush1.msra.mxu0 0.0
    %6369 = vmatprep.subr.mxu0 0.0
    %6370 = vmatpush1.msra.mxu0 0.0
    %6371 = vmatprep.subr.mxu0 0.0
    %6372 = vmatpush1.msra.mxu0 0.0
    %6373 = vmatprep.subr.mxu0 0.0
    %6374 = vmatpush1.msra.mxu0 %v6342
    %6375 = vmatprep.subr.mxu0 0.0
    %6376 = vmatpush1.msra.mxu0 %v6341
    %6377 = vmatprep.subr.mxu0 0.0
    %6378 = vmatpush1.msra.mxu0 %v6340
    %6379 = vmatprep.subr.mxu0 0.0
    %6380 = vmatpush1.msra.mxu0 %v6339
    %6381 = vmatprep.subr.mxu0 0.0
    %6382 = vmatpush1.msra.mxu0 %v6338
    %6383 = vmatprep.subr.mxu0 0.0
    %6384 = vmatpush1.msra.mxu0 %v6337
    %6385 = vmatprep.subr.mxu0 0.0
    %6386 = vmatpush1.msra.mxu0 %v6336
    %6387 = vmatprep.subr.mxu0 0.0
    %6388 = vmatpush1.msra.mxu0 %v6335
    %6389 = vmatprep.subr.mxu0 0.0
    %6390 = vmatpush2.msra.mxu0 0.0
    %6391 = vmatprep.subr.mxu0 0.0
    %6392 = vmatpush2.msra.mxu0 0.0
    %6393 = vmatprep.subr.mxu0 0.0
    %6394 = vmatpush2.msra.mxu0 0.0
    %6395 = vmatprep.subr.mxu0 0.0
    %6396 = vmatpush2.msra.mxu0 0.0
    %6397 = vmatprep.subr.mxu0 0.0
    %6398 = vmatpush2.msra.mxu0 0.0
    %6399 = vmatprep.subr.mxu0 0.0
    %6400 = vmatpush2.msra.mxu0 0.0
    %6401 = vmatprep.subr.mxu0 0.0
    %6402 = vmatpush2.msra.mxu0 0.0
    %6403 = vmatprep.subr.mxu0 0.0
    %6404 = vmatpush2.msra.mxu0 0.0
    %6405 = vmatprep.subr.mxu0 0.0
    %6406 = vmatpush2.msra.mxu0 0.0
    %6407 = vmatprep.subr.mxu0 0.0
    %6408 = vmatpush2.msra.mxu0 0.0
    %6409 = vmatprep.subr.mxu0 0.0
    %6410 = vmatpush2.msra.mxu0 0.0
    %6411 = vmatprep.subr.mxu0 0.0
    %6412 = vmatpush2.msra.mxu0 0.0
    %6413 = vmatprep.subr.mxu0 0.0
    %6414 = vmatpush2.msra.mxu0 0.0
    %6415 = vmatprep.subr.mxu0 0.0
    %6416 = vmatpush2.msra.mxu0 0.0
    %6417 = vmatprep.subr.mxu0 0.0
    %6418 = vmatpush2.msra.mxu0 0.0
    %6419 = vmatprep.subr.mxu0 0.0
    %6420 = vmatpush2.msra.mxu0 0.0
    %6421 = vmatprep.mubr.f32.mxu0 0.0
    %6422 = vmatmul.mubr.f32.gmra.mxu0 %v6352
    %v6423 = vpop.f32.mrf.mxu0
    %v6424 = vadd.f32 %v6349, %v6423
    %v6425 = vpop.f32.mrf.mxu0
    %6426 = vmatprep.mubr.f32.mxu0 0.0
    %6427 = vmatmul.mubr.f32.gmra.mxu0 %v6355
    %v6428 = vpop.f32.mrf.mxu0
    %v6429 = vadd.f32 %v6349, %v6428
    %v6430 = vpop.f32.mrf.mxu0
    %6431 = vdwg.mxu0
    %v6432 = vadd.f32 %v6232, %v6424
    %v6433 = vadd.f32 %v6233, %v6429
    %v6434 = vsel %vm223, %v6432, 0.0
    %6435 = vadd.xlane.f32.xlu0 %v6434
    %v6436 = vpop.xlane.xlu0 %6435
    %v6437 = vsel %vm223, %v6433, 0.0
    %6438 = vadd.xlane.f32.xlu0 %v6437
    %v6439 = vpop.xlane.xlu0 %6438
    %v6440 = vmul.f32 %v6436, %v3165
    %v6441 = vmul.f32 %v6439, %v3165
    %v6442 = vsub.f32 %v6432, %v6440
    %v6443 = vsub.f32 %v6433, %v6441
    %v6444 = vmul.f32 %v6442, %v6442
    %v6445 = vmul.f32 %v6443, %v6443
    %v6446 = vsel %vm223, %v6444, 0.0
    %6447 = vadd.xlane.f32.xlu0 %v6446
    %v6448 = vpop.xlane.xlu0 %6447
    %v6449 = vsel %vm223, %v6445, 0.0
    %6450 = vadd.xlane.f32.xlu0 %v6449
    %v6451 = vpop.xlane.xlu0 %6450
    %v6452 = vmul.f32 %v6448, %v3165
    %v6453 = vmul.f32 %v6451, %v3165
    %v6454 = vadd.f32 %v6452, 1e-05
    %v6455 = vadd.f32 %v6453, 1e-05
    %v6456 = vrsqrt.pop %v6454
    %v6457 = vrsqrt.pop %v6455
    %v6458 = vmul.f32 %v6442, %v6456
    %v6459 = vmul.f32 %v6443, %v6457
    %s6460 = scalar_lea.vmem %s22, 1
    %v6461 = vld [vmem:[%s6460] sm:$0x1]
    %v6463 = vlaneseq
    %v6464 = vshrl.u32 %v6463, 7
    %v6465 = vsub.s32 0, %v6464
    %v6466 = vrot.slane %v6461, %v6465
    %v6468 = vmul.f32 %v6458, %v6466
    %v6469 = vmul.f32 %v6459, %v6466
    %s6470 = scalar_lea.vmem %s23, 1
    %v6471 = vld [vmem:[%s6470] sm:$0x1]
    %v6473 = vlaneseq
    %v6474 = vshrl.u32 %v6473, 7
    %v6475 = vsub.s32 0, %v6474
    %v6476 = vrot.slane %v6471, %v6475
    %v6478 = vadd.f32 %v6468, %v6476
    %v6479 = vadd.f32 %v6469, %v6476
    %6480 = vst.msk [vmem:[#allocation2] sm:$0xff] %vm223, %v6478
    %6481 = vst.msk [vmem:[#allocation2 + $0x8] sm:$0xff] %vm223, %v6479
    // Predicated region
    $region98: #{tex_transformer_forward.1} parent=1 // pred_check
      _
    $region99: #{tex_transformer_forward.1} parent=1 // pred_check_branch
      %6483 = sbr.rel (0) target = $region101
    $region100: #{tex_transformer_forward.1} parent=1 // pred_region
      %s6485 = ssub.s32 256, 256
      %6486 = vsyncadd [#allocation3], %s6485
      %s6487 = sshll.u32 [#allocation2], 4
      %s6488 = int_to_ptr.vmem [resolvable:$true] %s6487
      %6493 = dma.vmem_to_hbm [thread:$0]  %s6488, 256, %s24, [#allocation3], 128, 128, 8
    $region101: #{tex_transformer_forward.1} parent=1 // pred_fallthru
      _
    // Predicated region
    $region102: #{tex_transformer_forward.1} parent=1 // pred_check
      _
    $region103: #{tex_transformer_forward.1} parent=1 // pred_check_branch
      %6495 = sbr.rel (0) target = $region105
    $region104: #{tex_transformer_forward.1} parent=1 // pred_region
      %6496 = dma.done [#allocation3], 256
    $region105: #{tex_transformer_forward.1} parent=1 // pred_fallthru
      _
    %6497 = vsyncpa [#allocation3], 1

</llo_original>
